<compile_context>
chip_gen: v7x
topology: tpu7x:2x2x1
jax: 0.10.0
libtpu: 0.0.40
codegen_flags: <defaults>
</compile_context>

<pallas_src>
import functools

import numpy as np

import jax
import jax.numpy as jnp
from jax import lax
from jax.experimental import pallas as pl
from jax.experimental.pallas import tpu as pltpu


# ---------------------------------------------------------------------------
# Trace-time geometry (pure Python / numpy; zero runtime cost)
# ---------------------------------------------------------------------------

def _conv_out(size, k, stride, pad):
    return (size + 2 * pad - k) // stride + 1


def _pool_windows(size, k, stride, pad):
    out = _conv_out(size, k, stride, pad)
    wins = []
    for o in range(out):
        lo = o * stride - pad
        wins.append([i for i in range(lo, lo + k) if 0 <= i < size])
    return out, wins


@functools.lru_cache(maxsize=None)
def _conv_geometry(h, w):
    """Static plan for the conv branch.  The PyTorch model (fc1 = Linear(96, .))
    requires layer2 to end at 1x1 spatial; asserted here."""
    # layer1: Conv2d(3,48,k=8,p=1,s=8) -> ReLU -> MaxPool2d(k=3,p=1,s=4)
    oh1, ow1 = _conv_out(h, 8, 8, 1), _conv_out(w, 8, 8, 1)
    p1h, row_wins = _pool_windows(oh1, 3, 4, 1)
    p1w, col_wins = _pool_windows(ow1, 3, 4, 1)
    # layer2: Conv2d(48,96,k=8,p=4,s=4) -> ReLU -> MaxPool2d(k=7,p=3,s=2)
    assert _conv_out(p1h, 8, 4, 4) == 1 and _conv_out(p1w, 8, 4, 4) == 1, (
        "input spatial size must reduce to 1x1 after layer2")
    assert _conv_out(1, 7, 2, 3) == 1   # final max-pool over a 1x1 map == identity

    # pool-1 windows as flat conv1-output positions, padded to a multiple of 8
    # members by repeating a member (max is idempotent) so the in-kernel reduce
    # is sublane-tile aligned.
    groups = []
    for i in range(p1h):
        for j in range(p1w):
            groups.append([r * ow1 + c for r in row_wins[i] for c in col_wins[j]])
    gp = max(8, -(-max(len(g) for g in groups) // 8) * 8)
    gather = np.array([g + [g[0]] * (gp - len(g)) for g in groups], np.int32)

    # conv2 has a 1x1 output, so only kernel taps overlapping the valid
    # (p1h, p1w) pooled map contribute: pooled position (i, j) <-> tap (i+4, j+4).
    taps = [(i + 4, j + 4) for i in range(p1h) for j in range(p1w)]
    return dict(oh1=oh1, ow1=ow1, n_groups=len(groups), group_pad=gp,
                gather=gather, taps=taps)


# ---------------------------------------------------------------------------
# The fused Pallas kernel (whole forward; weights VMEM-resident across grid)
# ---------------------------------------------------------------------------

def _one_emb_kernel(p1_ref, rn_ref,
                    w1_ref, b1_ref, w2_ref, b2_ref,
                    rnw_ref, rnb_ref,
                    fc1w_ref, fc1b_ref,
                    fc2wq_ref, fc2s_ref, fc2b_ref,
                    linq_rn_ref, lins_rn_ref, linq_e_ref, lins_e_ref, linb_ref,
                    o_ref, *, tb, group_pad):
    f32, bf16 = jnp.float32, jnp.bfloat16

    def l2norm(x):   # torch F.normalize(p=2, dim=1)
        ss = jnp.sum(x * x, axis=-1, keepdims=True)
        return x * lax.rsqrt(jnp.maximum(ss, 1e-24))

    def qdot(x, wq_ref, s_ref):
        # int8 weight -> bf16 on the VPU (exact for |q| <= 127), MXU dot with
        # f32 accumulation, per-column scale applied on the tiny (tb, N) result.
        w = wq_ref[...].astype(bf16)
        return jnp.dot(x, w, preferred_element_type=f32) * s_ref[...]

    # ---- layer1: group-blocked conv1 (one im2col matmul) + bias + ReLU -------
    y1 = jnp.dot(p1_ref[...], w1_ref[...], preferred_element_type=f32)
    y1 = jnp.maximum(y1 + b1_ref[...], 0.0)                  # (tb*GP, NG*48)

    # ---- layer1 max-pool: one reshape + one sublane reduce -------------------
    pooled = jnp.max(y1.reshape(tb, group_pad, y1.shape[-1]), axis=1)  # (tb, NG*48)

    # ---- layer2 conv (1x1 output) as ONE dot over the NG*48 K axis -----------
    e = jnp.dot(pooled.astype(bf16), w2_ref[...], preferred_element_type=f32)
    e = jnp.maximum(e + b2_ref[...], 0.0)                    # (tb, 96); layer2's
                                                             # pool on 1x1 map == id
    # TODO(synk): nn.Dropout() == identity in inference.

    # ---- fc1 -> fc2 (int8 weight) -> L2-normalize ----------------------------
    h = jnp.dot(e.astype(bf16), fc1w_ref[...], preferred_element_type=f32) + fc1b_ref[...]
    h = qdot(h.astype(bf16), fc2wq_ref, fc2s_ref) + fc2b_ref[...]
    h = l2norm(h)                                            # (tb, 500)

    # ---- resnet stand-in head: (tb,3) GAP feats via 3 VPU FMAs + L2-normalize -
    rn = rn_ref[...].astype(f32)                             # (tb, 3)
    rnw = rnw_ref[...].astype(f32)                           # (3, 1000)
    r = rnb_ref[...] + rn[:, 0:1] * rnw[0:1, :]
    for c in range(1, rnw.shape[0]):
        r = r + rn[:, c:c + 1] * rnw[c:c + 1, :]
    r = l2norm(r)                                            # (tb, 1000)

    # ---- linearization on concat([r, h]) via split (int8) weights ------------
    out = (qdot(r.astype(bf16), linq_rn_ref, lins_rn_ref)
           + qdot(h.astype(bf16), linq_e_ref, lins_e_ref)
           + linb_ref[...])
    o_ref[...] = l2norm(out).astype(o_ref.dtype)


# ---------------------------------------------------------------------------
# Forward wrapper (glue = layout plumbing on tiny activation tensors only)
# ---------------------------------------------------------------------------

def one_emb_forward(params, images_nchw):
    """images_nchw: (B, 3, H, W) f32 with H, W such that layer2 ends at 1x1."""
    B, C, H, W = images_nchw.shape
    assert C == 3
    geo = _conv_geometry(H, W)
    ng, gp, k1 = geo["n_groups"], geo["group_pad"], 3 * 8 * 8
    assert params["conv1_w_bd"].shape == (ng * k1, ng * 48), (
        "params were initialized for a different input spatial size")
    out_features = params["lin_b"].shape[-1]

    # stand-in resnet: global average pool features (see TODO(synk) above)
    rn_feat = jnp.mean(images_nchw, axis=(2, 3))             # (B, 3)

    # conv1 im2col in one XLA op; the pool-1 window gather places window
    # members along rows and groups along the feature (lane) axis, so the
    # kernel needs no lane-merging reshape:
    #   p1[b*GP + m, g*K1 + k] = patch-feature k at member m of pooled pos g.
    patches = lax.conv_general_dilated_patches(
        images_nchw, filter_shape=(8, 8), window_strides=(8, 8),
        padding=((1, 1), (1, 1)))                            # (B, 192, OH1, OW1)
    pm = patches.reshape(B, k1, geo["oh1"] * geo["ow1"])
    sel = jnp.take(pm, geo["gather"].reshape(-1), axis=2)    # (B, 192, NG*GP)
    sel = sel.reshape(B, k1, ng, gp)
    p1 = jnp.transpose(sel, (0, 3, 2, 1)).reshape(B * gp, ng * k1)
    p1 = p1.astype(jnp.bfloat16)

    weight_args = (params["conv1_w_bd"], params["conv1_b_t"],
                   params["conv2_w_flat"], params["conv2_b"],
                   params["rn_w"], params["rn_b"],
                   params["fc1_w"], params["fc1_b"],
                   params["fc2_wq"], params["fc2_s"], params["fc2_b"],
                   params["lin_wq_rn"], params["lin_s_rn"],
                   params["lin_wq_e"], params["lin_s_e"], params["lin_b"])
    args = (p1, rn_feat) + weight_args

    # Batch-tiled grid; weight BlockSpecs return a constant block index so each
    # weight is DMA'd from HBM once per call and stays VMEM-resident across all
    # grid steps (no re-fetch as B grows).  tb is either B itself or 8.
    tb = B if B <= 8 else (8 if B % 8 == 0 else B)
    nb = B // tb

    def const_spec(shape):
        nd = len(shape)
        return pl.BlockSpec(shape, lambda i, _nd=nd: (0,) * _nd)

    in_specs = ([pl.BlockSpec((tb * gp, ng * k1), lambda i: (i, 0)),
                 pl.BlockSpec((tb, 3), lambda i: (i, 0))]
                + [const_spec(a.shape) for a in weight_args])
    out_specs = pl.BlockSpec((tb, out_features), lambda i: (i, 0))

    kernel = functools.partial(_one_emb_kernel, tb=tb, group_pad=gp)
    return pl.pallas_call(
        kernel,
        out_shape=jax.ShapeDtypeStruct((B, out_features), jnp.float32),
        grid=(nb,),
        in_specs=in_specs,
        out_specs=out_specs,
        compiler_params=pltpu.CompilerParams(
            # single TC at tiny batch: don't duplicate the weight DMA across
            # megacore cores; explicit VMEM limit keeps v5e's 16 MiB default
            # scoped limit from being a surprise (safe on v7x's 64 MiB too).
            dimension_semantics=("arbitrary",),
            vmem_limit_bytes=32 * 1024 * 1024),
    )(*args)


# ---------------------------------------------------------------------------
# Deterministic parameter init: ALL weight layout work (transposes, conv2 tap
# stacking, conv1 block-diagonalization, int8 quantization) happens once here.
# ---------------------------------------------------------------------------

def _uniform(key, shape, fan_in):
    bound = 1.0 / np.sqrt(float(fan_in))
    return jax.random.uniform(key, shape, jnp.float32, -bound, bound)


def _quantize_cols(w):
    """Symmetric per-output-column int8 quantization of a (K, N) f32 matrix."""
    amax = jnp.max(jnp.abs(w), axis=0, keepdims=True)
    scale = jnp.maximum(amax, 1e-8) / 127.0
    q = jnp.clip(jnp.round(w / scale), -127.0, 127.0).astype(jnp.int8)
    return q, scale.astype(jnp.float32)


def init_params(key, out_features=1000, image_hw=(64, 64)):
    bf16 = jnp.bfloat16
    geo = _conv_geometry(*image_hw)
    ng, k1 = geo["n_groups"], 3 * 8 * 8
    ks = jax.random.split(key, 13)
    p = {}

    # stand-in resnet head: GAP -> Linear(3, 1000)   (see TODO(synk) above)
    p["rn_w"] = _uniform(ks[0], (3, 1000), 3).astype(bf16)
    p["rn_b"] = _uniform(ks[1], (1, 1000), 3)

    # layer1 conv: Conv2d(3,48,k=8,p=1,s=8); im2col (Cin*KH*KW, 48) weight is
    # replicated into a block-diagonal (NG*K1, NG*48) matrix so all NG pool-1
    # windows are convolved by one group-blocked matmul inside the kernel.
    w1 = _uniform(ks[2], (k1, 48), k1)
    w1bd = jnp.zeros((ng * k1, ng * 48), jnp.float32)
    for g in range(ng):
        w1bd = w1bd.at[g * k1:(g + 1) * k1, g * 48:(g + 1) * 48].set(w1)
    p["conv1_w_bd"] = w1bd.astype(bf16)
    p["conv1_b_t"] = jnp.tile(_uniform(ks[3], (1, 48), k1), (1, ng))

    # layer2 conv: Conv2d(48,96,k=8,p=4,s=4).  Its output is 1x1 spatial, so
    # only the NG taps overlapping the pooled map contribute; stacked once here
    # along K as (NG*48, 96).
    # TODO(synk): taps outside the 1x1-output receptive field are dropped (they
    #             can never touch data at this input size).
    w2_full = _uniform(ks[4], (8, 8, 48, 96), 48 * 8 * 8)    # (KH, KW, Cin, Cout)
    p["conv2_w_flat"] = jnp.concatenate(
        [w2_full[kh, kw] for kh, kw in geo["taps"]], axis=0).astype(bf16)
    p["conv2_b"] = _uniform(ks[5], (1, 96), 48 * 8 * 8)

    # fc1: Linear(96,1000) stays bf16 (small); fc2: Linear(1000,500) int8.
    p["fc1_w"] = _uniform(ks[6], (96, 1000), 96).astype(bf16)
    p["fc1_b"] = _uniform(ks[7], (1, 1000), 96)
    p["fc2_wq"], p["fc2_s"] = _quantize_cols(_uniform(ks[8], (1000, 500), 1000))
    p["fc2_b"] = _uniform(ks[9], (1, 500), 1000)

    # linearization: Linear(1500, out) split into the rn (first 1000 K rows)
    # and conv-branch (last 500 K rows) blocks -> no concat in-kernel; int8.
    p["lin_wq_rn"], p["lin_s_rn"] = _quantize_cols(
        _uniform(ks[10], (1000, out_features), 1500))
    p["lin_wq_e"], p["lin_s_e"] = _quantize_cols(
        _uniform(ks[11], (500, out_features), 1500))
    p["lin_b"] = _uniform(ks[12], (1, out_features), 1500)
    return p


# ---------------------------------------------------------------------------
# Main
# ---------------------------------------------------------------------------

if __name__ == "__main__":
    OUT_FEATURES = 1000
    key = jax.random.PRNGKey(0)
    img_key, param_key = jax.random.split(key)

    # 64x64 is the smallest "nice" input whose conv/pool stack ends at 1x1
    # spatial, which fc1 = Linear(96, 1000) requires.
    images = jax.random.normal(img_key, (2, 3, 64, 64), jnp.float32)
    params = init_params(param_key, out_features=OUT_FEATURES, image_hw=(64, 64))

    fwd = jax.jit(one_emb_forward)
    out = jax.block_until_ready(fwd(params, images))

    assert out.shape == (2, OUT_FEATURES), out.shape
    assert bool(jnp.all(jnp.isfinite(out)))
    # output rows are L2-normalized
    assert bool(jnp.allclose(jnp.linalg.norm(out, axis=1), 1.0, atol=1e-4))

    print("KERNEL_OK")
</pallas_src>

<mosaic_0001>
module attributes {stable_mosaic.version = 11 : i64} {
  func.func @_one_emb_kernel(%arg0: i32, %arg1: memref<32x768xbf16, #tpu.memory_space<vmem>>, %arg2: memref<2x3xf32, #tpu.memory_space<vmem>>, %arg3: memref<768x192xbf16, #tpu.memory_space<vmem>>, %arg4: memref<1x192xf32, #tpu.memory_space<vmem>>, %arg5: memref<192x96xbf16, #tpu.memory_space<vmem>>, %arg6: memref<1x96xf32, #tpu.memory_space<vmem>>, %arg7: memref<3x1000xbf16, #tpu.memory_space<vmem>>, %arg8: memref<1x1000xf32, #tpu.memory_space<vmem>>, %arg9: memref<96x1000xbf16, #tpu.memory_space<vmem>>, %arg10: memref<1x1000xf32, #tpu.memory_space<vmem>>, %arg11: memref<1000x500xi8, #tpu.memory_space<vmem>>, %arg12: memref<1x500xf32, #tpu.memory_space<vmem>>, %arg13: memref<1x500xf32, #tpu.memory_space<vmem>>, %arg14: memref<1000x1000xi8, #tpu.memory_space<vmem>>, %arg15: memref<1x1000xf32, #tpu.memory_space<vmem>>, %arg16: memref<500x1000xi8, #tpu.memory_space<vmem>>, %arg17: memref<1x1000xf32, #tpu.memory_space<vmem>>, %arg18: memref<1x1000xf32, #tpu.memory_space<vmem>>, %arg19: memref<2x1000xf32, #tpu.memory_space<vmem>>) attributes {dimension_semantics = [#tpu.dimension_semantics<arbitrary>], iteration_bounds = array<i64: 1>, scalar_prefetch = 0 : i64, scratch_operands = 0 : i64, tpu.core_type = #tpu.core_type<tc>, window_params = [{transform_indices = @transform_0, window_bounds = array<i64: 32, 768>}, {transform_indices = @transform_1, window_bounds = array<i64: 2, 3>}, {pipeline_mode = #tpu.pipeline_mode<synchronous>, transform_indices = @transform_2, window_bounds = array<i64: 768, 192>}, {pipeline_mode = #tpu.pipeline_mode<synchronous>, transform_indices = @transform_3, window_bounds = array<i64: 1, 192>}, {pipeline_mode = #tpu.pipeline_mode<synchronous>, transform_indices = @transform_4, window_bounds = array<i64: 192, 96>}, {pipeline_mode = #tpu.pipeline_mode<synchronous>, transform_indices = @transform_5, window_bounds = array<i64: 1, 96>}, {pipeline_mode = #tpu.pipeline_mode<synchronous>, transform_indices = @transform_6, window_bounds = array<i64: 3, 1000>}, {pipeline_mode = #tpu.pipeline_mode<synchronous>, transform_indices = @transform_7, window_bounds = array<i64: 1, 1000>}, {pipeline_mode = #tpu.pipeline_mode<synchronous>, transform_indices = @transform_8, window_bounds = array<i64: 96, 1000>}, {pipeline_mode = #tpu.pipeline_mode<synchronous>, transform_indices = @transform_9, window_bounds = array<i64: 1, 1000>}, {pipeline_mode = #tpu.pipeline_mode<synchronous>, transform_indices = @transform_10, window_bounds = array<i64: 1000, 500>}, {pipeline_mode = #tpu.pipeline_mode<synchronous>, transform_indices = @transform_11, window_bounds = array<i64: 1, 500>}, {pipeline_mode = #tpu.pipeline_mode<synchronous>, transform_indices = @transform_12, window_bounds = array<i64: 1, 500>}, {pipeline_mode = #tpu.pipeline_mode<synchronous>, transform_indices = @transform_13, window_bounds = array<i64: 1000, 1000>}, {pipeline_mode = #tpu.pipeline_mode<synchronous>, transform_indices = @transform_14, window_bounds = array<i64: 1, 1000>}, {pipeline_mode = #tpu.pipeline_mode<synchronous>, transform_indices = @transform_15, window_bounds = array<i64: 500, 1000>}, {pipeline_mode = #tpu.pipeline_mode<synchronous>, transform_indices = @transform_16, window_bounds = array<i64: 1, 1000>}, {pipeline_mode = #tpu.pipeline_mode<synchronous>, transform_indices = @transform_17, window_bounds = array<i64: 1, 1000>}, {transform_indices = @transform_18, window_bounds = array<i64: 2, 1000>}]} {
    %c0 = arith.constant 0 : index
    %c0_0 = arith.constant 0 : index
    %0 = vector.load %arg1[%c0, %c0_0] : memref<32x768xbf16, #tpu.memory_space<vmem>>, vector<32x768xbf16>
    %c0_1 = arith.constant 0 : index
    %c0_2 = arith.constant 0 : index
    %1 = vector.load %arg3[%c0_1, %c0_2] : memref<768x192xbf16, #tpu.memory_space<vmem>>, vector<768x192xbf16>
    %cst = arith.constant dense<0.000000e+00> : vector<32x192xf32>
    %2 = tpu.matmul %0, %1, %cst {dimension_numbers = #tpu.dot_dimension_numbers<[1], [0], [0], [1], [0, 0, 1, 1], [], []>} : vector<32x768xbf16>, vector<768x192xbf16>, vector<32x192xf32> -> vector<32x192xf32>
    %c0_3 = arith.constant 0 : index
    %c0_4 = arith.constant 0 : index
    %3 = vector.load %arg4[%c0_3, %c0_4] : memref<1x192xf32, #tpu.memory_space<vmem>>, vector<1x192xf32>
    %4 = vector.broadcast %3 : vector<1x192xf32> to vector<32x192xf32>
    %5 = arith.addf %2, %4 : vector<32x192xf32>
    %cst_5 = arith.constant 0.000000e+00 : f32
    %6 = vector.broadcast %cst_5 : f32 to vector<32x192xf32>
    %7 = arith.maximumf %5, %6 : vector<32x192xf32>
    %8 = vector.shape_cast %7 : vector<32x192xf32> to vector<2x16x192xf32>
    %cst_6 = arith.constant dense<0xFF800000> : vector<2x192xf32>
    %9 = vector.multi_reduction <maximumf>, %8, %cst_6 [1] : vector<2x16x192xf32> to vector<2x192xf32>
    %10 = arith.truncf %9 : vector<2x192xf32> to vector<2x192xbf16>
    %c0_7 = arith.constant 0 : index
    %c0_8 = arith.constant 0 : index
    %11 = vector.load %arg5[%c0_7, %c0_8] : memref<192x96xbf16, #tpu.memory_space<vmem>>, vector<192x96xbf16>
    %cst_9 = arith.constant dense<0.000000e+00> : vector<2x96xf32>
    %12 = tpu.matmul %10, %11, %cst_9 {dimension_numbers = #tpu.dot_dimension_numbers<[1], [0], [0], [1], [0, 0, 1, 1], [], []>} : vector<2x192xbf16>, vector<192x96xbf16>, vector<2x96xf32> -> vector<2x96xf32>
    %c0_10 = arith.constant 0 : index
    %c0_11 = arith.constant 0 : index
    %13 = vector.load %arg6[%c0_10, %c0_11] : memref<1x96xf32, #tpu.memory_space<vmem>>, vector<1x96xf32>
    %14 = vector.broadcast %13 : vector<1x96xf32> to vector<2x96xf32>
    %15 = arith.addf %12, %14 : vector<2x96xf32>
    %cst_12 = arith.constant 0.000000e+00 : f32
    %16 = vector.broadcast %cst_12 : f32 to vector<2x96xf32>
    %17 = arith.maximumf %15, %16 : vector<2x96xf32>
    %18 = arith.truncf %17 : vector<2x96xf32> to vector<2x96xbf16>
    %c0_13 = arith.constant 0 : index
    %c0_14 = arith.constant 0 : index
    %19 = vector.load %arg9[%c0_13, %c0_14] : memref<96x1000xbf16, #tpu.memory_space<vmem>>, vector<96x1000xbf16>
    %cst_15 = arith.constant dense<0.000000e+00> : vector<2x1000xf32>
    %20 = tpu.matmul %18, %19, %cst_15 {dimension_numbers = #tpu.dot_dimension_numbers<[1], [0], [0], [1], [0, 0, 1, 1], [], []>} : vector<2x96xbf16>, vector<96x1000xbf16>, vector<2x1000xf32> -> vector<2x1000xf32>
    %c0_16 = arith.constant 0 : index
    %c0_17 = arith.constant 0 : index
    %21 = vector.load %arg10[%c0_16, %c0_17] : memref<1x1000xf32, #tpu.memory_space<vmem>>, vector<1x1000xf32>
    %22 = vector.broadcast %21 : vector<1x1000xf32> to vector<2x1000xf32>
    %23 = arith.addf %20, %22 : vector<2x1000xf32>
    %24 = arith.truncf %23 : vector<2x1000xf32> to vector<2x1000xbf16>
    %c0_18 = arith.constant 0 : index
    %c0_19 = arith.constant 0 : index
    %25 = vector.load %arg11[%c0_18, %c0_19] : memref<1000x500xi8, #tpu.memory_space<vmem>>, vector<1000x500xi8>
    %26 = arith.sitofp %25 : vector<1000x500xi8> to vector<1000x500xbf16>
    %cst_20 = arith.constant dense<0.000000e+00> : vector<2x500xf32>
    %27 = tpu.matmul %24, %26, %cst_20 {dimension_numbers = #tpu.dot_dimension_numbers<[1], [0], [0], [1], [0, 0, 1, 1], [], []>} : vector<2x1000xbf16>, vector<1000x500xbf16>, vector<2x500xf32> -> vector<2x500xf32>
    %c0_21 = arith.constant 0 : index
    %c0_22 = arith.constant 0 : index
    %28 = vector.load %arg12[%c0_21, %c0_22] : memref<1x500xf32, #tpu.memory_space<vmem>>, vector<1x500xf32>
    %29 = vector.broadcast %28 : vector<1x500xf32> to vector<2x500xf32>
    %30 = arith.mulf %27, %29 : vector<2x500xf32>
    %c0_23 = arith.constant 0 : index
    %c0_24 = arith.constant 0 : index
    %31 = vector.load %arg13[%c0_23, %c0_24] : memref<1x500xf32, #tpu.memory_space<vmem>>, vector<1x500xf32>
    %32 = vector.broadcast %31 : vector<1x500xf32> to vector<2x500xf32>
    %33 = arith.addf %30, %32 : vector<2x500xf32>
    %34 = arith.mulf %33, %33 : vector<2x500xf32>
    %cst_25 = arith.constant dense<0.000000e+00> : vector<2xf32>
    %35 = vector.multi_reduction <add>, %34, %cst_25 [1] : vector<2x500xf32> to vector<2xf32>
    %36 = vector.shape_cast %35 : vector<2xf32> to vector<2x1xf32>
    %cst_26 = arith.constant 1.000000e-24 : f32
    %37 = vector.broadcast %cst_26 : f32 to vector<2x1xf32>
    %38 = arith.maximumf %36, %37 : vector<2x1xf32>
    %39 = math.rsqrt %38 : vector<2x1xf32>
    %40 = vector.broadcast %39 : vector<2x1xf32> to vector<2x500xf32>
    %41 = arith.mulf %33, %40 : vector<2x500xf32>
    %c0_27 = arith.constant 0 : index
    %c0_28 = arith.constant 0 : index
    %42 = vector.load %arg2[%c0_27, %c0_28] : memref<2x3xf32, #tpu.memory_space<vmem>>, vector<2x3xf32>
    %c0_29 = arith.constant 0 : index
    %c0_30 = arith.constant 0 : index
    %43 = vector.load %arg7[%c0_29, %c0_30] : memref<3x1000xbf16, #tpu.memory_space<vmem>>, vector<3x1000xbf16>
    %44 = arith.extf %43 : vector<3x1000xbf16> to vector<3x1000xf32>
    %c0_31 = arith.constant 0 : index
    %c0_32 = arith.constant 0 : index
    %45 = vector.load %arg8[%c0_31, %c0_32] : memref<1x1000xf32, #tpu.memory_space<vmem>>, vector<1x1000xf32>
    %46 = vector.extract_strided_slice %42 {offsets = [0, 0], sizes = [2, 1], strides = [1, 1]} : vector<2x3xf32> to vector<2x1xf32>
    %47 = vector.extract_strided_slice %44 {offsets = [0, 0], sizes = [1, 1000], strides = [1, 1]} : vector<3x1000xf32> to vector<1x1000xf32>
    %48 = vector.broadcast %46 : vector<2x1xf32> to vector<2x1000xf32>
    %49 = vector.broadcast %47 : vector<1x1000xf32> to vector<2x1000xf32>
    %50 = arith.mulf %48, %49 : vector<2x1000xf32>
    %51 = vector.broadcast %45 : vector<1x1000xf32> to vector<2x1000xf32>
    %52 = arith.addf %51, %50 : vector<2x1000xf32>
    %53 = vector.extract_strided_slice %42 {offsets = [0, 1], sizes = [2, 1], strides = [1, 1]} : vector<2x3xf32> to vector<2x1xf32>
    %54 = vector.extract_strided_slice %44 {offsets = [1, 0], sizes = [1, 1000], strides = [1, 1]} : vector<3x1000xf32> to vector<1x1000xf32>
    %55 = vector.broadcast %53 : vector<2x1xf32> to vector<2x1000xf32>
    %56 = vector.broadcast %54 : vector<1x1000xf32> to vector<2x1000xf32>
    %57 = arith.mulf %55, %56 : vector<2x1000xf32>
    %58 = arith.addf %52, %57 : vector<2x1000xf32>
    %59 = vector.extract_strided_slice %42 {offsets = [0, 2], sizes = [2, 1], strides = [1, 1]} : vector<2x3xf32> to vector<2x1xf32>
    %60 = vector.extract_strided_slice %44 {offsets = [2, 0], sizes = [1, 1000], strides = [1, 1]} : vector<3x1000xf32> to vector<1x1000xf32>
    %61 = vector.broadcast %59 : vector<2x1xf32> to vector<2x1000xf32>
    %62 = vector.broadcast %60 : vector<1x1000xf32> to vector<2x1000xf32>
    %63 = arith.mulf %61, %62 : vector<2x1000xf32>
    %64 = arith.addf %58, %63 : vector<2x1000xf32>
    %65 = arith.mulf %64, %64 : vector<2x1000xf32>
    %cst_33 = arith.constant dense<0.000000e+00> : vector<2xf32>
    %66 = vector.multi_reduction <add>, %65, %cst_33 [1] : vector<2x1000xf32> to vector<2xf32>
    %67 = vector.shape_cast %66 : vector<2xf32> to vector<2x1xf32>
    %cst_34 = arith.constant 1.000000e-24 : f32
    %68 = vector.broadcast %cst_34 : f32 to vector<2x1xf32>
    %69 = arith.maximumf %67, %68 : vector<2x1xf32>
    %70 = math.rsqrt %69 : vector<2x1xf32>
    %71 = vector.broadcast %70 : vector<2x1xf32> to vector<2x1000xf32>
    %72 = arith.mulf %64, %71 : vector<2x1000xf32>
    %73 = arith.truncf %72 : vector<2x1000xf32> to vector<2x1000xbf16>
    %c0_35 = arith.constant 0 : index
    %c0_36 = arith.constant 0 : index
    %74 = vector.load %arg14[%c0_35, %c0_36] : memref<1000x1000xi8, #tpu.memory_space<vmem>>, vector<1000x1000xi8>
    %75 = arith.sitofp %74 : vector<1000x1000xi8> to vector<1000x1000xbf16>
    %cst_37 = arith.constant dense<0.000000e+00> : vector<2x1000xf32>
    %76 = tpu.matmul %73, %75, %cst_37 {dimension_numbers = #tpu.dot_dimension_numbers<[1], [0], [0], [1], [0, 0, 1, 1], [], []>} : vector<2x1000xbf16>, vector<1000x1000xbf16>, vector<2x1000xf32> -> vector<2x1000xf32>
    %c0_38 = arith.constant 0 : index
    %c0_39 = arith.constant 0 : index
    %77 = vector.load %arg15[%c0_38, %c0_39] : memref<1x1000xf32, #tpu.memory_space<vmem>>, vector<1x1000xf32>
    %78 = vector.broadcast %77 : vector<1x1000xf32> to vector<2x1000xf32>
    %79 = arith.mulf %76, %78 : vector<2x1000xf32>
    %80 = arith.truncf %41 : vector<2x500xf32> to vector<2x500xbf16>
    %c0_40 = arith.constant 0 : index
    %c0_41 = arith.constant 0 : index
    %81 = vector.load %arg16[%c0_40, %c0_41] : memref<500x1000xi8, #tpu.memory_space<vmem>>, vector<500x1000xi8>
    %82 = arith.sitofp %81 : vector<500x1000xi8> to vector<500x1000xbf16>
    %cst_42 = arith.constant dense<0.000000e+00> : vector<2x1000xf32>
    %83 = tpu.matmul %80, %82, %cst_42 {dimension_numbers = #tpu.dot_dimension_numbers<[1], [0], [0], [1], [0, 0, 1, 1], [], []>} : vector<2x500xbf16>, vector<500x1000xbf16>, vector<2x1000xf32> -> vector<2x1000xf32>
    %c0_43 = arith.constant 0 : index
    %c0_44 = arith.constant 0 : index
    %84 = vector.load %arg17[%c0_43, %c0_44] : memref<1x1000xf32, #tpu.memory_space<vmem>>, vector<1x1000xf32>
    %85 = vector.broadcast %84 : vector<1x1000xf32> to vector<2x1000xf32>
    %86 = arith.mulf %83, %85 : vector<2x1000xf32>
    %87 = arith.addf %79, %86 : vector<2x1000xf32>
    %c0_45 = arith.constant 0 : index
    %c0_46 = arith.constant 0 : index
    %88 = vector.load %arg18[%c0_45, %c0_46] : memref<1x1000xf32, #tpu.memory_space<vmem>>, vector<1x1000xf32>
    %89 = vector.broadcast %88 : vector<1x1000xf32> to vector<2x1000xf32>
    %90 = arith.addf %87, %89 : vector<2x1000xf32>
    %91 = arith.mulf %90, %90 : vector<2x1000xf32>
    %cst_47 = arith.constant dense<0.000000e+00> : vector<2xf32>
    %92 = vector.multi_reduction <add>, %91, %cst_47 [1] : vector<2x1000xf32> to vector<2xf32>
    %93 = vector.shape_cast %92 : vector<2xf32> to vector<2x1xf32>
    %cst_48 = arith.constant 1.000000e-24 : f32
    %94 = vector.broadcast %cst_48 : f32 to vector<2x1xf32>
    %95 = arith.maximumf %93, %94 : vector<2x1xf32>
    %96 = math.rsqrt %95 : vector<2x1xf32>
    %97 = vector.broadcast %96 : vector<2x1xf32> to vector<2x1000xf32>
    %98 = arith.mulf %90, %97 : vector<2x1000xf32>
    %c0_49 = arith.constant 0 : index
    %c0_50 = arith.constant 0 : index
    %99 = vector.load %arg19[%c0_49, %c0_50] : memref<2x1000xf32, #tpu.memory_space<vmem>>, vector<2x1000xf32>
    tpu.vector_store %arg19[%c0_49, %c0_50], %98 {strides = array<i32>} : memref<2x1000xf32, #tpu.memory_space<vmem>>, vector<2x1000xf32>,
    return
  }
  func.func @transform_0(%arg0: i32) -> (i32, i32) {
    %c0_i32 = arith.constant 0 : i32
    %c0_i32_0 = arith.constant 0 : i32
    return %arg0, %c0_i32 : i32, i32
  }
  func.func @transform_1(%arg0: i32) -> (i32, i32) {
    %c0_i32 = arith.constant 0 : i32
    %c0_i32_0 = arith.constant 0 : i32
    return %arg0, %c0_i32 : i32, i32
  }
  func.func @transform_2(%arg0: i32) -> (i32, i32) {
    %c0_i32 = arith.constant 0 : i32
    %c0_i32_0 = arith.constant 0 : i32
    %c0_i32_1 = arith.constant 0 : i32
    return %c0_i32, %c0_i32_0 : i32, i32
  }
  func.func @transform_3(%arg0: i32) -> (i32, i32) {
    %c0_i32 = arith.constant 0 : i32
    %c0_i32_0 = arith.constant 0 : i32
    %c0_i32_1 = arith.constant 0 : i32
    return %c0_i32, %c0_i32_0 : i32, i32
  }
  func.func @transform_4(%arg0: i32) -> (i32, i32) {
    %c0_i32 = arith.constant 0 : i32
    %c0_i32_0 = arith.constant 0 : i32
    %c0_i32_1 = arith.constant 0 : i32
    return %c0_i32, %c0_i32_0 : i32, i32
  }
  func.func @transform_5(%arg0: i32) -> (i32, i32) {
    %c0_i32 = arith.constant 0 : i32
    %c0_i32_0 = arith.constant 0 : i32
    %c0_i32_1 = arith.constant 0 : i32
    return %c0_i32, %c0_i32_0 : i32, i32
  }
  func.func @transform_6(%arg0: i32) -> (i32, i32) {
    %c0_i32 = arith.constant 0 : i32
    %c0_i32_0 = arith.constant 0 : i32
    %c0_i32_1 = arith.constant 0 : i32
    return %c0_i32, %c0_i32_0 : i32, i32
  }
  func.func @transform_7(%arg0: i32) -> (i32, i32) {
    %c0_i32 = arith.constant 0 : i32
    %c0_i32_0 = arith.constant 0 : i32
    %c0_i32_1 = arith.constant 0 : i32
    return %c0_i32, %c0_i32_0 : i32, i32
  }
  func.func @transform_8(%arg0: i32) -> (i32, i32) {
    %c0_i32 = arith.constant 0 : i32
    %c0_i32_0 = arith.constant 0 : i32
    %c0_i32_1 = arith.constant 0 : i32
    return %c0_i32, %c0_i32_0 : i32, i32
  }
  func.func @transform_9(%arg0: i32) -> (i32, i32) {
    %c0_i32 = arith.constant 0 : i32
    %c0_i32_0 = arith.constant 0 : i32
    %c0_i32_1 = arith.constant 0 : i32
    return %c0_i32, %c0_i32_0 : i32, i32
  }
  func.func @transform_10(%arg0: i32) -> (i32, i32) {
    %c0_i32 = arith.constant 0 : i32
    %c0_i32_0 = arith.constant 0 : i32
    %c0_i32_1 = arith.constant 0 : i32
    return %c0_i32, %c0_i32_0 : i32, i32
  }
  func.func @transform_11(%arg0: i32) -> (i32, i32) {
    %c0_i32 = arith.constant 0 : i32
    %c0_i32_0 = arith.constant 0 : i32
    %c0_i32_1 = arith.constant 0 : i32
    return %c0_i32, %c0_i32_0 : i32, i32
  }
  func.func @transform_12(%arg0: i32) -> (i32, i32) {
    %c0_i32 = arith.constant 0 : i32
    %c0_i32_0 = arith.constant 0 : i32
    %c0_i32_1 = arith.constant 0 : i32
    return %c0_i32, %c0_i32_0 : i32, i32
  }
  func.func @transform_13(%arg0: i32) -> (i32, i32) {
    %c0_i32 = arith.constant 0 : i32
    %c0_i32_0 = arith.constant 0 : i32
    %c0_i32_1 = arith.constant 0 : i32
    return %c0_i32, %c0_i32_0 : i32, i32
  }
  func.func @transform_14(%arg0: i32) -> (i32, i32) {
    %c0_i32 = arith.constant 0 : i32
    %c0_i32_0 = arith.constant 0 : i32
    %c0_i32_1 = arith.constant 0 : i32
    return %c0_i32, %c0_i32_0 : i32, i32
  }
  func.func @transform_15(%arg0: i32) -> (i32, i32) {
    %c0_i32 = arith.constant 0 : i32
    %c0_i32_0 = arith.constant 0 : i32
    %c0_i32_1 = arith.constant 0 : i32
    return %c0_i32, %c0_i32_0 : i32, i32
  }
  func.func @transform_16(%arg0: i32) -> (i32, i32) {
    %c0_i32 = arith.constant 0 : i32
    %c0_i32_0 = arith.constant 0 : i32
    %c0_i32_1 = arith.constant 0 : i32
    return %c0_i32, %c0_i32_0 : i32, i32
  }
  func.func @transform_17(%arg0: i32) -> (i32, i32) {
    %c0_i32 = arith.constant 0 : i32
    %c0_i32_0 = arith.constant 0 : i32
    %c0_i32_1 = arith.constant 0 : i32
    return %c0_i32, %c0_i32_0 : i32, i32
  }
  func.func @transform_18(%arg0: i32) -> (i32, i32) {
    %c0_i32 = arith.constant 0 : i32
    %c0_i32_0 = arith.constant 0 : i32
    return %arg0, %c0_i32 : i32, i32
  }
}

</mosaic_0001>

<llo_original>
// kernel: one_emb_forward.1
$region0: #{one_emb_forward.1}
  #allocation0 [shape = 'u32[]', space=smem, size = 0x4, offset = 0x4, fixed_abs, tag = 'smem constant byte address 0x4 - core index']
  #allocation1 [shape = 'u32[144,128]{1,0:T(1,128)}', space=vmem, size = 0x12000, scoped, tag = 'internal scratch']
  %s0 = inlined_call_operand.vmem [shape: bf16[32,768], index: 0, kind: input, shape index: {}]
  %s1 = inlined_call_operand.vmem [shape: f32[2,3], index: 1, kind: input, shape index: {}]
  %s2 = inlined_call_operand.vmem [shape: bf16[768,192], index: 2, kind: input, shape index: {}]
  %s3 = inlined_call_operand.vmem [shape: f32[1,192], index: 3, kind: input, shape index: {}]
  %s4 = inlined_call_operand.vmem [shape: bf16[192,96], index: 4, kind: input, shape index: {}]
  %s5 = inlined_call_operand.vmem [shape: f32[1,96], index: 5, kind: input, shape index: {}]
  %s6 = inlined_call_operand.vmem [shape: bf16[3,1000], index: 6, kind: input, shape index: {}]
  %s7 = inlined_call_operand.vmem [shape: f32[1,1000], index: 7, kind: input, shape index: {}]
  %s8 = inlined_call_operand.vmem [shape: bf16[96,1000], index: 8, kind: input, shape index: {}]
  %s9 = inlined_call_operand.vmem [shape: f32[1,1000], index: 9, kind: input, shape index: {}]
  %s10 = inlined_call_operand.vmem [shape: s8[1000,500], index: 10, kind: input, shape index: {}]
  %s11 = inlined_call_operand.vmem [shape: f32[1,500], index: 11, kind: input, shape index: {}]
  %s12 = inlined_call_operand.vmem [shape: f32[1,500], index: 12, kind: input, shape index: {}]
  %s13 = inlined_call_operand.vmem [shape: s8[1000,1000], index: 13, kind: input, shape index: {}]
  %s14 = inlined_call_operand.vmem [shape: f32[1,1000], index: 14, kind: input, shape index: {}]
  %s15 = inlined_call_operand.vmem [shape: s8[500,1000], index: 15, kind: input, shape index: {}]
  %s16 = inlined_call_operand.vmem [shape: f32[1,1000], index: 16, kind: input, shape index: {}]
  %s17 = inlined_call_operand.vmem [shape: f32[1,1000], index: 17, kind: input, shape index: {}]
  %s18 = inlined_call_operand.hbm [shape: f32[2,1000], index: 18, kind: output, shape index: {}]
  %s19 = sld [smem:[#allocation0]]
  $region82: #{one_emb_forward.1} parent=0
    _
  %s21 = ssub.s32 1, %s19
  %s22 = scalar_select 0, %s21, %s19
  $region1: #{one_emb_forward.1} parent=0
    #allocation2 [shape = 'u8[8192]{0}', space=vmem, size = 0x2000, scoped, tag = 'output window, operand 0, single buffered']
    #allocation3 [shape = 's32[1]{0}', space=sflag, size = 0x4, scoped, tag = 'scoped memory for one_emb_forward.1']
    %23 = vsyncpa [#allocation3], 0
    // Predicated region
    $region2: #{one_emb_forward.1} parent=1 // pred_check
      _
    $region3: #{one_emb_forward.1} parent=1 // pred_check_branch
      %25 = sbr.rel (0) target = $region5
    $region4: #{one_emb_forward.1} parent=1 // pred_region
      _
    $region5: #{one_emb_forward.1} parent=1 // pred_fallthru
      _
    // Predicated region
    $region6: #{one_emb_forward.1} parent=1 // pred_check
      _
    $region7: #{one_emb_forward.1} parent=1 // pred_check_branch
      %27 = sbr.rel (0) target = $region9
    $region8: #{one_emb_forward.1} parent=1 // pred_region
      _
    $region9: #{one_emb_forward.1} parent=1 // pred_fallthru
      _
    // Predicated region
    $region10: #{one_emb_forward.1} parent=1 // pred_check
      _
    $region11: #{one_emb_forward.1} parent=1 // pred_check_branch
      %29 = sbr.rel (0) target = $region13
    $region12: #{one_emb_forward.1} parent=1 // pred_region
      _
    $region13: #{one_emb_forward.1} parent=1 // pred_fallthru
      _
    // Predicated region
    $region14: #{one_emb_forward.1} parent=1 // pred_check
      _
    $region15: #{one_emb_forward.1} parent=1 // pred_check_branch
      %31 = sbr.rel (0) target = $region17
    $region16: #{one_emb_forward.1} parent=1 // pred_region
      _
    $region17: #{one_emb_forward.1} parent=1 // pred_fallthru
      _
    // Predicated region
    $region18: #{one_emb_forward.1} parent=1 // pred_check
      _
    $region19: #{one_emb_forward.1} parent=1 // pred_check_branch
      %33 = sbr.rel (0) target = $region21
    $region20: #{one_emb_forward.1} parent=1 // pred_region
      _
    $region21: #{one_emb_forward.1} parent=1 // pred_fallthru
      _
    // Predicated region
    $region22: #{one_emb_forward.1} parent=1 // pred_check
      _
    $region23: #{one_emb_forward.1} parent=1 // pred_check_branch
      %35 = sbr.rel (0) target = $region25
    $region24: #{one_emb_forward.1} parent=1 // pred_region
      _
    $region25: #{one_emb_forward.1} parent=1 // pred_fallthru
      _
    // Predicated region
    $region26: #{one_emb_forward.1} parent=1 // pred_check
      _
    $region27: #{one_emb_forward.1} parent=1 // pred_check_branch
      %37 = sbr.rel (0) target = $region29
    $region28: #{one_emb_forward.1} parent=1 // pred_region
      _
    $region29: #{one_emb_forward.1} parent=1 // pred_fallthru
      _
    // Predicated region
    $region30: #{one_emb_forward.1} parent=1 // pred_check
      _
    $region31: #{one_emb_forward.1} parent=1 // pred_check_branch
      %39 = sbr.rel (0) target = $region33
    $region32: #{one_emb_forward.1} parent=1 // pred_region
      _
    $region33: #{one_emb_forward.1} parent=1 // pred_fallthru
      _
    // Predicated region
    $region34: #{one_emb_forward.1} parent=1 // pred_check
      _
    $region35: #{one_emb_forward.1} parent=1 // pred_check_branch
      %41 = sbr.rel (0) target = $region37
    $region36: #{one_emb_forward.1} parent=1 // pred_region
      _
    $region37: #{one_emb_forward.1} parent=1 // pred_fallthru
      _
    // Predicated region
    $region38: #{one_emb_forward.1} parent=1 // pred_check
      _
    $region39: #{one_emb_forward.1} parent=1 // pred_check_branch
      %43 = sbr.rel (0) target = $region41
    $region40: #{one_emb_forward.1} parent=1 // pred_region
      _
    $region41: #{one_emb_forward.1} parent=1 // pred_fallthru
      _
    // Predicated region
    $region42: #{one_emb_forward.1} parent=1 // pred_check
      _
    $region43: #{one_emb_forward.1} parent=1 // pred_check_branch
      %45 = sbr.rel (0) target = $region45
    $region44: #{one_emb_forward.1} parent=1 // pred_region
      _
    $region45: #{one_emb_forward.1} parent=1 // pred_fallthru
      _
    // Predicated region
    $region46: #{one_emb_forward.1} parent=1 // pred_check
      _
    $region47: #{one_emb_forward.1} parent=1 // pred_check_branch
      %47 = sbr.rel (0) target = $region49
    $region48: #{one_emb_forward.1} parent=1 // pred_region
      _
    $region49: #{one_emb_forward.1} parent=1 // pred_fallthru
      _
    // Predicated region
    $region50: #{one_emb_forward.1} parent=1 // pred_check
      _
    $region51: #{one_emb_forward.1} parent=1 // pred_check_branch
      %49 = sbr.rel (0) target = $region53
    $region52: #{one_emb_forward.1} parent=1 // pred_region
      _
    $region53: #{one_emb_forward.1} parent=1 // pred_fallthru
      _
    // Predicated region
    $region54: #{one_emb_forward.1} parent=1 // pred_check
      _
    $region55: #{one_emb_forward.1} parent=1 // pred_check_branch
      %51 = sbr.rel (0) target = $region57
    $region56: #{one_emb_forward.1} parent=1 // pred_region
      _
    $region57: #{one_emb_forward.1} parent=1 // pred_fallthru
      _
    // Predicated region
    $region58: #{one_emb_forward.1} parent=1 // pred_check
      _
    $region59: #{one_emb_forward.1} parent=1 // pred_check_branch
      %53 = sbr.rel (0) target = $region61
    $region60: #{one_emb_forward.1} parent=1 // pred_region
      _
    $region61: #{one_emb_forward.1} parent=1 // pred_fallthru
      _
    // Predicated region
    $region62: #{one_emb_forward.1} parent=1 // pred_check
      _
    $region63: #{one_emb_forward.1} parent=1 // pred_check_branch
      %55 = sbr.rel (0) target = $region65
    $region64: #{one_emb_forward.1} parent=1 // pred_region
      _
    $region65: #{one_emb_forward.1} parent=1 // pred_fallthru
      _
    // Predicated region
    $region66: #{one_emb_forward.1} parent=1 // pred_check
      _
    $region67: #{one_emb_forward.1} parent=1 // pred_check_branch
      %57 = sbr.rel (0) target = $region69
    $region68: #{one_emb_forward.1} parent=1 // pred_region
      _
    $region69: #{one_emb_forward.1} parent=1 // pred_fallthru
      _
    // Predicated region
    $region70: #{one_emb_forward.1} parent=1 // pred_check
      _
    $region71: #{one_emb_forward.1} parent=1 // pred_check_branch
      %59 = sbr.rel (0) target = $region73
    $region72: #{one_emb_forward.1} parent=1 // pred_region
      _
    $region73: #{one_emb_forward.1} parent=1 // pred_fallthru
      _
    %v61 = vld [vmem:[%s0] sm:$0xff]
    %v62 = vld [vmem:[%s0 + $0x8] sm:$0xff]
    %v63 = vld [vmem:[%s0 + $0x10] sm:$0xff]
    %v64 = vld [vmem:[%s0 + $0x18] sm:$0xff]
    %v65 = vld [vmem:[%s0 + $0x20] sm:$0xff]
    %v66 = vld [vmem:[%s0 + $0x28] sm:$0xff]
    %v67 = vld [vmem:[%s0 + $0x30] sm:$0xff]
    %v68 = vld [vmem:[%s0 + $0x38] sm:$0xff]
    %v69 = vld [vmem:[%s0 + $0x40] sm:$0xff]
    %v70 = vld [vmem:[%s0 + $0x48] sm:$0xff]
    %v71 = vld [vmem:[%s0 + $0x50] sm:$0xff]
    %v72 = vld [vmem:[%s0 + $0x58] sm:$0xff]
    %v73 = vld [vmem:[%s2] sm:$0xff]
    %v74 = vld [vmem:[%s2 + $0x8] sm:$0xff]
    %v75 = vld [vmem:[%s2 + $0x10] sm:$0xff]
    %v76 = vld [vmem:[%s2 + $0x18] sm:$0xff]
    %v77 = vld [vmem:[%s2 + $0x20] sm:$0xff]
    %v78 = vld [vmem:[%s2 + $0x28] sm:$0xff]
    %v79 = vld [vmem:[%s2 + $0x30] sm:$0xff]
    %v80 = vld [vmem:[%s2 + $0x38] sm:$0xff]
    %v81 = vld [vmem:[%s2 + $0x40] sm:$0xff]
    %v82 = vld [vmem:[%s2 + $0x48] sm:$0xff]
    %v83 = vld [vmem:[%s2 + $0x50] sm:$0xff]
    %v84 = vld [vmem:[%s2 + $0x58] sm:$0xff]
    %v85 = vld [vmem:[%s2 + $0x60] sm:$0xff]
    %v86 = vld [vmem:[%s2 + $0x68] sm:$0xff]
    %v87 = vld [vmem:[%s2 + $0x70] sm:$0xff]
    %v88 = vld [vmem:[%s2 + $0x78] sm:$0xff]
    %v89 = vld [vmem:[%s2 + $0x80] sm:$0xff]
    %v90 = vld [vmem:[%s2 + $0x88] sm:$0xff]
    %v91 = vld [vmem:[%s2 + $0x90] sm:$0xff]
    %v92 = vld [vmem:[%s2 + $0x98] sm:$0xff]
    %v93 = vld [vmem:[%s2 + $0xa0] sm:$0xff]
    %v94 = vld [vmem:[%s2 + $0xa8] sm:$0xff]
    %v95 = vld [vmem:[%s2 + $0xb0] sm:$0xff]
    %v96 = vld [vmem:[%s2 + $0xb8] sm:$0xff]
    %v97 = vld [vmem:[%s2 + $0xc0] sm:$0xff]
    %v98 = vld [vmem:[%s2 + $0xc8] sm:$0xff]
    %v99 = vld [vmem:[%s2 + $0xd0] sm:$0xff]
    %v100 = vld [vmem:[%s2 + $0xd8] sm:$0xff]
    %v101 = vld [vmem:[%s2 + $0xe0] sm:$0xff]
    %v102 = vld [vmem:[%s2 + $0xe8] sm:$0xff]
    %v103 = vld [vmem:[%s2 + $0xf0] sm:$0xff]
    %v104 = vld [vmem:[%s2 + $0xf8] sm:$0xff]
    %v105 = vld [vmem:[%s2 + $0x100] sm:$0xff]
    %v106 = vld [vmem:[%s2 + $0x108] sm:$0xff]
    %v107 = vld [vmem:[%s2 + $0x110] sm:$0xff]
    %v108 = vld [vmem:[%s2 + $0x118] sm:$0xff]
    %v109 = vld [vmem:[%s2 + $0x120] sm:$0xff]
    %v110 = vld [vmem:[%s2 + $0x128] sm:$0xff]
    %v111 = vld [vmem:[%s2 + $0x130] sm:$0xff]
    %v112 = vld [vmem:[%s2 + $0x138] sm:$0xff]
    %v113 = vld [vmem:[%s2 + $0x140] sm:$0xff]
    %v114 = vld [vmem:[%s2 + $0x148] sm:$0xff]
    %v115 = vld [vmem:[%s2 + $0x150] sm:$0xff]
    %v116 = vld [vmem:[%s2 + $0x158] sm:$0xff]
    %v117 = vld [vmem:[%s2 + $0x160] sm:$0xff]
    %v118 = vld [vmem:[%s2 + $0x168] sm:$0xff]
    %v119 = vld [vmem:[%s2 + $0x170] sm:$0xff]
    %v120 = vld [vmem:[%s2 + $0x178] sm:$0xff]
    %v121 = vld [vmem:[%s2 + $0x180] sm:$0xff]
    %v122 = vld [vmem:[%s2 + $0x188] sm:$0xff]
    %v123 = vld [vmem:[%s2 + $0x190] sm:$0xff]
    %v124 = vld [vmem:[%s2 + $0x198] sm:$0xff]
    %v125 = vld [vmem:[%s2 + $0x1a0] sm:$0xff]
    %v126 = vld [vmem:[%s2 + $0x1a8] sm:$0xff]
    %v127 = vld [vmem:[%s2 + $0x1b0] sm:$0xff]
    %v128 = vld [vmem:[%s2 + $0x1b8] sm:$0xff]
    %v129 = vld [vmem:[%s2 + $0x1c0] sm:$0xff]
    %v130 = vld [vmem:[%s2 + $0x1c8] sm:$0xff]
    %v131 = vld [vmem:[%s2 + $0x1d0] sm:$0xff]
    %v132 = vld [vmem:[%s2 + $0x1d8] sm:$0xff]
    %v133 = vld [vmem:[%s2 + $0x1e0] sm:$0xff]
    %v134 = vld [vmem:[%s2 + $0x1e8] sm:$0xff]
    %v135 = vld [vmem:[%s2 + $0x1f0] sm:$0xff]
    %v136 = vld [vmem:[%s2 + $0x1f8] sm:$0xff]
    %v137 = vld [vmem:[%s2 + $0x200] sm:$0xff]
    %v138 = vld [vmem:[%s2 + $0x208] sm:$0xff]
    %v139 = vld [vmem:[%s2 + $0x210] sm:$0xff]
    %v140 = vld [vmem:[%s2 + $0x218] sm:$0xff]
    %v141 = vld [vmem:[%s2 + $0x220] sm:$0xff]
    %v142 = vld [vmem:[%s2 + $0x228] sm:$0xff]
    %v143 = vld [vmem:[%s2 + $0x230] sm:$0xff]
    %v144 = vld [vmem:[%s2 + $0x238] sm:$0xff]
    %v145 = vld [vmem:[%s2 + $0x240] sm:$0xff]
    %v146 = vld [vmem:[%s2 + $0x248] sm:$0xff]
    %v147 = vld [vmem:[%s2 + $0x250] sm:$0xff]
    %v148 = vld [vmem:[%s2 + $0x258] sm:$0xff]
    %v149 = vld [vmem:[%s2 + $0x260] sm:$0xff]
    %v150 = vld [vmem:[%s2 + $0x268] sm:$0xff]
    %v151 = vld [vmem:[%s2 + $0x270] sm:$0xff]
    %v152 = vld [vmem:[%s2 + $0x278] sm:$0xff]
    %v153 = vld [vmem:[%s2 + $0x280] sm:$0xff]
    %v154 = vld [vmem:[%s2 + $0x288] sm:$0xff]
    %v155 = vld [vmem:[%s2 + $0x290] sm:$0xff]
    %v156 = vld [vmem:[%s2 + $0x298] sm:$0xff]
    %v157 = vld [vmem:[%s2 + $0x2a0] sm:$0xff]
    %v158 = vld [vmem:[%s2 + $0x2a8] sm:$0xff]
    %v159 = vld [vmem:[%s2 + $0x2b0] sm:$0xff]
    %v160 = vld [vmem:[%s2 + $0x2b8] sm:$0xff]
    %v161 = vld [vmem:[%s2 + $0x2c0] sm:$0xff]
    %v162 = vld [vmem:[%s2 + $0x2c8] sm:$0xff]
    %v163 = vld [vmem:[%s2 + $0x2d0] sm:$0xff]
    %v164 = vld [vmem:[%s2 + $0x2d8] sm:$0xff]
    %v165 = vld [vmem:[%s2 + $0x2e0] sm:$0xff]
    %v166 = vld [vmem:[%s2 + $0x2e8] sm:$0xff]
    %v167 = vld [vmem:[%s2 + $0x2f0] sm:$0xff]
    %v168 = vld [vmem:[%s2 + $0x2f8] sm:$0xff]
    %v169 = vld [vmem:[%s3] sm:$0x3]
    %v171 = vlaneseq
    %v172 = vshrl.u32 %v171, 7
    %v173 = vsub.s32 0, %v172
    %v174 = vrot.slane %v169, %v173
    %v175 = vlaneseq
    %v176 = vshrl.u32 %v175, 7
    %v177 = vsub.s32 1, %v176
    %v178 = vrot.slane %v169, %v177
    %v193 = vunpack.c.l.b16 %v61
    %v194 = vunpack.c.h.b16 %v61
    %v195 = vunpack.c.l.b16 %v62
    %v196 = vunpack.c.h.b16 %v62
    %v197 = vunpack.c.l.b16 %v63
    %v198 = vunpack.c.h.b16 %v63
    %v199 = vunpack.c.l.b16 %v64
    %v200 = vunpack.c.h.b16 %v64
    %v201 = vunpack.c.l.b16 %v65
    %v202 = vunpack.c.h.b16 %v65
    %v203 = vunpack.c.l.b16 %v66
    %v204 = vunpack.c.h.b16 %v66
    %v205 = vunpack.c.l.b16 %v67
    %v206 = vunpack.c.h.b16 %v67
    %v207 = vunpack.c.l.b16 %v68
    %v208 = vunpack.c.h.b16 %v68
    %v209 = vunpack.c.l.b16 %v69
    %v210 = vunpack.c.h.b16 %v69
    %v211 = vunpack.c.l.b16 %v70
    %v212 = vunpack.c.h.b16 %v70
    %v213 = vunpack.c.l.b16 %v71
    %v214 = vunpack.c.h.b16 %v71
    %v215 = vunpack.c.l.b16 %v72
    %v216 = vunpack.c.h.b16 %v72
    %v217 = vpack.c.b16 %v199, %v193
    %v218 = vpack.c.b16 %v200, %v194
    %v219 = vpack.c.b16 %v201, %v195
    %v220 = vpack.c.b16 %v202, %v196
    %v221 = vpack.c.b16 %v203, %v197
    %v222 = vpack.c.b16 %v204, %v198
    %v223 = vpack.c.b16 %v211, %v205
    %v224 = vpack.c.b16 %v212, %v206
    %v225 = vpack.c.b16 %v213, %v207
    %v226 = vpack.c.b16 %v214, %v208
    %v227 = vpack.c.b16 %v215, %v209
    %v228 = vpack.c.b16 %v216, %v210
    %v337 = vunpack.c.l.b16 %v73
    %v338 = vunpack.c.h.b16 %v73
    %v339 = vunpack.c.l.b16 %v74
    %v340 = vunpack.c.h.b16 %v74
    %v341 = vunpack.c.l.b16 %v75
    %v342 = vunpack.c.h.b16 %v75
    %v343 = vunpack.c.l.b16 %v76
    %v344 = vunpack.c.h.b16 %v76
    %v345 = vunpack.c.l.b16 %v77
    %v346 = vunpack.c.h.b16 %v77
    %v347 = vunpack.c.l.b16 %v78
    %v348 = vunpack.c.h.b16 %v78
    %v349 = vunpack.c.l.b16 %v79
    %v350 = vunpack.c.h.b16 %v79
    %v351 = vunpack.c.l.b16 %v80
    %v352 = vunpack.c.h.b16 %v80
    %v353 = vunpack.c.l.b16 %v81
    %v354 = vunpack.c.h.b16 %v81
    %v355 = vunpack.c.l.b16 %v82
    %v356 = vunpack.c.h.b16 %v82
    %v357 = vunpack.c.l.b16 %v83
    %v358 = vunpack.c.h.b16 %v83
    %v359 = vunpack.c.l.b16 %v84
    %v360 = vunpack.c.h.b16 %v84
    %v361 = vunpack.c.l.b16 %v85
    %v362 = vunpack.c.h.b16 %v85
    %v363 = vunpack.c.l.b16 %v86
    %v364 = vunpack.c.h.b16 %v86
    %v365 = vunpack.c.l.b16 %v87
    %v366 = vunpack.c.h.b16 %v87
    %v367 = vunpack.c.l.b16 %v88
    %v368 = vunpack.c.h.b16 %v88
    %v369 = vunpack.c.l.b16 %v89
    %v370 = vunpack.c.h.b16 %v89
    %v371 = vunpack.c.l.b16 %v90
    %v372 = vunpack.c.h.b16 %v90
    %v373 = vunpack.c.l.b16 %v91
    %v374 = vunpack.c.h.b16 %v91
    %v375 = vunpack.c.l.b16 %v92
    %v376 = vunpack.c.h.b16 %v92
    %v377 = vunpack.c.l.b16 %v93
    %v378 = vunpack.c.h.b16 %v93
    %v379 = vunpack.c.l.b16 %v94
    %v380 = vunpack.c.h.b16 %v94
    %v381 = vunpack.c.l.b16 %v95
    %v382 = vunpack.c.h.b16 %v95
    %v383 = vunpack.c.l.b16 %v96
    %v384 = vunpack.c.h.b16 %v96
    %v385 = vunpack.c.l.b16 %v97
    %v386 = vunpack.c.h.b16 %v97
    %v387 = vunpack.c.l.b16 %v98
    %v388 = vunpack.c.h.b16 %v98
    %v389 = vunpack.c.l.b16 %v99
    %v390 = vunpack.c.h.b16 %v99
    %v391 = vunpack.c.l.b16 %v100
    %v392 = vunpack.c.h.b16 %v100
    %v393 = vunpack.c.l.b16 %v101
    %v394 = vunpack.c.h.b16 %v101
    %v395 = vunpack.c.l.b16 %v102
    %v396 = vunpack.c.h.b16 %v102
    %v397 = vunpack.c.l.b16 %v103
    %v398 = vunpack.c.h.b16 %v103
    %v399 = vunpack.c.l.b16 %v104
    %v400 = vunpack.c.h.b16 %v104
    %v401 = vunpack.c.l.b16 %v105
    %v402 = vunpack.c.h.b16 %v105
    %v403 = vunpack.c.l.b16 %v106
    %v404 = vunpack.c.h.b16 %v106
    %v405 = vunpack.c.l.b16 %v107
    %v406 = vunpack.c.h.b16 %v107
    %v407 = vunpack.c.l.b16 %v108
    %v408 = vunpack.c.h.b16 %v108
    %v409 = vunpack.c.l.b16 %v109
    %v410 = vunpack.c.h.b16 %v109
    %v411 = vunpack.c.l.b16 %v110
    %v412 = vunpack.c.h.b16 %v110
    %v413 = vunpack.c.l.b16 %v111
    %v414 = vunpack.c.h.b16 %v111
    %v415 = vunpack.c.l.b16 %v112
    %v416 = vunpack.c.h.b16 %v112
    %v417 = vunpack.c.l.b16 %v113
    %v418 = vunpack.c.h.b16 %v113
    %v419 = vunpack.c.l.b16 %v114
    %v420 = vunpack.c.h.b16 %v114
    %v421 = vunpack.c.l.b16 %v115
    %v422 = vunpack.c.h.b16 %v115
    %v423 = vunpack.c.l.b16 %v116
    %v424 = vunpack.c.h.b16 %v116
    %v425 = vunpack.c.l.b16 %v117
    %v426 = vunpack.c.h.b16 %v117
    %v427 = vunpack.c.l.b16 %v118
    %v428 = vunpack.c.h.b16 %v118
    %v429 = vunpack.c.l.b16 %v119
    %v430 = vunpack.c.h.b16 %v119
    %v431 = vunpack.c.l.b16 %v120
    %v432 = vunpack.c.h.b16 %v120
    %v433 = vunpack.c.l.b16 %v121
    %v434 = vunpack.c.h.b16 %v121
    %v435 = vunpack.c.l.b16 %v122
    %v436 = vunpack.c.h.b16 %v122
    %v437 = vunpack.c.l.b16 %v123
    %v438 = vunpack.c.h.b16 %v123
    %v439 = vunpack.c.l.b16 %v124
    %v440 = vunpack.c.h.b16 %v124
    %v441 = vunpack.c.l.b16 %v125
    %v442 = vunpack.c.h.b16 %v125
    %v443 = vunpack.c.l.b16 %v126
    %v444 = vunpack.c.h.b16 %v126
    %v445 = vunpack.c.l.b16 %v127
    %v446 = vunpack.c.h.b16 %v127
    %v447 = vunpack.c.l.b16 %v128
    %v448 = vunpack.c.h.b16 %v128
    %v449 = vunpack.c.l.b16 %v129
    %v450 = vunpack.c.h.b16 %v129
    %v451 = vunpack.c.l.b16 %v130
    %v452 = vunpack.c.h.b16 %v130
    %v453 = vunpack.c.l.b16 %v131
    %v454 = vunpack.c.h.b16 %v131
    %v455 = vunpack.c.l.b16 %v132
    %v456 = vunpack.c.h.b16 %v132
    %v457 = vunpack.c.l.b16 %v133
    %v458 = vunpack.c.h.b16 %v133
    %v459 = vunpack.c.l.b16 %v134
    %v460 = vunpack.c.h.b16 %v134
    %v461 = vunpack.c.l.b16 %v135
    %v462 = vunpack.c.h.b16 %v135
    %v463 = vunpack.c.l.b16 %v136
    %v464 = vunpack.c.h.b16 %v136
    %v465 = vunpack.c.l.b16 %v137
    %v466 = vunpack.c.h.b16 %v137
    %v467 = vunpack.c.l.b16 %v138
    %v468 = vunpack.c.h.b16 %v138
    %v469 = vunpack.c.l.b16 %v139
    %v470 = vunpack.c.h.b16 %v139
    %v471 = vunpack.c.l.b16 %v140
    %v472 = vunpack.c.h.b16 %v140
    %v473 = vunpack.c.l.b16 %v141
    %v474 = vunpack.c.h.b16 %v141
    %v475 = vunpack.c.l.b16 %v142
    %v476 = vunpack.c.h.b16 %v142
    %v477 = vunpack.c.l.b16 %v143
    %v478 = vunpack.c.h.b16 %v143
    %v479 = vunpack.c.l.b16 %v144
    %v480 = vunpack.c.h.b16 %v144
    %v481 = vunpack.c.l.b16 %v145
    %v482 = vunpack.c.h.b16 %v145
    %v483 = vunpack.c.l.b16 %v146
    %v484 = vunpack.c.h.b16 %v146
    %v485 = vunpack.c.l.b16 %v147
    %v486 = vunpack.c.h.b16 %v147
    %v487 = vunpack.c.l.b16 %v148
    %v488 = vunpack.c.h.b16 %v148
    %v489 = vunpack.c.l.b16 %v149
    %v490 = vunpack.c.h.b16 %v149
    %v491 = vunpack.c.l.b16 %v150
    %v492 = vunpack.c.h.b16 %v150
    %v493 = vunpack.c.l.b16 %v151
    %v494 = vunpack.c.h.b16 %v151
    %v495 = vunpack.c.l.b16 %v152
    %v496 = vunpack.c.h.b16 %v152
    %v497 = vunpack.c.l.b16 %v153
    %v498 = vunpack.c.h.b16 %v153
    %v499 = vunpack.c.l.b16 %v154
    %v500 = vunpack.c.h.b16 %v154
    %v501 = vunpack.c.l.b16 %v155
    %v502 = vunpack.c.h.b16 %v155
    %v503 = vunpack.c.l.b16 %v156
    %v504 = vunpack.c.h.b16 %v156
    %v505 = vunpack.c.l.b16 %v157
    %v506 = vunpack.c.h.b16 %v157
    %v507 = vunpack.c.l.b16 %v158
    %v508 = vunpack.c.h.b16 %v158
    %v509 = vunpack.c.l.b16 %v159
    %v510 = vunpack.c.h.b16 %v159
    %v511 = vunpack.c.l.b16 %v160
    %v512 = vunpack.c.h.b16 %v160
    %v513 = vunpack.c.l.b16 %v161
    %v514 = vunpack.c.h.b16 %v161
    %v515 = vunpack.c.l.b16 %v162
    %v516 = vunpack.c.h.b16 %v162
    %v517 = vunpack.c.l.b16 %v163
    %v518 = vunpack.c.h.b16 %v163
    %v519 = vunpack.c.l.b16 %v164
    %v520 = vunpack.c.h.b16 %v164
    %v521 = vunpack.c.l.b16 %v165
    %v522 = vunpack.c.h.b16 %v165
    %v523 = vunpack.c.l.b16 %v166
    %v524 = vunpack.c.h.b16 %v166
    %v525 = vunpack.c.l.b16 %v167
    %v526 = vunpack.c.h.b16 %v167
    %v527 = vunpack.c.l.b16 %v168
    %v528 = vunpack.c.h.b16 %v168
    %v529 = vpack.c.b16 %v339, %v337
    %v530 = vpack.c.b16 %v340, %v338
    %v531 = vpack.c.b16 %v343, %v341
    %v532 = vpack.c.b16 %v344, %v342
    %v533 = vpack.c.b16 %v347, %v345
    %v534 = vpack.c.b16 %v348, %v346
    %v535 = vpack.c.b16 %v351, %v349
    %v536 = vpack.c.b16 %v352, %v350
    %v537 = vpack.c.b16 %v355, %v353
    %v538 = vpack.c.b16 %v356, %v354
    %v539 = vpack.c.b16 %v359, %v357
    %v540 = vpack.c.b16 %v360, %v358
    %v541 = vpack.c.b16 %v363, %v361
    %v542 = vpack.c.b16 %v364, %v362
    %v543 = vpack.c.b16 %v367, %v365
    %v544 = vpack.c.b16 %v368, %v366
    %v545 = vpack.c.b16 %v371, %v369
    %v546 = vpack.c.b16 %v372, %v370
    %v547 = vpack.c.b16 %v375, %v373
    %v548 = vpack.c.b16 %v376, %v374
    %v549 = vpack.c.b16 %v379, %v377
    %v550 = vpack.c.b16 %v380, %v378
    %v551 = vpack.c.b16 %v383, %v381
    %v552 = vpack.c.b16 %v384, %v382
    %v553 = vpack.c.b16 %v387, %v385
    %v554 = vpack.c.b16 %v388, %v386
    %v555 = vpack.c.b16 %v391, %v389
    %v556 = vpack.c.b16 %v392, %v390
    %v557 = vpack.c.b16 %v395, %v393
    %v558 = vpack.c.b16 %v396, %v394
    %v559 = vpack.c.b16 %v399, %v397
    %v560 = vpack.c.b16 %v400, %v398
    %v561 = vpack.c.b16 %v403, %v401
    %v562 = vpack.c.b16 %v404, %v402
    %v563 = vpack.c.b16 %v407, %v405
    %v564 = vpack.c.b16 %v408, %v406
    %v565 = vpack.c.b16 %v411, %v409
    %v566 = vpack.c.b16 %v412, %v410
    %v567 = vpack.c.b16 %v415, %v413
    %v568 = vpack.c.b16 %v416, %v414
    %v569 = vpack.c.b16 %v419, %v417
    %v570 = vpack.c.b16 %v420, %v418
    %v571 = vpack.c.b16 %v423, %v421
    %v572 = vpack.c.b16 %v424, %v422
    %v573 = vpack.c.b16 %v427, %v425
    %v574 = vpack.c.b16 %v428, %v426
    %v575 = vpack.c.b16 %v431, %v429
    %v576 = vpack.c.b16 %v432, %v430
    %v577 = vpack.c.b16 %v435, %v433
    %v578 = vpack.c.b16 %v436, %v434
    %v579 = vpack.c.b16 %v439, %v437
    %v580 = vpack.c.b16 %v440, %v438
    %v581 = vpack.c.b16 %v443, %v441
    %v582 = vpack.c.b16 %v444, %v442
    %v583 = vpack.c.b16 %v447, %v445
    %v584 = vpack.c.b16 %v448, %v446
    %v585 = vpack.c.b16 %v451, %v449
    %v586 = vpack.c.b16 %v452, %v450
    %v587 = vpack.c.b16 %v455, %v453
    %v588 = vpack.c.b16 %v456, %v454
    %v589 = vpack.c.b16 %v459, %v457
    %v590 = vpack.c.b16 %v460, %v458
    %v591 = vpack.c.b16 %v463, %v461
    %v592 = vpack.c.b16 %v464, %v462
    %v593 = vpack.c.b16 %v467, %v465
    %v594 = vpack.c.b16 %v468, %v466
    %v595 = vpack.c.b16 %v471, %v469
    %v596 = vpack.c.b16 %v472, %v470
    %v597 = vpack.c.b16 %v475, %v473
    %v598 = vpack.c.b16 %v476, %v474
    %v599 = vpack.c.b16 %v479, %v477
    %v600 = vpack.c.b16 %v480, %v478
    %v601 = vpack.c.b16 %v483, %v481
    %v602 = vpack.c.b16 %v484, %v482
    %v603 = vpack.c.b16 %v487, %v485
    %v604 = vpack.c.b16 %v488, %v486
    %v605 = vpack.c.b16 %v491, %v489
    %v606 = vpack.c.b16 %v492, %v490
    %v607 = vpack.c.b16 %v495, %v493
    %v608 = vpack.c.b16 %v496, %v494
    %v609 = vpack.c.b16 %v499, %v497
    %v610 = vpack.c.b16 %v500, %v498
    %v611 = vpack.c.b16 %v503, %v501
    %v612 = vpack.c.b16 %v504, %v502
    %v613 = vpack.c.b16 %v507, %v505
    %v614 = vpack.c.b16 %v508, %v506
    %v615 = vpack.c.b16 %v511, %v509
    %v616 = vpack.c.b16 %v512, %v510
    %v617 = vpack.c.b16 %v515, %v513
    %v618 = vpack.c.b16 %v516, %v514
    %v619 = vpack.c.b16 %v519, %v517
    %v620 = vpack.c.b16 %v520, %v518
    %v621 = vpack.c.b16 %v523, %v521
    %v622 = vpack.c.b16 %v524, %v522
    %v623 = vpack.c.b16 %v527, %v525
    %v624 = vpack.c.b16 %v528, %v526
    %721 = vmatprep.subr.bf16.mxu0 %v530
    %722 = vmatpush1.bf16.msra.mxu0 %v529
    %723 = vmatprep.subr.bf16.mxu0 %v532
    %724 = vmatpush1.bf16.msra.mxu0 %v531
    %725 = vmatprep.subr.bf16.mxu0 %v534
    %726 = vmatpush1.bf16.msra.mxu0 %v533
    %727 = vmatprep.subr.bf16.mxu0 %v536
    %728 = vmatpush1.bf16.msra.mxu0 %v535
    %729 = vmatprep.subr.bf16.mxu0 %v538
    %730 = vmatpush1.bf16.msra.mxu0 %v537
    %731 = vmatprep.subr.bf16.mxu0 %v540
    %732 = vmatpush1.bf16.msra.mxu0 %v539
    %733 = vmatprep.subr.bf16.mxu0 %v542
    %734 = vmatpush1.bf16.msra.mxu0 %v541
    %735 = vmatprep.subr.bf16.mxu0 %v544
    %736 = vmatpush1.bf16.msra.mxu0 %v543
    %737 = vmatprep.subr.bf16.mxu0 %v546
    %738 = vmatpush1.bf16.msra.mxu0 %v545
    %739 = vmatprep.subr.bf16.mxu0 %v548
    %740 = vmatpush1.bf16.msra.mxu0 %v547
    %741 = vmatprep.subr.bf16.mxu0 %v550
    %742 = vmatpush1.bf16.msra.mxu0 %v549
    %743 = vmatprep.subr.bf16.mxu0 %v552
    %744 = vmatpush1.bf16.msra.mxu0 %v551
    %745 = vmatprep.subr.bf16.mxu0 %v554
    %746 = vmatpush1.bf16.msra.mxu0 %v553
    %747 = vmatprep.subr.bf16.mxu0 %v556
    %748 = vmatpush1.bf16.msra.mxu0 %v555
    %749 = vmatprep.subr.bf16.mxu0 %v558
    %750 = vmatpush1.bf16.msra.mxu0 %v557
    %751 = vmatprep.subr.bf16.mxu0 %v560
    %752 = vmatpush1.bf16.msra.mxu0 %v559
    %753 = vmatprep.mubr.bf16.mxu0 %v218
    %754 = vmatmul.mubr.bf16.gmra.mrb[0].mxu0 %v217
    %v755 = vpop.f32.mrb[0].mxu0
    %v756 = vadd.f32 %v174, %v755
    %v757 = vpop.f32.mrb[0].mxu0
    %v758 = vadd.f32 %v178, %v757
    %v759 = vpop.f32.mrb[0].mxu0
    %v760 = vadd.f32 %v174, %v759
    %v761 = vpop.f32.mrb[0].mxu0
    %v762 = vadd.f32 %v178, %v761
    %763 = vmatprep.mubr.bf16.mxu0 %v224
    %764 = vmatmul.mubr.bf16.gmra.mrb[0].mxu0 %v223
    %v765 = vpop.f32.mrb[0].mxu0
    %v766 = vadd.f32 %v174, %v765
    %v767 = vpop.f32.mrb[0].mxu0
    %v768 = vadd.f32 %v178, %v767
    %v769 = vpop.f32.mrb[0].mxu0
    %v770 = vadd.f32 %v174, %v769
    %v771 = vpop.f32.mrb[0].mxu0
    %v772 = vadd.f32 %v178, %v771
    %773 = vdwg.mxu0
    %774 = vmatprep.subr.bf16.mxu0 %v562
    %775 = vmatpush1.bf16.msra.mxu0 %v561
    %776 = vmatprep.subr.bf16.mxu0 %v564
    %777 = vmatpush1.bf16.msra.mxu0 %v563
    %778 = vmatprep.subr.bf16.mxu0 %v566
    %779 = vmatpush1.bf16.msra.mxu0 %v565
    %780 = vmatprep.subr.bf16.mxu0 %v568
    %781 = vmatpush1.bf16.msra.mxu0 %v567
    %782 = vmatprep.subr.bf16.mxu0 %v570
    %783 = vmatpush1.bf16.msra.mxu0 %v569
    %784 = vmatprep.subr.bf16.mxu0 %v572
    %785 = vmatpush1.bf16.msra.mxu0 %v571
    %786 = vmatprep.subr.bf16.mxu0 %v574
    %787 = vmatpush1.bf16.msra.mxu0 %v573
    %788 = vmatprep.subr.bf16.mxu0 %v576
    %789 = vmatpush1.bf16.msra.mxu0 %v575
    %790 = vmatprep.subr.bf16.mxu0 %v578
    %791 = vmatpush1.bf16.msra.mxu0 %v577
    %792 = vmatprep.subr.bf16.mxu0 %v580
    %793 = vmatpush1.bf16.msra.mxu0 %v579
    %794 = vmatprep.subr.bf16.mxu0 %v582
    %795 = vmatpush1.bf16.msra.mxu0 %v581
    %796 = vmatprep.subr.bf16.mxu0 %v584
    %797 = vmatpush1.bf16.msra.mxu0 %v583
    %798 = vmatprep.subr.bf16.mxu0 %v586
    %799 = vmatpush1.bf16.msra.mxu0 %v585
    %800 = vmatprep.subr.bf16.mxu0 %v588
    %801 = vmatpush1.bf16.msra.mxu0 %v587
    %802 = vmatprep.subr.bf16.mxu0 %v590
    %803 = vmatpush1.bf16.msra.mxu0 %v589
    %804 = vmatprep.subr.bf16.mxu0 %v592
    %805 = vmatpush1.bf16.msra.mxu0 %v591
    %806 = vmatprep.mubr.bf16.mxu0 %v220
    %807 = vmatmul.mubr.bf16.gmra.mrb[0].mxu0 %v219
    %v808 = vpop.f32.mrb[0].mxu0
    %v809 = vadd.f32 %v756, %v808
    %v810 = vpop.f32.mrb[0].mxu0
    %v811 = vadd.f32 %v758, %v810
    %v812 = vpop.f32.mrb[0].mxu0
    %v813 = vadd.f32 %v760, %v812
    %v814 = vpop.f32.mrb[0].mxu0
    %v815 = vadd.f32 %v762, %v814
    %816 = vmatprep.mubr.bf16.mxu0 %v226
    %817 = vmatmul.mubr.bf16.gmra.mrb[0].mxu0 %v225
    %v818 = vpop.f32.mrb[0].mxu0
    %v819 = vadd.f32 %v766, %v818
    %v820 = vpop.f32.mrb[0].mxu0
    %v821 = vadd.f32 %v768, %v820
    %v822 = vpop.f32.mrb[0].mxu0
    %v823 = vadd.f32 %v770, %v822
    %v824 = vpop.f32.mrb[0].mxu0
    %v825 = vadd.f32 %v772, %v824
    %826 = vdwg.mxu0
    %827 = vmatprep.subr.bf16.mxu0 %v594
    %828 = vmatpush1.bf16.msra.mxu0 %v593
    %829 = vmatprep.subr.bf16.mxu0 %v596
    %830 = vmatpush1.bf16.msra.mxu0 %v595
    %831 = vmatprep.subr.bf16.mxu0 %v598
    %832 = vmatpush1.bf16.msra.mxu0 %v597
    %833 = vmatprep.subr.bf16.mxu0 %v600
    %834 = vmatpush1.bf16.msra.mxu0 %v599
    %835 = vmatprep.subr.bf16.mxu0 %v602
    %836 = vmatpush1.bf16.msra.mxu0 %v601
    %837 = vmatprep.subr.bf16.mxu0 %v604
    %838 = vmatpush1.bf16.msra.mxu0 %v603
    %839 = vmatprep.subr.bf16.mxu0 %v606
    %840 = vmatpush1.bf16.msra.mxu0 %v605
    %841 = vmatprep.subr.bf16.mxu0 %v608
    %842 = vmatpush1.bf16.msra.mxu0 %v607
    %843 = vmatprep.subr.bf16.mxu0 %v610
    %844 = vmatpush1.bf16.msra.mxu0 %v609
    %845 = vmatprep.subr.bf16.mxu0 %v612
    %846 = vmatpush1.bf16.msra.mxu0 %v611
    %847 = vmatprep.subr.bf16.mxu0 %v614
    %848 = vmatpush1.bf16.msra.mxu0 %v613
    %849 = vmatprep.subr.bf16.mxu0 %v616
    %850 = vmatpush1.bf16.msra.mxu0 %v615
    %851 = vmatprep.subr.bf16.mxu0 %v618
    %852 = vmatpush1.bf16.msra.mxu0 %v617
    %853 = vmatprep.subr.bf16.mxu0 %v620
    %854 = vmatpush1.bf16.msra.mxu0 %v619
    %855 = vmatprep.subr.bf16.mxu0 %v622
    %856 = vmatpush1.bf16.msra.mxu0 %v621
    %857 = vmatprep.subr.bf16.mxu0 %v624
    %858 = vmatpush1.bf16.msra.mxu0 %v623
    %859 = vmatprep.mubr.bf16.mxu0 %v222
    %860 = vmatmul.mubr.bf16.gmra.mrb[0].mxu0 %v221
    %v861 = vpop.f32.mrb[0].mxu0
    %v862 = vadd.f32 %v809, %v861
    %v863 = vpop.f32.mrb[0].mxu0
    %v864 = vadd.f32 %v811, %v863
    %v865 = vpop.f32.mrb[0].mxu0
    %v866 = vadd.f32 %v813, %v865
    %v867 = vpop.f32.mrb[0].mxu0
    %v868 = vadd.f32 %v815, %v867
    %869 = vmatprep.mubr.bf16.mxu0 %v228
    %870 = vmatmul.mubr.bf16.gmra.mrb[0].mxu0 %v227
    %v871 = vpop.f32.mrb[0].mxu0
    %v872 = vadd.f32 %v819, %v871
    %v873 = vpop.f32.mrb[0].mxu0
    %v874 = vadd.f32 %v821, %v873
    %v875 = vpop.f32.mrb[0].mxu0
    %v876 = vadd.f32 %v823, %v875
    %v877 = vpop.f32.mrb[0].mxu0
    %v878 = vadd.f32 %v825, %v877
    %879 = vdwg.mxu0
    %v880 = vmax.f32 %v862, 0.0
    %v881 = vmax.f32 %v864, 0.0
    %v882 = vmax.f32 %v866, 0.0
    %v883 = vmax.f32 %v868, 0.0
    %v884 = vmax.f32 %v872, 0.0
    %v885 = vmax.f32 %v874, 0.0
    %v886 = vmax.f32 %v876, 0.0
    %v887 = vmax.f32 %v878, 0.0
    %v888 = vmax.f32 %v880, %v882
    %v889 = vrot.slane %v888, 4
    %v890 = vmax.f32 %v888, %v889
    %v891 = vrot.slane %v890, 2
    %v892 = vmax.f32 %v890, %v891
    %v893 = vrot.slane %v892, 1
    %v894 = vmax.f32 %v892, %v893
    %vm895 = vcmask 523264
    %v896 = vsel %vm895, %v881, -inf
    %v897 = vsel %vm895, %v883, -inf
    %v898 = vmax.f32 %v896, %v897
    %v899 = vrot.slane %v898, 4
    %v900 = vmax.f32 %v898, %v899
    %v901 = vrot.slane %v900, 2
    %v902 = vmax.f32 %v900, %v901
    %v903 = vrot.slane %v902, 1
    %v904 = vmax.f32 %v902, %v903
    %v905 = vmax.f32 %v884, %v886
    %v906 = vrot.slane %v905, 4
    %v907 = vmax.f32 %v905, %v906
    %v908 = vrot.slane %v907, 2
    %v909 = vmax.f32 %v907, %v908
    %v910 = vrot.slane %v909, 1
    %v911 = vmax.f32 %v909, %v910
    %v912 = vsel %vm895, %v885, -inf
    %v913 = vsel %vm895, %v887, -inf
    %v914 = vmax.f32 %v912, %v913
    %v915 = vrot.slane %v914, 4
    %v916 = vmax.f32 %v914, %v915
    %v917 = vrot.slane %v916, 2
    %v918 = vmax.f32 %v916, %v917
    %v919 = vrot.slane %v918, 1
    %v920 = vmax.f32 %v918, %v919
    %v921 = vpack.c.bf16 %v894, %v894
    %v922 = vpack.c.bf16 %v904, %v904
    %v923 = vpack.c.bf16 %v911, %v911
    %v924 = vpack.c.bf16 %v920, %v920
    %v925 = vld [vmem:[%s4] sm:$0xf]
    %v926 = vld [vmem:[%s4 + $0x4] sm:$0xf]
    %v927 = vld [vmem:[%s4 + $0x8] sm:$0xf]
    %v928 = vld [vmem:[%s4 + $0xc] sm:$0xf]
    %v929 = vld [vmem:[%s4 + $0x10] sm:$0xf]
    %v930 = vld [vmem:[%s4 + $0x14] sm:$0xf]
    %v931 = vld [vmem:[%s4 + $0x18] sm:$0xf]
    %v932 = vld [vmem:[%s4 + $0x1c] sm:$0xf]
    %v933 = vld [vmem:[%s4 + $0x20] sm:$0xf]
    %v934 = vld [vmem:[%s4 + $0x24] sm:$0xf]
    %v935 = vld [vmem:[%s4 + $0x28] sm:$0xf]
    %v936 = vld [vmem:[%s4 + $0x2c] sm:$0xf]
    %v937 = vld [vmem:[%s4 + $0x30] sm:$0xf]
    %v938 = vld [vmem:[%s4 + $0x34] sm:$0xf]
    %v939 = vld [vmem:[%s4 + $0x38] sm:$0xf]
    %v940 = vld [vmem:[%s4 + $0x3c] sm:$0xf]
    %v941 = vld [vmem:[%s4 + $0x40] sm:$0xf]
    %v942 = vld [vmem:[%s4 + $0x44] sm:$0xf]
    %v943 = vld [vmem:[%s4 + $0x48] sm:$0xf]
    %v944 = vld [vmem:[%s4 + $0x4c] sm:$0xf]
    %v945 = vld [vmem:[%s4 + $0x50] sm:$0xf]
    %v946 = vld [vmem:[%s4 + $0x54] sm:$0xf]
    %v947 = vld [vmem:[%s4 + $0x58] sm:$0xf]
    %v948 = vld [vmem:[%s4 + $0x5c] sm:$0xf]
    %v949 = vld [vmem:[%s5] sm:$0x1]
    %v951 = vlaneseq
    %v952 = vshrl.u32 %v951, 7
    %v953 = vsub.s32 0, %v952
    %v954 = vrot.slane %v949, %v953
    %v960 = vunpack.c.l.b16 %v921
    %v961 = vunpack.c.l.b16 %v922
    %v962 = vunpack.c.l.b16 %v923
    %v963 = vunpack.c.l.b16 %v924
    %vm964 = vcmask 1041409
    %v965 = vsel %vm964, %v962, %v960
    %v966 = vsel %vm964, %v963, %v961
    %v967 = vpack.c.b16 %v965, %v965
    %v968 = vpack.c.b16 %v966, %v966
    %v994 = vunpack.c.l.b16 %v925
    %v995 = vunpack.c.l.b16 %v926
    %v996 = vunpack.c.l.b16 %v927
    %v997 = vunpack.c.l.b16 %v928
    %v998 = vunpack.c.l.b16 %v929
    %v999 = vunpack.c.l.b16 %v930
    %v1000 = vunpack.c.l.b16 %v931
    %v1001 = vunpack.c.l.b16 %v932
    %v1002 = vunpack.c.l.b16 %v933
    %v1003 = vunpack.c.l.b16 %v934
    %v1004 = vunpack.c.l.b16 %v935
    %v1005 = vunpack.c.l.b16 %v936
    %v1006 = vunpack.c.l.b16 %v937
    %v1007 = vunpack.c.l.b16 %v938
    %v1008 = vunpack.c.l.b16 %v939
    %v1009 = vunpack.c.l.b16 %v940
    %v1010 = vunpack.c.l.b16 %v941
    %v1011 = vunpack.c.l.b16 %v942
    %v1012 = vunpack.c.l.b16 %v943
    %v1013 = vunpack.c.l.b16 %v944
    %v1014 = vunpack.c.l.b16 %v945
    %v1015 = vunpack.c.l.b16 %v946
    %v1016 = vunpack.c.l.b16 %v947
    %v1017 = vunpack.c.l.b16 %v948
    %v1018 = vpack.c.b16 %v995, %v994
    %v1019 = vpack.c.b16 %v997, %v996
    %v1020 = vpack.c.b16 %v999, %v998
    %v1021 = vpack.c.b16 %v1001, %v1000
    %v1022 = vpack.c.b16 %v1003, %v1002
    %v1023 = vpack.c.b16 %v1005, %v1004
    %v1024 = vpack.c.b16 %v1007, %v1006
    %v1025 = vpack.c.b16 %v1009, %v1008
    %v1026 = vpack.c.b16 %v1011, %v1010
    %v1027 = vpack.c.b16 %v1013, %v1012
    %v1028 = vpack.c.b16 %v1015, %v1014
    %v1029 = vpack.c.b16 %v1017, %v1016
    %v1043 = vsel %vm895, %v968, 0
    %1045 = vmatprep.subr.bf16.mxu0 0
    %1046 = vmatpush1.bf16.msra.mxu0 %v1018
    %1047 = vmatprep.subr.bf16.mxu0 0
    %1048 = vmatpush1.bf16.msra.mxu0 %v1019
    %1049 = vmatprep.subr.bf16.mxu0 0
    %1050 = vmatpush1.bf16.msra.mxu0 %v1020
    %1051 = vmatprep.subr.bf16.mxu0 0
    %1052 = vmatpush1.bf16.msra.mxu0 %v1021
    %1053 = vmatprep.subr.bf16.mxu0 0
    %1054 = vmatpush1.bf16.msra.mxu0 %v1022
    %1055 = vmatprep.subr.bf16.mxu0 0
    %1056 = vmatpush1.bf16.msra.mxu0 %v1023
    %1057 = vmatprep.subr.bf16.mxu0 0
    %1058 = vmatpush1.bf16.msra.mxu0 %v1024
    %1059 = vmatprep.subr.bf16.mxu0 0
    %1060 = vmatpush1.bf16.msra.mxu0 %v1025
    %1061 = vmatprep.subr.bf16.mxu0 0
    %1062 = vmatpush1.bf16.msra.mxu0 %v1026
    %1063 = vmatprep.subr.bf16.mxu0 0
    %1064 = vmatpush1.bf16.msra.mxu0 %v1027
    %1065 = vmatprep.subr.bf16.mxu0 0
    %1066 = vmatpush1.bf16.msra.mxu0 %v1028
    %1067 = vmatprep.subr.bf16.mxu0 0
    %1068 = vmatpush1.bf16.msra.mxu0 %v1029
    %1069 = vmatprep.subr.bf16.mxu0 0
    %1070 = vmatpush1.bf16.msra.mxu0 0
    %1071 = vmatprep.subr.bf16.mxu0 0
    %1072 = vmatpush1.bf16.msra.mxu0 0
    %1073 = vmatprep.subr.bf16.mxu0 0
    %1074 = vmatpush1.bf16.msra.mxu0 0
    %1075 = vmatprep.subr.bf16.mxu0 0
    %1076 = vmatpush1.bf16.msra.mxu0 0
    %1077 = vmatprep.mubr.bf16.mxu0 %v1043
    %1078 = vmatmul.mubr.bf16.gmra.mrb[0].mxu0 %v967
    %v1079 = vpop.f32.mrb[0].mxu0
    %v1080 = vadd.f32 %v954, %v1079
    %v1081 = vpop.f32.mrb[0].mxu0
    %v1082 = vpop.f32.mrb[0].mxu0
    %v1083 = vpop.f32.mrb[0].mxu0
    %1084 = vdwg.mxu0
    %v1085 = vmax.f32 %v1080, 0.0
    %v1086 = vpack.c.bf16 %v1085, %v1085
    %v1087 = vld [vmem:[%s8] sm:$0xff]
    %v1088 = vld [vmem:[%s8 + $0x8] sm:$0xff]
    %v1089 = vld [vmem:[%s8 + $0x10] sm:$0xff]
    %v1090 = vld [vmem:[%s8 + $0x18] sm:$0xff]
    %v1091 = vld [vmem:[%s8 + $0x20] sm:$0xff]
    %v1092 = vld [vmem:[%s8 + $0x28] sm:$0xff]
    %v1093 = vld [vmem:[%s8 + $0x30] sm:$0xff]
    %v1094 = vld [vmem:[%s8 + $0x38] sm:$0xff]
    %v1095 = vld [vmem:[%s8 + $0x40] sm:$0xff]
    %v1096 = vld [vmem:[%s8 + $0x48] sm:$0xff]
    %v1097 = vld [vmem:[%s8 + $0x50] sm:$0xff]
    %v1098 = vld [vmem:[%s8 + $0x58] sm:$0xff]
    %v1099 = vld [vmem:[%s8 + $0x60] sm:$0xff]
    %v1100 = vld [vmem:[%s8 + $0x68] sm:$0xff]
    %v1101 = vld [vmem:[%s8 + $0x70] sm:$0xff]
    %v1102 = vld [vmem:[%s8 + $0x78] sm:$0xff]
    %v1103 = vld [vmem:[%s8 + $0x80] sm:$0xff]
    %v1104 = vld [vmem:[%s8 + $0x88] sm:$0xff]
    %v1105 = vld [vmem:[%s8 + $0x90] sm:$0xff]
    %v1106 = vld [vmem:[%s8 + $0x98] sm:$0xff]
    %v1107 = vld [vmem:[%s8 + $0xa0] sm:$0xff]
    %v1108 = vld [vmem:[%s8 + $0xa8] sm:$0xff]
    %v1109 = vld [vmem:[%s8 + $0xb0] sm:$0xff]
    %v1110 = vld [vmem:[%s8 + $0xb8] sm:$0xff]
    %v1111 = vld [vmem:[%s8 + $0xc0] sm:$0xff]
    %v1112 = vld [vmem:[%s8 + $0xc8] sm:$0xff]
    %v1113 = vld [vmem:[%s8 + $0xd0] sm:$0xff]
    %v1114 = vld [vmem:[%s8 + $0xd8] sm:$0xff]
    %v1115 = vld [vmem:[%s8 + $0xe0] sm:$0xff]
    %v1116 = vld [vmem:[%s8 + $0xe8] sm:$0xff]
    %v1117 = vld [vmem:[%s8 + $0xf0] sm:$0xff]
    %v1118 = vld [vmem:[%s8 + $0xf8] sm:$0xff]
    %v1119 = vld [vmem:[%s8 + $0x100] sm:$0xff]
    %v1120 = vld [vmem:[%s8 + $0x108] sm:$0xff]
    %v1121 = vld [vmem:[%s8 + $0x110] sm:$0xff]
    %v1122 = vld [vmem:[%s8 + $0x118] sm:$0xff]
    %v1123 = vld [vmem:[%s8 + $0x120] sm:$0xff]
    %v1124 = vld [vmem:[%s8 + $0x128] sm:$0xff]
    %v1125 = vld [vmem:[%s8 + $0x130] sm:$0xff]
    %v1126 = vld [vmem:[%s8 + $0x138] sm:$0xff]
    %v1127 = vld [vmem:[%s8 + $0x140] sm:$0xff]
    %v1128 = vld [vmem:[%s8 + $0x148] sm:$0xff]
    %v1129 = vld [vmem:[%s8 + $0x150] sm:$0xff]
    %v1130 = vld [vmem:[%s8 + $0x158] sm:$0xff]
    %v1131 = vld [vmem:[%s8 + $0x160] sm:$0xff]
    %v1132 = vld [vmem:[%s8 + $0x168] sm:$0xff]
    %v1133 = vld [vmem:[%s8 + $0x170] sm:$0xff]
    %v1134 = vld [vmem:[%s8 + $0x178] sm:$0xff]
    %v1135 = vld [vmem:[%s9] sm:$0xff]
    %v1137 = vlaneseq
    %v1138 = vshrl.u32 %v1137, 7
    %v1139 = vsub.s32 0, %v1138
    %v1140 = vrot.slane %v1135, %v1139
    %v1141 = vlaneseq
    %v1142 = vshrl.u32 %v1141, 7
    %v1143 = vsub.s32 1, %v1142
    %v1144 = vrot.slane %v1135, %v1143
    %v1145 = vlaneseq
    %v1146 = vshrl.u32 %v1145, 7
    %v1147 = vsub.s32 2, %v1146
    %v1148 = vrot.slane %v1135, %v1147
    %v1149 = vlaneseq
    %v1150 = vshrl.u32 %v1149, 7
    %v1151 = vsub.s32 3, %v1150
    %v1152 = vrot.slane %v1135, %v1151
    %v1153 = vlaneseq
    %v1154 = vshrl.u32 %v1153, 7
    %v1155 = vsub.s32 4, %v1154
    %v1156 = vrot.slane %v1135, %v1155
    %v1157 = vlaneseq
    %v1158 = vshrl.u32 %v1157, 7
    %v1159 = vsub.s32 5, %v1158
    %v1160 = vrot.slane %v1135, %v1159
    %v1161 = vlaneseq
    %v1162 = vshrl.u32 %v1161, 7
    %v1163 = vsub.s32 6, %v1162
    %v1164 = vrot.slane %v1135, %v1163
    %v1165 = vlaneseq
    %v1166 = vshrl.u32 %v1165, 7
    %v1167 = vsub.s32 7, %v1166
    %v1168 = vrot.slane %v1135, %v1167
    %v1225 = vunpack.c.l.b16 %v1087
    %v1226 = vunpack.c.h.b16 %v1087
    %v1227 = vunpack.c.l.b16 %v1088
    %v1228 = vunpack.c.h.b16 %v1088
    %v1229 = vunpack.c.l.b16 %v1089
    %v1230 = vunpack.c.h.b16 %v1089
    %v1231 = vunpack.c.l.b16 %v1090
    %v1232 = vunpack.c.h.b16 %v1090
    %v1233 = vunpack.c.l.b16 %v1091
    %v1234 = vunpack.c.h.b16 %v1091
    %v1235 = vunpack.c.l.b16 %v1092
    %v1236 = vunpack.c.h.b16 %v1092
    %v1237 = vunpack.c.l.b16 %v1093
    %v1238 = vunpack.c.h.b16 %v1093
    %v1239 = vunpack.c.l.b16 %v1094
    %v1240 = vunpack.c.h.b16 %v1094
    %v1241 = vunpack.c.l.b16 %v1095
    %v1242 = vunpack.c.h.b16 %v1095
    %v1243 = vunpack.c.l.b16 %v1096
    %v1244 = vunpack.c.h.b16 %v1096
    %v1245 = vunpack.c.l.b16 %v1097
    %v1246 = vunpack.c.h.b16 %v1097
    %v1247 = vunpack.c.l.b16 %v1098
    %v1248 = vunpack.c.h.b16 %v1098
    %v1249 = vunpack.c.l.b16 %v1099
    %v1250 = vunpack.c.h.b16 %v1099
    %v1251 = vunpack.c.l.b16 %v1100
    %v1252 = vunpack.c.h.b16 %v1100
    %v1253 = vunpack.c.l.b16 %v1101
    %v1254 = vunpack.c.h.b16 %v1101
    %v1255 = vunpack.c.l.b16 %v1102
    %v1256 = vunpack.c.h.b16 %v1102
    %v1257 = vunpack.c.l.b16 %v1103
    %v1258 = vunpack.c.h.b16 %v1103
    %v1259 = vunpack.c.l.b16 %v1104
    %v1260 = vunpack.c.h.b16 %v1104
    %v1261 = vunpack.c.l.b16 %v1105
    %v1262 = vunpack.c.h.b16 %v1105
    %v1263 = vunpack.c.l.b16 %v1106
    %v1264 = vunpack.c.h.b16 %v1106
    %v1265 = vunpack.c.l.b16 %v1107
    %v1266 = vunpack.c.h.b16 %v1107
    %v1267 = vunpack.c.l.b16 %v1108
    %v1268 = vunpack.c.h.b16 %v1108
    %v1269 = vunpack.c.l.b16 %v1109
    %v1270 = vunpack.c.h.b16 %v1109
    %v1271 = vunpack.c.l.b16 %v1110
    %v1272 = vunpack.c.h.b16 %v1110
    %v1273 = vunpack.c.l.b16 %v1111
    %v1274 = vunpack.c.h.b16 %v1111
    %v1275 = vunpack.c.l.b16 %v1112
    %v1276 = vunpack.c.h.b16 %v1112
    %v1277 = vunpack.c.l.b16 %v1113
    %v1278 = vunpack.c.h.b16 %v1113
    %v1279 = vunpack.c.l.b16 %v1114
    %v1280 = vunpack.c.h.b16 %v1114
    %v1281 = vunpack.c.l.b16 %v1115
    %v1282 = vunpack.c.h.b16 %v1115
    %v1283 = vunpack.c.l.b16 %v1116
    %v1284 = vunpack.c.h.b16 %v1116
    %v1285 = vunpack.c.l.b16 %v1117
    %v1286 = vunpack.c.h.b16 %v1117
    %v1287 = vunpack.c.l.b16 %v1118
    %v1288 = vunpack.c.h.b16 %v1118
    %v1289 = vunpack.c.l.b16 %v1119
    %v1290 = vunpack.c.h.b16 %v1119
    %v1291 = vunpack.c.l.b16 %v1120
    %v1292 = vunpack.c.h.b16 %v1120
    %v1293 = vunpack.c.l.b16 %v1121
    %v1294 = vunpack.c.h.b16 %v1121
    %v1295 = vunpack.c.l.b16 %v1122
    %v1296 = vunpack.c.h.b16 %v1122
    %v1297 = vunpack.c.l.b16 %v1123
    %v1298 = vunpack.c.h.b16 %v1123
    %v1299 = vunpack.c.l.b16 %v1124
    %v1300 = vunpack.c.h.b16 %v1124
    %v1301 = vunpack.c.l.b16 %v1125
    %v1302 = vunpack.c.h.b16 %v1125
    %v1303 = vunpack.c.l.b16 %v1126
    %v1304 = vunpack.c.h.b16 %v1126
    %v1305 = vunpack.c.l.b16 %v1127
    %v1306 = vunpack.c.h.b16 %v1127
    %v1307 = vunpack.c.l.b16 %v1128
    %v1308 = vunpack.c.h.b16 %v1128
    %v1309 = vunpack.c.l.b16 %v1129
    %v1310 = vunpack.c.h.b16 %v1129
    %v1311 = vunpack.c.l.b16 %v1130
    %v1312 = vunpack.c.h.b16 %v1130
    %v1313 = vunpack.c.l.b16 %v1131
    %v1314 = vunpack.c.h.b16 %v1131
    %v1315 = vunpack.c.l.b16 %v1132
    %v1316 = vunpack.c.h.b16 %v1132
    %v1317 = vunpack.c.l.b16 %v1133
    %v1318 = vunpack.c.h.b16 %v1133
    %v1319 = vunpack.c.l.b16 %v1134
    %v1320 = vunpack.c.h.b16 %v1134
    %v1321 = vpack.c.b16 %v1233, %v1225
    %v1322 = vpack.c.b16 %v1234, %v1226
    %v1323 = vpack.c.b16 %v1235, %v1227
    %v1324 = vpack.c.b16 %v1236, %v1228
    %v1325 = vpack.c.b16 %v1237, %v1229
    %v1326 = vpack.c.b16 %v1238, %v1230
    %v1327 = vpack.c.b16 %v1239, %v1231
    %v1328 = vpack.c.b16 %v1240, %v1232
    %v1329 = vpack.c.b16 %v1249, %v1241
    %v1330 = vpack.c.b16 %v1250, %v1242
    %v1331 = vpack.c.b16 %v1251, %v1243
    %v1332 = vpack.c.b16 %v1252, %v1244
    %v1333 = vpack.c.b16 %v1253, %v1245
    %v1334 = vpack.c.b16 %v1254, %v1246
    %v1335 = vpack.c.b16 %v1255, %v1247
    %v1336 = vpack.c.b16 %v1256, %v1248
    %v1337 = vpack.c.b16 %v1265, %v1257
    %v1338 = vpack.c.b16 %v1266, %v1258
    %v1339 = vpack.c.b16 %v1267, %v1259
    %v1340 = vpack.c.b16 %v1268, %v1260
    %v1341 = vpack.c.b16 %v1269, %v1261
    %v1342 = vpack.c.b16 %v1270, %v1262
    %v1343 = vpack.c.b16 %v1271, %v1263
    %v1344 = vpack.c.b16 %v1272, %v1264
    %v1345 = vpack.c.b16 %v1281, %v1273
    %v1346 = vpack.c.b16 %v1282, %v1274
    %v1347 = vpack.c.b16 %v1283, %v1275
    %v1348 = vpack.c.b16 %v1284, %v1276
    %v1349 = vpack.c.b16 %v1285, %v1277
    %v1350 = vpack.c.b16 %v1286, %v1278
    %v1351 = vpack.c.b16 %v1287, %v1279
    %v1352 = vpack.c.b16 %v1288, %v1280
    %v1353 = vpack.c.b16 %v1297, %v1289
    %v1354 = vpack.c.b16 %v1298, %v1290
    %v1355 = vpack.c.b16 %v1299, %v1291
    %v1356 = vpack.c.b16 %v1300, %v1292
    %v1357 = vpack.c.b16 %v1301, %v1293
    %v1358 = vpack.c.b16 %v1302, %v1294
    %v1359 = vpack.c.b16 %v1303, %v1295
    %v1360 = vpack.c.b16 %v1304, %v1296
    %v1361 = vpack.c.b16 %v1313, %v1305
    %v1362 = vpack.c.b16 %v1314, %v1306
    %v1363 = vpack.c.b16 %v1315, %v1307
    %v1364 = vpack.c.b16 %v1316, %v1308
    %v1365 = vpack.c.b16 %v1317, %v1309
    %v1366 = vpack.c.b16 %v1318, %v1310
    %v1367 = vpack.c.b16 %v1319, %v1311
    %v1368 = vpack.c.b16 %v1320, %v1312
    %vm1417 = vcmask 785408
    %v1419 = vsel %vm1417, %v1086, 0
    %1421 = vmatprep.subr.bf16.mxu0 %v1322
    %1422 = vmatpush1.bf16.msra.mxu0 %v1321
    %1423 = vmatprep.subr.bf16.mxu0 %v1330
    %1424 = vmatpush1.bf16.msra.mxu0 %v1329
    %1425 = vmatprep.subr.bf16.mxu0 %v1338
    %1426 = vmatpush1.bf16.msra.mxu0 %v1337
    %1427 = vmatprep.subr.bf16.mxu0 %v1346
    %1428 = vmatpush1.bf16.msra.mxu0 %v1345
    %1429 = vmatprep.subr.bf16.mxu0 %v1354
    %1430 = vmatpush1.bf16.msra.mxu0 %v1353
    %1431 = vmatprep.subr.bf16.mxu0 %v1362
    %1432 = vmatpush1.bf16.msra.mxu0 %v1361
    %1433 = vmatprep.subr.bf16.mxu0 0
    %1434 = vmatpush1.bf16.msra.mxu0 0
    %1435 = vmatprep.subr.bf16.mxu0 0
    %1436 = vmatpush1.bf16.msra.mxu0 0
    %1437 = vmatprep.subr.bf16.mxu0 0
    %1438 = vmatpush1.bf16.msra.mxu0 0
    %1439 = vmatprep.subr.bf16.mxu0 0
    %1440 = vmatpush1.bf16.msra.mxu0 0
    %1441 = vmatprep.subr.bf16.mxu0 0
    %1442 = vmatpush1.bf16.msra.mxu0 0
    %1443 = vmatprep.subr.bf16.mxu0 0
    %1444 = vmatpush1.bf16.msra.mxu0 0
    %1445 = vmatprep.subr.bf16.mxu0 0
    %1446 = vmatpush1.bf16.msra.mxu0 0
    %1447 = vmatprep.subr.bf16.mxu0 0
    %1448 = vmatpush1.bf16.msra.mxu0 0
    %1449 = vmatprep.subr.bf16.mxu0 0
    %1450 = vmatpush1.bf16.msra.mxu0 0
    %1451 = vmatprep.subr.bf16.mxu0 0
    %1452 = vmatpush1.bf16.msra.mxu0 0
    %1453 = vmatprep.mubr.bf16.mxu0 0
    %1454 = vmatmul.mubr.bf16.gmra.mrb[0].mxu0 %v1419
    %v1455 = vpop.f32.mrb[0].mxu0
    %v1456 = vadd.f32 %v1140, %v1455
    %v1457 = vpop.f32.mrb[0].mxu0
    %v1458 = vadd.f32 %v1144, %v1457
    %v1459 = vpop.f32.mrb[0].mxu0
    %v1460 = vpop.f32.mrb[0].mxu0
    %1461 = vdwg.mxu0
    %1462 = vmatprep.subr.bf16.mxu0 %v1324
    %1463 = vmatpush1.bf16.msra.mxu0 %v1323
    %1464 = vmatprep.subr.bf16.mxu0 %v1332
    %1465 = vmatpush1.bf16.msra.mxu0 %v1331
    %1466 = vmatprep.subr.bf16.mxu0 %v1340
    %1467 = vmatpush1.bf16.msra.mxu0 %v1339
    %1468 = vmatprep.subr.bf16.mxu0 %v1348
    %1469 = vmatpush1.bf16.msra.mxu0 %v1347
    %1470 = vmatprep.subr.bf16.mxu0 %v1356
    %1471 = vmatpush1.bf16.msra.mxu0 %v1355
    %1472 = vmatprep.subr.bf16.mxu0 %v1364
    %1473 = vmatpush1.bf16.msra.mxu0 %v1363
    %1474 = vmatprep.subr.bf16.mxu0 0
    %1475 = vmatpush1.bf16.msra.mxu0 0
    %1476 = vmatprep.subr.bf16.mxu0 0
    %1477 = vmatpush1.bf16.msra.mxu0 0
    %1478 = vmatprep.subr.bf16.mxu0 0
    %1479 = vmatpush1.bf16.msra.mxu0 0
    %1480 = vmatprep.subr.bf16.mxu0 0
    %1481 = vmatpush1.bf16.msra.mxu0 0
    %1482 = vmatprep.subr.bf16.mxu0 0
    %1483 = vmatpush1.bf16.msra.mxu0 0
    %1484 = vmatprep.subr.bf16.mxu0 0
    %1485 = vmatpush1.bf16.msra.mxu0 0
    %1486 = vmatprep.subr.bf16.mxu0 0
    %1487 = vmatpush1.bf16.msra.mxu0 0
    %1488 = vmatprep.subr.bf16.mxu0 0
    %1489 = vmatpush1.bf16.msra.mxu0 0
    %1490 = vmatprep.subr.bf16.mxu0 0
    %1491 = vmatpush1.bf16.msra.mxu0 0
    %1492 = vmatprep.subr.bf16.mxu0 0
    %1493 = vmatpush1.bf16.msra.mxu0 0
    %1494 = vmatprep.mubr.bf16.mxu0 0
    %1495 = vmatmul.mubr.bf16.gmra.mrb[0].mxu0 %v1419
    %v1496 = vpop.f32.mrb[0].mxu0
    %v1497 = vadd.f32 %v1148, %v1496
    %v1498 = vpop.f32.mrb[0].mxu0
    %v1499 = vadd.f32 %v1152, %v1498
    %v1500 = vpop.f32.mrb[0].mxu0
    %v1501 = vpop.f32.mrb[0].mxu0
    %1502 = vdwg.mxu0
    %1503 = vmatprep.subr.bf16.mxu0 %v1326
    %1504 = vmatpush1.bf16.msra.mxu0 %v1325
    %1505 = vmatprep.subr.bf16.mxu0 %v1334
    %1506 = vmatpush1.bf16.msra.mxu0 %v1333
    %1507 = vmatprep.subr.bf16.mxu0 %v1342
    %1508 = vmatpush1.bf16.msra.mxu0 %v1341
    %1509 = vmatprep.subr.bf16.mxu0 %v1350
    %1510 = vmatpush1.bf16.msra.mxu0 %v1349
    %1511 = vmatprep.subr.bf16.mxu0 %v1358
    %1512 = vmatpush1.bf16.msra.mxu0 %v1357
    %1513 = vmatprep.subr.bf16.mxu0 %v1366
    %1514 = vmatpush1.bf16.msra.mxu0 %v1365
    %1515 = vmatprep.subr.bf16.mxu0 0
    %1516 = vmatpush1.bf16.msra.mxu0 0
    %1517 = vmatprep.subr.bf16.mxu0 0
    %1518 = vmatpush1.bf16.msra.mxu0 0
    %1519 = vmatprep.subr.bf16.mxu0 0
    %1520 = vmatpush1.bf16.msra.mxu0 0
    %1521 = vmatprep.subr.bf16.mxu0 0
    %1522 = vmatpush1.bf16.msra.mxu0 0
    %1523 = vmatprep.subr.bf16.mxu0 0
    %1524 = vmatpush1.bf16.msra.mxu0 0
    %1525 = vmatprep.subr.bf16.mxu0 0
    %1526 = vmatpush1.bf16.msra.mxu0 0
    %1527 = vmatprep.subr.bf16.mxu0 0
    %1528 = vmatpush1.bf16.msra.mxu0 0
    %1529 = vmatprep.subr.bf16.mxu0 0
    %1530 = vmatpush1.bf16.msra.mxu0 0
    %1531 = vmatprep.subr.bf16.mxu0 0
    %1532 = vmatpush1.bf16.msra.mxu0 0
    %1533 = vmatprep.subr.bf16.mxu0 0
    %1534 = vmatpush1.bf16.msra.mxu0 0
    %1535 = vmatprep.mubr.bf16.mxu0 0
    %1536 = vmatmul.mubr.bf16.gmra.mrb[0].mxu0 %v1419
    %v1537 = vpop.f32.mrb[0].mxu0
    %v1538 = vadd.f32 %v1156, %v1537
    %v1539 = vpop.f32.mrb[0].mxu0
    %v1540 = vadd.f32 %v1160, %v1539
    %v1541 = vpop.f32.mrb[0].mxu0
    %v1542 = vpop.f32.mrb[0].mxu0
    %1543 = vdwg.mxu0
    %1544 = vmatprep.subr.bf16.mxu0 %v1328
    %1545 = vmatpush1.bf16.msra.mxu0 %v1327
    %1546 = vmatprep.subr.bf16.mxu0 %v1336
    %1547 = vmatpush1.bf16.msra.mxu0 %v1335
    %1548 = vmatprep.subr.bf16.mxu0 %v1344
    %1549 = vmatpush1.bf16.msra.mxu0 %v1343
    %1550 = vmatprep.subr.bf16.mxu0 %v1352
    %1551 = vmatpush1.bf16.msra.mxu0 %v1351
    %1552 = vmatprep.subr.bf16.mxu0 %v1360
    %1553 = vmatpush1.bf16.msra.mxu0 %v1359
    %1554 = vmatprep.subr.bf16.mxu0 %v1368
    %1555 = vmatpush1.bf16.msra.mxu0 %v1367
    %1556 = vmatprep.subr.bf16.mxu0 0
    %1557 = vmatpush1.bf16.msra.mxu0 0
    %1558 = vmatprep.subr.bf16.mxu0 0
    %1559 = vmatpush1.bf16.msra.mxu0 0
    %1560 = vmatprep.subr.bf16.mxu0 0
    %1561 = vmatpush1.bf16.msra.mxu0 0
    %1562 = vmatprep.subr.bf16.mxu0 0
    %1563 = vmatpush1.bf16.msra.mxu0 0
    %1564 = vmatprep.subr.bf16.mxu0 0
    %1565 = vmatpush1.bf16.msra.mxu0 0
    %1566 = vmatprep.subr.bf16.mxu0 0
    %1567 = vmatpush1.bf16.msra.mxu0 0
    %1568 = vmatprep.subr.bf16.mxu0 0
    %1569 = vmatpush1.bf16.msra.mxu0 0
    %1570 = vmatprep.subr.bf16.mxu0 0
    %1571 = vmatpush1.bf16.msra.mxu0 0
    %1572 = vmatprep.subr.bf16.mxu0 0
    %1573 = vmatpush1.bf16.msra.mxu0 0
    %1574 = vmatprep.subr.bf16.mxu0 0
    %1575 = vmatpush1.bf16.msra.mxu0 0
    %1576 = vmatprep.mubr.bf16.mxu0 0
    %1577 = vmatmul.mubr.bf16.gmra.mrb[0].mxu0 %v1419
    %v1578 = vpop.f32.mrb[0].mxu0
    %v1579 = vadd.f32 %v1164, %v1578
    %v1580 = vpop.f32.mrb[0].mxu0
    %v1581 = vadd.f32 %v1168, %v1580
    %v1582 = vpop.f32.mrb[0].mxu0
    %v1583 = vpop.f32.mrb[0].mxu0
    %1584 = vdwg.mxu0
    %v1585 = vpack.c.bf16 %v1456, %v1456
    %v1586 = vpack.c.bf16 %v1458, %v1458
    %v1587 = vpack.c.bf16 %v1497, %v1497
    %v1588 = vpack.c.bf16 %v1499, %v1499
    %v1589 = vpack.c.bf16 %v1538, %v1538
    %v1590 = vpack.c.bf16 %v1540, %v1540
    %v1591 = vpack.c.bf16 %v1579, %v1579
    %v1592 = vpack.c.bf16 %v1581, %v1581
    %v1593 = vld [vmem:[%s10] sm:$0xff]
    %v1594 = vld [vmem:[%s10 + $0x8] sm:$0xff]
    %v1595 = vld [vmem:[%s10 + $0x10] sm:$0xff]
    %v1596 = vld [vmem:[%s10 + $0x18] sm:$0xff]
    %v1597 = vld [vmem:[%s10 + $0x20] sm:$0xff]
    %v1598 = vld [vmem:[%s10 + $0x28] sm:$0xff]
    %v1599 = vld [vmem:[%s10 + $0x30] sm:$0xff]
    %v1600 = vld [vmem:[%s10 + $0x38] sm:$0xff]
    %v1601 = vld [vmem:[%s10 + $0x40] sm:$0xff]
    %v1602 = vld [vmem:[%s10 + $0x48] sm:$0xff]
    %v1603 = vld [vmem:[%s10 + $0x50] sm:$0xff]
    %v1604 = vld [vmem:[%s10 + $0x58] sm:$0xff]
    %v1605 = vld [vmem:[%s10 + $0x60] sm:$0xff]
    %v1606 = vld [vmem:[%s10 + $0x68] sm:$0xff]
    %v1607 = vld [vmem:[%s10 + $0x70] sm:$0xff]
    %v1608 = vld [vmem:[%s10 + $0x78] sm:$0xff]
    %v1609 = vld [vmem:[%s10 + $0x80] sm:$0xff]
    %v1610 = vld [vmem:[%s10 + $0x88] sm:$0xff]
    %v1611 = vld [vmem:[%s10 + $0x90] sm:$0xff]
    %v1612 = vld [vmem:[%s10 + $0x98] sm:$0xff]
    %v1613 = vld [vmem:[%s10 + $0xa0] sm:$0xff]
    %v1614 = vld [vmem:[%s10 + $0xa8] sm:$0xff]
    %v1615 = vld [vmem:[%s10 + $0xb0] sm:$0xff]
    %v1616 = vld [vmem:[%s10 + $0xb8] sm:$0xff]
    %v1617 = vld [vmem:[%s10 + $0xc0] sm:$0xff]
    %v1618 = vld [vmem:[%s10 + $0xc8] sm:$0xff]
    %v1619 = vld [vmem:[%s10 + $0xd0] sm:$0xff]
    %v1620 = vld [vmem:[%s10 + $0xd8] sm:$0xff]
    %v1621 = vld [vmem:[%s10 + $0xe0] sm:$0xff]
    %v1622 = vld [vmem:[%s10 + $0xe8] sm:$0xff]
    %v1623 = vld [vmem:[%s10 + $0xf0] sm:$0xff]
    %v1624 = vld [vmem:[%s10 + $0xf8] sm:$0xff]
    %v1625 = vld [vmem:[%s10 + $0x100] sm:$0xff]
    %v1626 = vld [vmem:[%s10 + $0x108] sm:$0xff]
    %v1627 = vld [vmem:[%s10 + $0x110] sm:$0xff]
    %v1628 = vld [vmem:[%s10 + $0x118] sm:$0xff]
    %v1629 = vld [vmem:[%s10 + $0x120] sm:$0xff]
    %v1630 = vld [vmem:[%s10 + $0x128] sm:$0xff]
    %v1631 = vld [vmem:[%s10 + $0x130] sm:$0xff]
    %v1632 = vld [vmem:[%s10 + $0x138] sm:$0xff]
    %v1633 = vld [vmem:[%s10 + $0x140] sm:$0xff]
    %v1634 = vld [vmem:[%s10 + $0x148] sm:$0xff]
    %v1635 = vld [vmem:[%s10 + $0x150] sm:$0xff]
    %v1636 = vld [vmem:[%s10 + $0x158] sm:$0xff]
    %v1637 = vld [vmem:[%s10 + $0x160] sm:$0xff]
    %v1638 = vld [vmem:[%s10 + $0x168] sm:$0xff]
    %v1639 = vld [vmem:[%s10 + $0x170] sm:$0xff]
    %v1640 = vld [vmem:[%s10 + $0x178] sm:$0xff]
    %v1641 = vld [vmem:[%s10 + $0x180] sm:$0xff]
    %v1642 = vld [vmem:[%s10 + $0x188] sm:$0xff]
    %v1643 = vld [vmem:[%s10 + $0x190] sm:$0xff]
    %v1644 = vld [vmem:[%s10 + $0x198] sm:$0xff]
    %v1645 = vld [vmem:[%s10 + $0x1a0] sm:$0xff]
    %v1646 = vld [vmem:[%s10 + $0x1a8] sm:$0xff]
    %v1647 = vld [vmem:[%s10 + $0x1b0] sm:$0xff]
    %v1648 = vld [vmem:[%s10 + $0x1b8] sm:$0xff]
    %v1649 = vld [vmem:[%s10 + $0x1c0] sm:$0xff]
    %v1650 = vld [vmem:[%s10 + $0x1c8] sm:$0xff]
    %v1651 = vld [vmem:[%s10 + $0x1d0] sm:$0xff]
    %v1652 = vld [vmem:[%s10 + $0x1d8] sm:$0xff]
    %v1653 = vld [vmem:[%s10 + $0x1e0] sm:$0xff]
    %v1654 = vld [vmem:[%s10 + $0x1e8] sm:$0xff]
    %v1655 = vld [vmem:[%s10 + $0x1f0] sm:$0xff]
    %v1656 = vld [vmem:[%s10 + $0x1f8] sm:$0xff]
    %v1657 = vld [vmem:[%s10 + $0x200] sm:$0xff]
    %v1658 = vld [vmem:[%s10 + $0x208] sm:$0xff]
    %v1659 = vld [vmem:[%s10 + $0x210] sm:$0xff]
    %v1660 = vld [vmem:[%s10 + $0x218] sm:$0xff]
    %v1661 = vld [vmem:[%s10 + $0x220] sm:$0xff]
    %v1662 = vld [vmem:[%s10 + $0x228] sm:$0xff]
    %v1663 = vld [vmem:[%s10 + $0x230] sm:$0xff]
    %v1664 = vld [vmem:[%s10 + $0x238] sm:$0xff]
    %v1665 = vld [vmem:[%s10 + $0x240] sm:$0xff]
    %v1666 = vld [vmem:[%s10 + $0x248] sm:$0xff]
    %v1667 = vld [vmem:[%s10 + $0x250] sm:$0xff]
    %v1668 = vld [vmem:[%s10 + $0x258] sm:$0xff]
    %v1669 = vld [vmem:[%s10 + $0x260] sm:$0xff]
    %v1670 = vld [vmem:[%s10 + $0x268] sm:$0xff]
    %v1671 = vld [vmem:[%s10 + $0x270] sm:$0xff]
    %v1672 = vld [vmem:[%s10 + $0x278] sm:$0xff]
    %v1673 = vld [vmem:[%s10 + $0x280] sm:$0xff]
    %v1674 = vld [vmem:[%s10 + $0x288] sm:$0xff]
    %v1675 = vld [vmem:[%s10 + $0x290] sm:$0xff]
    %v1676 = vld [vmem:[%s10 + $0x298] sm:$0xff]
    %v1677 = vld [vmem:[%s10 + $0x2a0] sm:$0xff]
    %v1678 = vld [vmem:[%s10 + $0x2a8] sm:$0xff]
    %v1679 = vld [vmem:[%s10 + $0x2b0] sm:$0xff]
    %v1680 = vld [vmem:[%s10 + $0x2b8] sm:$0xff]
    %v1681 = vld [vmem:[%s10 + $0x2c0] sm:$0xff]
    %v1682 = vld [vmem:[%s10 + $0x2c8] sm:$0xff]
    %v1683 = vld [vmem:[%s10 + $0x2d0] sm:$0xff]
    %v1684 = vld [vmem:[%s10 + $0x2d8] sm:$0xff]
    %v1685 = vld [vmem:[%s10 + $0x2e0] sm:$0xff]
    %v1686 = vld [vmem:[%s10 + $0x2e8] sm:$0xff]
    %v1687 = vld [vmem:[%s10 + $0x2f0] sm:$0xff]
    %v1688 = vld [vmem:[%s10 + $0x2f8] sm:$0xff]
    %v1689 = vld [vmem:[%s10 + $0x300] sm:$0xff]
    %v1690 = vld [vmem:[%s10 + $0x308] sm:$0xff]
    %v1691 = vld [vmem:[%s10 + $0x310] sm:$0xff]
    %v1692 = vld [vmem:[%s10 + $0x318] sm:$0xff]
    %v1693 = vld [vmem:[%s10 + $0x320] sm:$0xff]
    %v1694 = vld [vmem:[%s10 + $0x328] sm:$0xff]
    %v1695 = vld [vmem:[%s10 + $0x330] sm:$0xff]
    %v1696 = vld [vmem:[%s10 + $0x338] sm:$0xff]
    %v1697 = vld [vmem:[%s10 + $0x340] sm:$0xff]
    %v1698 = vld [vmem:[%s10 + $0x348] sm:$0xff]
    %v1699 = vld [vmem:[%s10 + $0x350] sm:$0xff]
    %v1700 = vld [vmem:[%s10 + $0x358] sm:$0xff]
    %v1701 = vld [vmem:[%s10 + $0x360] sm:$0xff]
    %v1702 = vld [vmem:[%s10 + $0x368] sm:$0xff]
    %v1703 = vld [vmem:[%s10 + $0x370] sm:$0xff]
    %v1704 = vld [vmem:[%s10 + $0x378] sm:$0xff]
    %v1705 = vld [vmem:[%s10 + $0x380] sm:$0xff]
    %v1706 = vld [vmem:[%s10 + $0x388] sm:$0xff]
    %v1707 = vld [vmem:[%s10 + $0x390] sm:$0xff]
    %v1708 = vld [vmem:[%s10 + $0x398] sm:$0xff]
    %v1709 = vld [vmem:[%s10 + $0x3a0] sm:$0xff]
    %v1710 = vld [vmem:[%s10 + $0x3a8] sm:$0xff]
    %v1711 = vld [vmem:[%s10 + $0x3b0] sm:$0xff]
    %v1712 = vld [vmem:[%s10 + $0x3b8] sm:$0xff]
    %v1713 = vld [vmem:[%s10 + $0x3c0] sm:$0xff]
    %v1714 = vld [vmem:[%s10 + $0x3c8] sm:$0xff]
    %v1715 = vld [vmem:[%s10 + $0x3d0] sm:$0xff]
    %v1716 = vld [vmem:[%s10 + $0x3d8] sm:$0xff]
    %v1717 = vld [vmem:[%s10 + $0x3e0] sm:$0xff]
    %v1718 = vunpack.c.l.s8.bf16 %v1593
    %v1719 = vunpack.c.h.s8.bf16 %v1593
    %v1720 = vunpack.c.l.s8.bf16 %v1594
    %v1721 = vunpack.c.h.s8.bf16 %v1594
    %v1722 = vunpack.c.l.s8.bf16 %v1595
    %v1723 = vunpack.c.h.s8.bf16 %v1595
    %v1724 = vunpack.c.l.s8.bf16 %v1596
    %v1725 = vunpack.c.h.s8.bf16 %v1596
    %v1726 = vunpack.c.l.s8.bf16 %v1597
    %v1727 = vunpack.c.h.s8.bf16 %v1597
    %v1728 = vunpack.c.l.s8.bf16 %v1598
    %v1729 = vunpack.c.h.s8.bf16 %v1598
    %v1730 = vunpack.c.l.s8.bf16 %v1599
    %v1731 = vunpack.c.h.s8.bf16 %v1599
    %v1732 = vunpack.c.l.s8.bf16 %v1600
    %v1733 = vunpack.c.h.s8.bf16 %v1600
    %v1734 = vunpack.c.l.s8.bf16 %v1601
    %v1735 = vunpack.c.h.s8.bf16 %v1601
    %v1736 = vunpack.c.l.s8.bf16 %v1602
    %v1737 = vunpack.c.h.s8.bf16 %v1602
    %v1738 = vunpack.c.l.s8.bf16 %v1603
    %v1739 = vunpack.c.h.s8.bf16 %v1603
    %v1740 = vunpack.c.l.s8.bf16 %v1604
    %v1741 = vunpack.c.h.s8.bf16 %v1604
    %v1742 = vunpack.c.l.s8.bf16 %v1605
    %v1743 = vunpack.c.h.s8.bf16 %v1605
    %v1744 = vunpack.c.l.s8.bf16 %v1606
    %v1745 = vunpack.c.h.s8.bf16 %v1606
    %v1746 = vunpack.c.l.s8.bf16 %v1607
    %v1747 = vunpack.c.h.s8.bf16 %v1607
    %v1748 = vunpack.c.l.s8.bf16 %v1608
    %v1749 = vunpack.c.h.s8.bf16 %v1608
    %v1750 = vunpack.c.l.s8.bf16 %v1609
    %v1751 = vunpack.c.h.s8.bf16 %v1609
    %v1752 = vunpack.c.l.s8.bf16 %v1610
    %v1753 = vunpack.c.h.s8.bf16 %v1610
    %v1754 = vunpack.c.l.s8.bf16 %v1611
    %v1755 = vunpack.c.h.s8.bf16 %v1611
    %v1756 = vunpack.c.l.s8.bf16 %v1612
    %v1757 = vunpack.c.h.s8.bf16 %v1612
    %v1758 = vunpack.c.l.s8.bf16 %v1613
    %v1759 = vunpack.c.h.s8.bf16 %v1613
    %v1760 = vunpack.c.l.s8.bf16 %v1614
    %v1761 = vunpack.c.h.s8.bf16 %v1614
    %v1762 = vunpack.c.l.s8.bf16 %v1615
    %v1763 = vunpack.c.h.s8.bf16 %v1615
    %v1764 = vunpack.c.l.s8.bf16 %v1616
    %v1765 = vunpack.c.h.s8.bf16 %v1616
    %v1766 = vunpack.c.l.s8.bf16 %v1617
    %v1767 = vunpack.c.h.s8.bf16 %v1617
    %v1768 = vunpack.c.l.s8.bf16 %v1618
    %v1769 = vunpack.c.h.s8.bf16 %v1618
    %v1770 = vunpack.c.l.s8.bf16 %v1619
    %v1771 = vunpack.c.h.s8.bf16 %v1619
    %v1772 = vunpack.c.l.s8.bf16 %v1620
    %v1773 = vunpack.c.h.s8.bf16 %v1620
    %v1774 = vunpack.c.l.s8.bf16 %v1621
    %v1775 = vunpack.c.h.s8.bf16 %v1621
    %v1776 = vunpack.c.l.s8.bf16 %v1622
    %v1777 = vunpack.c.h.s8.bf16 %v1622
    %v1778 = vunpack.c.l.s8.bf16 %v1623
    %v1779 = vunpack.c.h.s8.bf16 %v1623
    %v1780 = vunpack.c.l.s8.bf16 %v1624
    %v1781 = vunpack.c.h.s8.bf16 %v1624
    %v1782 = vunpack.c.l.s8.bf16 %v1625
    %v1783 = vunpack.c.h.s8.bf16 %v1625
    %v1784 = vunpack.c.l.s8.bf16 %v1626
    %v1785 = vunpack.c.h.s8.bf16 %v1626
    %v1786 = vunpack.c.l.s8.bf16 %v1627
    %v1787 = vunpack.c.h.s8.bf16 %v1627
    %v1788 = vunpack.c.l.s8.bf16 %v1628
    %v1789 = vunpack.c.h.s8.bf16 %v1628
    %v1790 = vunpack.c.l.s8.bf16 %v1629
    %v1791 = vunpack.c.h.s8.bf16 %v1629
    %v1792 = vunpack.c.l.s8.bf16 %v1630
    %v1793 = vunpack.c.h.s8.bf16 %v1630
    %v1794 = vunpack.c.l.s8.bf16 %v1631
    %v1795 = vunpack.c.h.s8.bf16 %v1631
    %v1796 = vunpack.c.l.s8.bf16 %v1632
    %v1797 = vunpack.c.h.s8.bf16 %v1632
    %v1798 = vunpack.c.l.s8.bf16 %v1633
    %v1799 = vunpack.c.h.s8.bf16 %v1633
    %v1800 = vunpack.c.l.s8.bf16 %v1634
    %v1801 = vunpack.c.h.s8.bf16 %v1634
    %v1802 = vunpack.c.l.s8.bf16 %v1635
    %v1803 = vunpack.c.h.s8.bf16 %v1635
    %v1804 = vunpack.c.l.s8.bf16 %v1636
    %v1805 = vunpack.c.h.s8.bf16 %v1636
    %v1806 = vunpack.c.l.s8.bf16 %v1637
    %v1807 = vunpack.c.h.s8.bf16 %v1637
    %v1808 = vunpack.c.l.s8.bf16 %v1638
    %v1809 = vunpack.c.h.s8.bf16 %v1638
    %v1810 = vunpack.c.l.s8.bf16 %v1639
    %v1811 = vunpack.c.h.s8.bf16 %v1639
    %v1812 = vunpack.c.l.s8.bf16 %v1640
    %v1813 = vunpack.c.h.s8.bf16 %v1640
    %v1814 = vunpack.c.l.s8.bf16 %v1641
    %v1815 = vunpack.c.h.s8.bf16 %v1641
    %v1816 = vunpack.c.l.s8.bf16 %v1642
    %v1817 = vunpack.c.h.s8.bf16 %v1642
    %v1818 = vunpack.c.l.s8.bf16 %v1643
    %v1819 = vunpack.c.h.s8.bf16 %v1643
    %v1820 = vunpack.c.l.s8.bf16 %v1644
    %v1821 = vunpack.c.h.s8.bf16 %v1644
    %v1822 = vunpack.c.l.s8.bf16 %v1645
    %v1823 = vunpack.c.h.s8.bf16 %v1645
    %v1824 = vunpack.c.l.s8.bf16 %v1646
    %v1825 = vunpack.c.h.s8.bf16 %v1646
    %v1826 = vunpack.c.l.s8.bf16 %v1647
    %v1827 = vunpack.c.h.s8.bf16 %v1647
    %v1828 = vunpack.c.l.s8.bf16 %v1648
    %v1829 = vunpack.c.h.s8.bf16 %v1648
    %v1830 = vunpack.c.l.s8.bf16 %v1649
    %v1831 = vunpack.c.h.s8.bf16 %v1649
    %v1832 = vunpack.c.l.s8.bf16 %v1650
    %v1833 = vunpack.c.h.s8.bf16 %v1650
    %v1834 = vunpack.c.l.s8.bf16 %v1651
    %v1835 = vunpack.c.h.s8.bf16 %v1651
    %v1836 = vunpack.c.l.s8.bf16 %v1652
    %v1837 = vunpack.c.h.s8.bf16 %v1652
    %v1838 = vunpack.c.l.s8.bf16 %v1653
    %v1839 = vunpack.c.h.s8.bf16 %v1653
    %v1840 = vunpack.c.l.s8.bf16 %v1654
    %v1841 = vunpack.c.h.s8.bf16 %v1654
    %v1842 = vunpack.c.l.s8.bf16 %v1655
    %v1843 = vunpack.c.h.s8.bf16 %v1655
    %v1844 = vunpack.c.l.s8.bf16 %v1656
    %v1845 = vunpack.c.h.s8.bf16 %v1656
    %v1846 = vunpack.c.l.s8.bf16 %v1657
    %v1847 = vunpack.c.h.s8.bf16 %v1657
    %v1848 = vunpack.c.l.s8.bf16 %v1658
    %v1849 = vunpack.c.h.s8.bf16 %v1658
    %v1850 = vunpack.c.l.s8.bf16 %v1659
    %v1851 = vunpack.c.h.s8.bf16 %v1659
    %v1852 = vunpack.c.l.s8.bf16 %v1660
    %v1853 = vunpack.c.h.s8.bf16 %v1660
    %v1854 = vunpack.c.l.s8.bf16 %v1661
    %v1855 = vunpack.c.h.s8.bf16 %v1661
    %v1856 = vunpack.c.l.s8.bf16 %v1662
    %v1857 = vunpack.c.h.s8.bf16 %v1662
    %v1858 = vunpack.c.l.s8.bf16 %v1663
    %v1859 = vunpack.c.h.s8.bf16 %v1663
    %v1860 = vunpack.c.l.s8.bf16 %v1664
    %v1861 = vunpack.c.h.s8.bf16 %v1664
    %v1862 = vunpack.c.l.s8.bf16 %v1665
    %v1863 = vunpack.c.h.s8.bf16 %v1665
    %v1864 = vunpack.c.l.s8.bf16 %v1666
    %v1865 = vunpack.c.h.s8.bf16 %v1666
    %v1866 = vunpack.c.l.s8.bf16 %v1667
    %v1867 = vunpack.c.h.s8.bf16 %v1667
    %v1868 = vunpack.c.l.s8.bf16 %v1668
    %v1869 = vunpack.c.h.s8.bf16 %v1668
    %v1870 = vunpack.c.l.s8.bf16 %v1669
    %v1871 = vunpack.c.h.s8.bf16 %v1669
    %v1872 = vunpack.c.l.s8.bf16 %v1670
    %v1873 = vunpack.c.h.s8.bf16 %v1670
    %v1874 = vunpack.c.l.s8.bf16 %v1671
    %v1875 = vunpack.c.h.s8.bf16 %v1671
    %v1876 = vunpack.c.l.s8.bf16 %v1672
    %v1877 = vunpack.c.h.s8.bf16 %v1672
    %v1878 = vunpack.c.l.s8.bf16 %v1673
    %v1879 = vunpack.c.h.s8.bf16 %v1673
    %v1880 = vunpack.c.l.s8.bf16 %v1674
    %v1881 = vunpack.c.h.s8.bf16 %v1674
    %v1882 = vunpack.c.l.s8.bf16 %v1675
    %v1883 = vunpack.c.h.s8.bf16 %v1675
    %v1884 = vunpack.c.l.s8.bf16 %v1676
    %v1885 = vunpack.c.h.s8.bf16 %v1676
    %v1886 = vunpack.c.l.s8.bf16 %v1677
    %v1887 = vunpack.c.h.s8.bf16 %v1677
    %v1888 = vunpack.c.l.s8.bf16 %v1678
    %v1889 = vunpack.c.h.s8.bf16 %v1678
    %v1890 = vunpack.c.l.s8.bf16 %v1679
    %v1891 = vunpack.c.h.s8.bf16 %v1679
    %v1892 = vunpack.c.l.s8.bf16 %v1680
    %v1893 = vunpack.c.h.s8.bf16 %v1680
    %v1894 = vunpack.c.l.s8.bf16 %v1681
    %v1895 = vunpack.c.h.s8.bf16 %v1681
    %v1896 = vunpack.c.l.s8.bf16 %v1682
    %v1897 = vunpack.c.h.s8.bf16 %v1682
    %v1898 = vunpack.c.l.s8.bf16 %v1683
    %v1899 = vunpack.c.h.s8.bf16 %v1683
    %v1900 = vunpack.c.l.s8.bf16 %v1684
    %v1901 = vunpack.c.h.s8.bf16 %v1684
    %v1902 = vunpack.c.l.s8.bf16 %v1685
    %v1903 = vunpack.c.h.s8.bf16 %v1685
    %v1904 = vunpack.c.l.s8.bf16 %v1686
    %v1905 = vunpack.c.h.s8.bf16 %v1686
    %v1906 = vunpack.c.l.s8.bf16 %v1687
    %v1907 = vunpack.c.h.s8.bf16 %v1687
    %v1908 = vunpack.c.l.s8.bf16 %v1688
    %v1909 = vunpack.c.h.s8.bf16 %v1688
    %v1910 = vunpack.c.l.s8.bf16 %v1689
    %v1911 = vunpack.c.h.s8.bf16 %v1689
    %v1912 = vunpack.c.l.s8.bf16 %v1690
    %v1913 = vunpack.c.h.s8.bf16 %v1690
    %v1914 = vunpack.c.l.s8.bf16 %v1691
    %v1915 = vunpack.c.h.s8.bf16 %v1691
    %v1916 = vunpack.c.l.s8.bf16 %v1692
    %v1917 = vunpack.c.h.s8.bf16 %v1692
    %v1918 = vunpack.c.l.s8.bf16 %v1693
    %v1919 = vunpack.c.h.s8.bf16 %v1693
    %v1920 = vunpack.c.l.s8.bf16 %v1694
    %v1921 = vunpack.c.h.s8.bf16 %v1694
    %v1922 = vunpack.c.l.s8.bf16 %v1695
    %v1923 = vunpack.c.h.s8.bf16 %v1695
    %v1924 = vunpack.c.l.s8.bf16 %v1696
    %v1925 = vunpack.c.h.s8.bf16 %v1696
    %v1926 = vunpack.c.l.s8.bf16 %v1697
    %v1927 = vunpack.c.h.s8.bf16 %v1697
    %v1928 = vunpack.c.l.s8.bf16 %v1698
    %v1929 = vunpack.c.h.s8.bf16 %v1698
    %v1930 = vunpack.c.l.s8.bf16 %v1699
    %v1931 = vunpack.c.h.s8.bf16 %v1699
    %v1932 = vunpack.c.l.s8.bf16 %v1700
    %v1933 = vunpack.c.h.s8.bf16 %v1700
    %v1934 = vunpack.c.l.s8.bf16 %v1701
    %v1935 = vunpack.c.h.s8.bf16 %v1701
    %v1936 = vunpack.c.l.s8.bf16 %v1702
    %v1937 = vunpack.c.h.s8.bf16 %v1702
    %v1938 = vunpack.c.l.s8.bf16 %v1703
    %v1939 = vunpack.c.h.s8.bf16 %v1703
    %v1940 = vunpack.c.l.s8.bf16 %v1704
    %v1941 = vunpack.c.h.s8.bf16 %v1704
    %v1942 = vunpack.c.l.s8.bf16 %v1705
    %v1943 = vunpack.c.h.s8.bf16 %v1705
    %v1944 = vunpack.c.l.s8.bf16 %v1706
    %v1945 = vunpack.c.h.s8.bf16 %v1706
    %v1946 = vunpack.c.l.s8.bf16 %v1707
    %v1947 = vunpack.c.h.s8.bf16 %v1707
    %v1948 = vunpack.c.l.s8.bf16 %v1708
    %v1949 = vunpack.c.h.s8.bf16 %v1708
    %v1950 = vunpack.c.l.s8.bf16 %v1709
    %v1951 = vunpack.c.h.s8.bf16 %v1709
    %v1952 = vunpack.c.l.s8.bf16 %v1710
    %v1953 = vunpack.c.h.s8.bf16 %v1710
    %v1954 = vunpack.c.l.s8.bf16 %v1711
    %v1955 = vunpack.c.h.s8.bf16 %v1711
    %v1956 = vunpack.c.l.s8.bf16 %v1712
    %v1957 = vunpack.c.h.s8.bf16 %v1712
    %v1958 = vunpack.c.l.s8.bf16 %v1713
    %v1959 = vunpack.c.h.s8.bf16 %v1713
    %v1960 = vunpack.c.l.s8.bf16 %v1714
    %v1961 = vunpack.c.h.s8.bf16 %v1714
    %v1962 = vunpack.c.l.s8.bf16 %v1715
    %v1963 = vunpack.c.h.s8.bf16 %v1715
    %v1964 = vunpack.c.l.s8.bf16 %v1716
    %v1965 = vunpack.c.h.s8.bf16 %v1716
    %v1966 = vunpack.c.l.s8.bf16 %v1717
    %v1967 = vunpack.c.h.s8.bf16 %v1717
    %v2218 = vunpack.c.l.b16 %v1718
    %v2219 = vunpack.c.h.b16 %v1718
    %v2220 = vunpack.c.l.b16 %v1719
    %v2221 = vunpack.c.h.b16 %v1719
    %v2222 = vunpack.c.l.b16 %v1720
    %v2223 = vunpack.c.h.b16 %v1720
    %v2224 = vunpack.c.l.b16 %v1721
    %v2225 = vunpack.c.h.b16 %v1721
    %v2226 = vunpack.c.l.b16 %v1722
    %v2227 = vunpack.c.h.b16 %v1722
    %v2228 = vunpack.c.l.b16 %v1723
    %v2229 = vunpack.c.h.b16 %v1723
    %v2230 = vunpack.c.l.b16 %v1724
    %v2231 = vunpack.c.h.b16 %v1724
    %v2232 = vunpack.c.l.b16 %v1725
    %v2233 = vunpack.c.h.b16 %v1725
    %v2234 = vunpack.c.l.b16 %v1726
    %v2235 = vunpack.c.h.b16 %v1726
    %v2236 = vunpack.c.l.b16 %v1727
    %v2237 = vunpack.c.h.b16 %v1727
    %v2238 = vunpack.c.l.b16 %v1728
    %v2239 = vunpack.c.h.b16 %v1728
    %v2240 = vunpack.c.l.b16 %v1729
    %v2241 = vunpack.c.h.b16 %v1729
    %v2242 = vunpack.c.l.b16 %v1730
    %v2243 = vunpack.c.h.b16 %v1730
    %v2244 = vunpack.c.l.b16 %v1731
    %v2245 = vunpack.c.h.b16 %v1731
    %v2246 = vunpack.c.l.b16 %v1732
    %v2247 = vunpack.c.h.b16 %v1732
    %v2248 = vunpack.c.l.b16 %v1733
    %v2249 = vunpack.c.h.b16 %v1733
    %v2250 = vunpack.c.l.b16 %v1734
    %v2251 = vunpack.c.h.b16 %v1734
    %v2252 = vunpack.c.l.b16 %v1735
    %v2253 = vunpack.c.h.b16 %v1735
    %v2254 = vunpack.c.l.b16 %v1736
    %v2255 = vunpack.c.h.b16 %v1736
    %v2256 = vunpack.c.l.b16 %v1737
    %v2257 = vunpack.c.h.b16 %v1737
    %v2258 = vunpack.c.l.b16 %v1738
    %v2259 = vunpack.c.h.b16 %v1738
    %v2260 = vunpack.c.l.b16 %v1739
    %v2261 = vunpack.c.h.b16 %v1739
    %v2262 = vunpack.c.l.b16 %v1740
    %v2263 = vunpack.c.h.b16 %v1740
    %v2264 = vunpack.c.l.b16 %v1741
    %v2265 = vunpack.c.h.b16 %v1741
    %v2266 = vunpack.c.l.b16 %v1742
    %v2267 = vunpack.c.h.b16 %v1742
    %v2268 = vunpack.c.l.b16 %v1743
    %v2269 = vunpack.c.h.b16 %v1743
    %v2270 = vunpack.c.l.b16 %v1744
    %v2271 = vunpack.c.h.b16 %v1744
    %v2272 = vunpack.c.l.b16 %v1745
    %v2273 = vunpack.c.h.b16 %v1745
    %v2274 = vunpack.c.l.b16 %v1746
    %v2275 = vunpack.c.h.b16 %v1746
    %v2276 = vunpack.c.l.b16 %v1747
    %v2277 = vunpack.c.h.b16 %v1747
    %v2278 = vunpack.c.l.b16 %v1748
    %v2279 = vunpack.c.h.b16 %v1748
    %v2280 = vunpack.c.l.b16 %v1749
    %v2281 = vunpack.c.h.b16 %v1749
    %v2282 = vunpack.c.l.b16 %v1750
    %v2283 = vunpack.c.h.b16 %v1750
    %v2284 = vunpack.c.l.b16 %v1751
    %v2285 = vunpack.c.h.b16 %v1751
    %v2286 = vunpack.c.l.b16 %v1752
    %v2287 = vunpack.c.h.b16 %v1752
    %v2288 = vunpack.c.l.b16 %v1753
    %v2289 = vunpack.c.h.b16 %v1753
    %v2290 = vunpack.c.l.b16 %v1754
    %v2291 = vunpack.c.h.b16 %v1754
    %v2292 = vunpack.c.l.b16 %v1755
    %v2293 = vunpack.c.h.b16 %v1755
    %v2294 = vunpack.c.l.b16 %v1756
    %v2295 = vunpack.c.h.b16 %v1756
    %v2296 = vunpack.c.l.b16 %v1757
    %v2297 = vunpack.c.h.b16 %v1757
    %v2298 = vunpack.c.l.b16 %v1758
    %v2299 = vunpack.c.h.b16 %v1758
    %v2300 = vunpack.c.l.b16 %v1759
    %v2301 = vunpack.c.h.b16 %v1759
    %v2302 = vunpack.c.l.b16 %v1760
    %v2303 = vunpack.c.h.b16 %v1760
    %v2304 = vunpack.c.l.b16 %v1761
    %v2305 = vunpack.c.h.b16 %v1761
    %v2306 = vunpack.c.l.b16 %v1762
    %v2307 = vunpack.c.h.b16 %v1762
    %v2308 = vunpack.c.l.b16 %v1763
    %v2309 = vunpack.c.h.b16 %v1763
    %v2310 = vunpack.c.l.b16 %v1764
    %v2311 = vunpack.c.h.b16 %v1764
    %v2312 = vunpack.c.l.b16 %v1765
    %v2313 = vunpack.c.h.b16 %v1765
    %v2314 = vunpack.c.l.b16 %v1766
    %v2315 = vunpack.c.h.b16 %v1766
    %v2316 = vunpack.c.l.b16 %v1767
    %v2317 = vunpack.c.h.b16 %v1767
    %v2318 = vunpack.c.l.b16 %v1768
    %v2319 = vunpack.c.h.b16 %v1768
    %v2320 = vunpack.c.l.b16 %v1769
    %v2321 = vunpack.c.h.b16 %v1769
    %v2322 = vunpack.c.l.b16 %v1770
    %v2323 = vunpack.c.h.b16 %v1770
    %v2324 = vunpack.c.l.b16 %v1771
    %v2325 = vunpack.c.h.b16 %v1771
    %v2326 = vunpack.c.l.b16 %v1772
    %v2327 = vunpack.c.h.b16 %v1772
    %v2328 = vunpack.c.l.b16 %v1773
    %v2329 = vunpack.c.h.b16 %v1773
    %v2330 = vunpack.c.l.b16 %v1774
    %v2331 = vunpack.c.h.b16 %v1774
    %v2332 = vunpack.c.l.b16 %v1775
    %v2333 = vunpack.c.h.b16 %v1775
    %v2334 = vunpack.c.l.b16 %v1776
    %v2335 = vunpack.c.h.b16 %v1776
    %v2336 = vunpack.c.l.b16 %v1777
    %v2337 = vunpack.c.h.b16 %v1777
    %v2338 = vunpack.c.l.b16 %v1778
    %v2339 = vunpack.c.h.b16 %v1778
    %v2340 = vunpack.c.l.b16 %v1779
    %v2341 = vunpack.c.h.b16 %v1779
    %v2342 = vunpack.c.l.b16 %v1780
    %v2343 = vunpack.c.h.b16 %v1780
    %v2344 = vunpack.c.l.b16 %v1781
    %v2345 = vunpack.c.h.b16 %v1781
    %v2346 = vunpack.c.l.b16 %v1782
    %v2347 = vunpack.c.h.b16 %v1782
    %v2348 = vunpack.c.l.b16 %v1783
    %v2349 = vunpack.c.h.b16 %v1783
    %v2350 = vunpack.c.l.b16 %v1784
    %v2351 = vunpack.c.h.b16 %v1784
    %v2352 = vunpack.c.l.b16 %v1785
    %v2353 = vunpack.c.h.b16 %v1785
    %v2354 = vunpack.c.l.b16 %v1786
    %v2355 = vunpack.c.h.b16 %v1786
    %v2356 = vunpack.c.l.b16 %v1787
    %v2357 = vunpack.c.h.b16 %v1787
    %v2358 = vunpack.c.l.b16 %v1788
    %v2359 = vunpack.c.h.b16 %v1788
    %v2360 = vunpack.c.l.b16 %v1789
    %v2361 = vunpack.c.h.b16 %v1789
    %v2362 = vunpack.c.l.b16 %v1790
    %v2363 = vunpack.c.h.b16 %v1790
    %v2364 = vunpack.c.l.b16 %v1791
    %v2365 = vunpack.c.h.b16 %v1791
    %v2366 = vunpack.c.l.b16 %v1792
    %v2367 = vunpack.c.h.b16 %v1792
    %v2368 = vunpack.c.l.b16 %v1793
    %v2369 = vunpack.c.h.b16 %v1793
    %v2370 = vunpack.c.l.b16 %v1794
    %v2371 = vunpack.c.h.b16 %v1794
    %v2372 = vunpack.c.l.b16 %v1795
    %v2373 = vunpack.c.h.b16 %v1795
    %v2374 = vunpack.c.l.b16 %v1796
    %v2375 = vunpack.c.h.b16 %v1796
    %v2376 = vunpack.c.l.b16 %v1797
    %v2377 = vunpack.c.h.b16 %v1797
    %v2378 = vunpack.c.l.b16 %v1798
    %v2379 = vunpack.c.h.b16 %v1798
    %v2380 = vunpack.c.l.b16 %v1799
    %v2381 = vunpack.c.h.b16 %v1799
    %v2382 = vunpack.c.l.b16 %v1800
    %v2383 = vunpack.c.h.b16 %v1800
    %v2384 = vunpack.c.l.b16 %v1801
    %v2385 = vunpack.c.h.b16 %v1801
    %v2386 = vunpack.c.l.b16 %v1802
    %v2387 = vunpack.c.h.b16 %v1802
    %v2388 = vunpack.c.l.b16 %v1803
    %v2389 = vunpack.c.h.b16 %v1803
    %v2390 = vunpack.c.l.b16 %v1804
    %v2391 = vunpack.c.h.b16 %v1804
    %v2392 = vunpack.c.l.b16 %v1805
    %v2393 = vunpack.c.h.b16 %v1805
    %v2394 = vunpack.c.l.b16 %v1806
    %v2395 = vunpack.c.h.b16 %v1806
    %v2396 = vunpack.c.l.b16 %v1807
    %v2397 = vunpack.c.h.b16 %v1807
    %v2398 = vunpack.c.l.b16 %v1808
    %v2399 = vunpack.c.h.b16 %v1808
    %v2400 = vunpack.c.l.b16 %v1809
    %v2401 = vunpack.c.h.b16 %v1809
    %v2402 = vunpack.c.l.b16 %v1810
    %v2403 = vunpack.c.h.b16 %v1810
    %v2404 = vunpack.c.l.b16 %v1811
    %v2405 = vunpack.c.h.b16 %v1811
    %v2406 = vunpack.c.l.b16 %v1812
    %v2407 = vunpack.c.h.b16 %v1812
    %v2408 = vunpack.c.l.b16 %v1813
    %v2409 = vunpack.c.h.b16 %v1813
    %v2410 = vunpack.c.l.b16 %v1814
    %v2411 = vunpack.c.h.b16 %v1814
    %v2412 = vunpack.c.l.b16 %v1815
    %v2413 = vunpack.c.h.b16 %v1815
    %v2414 = vunpack.c.l.b16 %v1816
    %v2415 = vunpack.c.h.b16 %v1816
    %v2416 = vunpack.c.l.b16 %v1817
    %v2417 = vunpack.c.h.b16 %v1817
    %v2418 = vunpack.c.l.b16 %v1818
    %v2419 = vunpack.c.h.b16 %v1818
    %v2420 = vunpack.c.l.b16 %v1819
    %v2421 = vunpack.c.h.b16 %v1819
    %v2422 = vunpack.c.l.b16 %v1820
    %v2423 = vunpack.c.h.b16 %v1820
    %v2424 = vunpack.c.l.b16 %v1821
    %v2425 = vunpack.c.h.b16 %v1821
    %v2426 = vunpack.c.l.b16 %v1822
    %v2427 = vunpack.c.h.b16 %v1822
    %v2428 = vunpack.c.l.b16 %v1823
    %v2429 = vunpack.c.h.b16 %v1823
    %v2430 = vunpack.c.l.b16 %v1824
    %v2431 = vunpack.c.h.b16 %v1824
    %v2432 = vunpack.c.l.b16 %v1825
    %v2433 = vunpack.c.h.b16 %v1825
    %v2434 = vunpack.c.l.b16 %v1826
    %v2435 = vunpack.c.h.b16 %v1826
    %v2436 = vunpack.c.l.b16 %v1827
    %v2437 = vunpack.c.h.b16 %v1827
    %v2438 = vunpack.c.l.b16 %v1828
    %v2439 = vunpack.c.h.b16 %v1828
    %v2440 = vunpack.c.l.b16 %v1829
    %v2441 = vunpack.c.h.b16 %v1829
    %v2442 = vunpack.c.l.b16 %v1830
    %v2443 = vunpack.c.h.b16 %v1830
    %v2444 = vunpack.c.l.b16 %v1831
    %v2445 = vunpack.c.h.b16 %v1831
    %v2446 = vunpack.c.l.b16 %v1832
    %v2447 = vunpack.c.h.b16 %v1832
    %v2448 = vunpack.c.l.b16 %v1833
    %v2449 = vunpack.c.h.b16 %v1833
    %v2450 = vunpack.c.l.b16 %v1834
    %v2451 = vunpack.c.h.b16 %v1834
    %v2452 = vunpack.c.l.b16 %v1835
    %v2453 = vunpack.c.h.b16 %v1835
    %v2454 = vunpack.c.l.b16 %v1836
    %v2455 = vunpack.c.h.b16 %v1836
    %v2456 = vunpack.c.l.b16 %v1837
    %v2457 = vunpack.c.h.b16 %v1837
    %v2458 = vunpack.c.l.b16 %v1838
    %v2459 = vunpack.c.h.b16 %v1838
    %v2460 = vunpack.c.l.b16 %v1839
    %v2461 = vunpack.c.h.b16 %v1839
    %v2462 = vunpack.c.l.b16 %v1840
    %v2463 = vunpack.c.h.b16 %v1840
    %v2464 = vunpack.c.l.b16 %v1841
    %v2465 = vunpack.c.h.b16 %v1841
    %v2466 = vunpack.c.l.b16 %v1842
    %v2467 = vunpack.c.h.b16 %v1842
    %v2468 = vunpack.c.l.b16 %v1843
    %v2469 = vunpack.c.h.b16 %v1843
    %v2470 = vunpack.c.l.b16 %v1844
    %v2471 = vunpack.c.h.b16 %v1844
    %v2472 = vunpack.c.l.b16 %v1845
    %v2473 = vunpack.c.h.b16 %v1845
    %v2474 = vunpack.c.l.b16 %v1846
    %v2475 = vunpack.c.h.b16 %v1846
    %v2476 = vunpack.c.l.b16 %v1847
    %v2477 = vunpack.c.h.b16 %v1847
    %v2478 = vunpack.c.l.b16 %v1848
    %v2479 = vunpack.c.h.b16 %v1848
    %v2480 = vunpack.c.l.b16 %v1849
    %v2481 = vunpack.c.h.b16 %v1849
    %v2482 = vunpack.c.l.b16 %v1850
    %v2483 = vunpack.c.h.b16 %v1850
    %v2484 = vunpack.c.l.b16 %v1851
    %v2485 = vunpack.c.h.b16 %v1851
    %v2486 = vunpack.c.l.b16 %v1852
    %v2487 = vunpack.c.h.b16 %v1852
    %v2488 = vunpack.c.l.b16 %v1853
    %v2489 = vunpack.c.h.b16 %v1853
    %v2490 = vunpack.c.l.b16 %v1854
    %v2491 = vunpack.c.h.b16 %v1854
    %v2492 = vunpack.c.l.b16 %v1855
    %v2493 = vunpack.c.h.b16 %v1855
    %v2494 = vunpack.c.l.b16 %v1856
    %v2495 = vunpack.c.h.b16 %v1856
    %v2496 = vunpack.c.l.b16 %v1857
    %v2497 = vunpack.c.h.b16 %v1857
    %v2498 = vunpack.c.l.b16 %v1858
    %v2499 = vunpack.c.h.b16 %v1858
    %v2500 = vunpack.c.l.b16 %v1859
    %v2501 = vunpack.c.h.b16 %v1859
    %v2502 = vunpack.c.l.b16 %v1860
    %v2503 = vunpack.c.h.b16 %v1860
    %v2504 = vunpack.c.l.b16 %v1861
    %v2505 = vunpack.c.h.b16 %v1861
    %v2506 = vunpack.c.l.b16 %v1862
    %v2507 = vunpack.c.h.b16 %v1862
    %v2508 = vunpack.c.l.b16 %v1863
    %v2509 = vunpack.c.h.b16 %v1863
    %v2510 = vunpack.c.l.b16 %v1864
    %v2511 = vunpack.c.h.b16 %v1864
    %v2512 = vunpack.c.l.b16 %v1865
    %v2513 = vunpack.c.h.b16 %v1865
    %v2514 = vunpack.c.l.b16 %v1866
    %v2515 = vunpack.c.h.b16 %v1866
    %v2516 = vunpack.c.l.b16 %v1867
    %v2517 = vunpack.c.h.b16 %v1867
    %v2518 = vunpack.c.l.b16 %v1868
    %v2519 = vunpack.c.h.b16 %v1868
    %v2520 = vunpack.c.l.b16 %v1869
    %v2521 = vunpack.c.h.b16 %v1869
    %v2522 = vunpack.c.l.b16 %v1870
    %v2523 = vunpack.c.h.b16 %v1870
    %v2524 = vunpack.c.l.b16 %v1871
    %v2525 = vunpack.c.h.b16 %v1871
    %v2526 = vunpack.c.l.b16 %v1872
    %v2527 = vunpack.c.h.b16 %v1872
    %v2528 = vunpack.c.l.b16 %v1873
    %v2529 = vunpack.c.h.b16 %v1873
    %v2530 = vunpack.c.l.b16 %v1874
    %v2531 = vunpack.c.h.b16 %v1874
    %v2532 = vunpack.c.l.b16 %v1875
    %v2533 = vunpack.c.h.b16 %v1875
    %v2534 = vunpack.c.l.b16 %v1876
    %v2535 = vunpack.c.h.b16 %v1876
    %v2536 = vunpack.c.l.b16 %v1877
    %v2537 = vunpack.c.h.b16 %v1877
    %v2538 = vunpack.c.l.b16 %v1878
    %v2539 = vunpack.c.h.b16 %v1878
    %v2540 = vunpack.c.l.b16 %v1879
    %v2541 = vunpack.c.h.b16 %v1879
    %v2542 = vunpack.c.l.b16 %v1880
    %v2543 = vunpack.c.h.b16 %v1880
    %v2544 = vunpack.c.l.b16 %v1881
    %v2545 = vunpack.c.h.b16 %v1881
    %v2546 = vunpack.c.l.b16 %v1882
    %v2547 = vunpack.c.h.b16 %v1882
    %v2548 = vunpack.c.l.b16 %v1883
    %v2549 = vunpack.c.h.b16 %v1883
    %v2550 = vunpack.c.l.b16 %v1884
    %v2551 = vunpack.c.h.b16 %v1884
    %v2552 = vunpack.c.l.b16 %v1885
    %v2553 = vunpack.c.h.b16 %v1885
    %v2554 = vunpack.c.l.b16 %v1886
    %v2555 = vunpack.c.h.b16 %v1886
    %v2556 = vunpack.c.l.b16 %v1887
    %v2557 = vunpack.c.h.b16 %v1887
    %v2558 = vunpack.c.l.b16 %v1888
    %v2559 = vunpack.c.h.b16 %v1888
    %v2560 = vunpack.c.l.b16 %v1889
    %v2561 = vunpack.c.h.b16 %v1889
    %v2562 = vunpack.c.l.b16 %v1890
    %v2563 = vunpack.c.h.b16 %v1890
    %v2564 = vunpack.c.l.b16 %v1891
    %v2565 = vunpack.c.h.b16 %v1891
    %v2566 = vunpack.c.l.b16 %v1892
    %v2567 = vunpack.c.h.b16 %v1892
    %v2568 = vunpack.c.l.b16 %v1893
    %v2569 = vunpack.c.h.b16 %v1893
    %v2570 = vunpack.c.l.b16 %v1894
    %v2571 = vunpack.c.h.b16 %v1894
    %v2572 = vunpack.c.l.b16 %v1895
    %v2573 = vunpack.c.h.b16 %v1895
    %v2574 = vunpack.c.l.b16 %v1896
    %v2575 = vunpack.c.h.b16 %v1896
    %v2576 = vunpack.c.l.b16 %v1897
    %v2577 = vunpack.c.h.b16 %v1897
    %v2578 = vunpack.c.l.b16 %v1898
    %v2579 = vunpack.c.h.b16 %v1898
    %v2580 = vunpack.c.l.b16 %v1899
    %v2581 = vunpack.c.h.b16 %v1899
    %v2582 = vunpack.c.l.b16 %v1900
    %v2583 = vunpack.c.h.b16 %v1900
    %v2584 = vunpack.c.l.b16 %v1901
    %v2585 = vunpack.c.h.b16 %v1901
    %v2586 = vunpack.c.l.b16 %v1902
    %v2587 = vunpack.c.h.b16 %v1902
    %v2588 = vunpack.c.l.b16 %v1903
    %v2589 = vunpack.c.h.b16 %v1903
    %v2590 = vunpack.c.l.b16 %v1904
    %v2591 = vunpack.c.h.b16 %v1904
    %v2592 = vunpack.c.l.b16 %v1905
    %v2593 = vunpack.c.h.b16 %v1905
    %v2594 = vunpack.c.l.b16 %v1906
    %v2595 = vunpack.c.h.b16 %v1906
    %v2596 = vunpack.c.l.b16 %v1907
    %v2597 = vunpack.c.h.b16 %v1907
    %v2598 = vunpack.c.l.b16 %v1908
    %v2599 = vunpack.c.h.b16 %v1908
    %v2600 = vunpack.c.l.b16 %v1909
    %v2601 = vunpack.c.h.b16 %v1909
    %v2602 = vunpack.c.l.b16 %v1910
    %v2603 = vunpack.c.h.b16 %v1910
    %v2604 = vunpack.c.l.b16 %v1911
    %v2605 = vunpack.c.h.b16 %v1911
    %v2606 = vunpack.c.l.b16 %v1912
    %v2607 = vunpack.c.h.b16 %v1912
    %v2608 = vunpack.c.l.b16 %v1913
    %v2609 = vunpack.c.h.b16 %v1913
    %v2610 = vunpack.c.l.b16 %v1914
    %v2611 = vunpack.c.h.b16 %v1914
    %v2612 = vunpack.c.l.b16 %v1915
    %v2613 = vunpack.c.h.b16 %v1915
    %v2614 = vunpack.c.l.b16 %v1916
    %v2615 = vunpack.c.h.b16 %v1916
    %v2616 = vunpack.c.l.b16 %v1917
    %v2617 = vunpack.c.h.b16 %v1917
    %v2618 = vunpack.c.l.b16 %v1918
    %v2619 = vunpack.c.h.b16 %v1918
    %v2620 = vunpack.c.l.b16 %v1919
    %v2621 = vunpack.c.h.b16 %v1919
    %v2622 = vunpack.c.l.b16 %v1920
    %v2623 = vunpack.c.h.b16 %v1920
    %v2624 = vunpack.c.l.b16 %v1921
    %v2625 = vunpack.c.h.b16 %v1921
    %v2626 = vunpack.c.l.b16 %v1922
    %v2627 = vunpack.c.h.b16 %v1922
    %v2628 = vunpack.c.l.b16 %v1923
    %v2629 = vunpack.c.h.b16 %v1923
    %v2630 = vunpack.c.l.b16 %v1924
    %v2631 = vunpack.c.h.b16 %v1924
    %v2632 = vunpack.c.l.b16 %v1925
    %v2633 = vunpack.c.h.b16 %v1925
    %v2634 = vunpack.c.l.b16 %v1926
    %v2635 = vunpack.c.h.b16 %v1926
    %v2636 = vunpack.c.l.b16 %v1927
    %v2637 = vunpack.c.h.b16 %v1927
    %v2638 = vunpack.c.l.b16 %v1928
    %v2639 = vunpack.c.h.b16 %v1928
    %v2640 = vunpack.c.l.b16 %v1929
    %v2641 = vunpack.c.h.b16 %v1929
    %v2642 = vunpack.c.l.b16 %v1930
    %v2643 = vunpack.c.h.b16 %v1930
    %v2644 = vunpack.c.l.b16 %v1931
    %v2645 = vunpack.c.h.b16 %v1931
    %v2646 = vunpack.c.l.b16 %v1932
    %v2647 = vunpack.c.h.b16 %v1932
    %v2648 = vunpack.c.l.b16 %v1933
    %v2649 = vunpack.c.h.b16 %v1933
    %v2650 = vunpack.c.l.b16 %v1934
    %v2651 = vunpack.c.h.b16 %v1934
    %v2652 = vunpack.c.l.b16 %v1935
    %v2653 = vunpack.c.h.b16 %v1935
    %v2654 = vunpack.c.l.b16 %v1936
    %v2655 = vunpack.c.h.b16 %v1936
    %v2656 = vunpack.c.l.b16 %v1937
    %v2657 = vunpack.c.h.b16 %v1937
    %v2658 = vunpack.c.l.b16 %v1938
    %v2659 = vunpack.c.h.b16 %v1938
    %v2660 = vunpack.c.l.b16 %v1939
    %v2661 = vunpack.c.h.b16 %v1939
    %v2662 = vunpack.c.l.b16 %v1940
    %v2663 = vunpack.c.h.b16 %v1940
    %v2664 = vunpack.c.l.b16 %v1941
    %v2665 = vunpack.c.h.b16 %v1941
    %v2666 = vunpack.c.l.b16 %v1942
    %v2667 = vunpack.c.h.b16 %v1942
    %v2668 = vunpack.c.l.b16 %v1943
    %v2669 = vunpack.c.h.b16 %v1943
    %v2670 = vunpack.c.l.b16 %v1944
    %v2671 = vunpack.c.h.b16 %v1944
    %v2672 = vunpack.c.l.b16 %v1945
    %v2673 = vunpack.c.h.b16 %v1945
    %v2674 = vunpack.c.l.b16 %v1946
    %v2675 = vunpack.c.h.b16 %v1946
    %v2676 = vunpack.c.l.b16 %v1947
    %v2677 = vunpack.c.h.b16 %v1947
    %v2678 = vunpack.c.l.b16 %v1948
    %v2679 = vunpack.c.h.b16 %v1948
    %v2680 = vunpack.c.l.b16 %v1949
    %v2681 = vunpack.c.h.b16 %v1949
    %v2682 = vunpack.c.l.b16 %v1950
    %v2683 = vunpack.c.h.b16 %v1950
    %v2684 = vunpack.c.l.b16 %v1951
    %v2685 = vunpack.c.h.b16 %v1951
    %v2686 = vunpack.c.l.b16 %v1952
    %v2687 = vunpack.c.h.b16 %v1952
    %v2688 = vunpack.c.l.b16 %v1953
    %v2689 = vunpack.c.h.b16 %v1953
    %v2690 = vunpack.c.l.b16 %v1954
    %v2691 = vunpack.c.h.b16 %v1954
    %v2692 = vunpack.c.l.b16 %v1955
    %v2693 = vunpack.c.h.b16 %v1955
    %v2694 = vunpack.c.l.b16 %v1956
    %v2695 = vunpack.c.h.b16 %v1956
    %v2696 = vunpack.c.l.b16 %v1957
    %v2697 = vunpack.c.h.b16 %v1957
    %v2698 = vunpack.c.l.b16 %v1958
    %v2699 = vunpack.c.h.b16 %v1958
    %v2700 = vunpack.c.l.b16 %v1959
    %v2701 = vunpack.c.h.b16 %v1959
    %v2702 = vunpack.c.l.b16 %v1960
    %v2703 = vunpack.c.h.b16 %v1960
    %v2704 = vunpack.c.l.b16 %v1961
    %v2705 = vunpack.c.h.b16 %v1961
    %v2706 = vunpack.c.l.b16 %v1962
    %v2707 = vunpack.c.h.b16 %v1962
    %v2708 = vunpack.c.l.b16 %v1963
    %v2709 = vunpack.c.h.b16 %v1963
    %v2710 = vunpack.c.l.b16 %v1964
    %v2711 = vunpack.c.h.b16 %v1964
    %v2712 = vunpack.c.l.b16 %v1965
    %v2713 = vunpack.c.h.b16 %v1965
    %v2714 = vunpack.c.l.b16 %v1966
    %v2715 = vunpack.c.h.b16 %v1966
    %v2716 = vunpack.c.l.b16 %v1967
    %v2717 = vunpack.c.h.b16 %v1967
    %v2718 = vpack.c.b16 %v2222, %v2218
    %v2719 = vpack.c.b16 %v2223, %v2219
    %v2720 = vpack.c.b16 %v2224, %v2220
    %v2721 = vpack.c.b16 %v2225, %v2221
    %v2722 = vpack.c.b16 %v2230, %v2226
    %v2723 = vpack.c.b16 %v2231, %v2227
    %v2724 = vpack.c.b16 %v2232, %v2228
    %v2725 = vpack.c.b16 %v2233, %v2229
    %v2726 = vpack.c.b16 %v2238, %v2234
    %v2727 = vpack.c.b16 %v2239, %v2235
    %v2728 = vpack.c.b16 %v2240, %v2236
    %v2729 = vpack.c.b16 %v2241, %v2237
    %v2730 = vpack.c.b16 %v2246, %v2242
    %v2731 = vpack.c.b16 %v2247, %v2243
    %v2732 = vpack.c.b16 %v2248, %v2244
    %v2733 = vpack.c.b16 %v2249, %v2245
    %v2734 = vpack.c.b16 %v2254, %v2250
    %v2735 = vpack.c.b16 %v2255, %v2251
    %v2736 = vpack.c.b16 %v2256, %v2252
    %v2737 = vpack.c.b16 %v2257, %v2253
    %v2738 = vpack.c.b16 %v2262, %v2258
    %v2739 = vpack.c.b16 %v2263, %v2259
    %v2740 = vpack.c.b16 %v2264, %v2260
    %v2741 = vpack.c.b16 %v2265, %v2261
    %v2742 = vpack.c.b16 %v2270, %v2266
    %v2743 = vpack.c.b16 %v2271, %v2267
    %v2744 = vpack.c.b16 %v2272, %v2268
    %v2745 = vpack.c.b16 %v2273, %v2269
    %v2746 = vpack.c.b16 %v2278, %v2274
    %v2747 = vpack.c.b16 %v2279, %v2275
    %v2748 = vpack.c.b16 %v2280, %v2276
    %v2749 = vpack.c.b16 %v2281, %v2277
    %v2750 = vpack.c.b16 %v2286, %v2282
    %v2751 = vpack.c.b16 %v2287, %v2283
    %v2752 = vpack.c.b16 %v2288, %v2284
    %v2753 = vpack.c.b16 %v2289, %v2285
    %v2754 = vpack.c.b16 %v2294, %v2290
    %v2755 = vpack.c.b16 %v2295, %v2291
    %v2756 = vpack.c.b16 %v2296, %v2292
    %v2757 = vpack.c.b16 %v2297, %v2293
    %v2758 = vpack.c.b16 %v2302, %v2298
    %v2759 = vpack.c.b16 %v2303, %v2299
    %v2760 = vpack.c.b16 %v2304, %v2300
    %v2761 = vpack.c.b16 %v2305, %v2301
    %v2762 = vpack.c.b16 %v2310, %v2306
    %v2763 = vpack.c.b16 %v2311, %v2307
    %v2764 = vpack.c.b16 %v2312, %v2308
    %v2765 = vpack.c.b16 %v2313, %v2309
    %v2766 = vpack.c.b16 %v2318, %v2314
    %v2767 = vpack.c.b16 %v2319, %v2315
    %v2768 = vpack.c.b16 %v2320, %v2316
    %v2769 = vpack.c.b16 %v2321, %v2317
    %v2770 = vpack.c.b16 %v2326, %v2322
    %v2771 = vpack.c.b16 %v2327, %v2323
    %v2772 = vpack.c.b16 %v2328, %v2324
    %v2773 = vpack.c.b16 %v2329, %v2325
    %v2774 = vpack.c.b16 %v2334, %v2330
    %v2775 = vpack.c.b16 %v2335, %v2331
    %v2776 = vpack.c.b16 %v2336, %v2332
    %v2777 = vpack.c.b16 %v2337, %v2333
    %v2778 = vpack.c.b16 %v2342, %v2338
    %v2779 = vpack.c.b16 %v2343, %v2339
    %v2780 = vpack.c.b16 %v2344, %v2340
    %v2781 = vpack.c.b16 %v2345, %v2341
    %v2782 = vpack.c.b16 %v2350, %v2346
    %v2783 = vpack.c.b16 %v2351, %v2347
    %v2784 = vpack.c.b16 %v2352, %v2348
    %v2785 = vpack.c.b16 %v2353, %v2349
    %v2786 = vpack.c.b16 %v2358, %v2354
    %v2787 = vpack.c.b16 %v2359, %v2355
    %v2788 = vpack.c.b16 %v2360, %v2356
    %v2789 = vpack.c.b16 %v2361, %v2357
    %v2790 = vpack.c.b16 %v2366, %v2362
    %v2791 = vpack.c.b16 %v2367, %v2363
    %v2792 = vpack.c.b16 %v2368, %v2364
    %v2793 = vpack.c.b16 %v2369, %v2365
    %v2794 = vpack.c.b16 %v2374, %v2370
    %v2795 = vpack.c.b16 %v2375, %v2371
    %v2796 = vpack.c.b16 %v2376, %v2372
    %v2797 = vpack.c.b16 %v2377, %v2373
    %v2798 = vpack.c.b16 %v2382, %v2378
    %v2799 = vpack.c.b16 %v2383, %v2379
    %v2800 = vpack.c.b16 %v2384, %v2380
    %v2801 = vpack.c.b16 %v2385, %v2381
    %v2802 = vpack.c.b16 %v2390, %v2386
    %v2803 = vpack.c.b16 %v2391, %v2387
    %v2804 = vpack.c.b16 %v2392, %v2388
    %v2805 = vpack.c.b16 %v2393, %v2389
    %v2806 = vpack.c.b16 %v2398, %v2394
    %v2807 = vpack.c.b16 %v2399, %v2395
    %v2808 = vpack.c.b16 %v2400, %v2396
    %v2809 = vpack.c.b16 %v2401, %v2397
    %v2810 = vpack.c.b16 %v2406, %v2402
    %v2811 = vpack.c.b16 %v2407, %v2403
    %v2812 = vpack.c.b16 %v2408, %v2404
    %v2813 = vpack.c.b16 %v2409, %v2405
    %v2814 = vpack.c.b16 %v2414, %v2410
    %v2815 = vpack.c.b16 %v2415, %v2411
    %v2816 = vpack.c.b16 %v2416, %v2412
    %v2817 = vpack.c.b16 %v2417, %v2413
    %v2818 = vpack.c.b16 %v2422, %v2418
    %v2819 = vpack.c.b16 %v2423, %v2419
    %v2820 = vpack.c.b16 %v2424, %v2420
    %v2821 = vpack.c.b16 %v2425, %v2421
    %v2822 = vpack.c.b16 %v2430, %v2426
    %v2823 = vpack.c.b16 %v2431, %v2427
    %v2824 = vpack.c.b16 %v2432, %v2428
    %v2825 = vpack.c.b16 %v2433, %v2429
    %v2826 = vpack.c.b16 %v2438, %v2434
    %v2827 = vpack.c.b16 %v2439, %v2435
    %v2828 = vpack.c.b16 %v2440, %v2436
    %v2829 = vpack.c.b16 %v2441, %v2437
    %v2830 = vpack.c.b16 %v2446, %v2442
    %v2831 = vpack.c.b16 %v2447, %v2443
    %v2832 = vpack.c.b16 %v2448, %v2444
    %v2833 = vpack.c.b16 %v2449, %v2445
    %v2834 = vpack.c.b16 %v2454, %v2450
    %v2835 = vpack.c.b16 %v2455, %v2451
    %v2836 = vpack.c.b16 %v2456, %v2452
    %v2837 = vpack.c.b16 %v2457, %v2453
    %v2838 = vpack.c.b16 %v2462, %v2458
    %v2839 = vpack.c.b16 %v2463, %v2459
    %v2840 = vpack.c.b16 %v2464, %v2460
    %v2841 = vpack.c.b16 %v2465, %v2461
    %v2842 = vpack.c.b16 %v2470, %v2466
    %v2843 = vpack.c.b16 %v2471, %v2467
    %v2844 = vpack.c.b16 %v2472, %v2468
    %v2845 = vpack.c.b16 %v2473, %v2469
    %v2846 = vpack.c.b16 %v2478, %v2474
    %v2847 = vpack.c.b16 %v2479, %v2475
    %v2848 = vpack.c.b16 %v2480, %v2476
    %v2849 = vpack.c.b16 %v2481, %v2477
    %v2850 = vpack.c.b16 %v2486, %v2482
    %v2851 = vpack.c.b16 %v2487, %v2483
    %v2852 = vpack.c.b16 %v2488, %v2484
    %v2853 = vpack.c.b16 %v2489, %v2485
    %v2854 = vpack.c.b16 %v2494, %v2490
    %v2855 = vpack.c.b16 %v2495, %v2491
    %v2856 = vpack.c.b16 %v2496, %v2492
    %v2857 = vpack.c.b16 %v2497, %v2493
    %v2858 = vpack.c.b16 %v2502, %v2498
    %v2859 = vpack.c.b16 %v2503, %v2499
    %v2860 = vpack.c.b16 %v2504, %v2500
    %v2861 = vpack.c.b16 %v2505, %v2501
    %v2862 = vpack.c.b16 %v2510, %v2506
    %v2863 = vpack.c.b16 %v2511, %v2507
    %v2864 = vpack.c.b16 %v2512, %v2508
    %v2865 = vpack.c.b16 %v2513, %v2509
    %v2866 = vpack.c.b16 %v2518, %v2514
    %v2867 = vpack.c.b16 %v2519, %v2515
    %v2868 = vpack.c.b16 %v2520, %v2516
    %v2869 = vpack.c.b16 %v2521, %v2517
    %v2870 = vpack.c.b16 %v2526, %v2522
    %v2871 = vpack.c.b16 %v2527, %v2523
    %v2872 = vpack.c.b16 %v2528, %v2524
    %v2873 = vpack.c.b16 %v2529, %v2525
    %v2874 = vpack.c.b16 %v2534, %v2530
    %v2875 = vpack.c.b16 %v2535, %v2531
    %v2876 = vpack.c.b16 %v2536, %v2532
    %v2877 = vpack.c.b16 %v2537, %v2533
    %v2878 = vpack.c.b16 %v2542, %v2538
    %v2879 = vpack.c.b16 %v2543, %v2539
    %v2880 = vpack.c.b16 %v2544, %v2540
    %v2881 = vpack.c.b16 %v2545, %v2541
    %v2882 = vpack.c.b16 %v2550, %v2546
    %v2883 = vpack.c.b16 %v2551, %v2547
    %v2884 = vpack.c.b16 %v2552, %v2548
    %v2885 = vpack.c.b16 %v2553, %v2549
    %v2886 = vpack.c.b16 %v2558, %v2554
    %v2887 = vpack.c.b16 %v2559, %v2555
    %v2888 = vpack.c.b16 %v2560, %v2556
    %v2889 = vpack.c.b16 %v2561, %v2557
    %v2890 = vpack.c.b16 %v2566, %v2562
    %v2891 = vpack.c.b16 %v2567, %v2563
    %v2892 = vpack.c.b16 %v2568, %v2564
    %v2893 = vpack.c.b16 %v2569, %v2565
    %v2894 = vpack.c.b16 %v2574, %v2570
    %v2895 = vpack.c.b16 %v2575, %v2571
    %v2896 = vpack.c.b16 %v2576, %v2572
    %v2897 = vpack.c.b16 %v2577, %v2573
    %v2898 = vpack.c.b16 %v2582, %v2578
    %v2899 = vpack.c.b16 %v2583, %v2579
    %v2900 = vpack.c.b16 %v2584, %v2580
    %v2901 = vpack.c.b16 %v2585, %v2581
    %v2902 = vpack.c.b16 %v2590, %v2586
    %v2903 = vpack.c.b16 %v2591, %v2587
    %v2904 = vpack.c.b16 %v2592, %v2588
    %v2905 = vpack.c.b16 %v2593, %v2589
    %v2906 = vpack.c.b16 %v2598, %v2594
    %v2907 = vpack.c.b16 %v2599, %v2595
    %v2908 = vpack.c.b16 %v2600, %v2596
    %v2909 = vpack.c.b16 %v2601, %v2597
    %v2910 = vpack.c.b16 %v2606, %v2602
    %v2911 = vpack.c.b16 %v2607, %v2603
    %v2912 = vpack.c.b16 %v2608, %v2604
    %v2913 = vpack.c.b16 %v2609, %v2605
    %v2914 = vpack.c.b16 %v2614, %v2610
    %v2915 = vpack.c.b16 %v2615, %v2611
    %v2916 = vpack.c.b16 %v2616, %v2612
    %v2917 = vpack.c.b16 %v2617, %v2613
    %v2918 = vpack.c.b16 %v2622, %v2618
    %v2919 = vpack.c.b16 %v2623, %v2619
    %v2920 = vpack.c.b16 %v2624, %v2620
    %v2921 = vpack.c.b16 %v2625, %v2621
    %v2922 = vpack.c.b16 %v2630, %v2626
    %v2923 = vpack.c.b16 %v2631, %v2627
    %v2924 = vpack.c.b16 %v2632, %v2628
    %v2925 = vpack.c.b16 %v2633, %v2629
    %v2926 = vpack.c.b16 %v2638, %v2634
    %v2927 = vpack.c.b16 %v2639, %v2635
    %v2928 = vpack.c.b16 %v2640, %v2636
    %v2929 = vpack.c.b16 %v2641, %v2637
    %v2930 = vpack.c.b16 %v2646, %v2642
    %v2931 = vpack.c.b16 %v2647, %v2643
    %v2932 = vpack.c.b16 %v2648, %v2644
    %v2933 = vpack.c.b16 %v2649, %v2645
    %v2934 = vpack.c.b16 %v2654, %v2650
    %v2935 = vpack.c.b16 %v2655, %v2651
    %v2936 = vpack.c.b16 %v2656, %v2652
    %v2937 = vpack.c.b16 %v2657, %v2653
    %v2938 = vpack.c.b16 %v2662, %v2658
    %v2939 = vpack.c.b16 %v2663, %v2659
    %v2940 = vpack.c.b16 %v2664, %v2660
    %v2941 = vpack.c.b16 %v2665, %v2661
    %v2942 = vpack.c.b16 %v2670, %v2666
    %v2943 = vpack.c.b16 %v2671, %v2667
    %v2944 = vpack.c.b16 %v2672, %v2668
    %v2945 = vpack.c.b16 %v2673, %v2669
    %v2946 = vpack.c.b16 %v2678, %v2674
    %v2947 = vpack.c.b16 %v2679, %v2675
    %v2948 = vpack.c.b16 %v2680, %v2676
    %v2949 = vpack.c.b16 %v2681, %v2677
    %v2950 = vpack.c.b16 %v2686, %v2682
    %v2951 = vpack.c.b16 %v2687, %v2683
    %v2952 = vpack.c.b16 %v2688, %v2684
    %v2953 = vpack.c.b16 %v2689, %v2685
    %v2954 = vpack.c.b16 %v2694, %v2690
    %v2955 = vpack.c.b16 %v2695, %v2691
    %v2956 = vpack.c.b16 %v2696, %v2692
    %v2957 = vpack.c.b16 %v2697, %v2693
    %v2958 = vpack.c.b16 %v2702, %v2698
    %v2959 = vpack.c.b16 %v2703, %v2699
    %v2960 = vpack.c.b16 %v2704, %v2700
    %v2961 = vpack.c.b16 %v2705, %v2701
    %v2962 = vpack.c.b16 %v2710, %v2706
    %v2963 = vpack.c.b16 %v2711, %v2707
    %v2964 = vpack.c.b16 %v2712, %v2708
    %v2965 = vpack.c.b16 %v2713, %v2709
    %v2966 = vpack.c.b16 %v2714, %v2714
    %v2967 = vpack.c.b16 %v2715, %v2715
    %v2968 = vpack.c.b16 %v2716, %v2716
    %v2969 = vpack.c.b16 %v2717, %v2717
    %vm3218 = vcmask 850944
    %v3220 = vsel %vm3218, %v1592, 0
    %vm3222 = vcmask 1043456
    %v3224 = vsel %vm3222, %v2966, 0
    %v3227 = vsel %vm3222, %v2967, 0
    %v3230 = vsel %vm3222, %v2968, 0
    %v3233 = vsel %vm3222, %v2969, 0
    %3235 = vmatprep.subr.bf16.mxu0 %v2719
    %3236 = vmatpush1.bf16.msra.mxu0 %v2718
    %3237 = vmatprep.subr.bf16.mxu0 %v2723
    %3238 = vmatpush1.bf16.msra.mxu0 %v2722
    %3239 = vmatprep.subr.bf16.mxu0 %v2727
    %3240 = vmatpush1.bf16.msra.mxu0 %v2726
    %3241 = vmatprep.subr.bf16.mxu0 %v2731
    %3242 = vmatpush1.bf16.msra.mxu0 %v2730
    %3243 = vmatprep.subr.bf16.mxu0 %v2735
    %3244 = vmatpush1.bf16.msra.mxu0 %v2734
    %3245 = vmatprep.subr.bf16.mxu0 %v2739
    %3246 = vmatpush1.bf16.msra.mxu0 %v2738
    %3247 = vmatprep.subr.bf16.mxu0 %v2743
    %3248 = vmatpush1.bf16.msra.mxu0 %v2742
    %3249 = vmatprep.subr.bf16.mxu0 %v2747
    %3250 = vmatpush1.bf16.msra.mxu0 %v2746
    %3251 = vmatprep.subr.bf16.mxu0 %v2751
    %3252 = vmatpush1.bf16.msra.mxu0 %v2750
    %3253 = vmatprep.subr.bf16.mxu0 %v2755
    %3254 = vmatpush1.bf16.msra.mxu0 %v2754
    %3255 = vmatprep.subr.bf16.mxu0 %v2759
    %3256 = vmatpush1.bf16.msra.mxu0 %v2758
    %3257 = vmatprep.subr.bf16.mxu0 %v2763
    %3258 = vmatpush1.bf16.msra.mxu0 %v2762
    %3259 = vmatprep.subr.bf16.mxu0 %v2767
    %3260 = vmatpush1.bf16.msra.mxu0 %v2766
    %3261 = vmatprep.subr.bf16.mxu0 %v2771
    %3262 = vmatpush1.bf16.msra.mxu0 %v2770
    %3263 = vmatprep.subr.bf16.mxu0 %v2775
    %3264 = vmatpush1.bf16.msra.mxu0 %v2774
    %3265 = vmatprep.subr.bf16.mxu0 %v2779
    %3266 = vmatpush1.bf16.msra.mxu0 %v2778
    %3267 = vmatprep.mubr.bf16.mxu0 %v1586
    %3268 = vmatmul.mubr.bf16.gmra.mrb[0].mxu0 %v1585
    %v3269 = vpop.f32.mrb[0].mxu0
    %v3270 = vadd.f32 0.0, %v3269
    %v3271 = vpop.f32.mrb[0].mxu0
    %v3272 = vadd.f32 0.0, %v3271
    %v3273 = vpop.f32.mrb[0].mxu0
    %v3274 = vpop.f32.mrb[0].mxu0
    %3275 = vdwg.mxu0
    %3276 = vmatprep.subr.bf16.mxu0 %v2783
    %3277 = vmatpush1.bf16.msra.mxu0 %v2782
    %3278 = vmatprep.subr.bf16.mxu0 %v2787
    %3279 = vmatpush1.bf16.msra.mxu0 %v2786
    %3280 = vmatprep.subr.bf16.mxu0 %v2791
    %3281 = vmatpush1.bf16.msra.mxu0 %v2790
    %3282 = vmatprep.subr.bf16.mxu0 %v2795
    %3283 = vmatpush1.bf16.msra.mxu0 %v2794
    %3284 = vmatprep.subr.bf16.mxu0 %v2799
    %3285 = vmatpush1.bf16.msra.mxu0 %v2798
    %3286 = vmatprep.subr.bf16.mxu0 %v2803
    %3287 = vmatpush1.bf16.msra.mxu0 %v2802
    %3288 = vmatprep.subr.bf16.mxu0 %v2807
    %3289 = vmatpush1.bf16.msra.mxu0 %v2806
    %3290 = vmatprep.subr.bf16.mxu0 %v2811
    %3291 = vmatpush1.bf16.msra.mxu0 %v2810
    %3292 = vmatprep.subr.bf16.mxu0 %v2815
    %3293 = vmatpush1.bf16.msra.mxu0 %v2814
    %3294 = vmatprep.subr.bf16.mxu0 %v2819
    %3295 = vmatpush1.bf16.msra.mxu0 %v2818
    %3296 = vmatprep.subr.bf16.mxu0 %v2823
    %3297 = vmatpush1.bf16.msra.mxu0 %v2822
    %3298 = vmatprep.subr.bf16.mxu0 %v2827
    %3299 = vmatpush1.bf16.msra.mxu0 %v2826
    %3300 = vmatprep.subr.bf16.mxu0 %v2831
    %3301 = vmatpush1.bf16.msra.mxu0 %v2830
    %3302 = vmatprep.subr.bf16.mxu0 %v2835
    %3303 = vmatpush1.bf16.msra.mxu0 %v2834
    %3304 = vmatprep.subr.bf16.mxu0 %v2839
    %3305 = vmatpush1.bf16.msra.mxu0 %v2838
    %3306 = vmatprep.subr.bf16.mxu0 %v2843
    %3307 = vmatpush1.bf16.msra.mxu0 %v2842
    %3308 = vmatprep.mubr.bf16.mxu0 %v1588
    %3309 = vmatmul.mubr.bf16.gmra.mrb[0].mxu0 %v1587
    %v3310 = vpop.f32.mrb[0].mxu0
    %v3311 = vadd.f32 %v3270, %v3310
    %v3312 = vpop.f32.mrb[0].mxu0
    %v3313 = vadd.f32 %v3272, %v3312
    %v3314 = vpop.f32.mrb[0].mxu0
    %v3315 = vpop.f32.mrb[0].mxu0
    %3316 = vdwg.mxu0
    %3317 = vmatprep.subr.bf16.mxu0 %v2847
    %3318 = vmatpush1.bf16.msra.mxu0 %v2846
    %3319 = vmatprep.subr.bf16.mxu0 %v2851
    %3320 = vmatpush1.bf16.msra.mxu0 %v2850
    %3321 = vmatprep.subr.bf16.mxu0 %v2855
    %3322 = vmatpush1.bf16.msra.mxu0 %v2854
    %3323 = vmatprep.subr.bf16.mxu0 %v2859
    %3324 = vmatpush1.bf16.msra.mxu0 %v2858
    %3325 = vmatprep.subr.bf16.mxu0 %v2863
    %3326 = vmatpush1.bf16.msra.mxu0 %v2862
    %3327 = vmatprep.subr.bf16.mxu0 %v2867
    %3328 = vmatpush1.bf16.msra.mxu0 %v2866
    %3329 = vmatprep.subr.bf16.mxu0 %v2871
    %3330 = vmatpush1.bf16.msra.mxu0 %v2870
    %3331 = vmatprep.subr.bf16.mxu0 %v2875
    %3332 = vmatpush1.bf16.msra.mxu0 %v2874
    %3333 = vmatprep.subr.bf16.mxu0 %v2879
    %3334 = vmatpush1.bf16.msra.mxu0 %v2878
    %3335 = vmatprep.subr.bf16.mxu0 %v2883
    %3336 = vmatpush1.bf16.msra.mxu0 %v2882
    %3337 = vmatprep.subr.bf16.mxu0 %v2887
    %3338 = vmatpush1.bf16.msra.mxu0 %v2886
    %3339 = vmatprep.subr.bf16.mxu0 %v2891
    %3340 = vmatpush1.bf16.msra.mxu0 %v2890
    %3341 = vmatprep.subr.bf16.mxu0 %v2895
    %3342 = vmatpush1.bf16.msra.mxu0 %v2894
    %3343 = vmatprep.subr.bf16.mxu0 %v2899
    %3344 = vmatpush1.bf16.msra.mxu0 %v2898
    %3345 = vmatprep.subr.bf16.mxu0 %v2903
    %3346 = vmatpush1.bf16.msra.mxu0 %v2902
    %3347 = vmatprep.subr.bf16.mxu0 %v2907
    %3348 = vmatpush1.bf16.msra.mxu0 %v2906
    %3349 = vmatprep.mubr.bf16.mxu0 %v1590
    %3350 = vmatmul.mubr.bf16.gmra.mrb[0].mxu0 %v1589
    %v3351 = vpop.f32.mrb[0].mxu0
    %v3352 = vadd.f32 %v3311, %v3351
    %v3353 = vpop.f32.mrb[0].mxu0
    %v3354 = vadd.f32 %v3313, %v3353
    %v3355 = vpop.f32.mrb[0].mxu0
    %v3356 = vpop.f32.mrb[0].mxu0
    %3357 = vdwg.mxu0
    %3358 = vmatprep.subr.bf16.mxu0 %v2911
    %3359 = vmatpush1.bf16.msra.mxu0 %v2910
    %3360 = vmatprep.subr.bf16.mxu0 %v2915
    %3361 = vmatpush1.bf16.msra.mxu0 %v2914
    %3362 = vmatprep.subr.bf16.mxu0 %v2919
    %3363 = vmatpush1.bf16.msra.mxu0 %v2918
    %3364 = vmatprep.subr.bf16.mxu0 %v2923
    %3365 = vmatpush1.bf16.msra.mxu0 %v2922
    %3366 = vmatprep.subr.bf16.mxu0 %v2927
    %3367 = vmatpush1.bf16.msra.mxu0 %v2926
    %3368 = vmatprep.subr.bf16.mxu0 %v2931
    %3369 = vmatpush1.bf16.msra.mxu0 %v2930
    %3370 = vmatprep.subr.bf16.mxu0 %v2935
    %3371 = vmatpush1.bf16.msra.mxu0 %v2934
    %3372 = vmatprep.subr.bf16.mxu0 %v2939
    %3373 = vmatpush1.bf16.msra.mxu0 %v2938
    %3374 = vmatprep.subr.bf16.mxu0 %v2943
    %3375 = vmatpush1.bf16.msra.mxu0 %v2942
    %3376 = vmatprep.subr.bf16.mxu0 %v2947
    %3377 = vmatpush1.bf16.msra.mxu0 %v2946
    %3378 = vmatprep.subr.bf16.mxu0 %v2951
    %3379 = vmatpush1.bf16.msra.mxu0 %v2950
    %3380 = vmatprep.subr.bf16.mxu0 %v2955
    %3381 = vmatpush1.bf16.msra.mxu0 %v2954
    %3382 = vmatprep.subr.bf16.mxu0 %v2959
    %3383 = vmatpush1.bf16.msra.mxu0 %v2958
    %3384 = vmatprep.subr.bf16.mxu0 %v2963
    %3385 = vmatpush1.bf16.msra.mxu0 %v2962
    %3386 = vmatprep.subr.bf16.mxu0 %v3227
    %3387 = vmatpush1.bf16.msra.mxu0 %v3224
    %3388 = vmatprep.subr.bf16.mxu0 0
    %3389 = vmatpush1.bf16.msra.mxu0 0
    %3390 = vmatprep.mubr.bf16.mxu0 %v3220
    %3391 = vmatmul.mubr.bf16.gmra.mrb[0].mxu0 %v1591
    %v3392 = vpop.f32.mrb[0].mxu0
    %v3393 = vadd.f32 %v3352, %v3392
    %v3394 = vpop.f32.mrb[0].mxu0
    %v3395 = vadd.f32 %v3354, %v3394
    %v3396 = vpop.f32.mrb[0].mxu0
    %v3397 = vpop.f32.mrb[0].mxu0
    %3398 = vdwg.mxu0
    %3399 = vmatprep.subr.bf16.mxu0 %v2721
    %3400 = vmatpush1.bf16.msra.mxu0 %v2720
    %3401 = vmatprep.subr.bf16.mxu0 %v2725
    %3402 = vmatpush1.bf16.msra.mxu0 %v2724
    %3403 = vmatprep.subr.bf16.mxu0 %v2729
    %3404 = vmatpush1.bf16.msra.mxu0 %v2728
    %3405 = vmatprep.subr.bf16.mxu0 %v2733
    %3406 = vmatpush1.bf16.msra.mxu0 %v2732
    %3407 = vmatprep.subr.bf16.mxu0 %v2737
    %3408 = vmatpush1.bf16.msra.mxu0 %v2736
    %3409 = vmatprep.subr.bf16.mxu0 %v2741
    %3410 = vmatpush1.bf16.msra.mxu0 %v2740
    %3411 = vmatprep.subr.bf16.mxu0 %v2745
    %3412 = vmatpush1.bf16.msra.mxu0 %v2744
    %3413 = vmatprep.subr.bf16.mxu0 %v2749
    %3414 = vmatpush1.bf16.msra.mxu0 %v2748
    %3415 = vmatprep.subr.bf16.mxu0 %v2753
    %3416 = vmatpush1.bf16.msra.mxu0 %v2752
    %3417 = vmatprep.subr.bf16.mxu0 %v2757
    %3418 = vmatpush1.bf16.msra.mxu0 %v2756
    %3419 = vmatprep.subr.bf16.mxu0 %v2761
    %3420 = vmatpush1.bf16.msra.mxu0 %v2760
    %3421 = vmatprep.subr.bf16.mxu0 %v2765
    %3422 = vmatpush1.bf16.msra.mxu0 %v2764
    %3423 = vmatprep.subr.bf16.mxu0 %v2769
    %3424 = vmatpush1.bf16.msra.mxu0 %v2768
    %3425 = vmatprep.subr.bf16.mxu0 %v2773
    %3426 = vmatpush1.bf16.msra.mxu0 %v2772
    %3427 = vmatprep.subr.bf16.mxu0 %v2777
    %3428 = vmatpush1.bf16.msra.mxu0 %v2776
    %3429 = vmatprep.subr.bf16.mxu0 %v2781
    %3430 = vmatpush1.bf16.msra.mxu0 %v2780
    %3431 = vmatprep.mubr.bf16.mxu0 %v1586
    %3432 = vmatmul.mubr.bf16.gmra.mrb[0].mxu0 %v1585
    %v3433 = vpop.f32.mrb[0].mxu0
    %v3434 = vadd.f32 0.0, %v3433
    %v3435 = vpop.f32.mrb[0].mxu0
    %v3436 = vadd.f32 0.0, %v3435
    %v3437 = vpop.f32.mrb[0].mxu0
    %v3438 = vpop.f32.mrb[0].mxu0
    %3439 = vdwg.mxu0
    %3440 = vmatprep.subr.bf16.mxu0 %v2785
    %3441 = vmatpush1.bf16.msra.mxu0 %v2784
    %3442 = vmatprep.subr.bf16.mxu0 %v2789
    %3443 = vmatpush1.bf16.msra.mxu0 %v2788
    %3444 = vmatprep.subr.bf16.mxu0 %v2793
    %3445 = vmatpush1.bf16.msra.mxu0 %v2792
    %3446 = vmatprep.subr.bf16.mxu0 %v2797
    %3447 = vmatpush1.bf16.msra.mxu0 %v2796
    %3448 = vmatprep.subr.bf16.mxu0 %v2801
    %3449 = vmatpush1.bf16.msra.mxu0 %v2800
    %3450 = vmatprep.subr.bf16.mxu0 %v2805
    %3451 = vmatpush1.bf16.msra.mxu0 %v2804
    %3452 = vmatprep.subr.bf16.mxu0 %v2809
    %3453 = vmatpush1.bf16.msra.mxu0 %v2808
    %3454 = vmatprep.subr.bf16.mxu0 %v2813
    %3455 = vmatpush1.bf16.msra.mxu0 %v2812
    %3456 = vmatprep.subr.bf16.mxu0 %v2817
    %3457 = vmatpush1.bf16.msra.mxu0 %v2816
    %3458 = vmatprep.subr.bf16.mxu0 %v2821
    %3459 = vmatpush1.bf16.msra.mxu0 %v2820
    %3460 = vmatprep.subr.bf16.mxu0 %v2825
    %3461 = vmatpush1.bf16.msra.mxu0 %v2824
    %3462 = vmatprep.subr.bf16.mxu0 %v2829
    %3463 = vmatpush1.bf16.msra.mxu0 %v2828
    %3464 = vmatprep.subr.bf16.mxu0 %v2833
    %3465 = vmatpush1.bf16.msra.mxu0 %v2832
    %3466 = vmatprep.subr.bf16.mxu0 %v2837
    %3467 = vmatpush1.bf16.msra.mxu0 %v2836
    %3468 = vmatprep.subr.bf16.mxu0 %v2841
    %3469 = vmatpush1.bf16.msra.mxu0 %v2840
    %3470 = vmatprep.subr.bf16.mxu0 %v2845
    %3471 = vmatpush1.bf16.msra.mxu0 %v2844
    %3472 = vmatprep.mubr.bf16.mxu0 %v1588
    %3473 = vmatmul.mubr.bf16.gmra.mrb[0].mxu0 %v1587
    %v3474 = vpop.f32.mrb[0].mxu0
    %v3475 = vadd.f32 %v3434, %v3474
    %v3476 = vpop.f32.mrb[0].mxu0
    %v3477 = vadd.f32 %v3436, %v3476
    %v3478 = vpop.f32.mrb[0].mxu0
    %v3479 = vpop.f32.mrb[0].mxu0
    %3480 = vdwg.mxu0
    %3481 = vmatprep.subr.bf16.mxu0 %v2849
    %3482 = vmatpush1.bf16.msra.mxu0 %v2848
    %3483 = vmatprep.subr.bf16.mxu0 %v2853
    %3484 = vmatpush1.bf16.msra.mxu0 %v2852
    %3485 = vmatprep.subr.bf16.mxu0 %v2857
    %3486 = vmatpush1.bf16.msra.mxu0 %v2856
    %3487 = vmatprep.subr.bf16.mxu0 %v2861
    %3488 = vmatpush1.bf16.msra.mxu0 %v2860
    %3489 = vmatprep.subr.bf16.mxu0 %v2865
    %3490 = vmatpush1.bf16.msra.mxu0 %v2864
    %3491 = vmatprep.subr.bf16.mxu0 %v2869
    %3492 = vmatpush1.bf16.msra.mxu0 %v2868
    %3493 = vmatprep.subr.bf16.mxu0 %v2873
    %3494 = vmatpush1.bf16.msra.mxu0 %v2872
    %3495 = vmatprep.subr.bf16.mxu0 %v2877
    %3496 = vmatpush1.bf16.msra.mxu0 %v2876
    %3497 = vmatprep.subr.bf16.mxu0 %v2881
    %3498 = vmatpush1.bf16.msra.mxu0 %v2880
    %3499 = vmatprep.subr.bf16.mxu0 %v2885
    %3500 = vmatpush1.bf16.msra.mxu0 %v2884
    %3501 = vmatprep.subr.bf16.mxu0 %v2889
    %3502 = vmatpush1.bf16.msra.mxu0 %v2888
    %3503 = vmatprep.subr.bf16.mxu0 %v2893
    %3504 = vmatpush1.bf16.msra.mxu0 %v2892
    %3505 = vmatprep.subr.bf16.mxu0 %v2897
    %3506 = vmatpush1.bf16.msra.mxu0 %v2896
    %3507 = vmatprep.subr.bf16.mxu0 %v2901
    %3508 = vmatpush1.bf16.msra.mxu0 %v2900
    %3509 = vmatprep.subr.bf16.mxu0 %v2905
    %3510 = vmatpush1.bf16.msra.mxu0 %v2904
    %3511 = vmatprep.subr.bf16.mxu0 %v2909
    %3512 = vmatpush1.bf16.msra.mxu0 %v2908
    %3513 = vmatprep.mubr.bf16.mxu0 %v1590
    %3514 = vmatmul.mubr.bf16.gmra.mrb[0].mxu0 %v1589
    %v3515 = vpop.f32.mrb[0].mxu0
    %v3516 = vadd.f32 %v3475, %v3515
    %v3517 = vpop.f32.mrb[0].mxu0
    %v3518 = vadd.f32 %v3477, %v3517
    %v3519 = vpop.f32.mrb[0].mxu0
    %v3520 = vpop.f32.mrb[0].mxu0
    %3521 = vdwg.mxu0
    %3522 = vmatprep.subr.bf16.mxu0 %v2913
    %3523 = vmatpush1.bf16.msra.mxu0 %v2912
    %3524 = vmatprep.subr.bf16.mxu0 %v2917
    %3525 = vmatpush1.bf16.msra.mxu0 %v2916
    %3526 = vmatprep.subr.bf16.mxu0 %v2921
    %3527 = vmatpush1.bf16.msra.mxu0 %v2920
    %3528 = vmatprep.subr.bf16.mxu0 %v2925
    %3529 = vmatpush1.bf16.msra.mxu0 %v2924
    %3530 = vmatprep.subr.bf16.mxu0 %v2929
    %3531 = vmatpush1.bf16.msra.mxu0 %v2928
    %3532 = vmatprep.subr.bf16.mxu0 %v2933
    %3533 = vmatpush1.bf16.msra.mxu0 %v2932
    %3534 = vmatprep.subr.bf16.mxu0 %v2937
    %3535 = vmatpush1.bf16.msra.mxu0 %v2936
    %3536 = vmatprep.subr.bf16.mxu0 %v2941
    %3537 = vmatpush1.bf16.msra.mxu0 %v2940
    %3538 = vmatprep.subr.bf16.mxu0 %v2945
    %3539 = vmatpush1.bf16.msra.mxu0 %v2944
    %3540 = vmatprep.subr.bf16.mxu0 %v2949
    %3541 = vmatpush1.bf16.msra.mxu0 %v2948
    %3542 = vmatprep.subr.bf16.mxu0 %v2953
    %3543 = vmatpush1.bf16.msra.mxu0 %v2952
    %3544 = vmatprep.subr.bf16.mxu0 %v2957
    %3545 = vmatpush1.bf16.msra.mxu0 %v2956
    %3546 = vmatprep.subr.bf16.mxu0 %v2961
    %3547 = vmatpush1.bf16.msra.mxu0 %v2960
    %3548 = vmatprep.subr.bf16.mxu0 %v2965
    %3549 = vmatpush1.bf16.msra.mxu0 %v2964
    %3550 = vmatprep.subr.bf16.mxu0 %v3233
    %3551 = vmatpush1.bf16.msra.mxu0 %v3230
    %3552 = vmatprep.subr.bf16.mxu0 0
    %3553 = vmatpush1.bf16.msra.mxu0 0
    %3554 = vmatprep.mubr.bf16.mxu0 %v3220
    %3555 = vmatmul.mubr.bf16.gmra.mrb[0].mxu0 %v1591
    %v3556 = vpop.f32.mrb[0].mxu0
    %v3557 = vadd.f32 %v3516, %v3556
    %v3558 = vpop.f32.mrb[0].mxu0
    %v3559 = vadd.f32 %v3518, %v3558
    %v3560 = vpop.f32.mrb[0].mxu0
    %v3561 = vpop.f32.mrb[0].mxu0
    %3562 = vdwg.mxu0
    %v3563 = vld [vmem:[%s11] sm:$0xf]
    %v3565 = vlaneseq
    %v3566 = vshrl.u32 %v3565, 7
    %v3567 = vsub.s32 0, %v3566
    %v3568 = vrot.slane %v3563, %v3567
    %v3569 = vlaneseq
    %v3570 = vshrl.u32 %v3569, 7
    %v3571 = vsub.s32 1, %v3570
    %v3572 = vrot.slane %v3563, %v3571
    %v3573 = vlaneseq
    %v3574 = vshrl.u32 %v3573, 7
    %v3575 = vsub.s32 2, %v3574
    %v3576 = vrot.slane %v3563, %v3575
    %v3577 = vlaneseq
    %v3578 = vshrl.u32 %v3577, 7
    %v3579 = vsub.s32 3, %v3578
    %v3580 = vrot.slane %v3563, %v3579
    %v3585 = vmul.f32 %v3393, %v3568
    %v3586 = vmul.f32 %v3395, %v3572
    %v3587 = vmul.f32 %v3557, %v3576
    %v3588 = vmul.f32 %v3559, %v3580
    %v3589 = vld [vmem:[%s12] sm:$0xf]
    %v3591 = vlaneseq
    %v3592 = vshrl.u32 %v3591, 7
    %v3593 = vsub.s32 0, %v3592
    %v3594 = vrot.slane %v3589, %v3593
    %v3595 = vlaneseq
    %v3596 = vshrl.u32 %v3595, 7
    %v3597 = vsub.s32 1, %v3596
    %v3598 = vrot.slane %v3589, %v3597
    %v3599 = vlaneseq
    %v3600 = vshrl.u32 %v3599, 7
    %v3601 = vsub.s32 2, %v3600
    %v3602 = vrot.slane %v3589, %v3601
    %v3603 = vlaneseq
    %v3604 = vshrl.u32 %v3603, 7
    %v3605 = vsub.s32 3, %v3604
    %v3606 = vrot.slane %v3589, %v3605
    %v3611 = vadd.f32 %v3585, %v3594
    %v3612 = vadd.f32 %v3586, %v3598
    %v3613 = vadd.f32 %v3587, %v3602
    %v3614 = vadd.f32 %v3588, %v3606
    %v3615 = vmul.f32 %v3611, %v3611
    %v3616 = vmul.f32 %v3612, %v3612
    %v3617 = vmul.f32 %v3613, %v3613
    %v3618 = vmul.f32 %v3614, %v3614
    %vm3619 = vcmask 1041408
    %v3620 = vsel %vm3619, %v3615, 0.0
    %v3621 = vsel %vm3619, %v3616, 0.0
    %v3622 = vadd.f32 %v3620, %v3621
    %v3623 = vsel %vm3619, %v3617, 0.0
    %v3624 = vadd.f32 %v3622, %v3623
    %vm3625 = vcmask 943104
    %v3626 = vsel %vm3625, %v3618, 0.0
    %v3627 = vadd.f32 %v3624, %v3626
    %3628 = vadd.xlane.f32.xlu0 %v3627
    %v3629 = vpop.xlane.xlu0 %3628
    %v3630 = vmax.f32 %v3629, 1e-24
    %v3631 = vrsqrt.pop %v3630
    %v3632 = vmul.f32 %v3611, %v3631
    %v3633 = vmul.f32 %v3612, %v3631
    %v3634 = vmul.f32 %v3613, %v3631
    %v3635 = vmul.f32 %v3614, %v3631
    %v3636 = vld [vmem:[%s1] sm:$0x3]
    %v3637 = vld [vmem:[%s6] sm:$0xff]
    %v3638 = vld [vmem:[%s6 + $0x8] sm:$0xff]
    %v3639 = vunpack.c.l.bf16 %v3637
    %v3640 = vunpack.c.h.bf16 %v3637
    %v3641 = vunpack.c.l.bf16 %v3638
    %v3642 = vunpack.c.h.bf16 %v3638
    %v3643 = vld [vmem:[%s7] sm:$0xff]
    %3645 = vset.pattern.permute.xlu0 0
    %3646 = vperm.xlu0 %3645, %v3636
    %v3647 = vpop.permute.xlu0 %3646
    %v3653 = vlaneseq
    %v3654 = vshrl.u32 %v3653, 7
    %v3655 = vsub.s32 0, %v3654
    %v3656 = vrot.slane %v3639, %v3655
    %v3657 = vlaneseq
    %v3658 = vshrl.u32 %v3657, 7
    %v3659 = vsub.s32 4, %v3658
    %v3660 = vrot.slane %v3639, %v3659
    %v3661 = vlaneseq
    %v3662 = vshrl.u32 %v3661, 7
    %v3663 = vsub.s32 0, %v3662
    %v3664 = vrot.slane %v3640, %v3663
    %v3665 = vlaneseq
    %v3666 = vshrl.u32 %v3665, 7
    %v3667 = vsub.s32 4, %v3666
    %v3668 = vrot.slane %v3640, %v3667
    %v3669 = vlaneseq
    %v3670 = vshrl.u32 %v3669, 7
    %v3671 = vsub.s32 0, %v3670
    %v3672 = vrot.slane %v3641, %v3671
    %v3673 = vlaneseq
    %v3674 = vshrl.u32 %v3673, 7
    %v3675 = vsub.s32 4, %v3674
    %v3676 = vrot.slane %v3641, %v3675
    %v3677 = vlaneseq
    %v3678 = vshrl.u32 %v3677, 7
    %v3679 = vsub.s32 0, %v3678
    %v3680 = vrot.slane %v3642, %v3679
    %v3681 = vlaneseq
    %v3682 = vshrl.u32 %v3681, 7
    %v3683 = vsub.s32 4, %v3682
    %v3684 = vrot.slane %v3642, %v3683
    %v3693 = vlaneseq
    %v3694 = vshrl.u32 %v3693, 7
    %v3695 = vsub.s32 0, %v3694
    %v3696 = vrot.slane %v3656, %v3695
    %v3697 = vlaneseq
    %v3698 = vshrl.u32 %v3697, 7
    %v3699 = vsub.s32 0, %v3698
    %v3700 = vrot.slane %v3660, %v3699
    %v3701 = vlaneseq
    %v3702 = vshrl.u32 %v3701, 7
    %v3703 = vsub.s32 0, %v3702
    %v3704 = vrot.slane %v3664, %v3703
    %v3705 = vlaneseq
    %v3706 = vshrl.u32 %v3705, 7
    %v3707 = vsub.s32 0, %v3706
    %v3708 = vrot.slane %v3668, %v3707
    %v3709 = vlaneseq
    %v3710 = vshrl.u32 %v3709, 7
    %v3711 = vsub.s32 0, %v3710
    %v3712 = vrot.slane %v3672, %v3711
    %v3713 = vlaneseq
    %v3714 = vshrl.u32 %v3713, 7
    %v3715 = vsub.s32 0, %v3714
    %v3716 = vrot.slane %v3676, %v3715
    %v3717 = vlaneseq
    %v3718 = vshrl.u32 %v3717, 7
    %v3719 = vsub.s32 0, %v3718
    %v3720 = vrot.slane %v3680, %v3719
    %v3721 = vlaneseq
    %v3722 = vshrl.u32 %v3721, 7
    %v3723 = vsub.s32 0, %v3722
    %v3724 = vrot.slane %v3684, %v3723
    %v3725 = vmul.f32 %v3647, %v3696
    %v3726 = vmul.f32 %v3647, %v3700
    %v3727 = vmul.f32 %v3647, %v3704
    %v3728 = vmul.f32 %v3647, %v3708
    %v3729 = vmul.f32 %v3647, %v3712
    %v3730 = vmul.f32 %v3647, %v3716
    %v3731 = vmul.f32 %v3647, %v3720
    %v3732 = vmul.f32 %v3647, %v3724
    %v3734 = vlaneseq
    %v3735 = vshrl.u32 %v3734, 7
    %v3736 = vsub.s32 0, %v3735
    %v3737 = vrot.slane %v3643, %v3736
    %v3738 = vlaneseq
    %v3739 = vshrl.u32 %v3738, 7
    %v3740 = vsub.s32 1, %v3739
    %v3741 = vrot.slane %v3643, %v3740
    %v3742 = vlaneseq
    %v3743 = vshrl.u32 %v3742, 7
    %v3744 = vsub.s32 2, %v3743
    %v3745 = vrot.slane %v3643, %v3744
    %v3746 = vlaneseq
    %v3747 = vshrl.u32 %v3746, 7
    %v3748 = vsub.s32 3, %v3747
    %v3749 = vrot.slane %v3643, %v3748
    %v3750 = vlaneseq
    %v3751 = vshrl.u32 %v3750, 7
    %v3752 = vsub.s32 4, %v3751
    %v3753 = vrot.slane %v3643, %v3752
    %v3754 = vlaneseq
    %v3755 = vshrl.u32 %v3754, 7
    %v3756 = vsub.s32 5, %v3755
    %v3757 = vrot.slane %v3643, %v3756
    %v3758 = vlaneseq
    %v3759 = vshrl.u32 %v3758, 7
    %v3760 = vsub.s32 6, %v3759
    %v3761 = vrot.slane %v3643, %v3760
    %v3762 = vlaneseq
    %v3763 = vshrl.u32 %v3762, 7
    %v3764 = vsub.s32 7, %v3763
    %v3765 = vrot.slane %v3643, %v3764
    %v3774 = vadd.f32 %v3737, %v3725
    %v3775 = vadd.f32 %v3741, %v3726
    %v3776 = vadd.f32 %v3745, %v3727
    %v3777 = vadd.f32 %v3749, %v3728
    %v3778 = vadd.f32 %v3753, %v3729
    %v3779 = vadd.f32 %v3757, %v3730
    %v3780 = vadd.f32 %v3761, %v3731
    %v3781 = vadd.f32 %v3765, %v3732
    %3782 = vset.pattern.permute.xlu0 1
    %3783 = vperm.xlu0 %3782, %v3636
    %v3784 = vpop.permute.xlu0 %3783
    %v3786 = vlaneseq
    %v3787 = vshrl.u32 %v3786, 7
    %v3788 = vsub.s32 1, %v3787
    %v3789 = vrot.slane %v3639, %v3788
    %v3790 = vlaneseq
    %v3791 = vshrl.u32 %v3790, 7
    %v3792 = vsub.s32 5, %v3791
    %v3793 = vrot.slane %v3639, %v3792
    %v3794 = vlaneseq
    %v3795 = vshrl.u32 %v3794, 7
    %v3796 = vsub.s32 1, %v3795
    %v3797 = vrot.slane %v3640, %v3796
    %v3798 = vlaneseq
    %v3799 = vshrl.u32 %v3798, 7
    %v3800 = vsub.s32 5, %v3799
    %v3801 = vrot.slane %v3640, %v3800
    %v3802 = vlaneseq
    %v3803 = vshrl.u32 %v3802, 7
    %v3804 = vsub.s32 1, %v3803
    %v3805 = vrot.slane %v3641, %v3804
    %v3806 = vlaneseq
    %v3807 = vshrl.u32 %v3806, 7
    %v3808 = vsub.s32 5, %v3807
    %v3809 = vrot.slane %v3641, %v3808
    %v3810 = vlaneseq
    %v3811 = vshrl.u32 %v3810, 7
    %v3812 = vsub.s32 1, %v3811
    %v3813 = vrot.slane %v3642, %v3812
    %v3814 = vlaneseq
    %v3815 = vshrl.u32 %v3814, 7
    %v3816 = vsub.s32 5, %v3815
    %v3817 = vrot.slane %v3642, %v3816
    %v3826 = vlaneseq
    %v3827 = vshrl.u32 %v3826, 7
    %v3828 = vsub.s32 1, %v3827
    %v3829 = vrot.slane %v3789, %v3828
    %v3830 = vlaneseq
    %v3831 = vshrl.u32 %v3830, 7
    %v3832 = vsub.s32 1, %v3831
    %v3833 = vrot.slane %v3793, %v3832
    %v3834 = vlaneseq
    %v3835 = vshrl.u32 %v3834, 7
    %v3836 = vsub.s32 1, %v3835
    %v3837 = vrot.slane %v3797, %v3836
    %v3838 = vlaneseq
    %v3839 = vshrl.u32 %v3838, 7
    %v3840 = vsub.s32 1, %v3839
    %v3841 = vrot.slane %v3801, %v3840
    %v3842 = vlaneseq
    %v3843 = vshrl.u32 %v3842, 7
    %v3844 = vsub.s32 1, %v3843
    %v3845 = vrot.slane %v3805, %v3844
    %v3846 = vlaneseq
    %v3847 = vshrl.u32 %v3846, 7
    %v3848 = vsub.s32 1, %v3847
    %v3849 = vrot.slane %v3809, %v3848
    %v3850 = vlaneseq
    %v3851 = vshrl.u32 %v3850, 7
    %v3852 = vsub.s32 1, %v3851
    %v3853 = vrot.slane %v3813, %v3852
    %v3854 = vlaneseq
    %v3855 = vshrl.u32 %v3854, 7
    %v3856 = vsub.s32 1, %v3855
    %v3857 = vrot.slane %v3817, %v3856
    %v3858 = vmul.f32 %v3784, %v3829
    %v3859 = vmul.f32 %v3784, %v3833
    %v3860 = vmul.f32 %v3784, %v3837
    %v3861 = vmul.f32 %v3784, %v3841
    %v3862 = vmul.f32 %v3784, %v3845
    %v3863 = vmul.f32 %v3784, %v3849
    %v3864 = vmul.f32 %v3784, %v3853
    %v3865 = vmul.f32 %v3784, %v3857
    %v3866 = vadd.f32 %v3774, %v3858
    %v3867 = vadd.f32 %v3775, %v3859
    %v3868 = vadd.f32 %v3776, %v3860
    %v3869 = vadd.f32 %v3777, %v3861
    %v3870 = vadd.f32 %v3778, %v3862
    %v3871 = vadd.f32 %v3779, %v3863
    %v3872 = vadd.f32 %v3780, %v3864
    %v3873 = vadd.f32 %v3781, %v3865
    %3874 = vset.pattern.permute.xlu0 2
    %3875 = vperm.xlu0 %3874, %v3636
    %v3876 = vpop.permute.xlu0 %3875
    %v3878 = vlaneseq
    %v3879 = vshrl.u32 %v3878, 7
    %v3880 = vsub.s32 2, %v3879
    %v3881 = vrot.slane %v3639, %v3880
    %v3882 = vlaneseq
    %v3883 = vshrl.u32 %v3882, 7
    %v3884 = vsub.s32 6, %v3883
    %v3885 = vrot.slane %v3639, %v3884
    %v3886 = vlaneseq
    %v3887 = vshrl.u32 %v3886, 7
    %v3888 = vsub.s32 2, %v3887
    %v3889 = vrot.slane %v3640, %v3888
    %v3890 = vlaneseq
    %v3891 = vshrl.u32 %v3890, 7
    %v3892 = vsub.s32 6, %v3891
    %v3893 = vrot.slane %v3640, %v3892
    %v3894 = vlaneseq
    %v3895 = vshrl.u32 %v3894, 7
    %v3896 = vsub.s32 2, %v3895
    %v3897 = vrot.slane %v3641, %v3896
    %v3898 = vlaneseq
    %v3899 = vshrl.u32 %v3898, 7
    %v3900 = vsub.s32 6, %v3899
    %v3901 = vrot.slane %v3641, %v3900
    %v3902 = vlaneseq
    %v3903 = vshrl.u32 %v3902, 7
    %v3904 = vsub.s32 2, %v3903
    %v3905 = vrot.slane %v3642, %v3904
    %v3906 = vlaneseq
    %v3907 = vshrl.u32 %v3906, 7
    %v3908 = vsub.s32 6, %v3907
    %v3909 = vrot.slane %v3642, %v3908
    %v3918 = vlaneseq
    %v3919 = vshrl.u32 %v3918, 7
    %v3920 = vsub.s32 2, %v3919
    %v3921 = vrot.slane %v3881, %v3920
    %v3922 = vlaneseq
    %v3923 = vshrl.u32 %v3922, 7
    %v3924 = vsub.s32 2, %v3923
    %v3925 = vrot.slane %v3885, %v3924
    %v3926 = vlaneseq
    %v3927 = vshrl.u32 %v3926, 7
    %v3928 = vsub.s32 2, %v3927
    %v3929 = vrot.slane %v3889, %v3928
    %v3930 = vlaneseq
    %v3931 = vshrl.u32 %v3930, 7
    %v3932 = vsub.s32 2, %v3931
    %v3933 = vrot.slane %v3893, %v3932
    %v3934 = vlaneseq
    %v3935 = vshrl.u32 %v3934, 7
    %v3936 = vsub.s32 2, %v3935
    %v3937 = vrot.slane %v3897, %v3936
    %v3938 = vlaneseq
    %v3939 = vshrl.u32 %v3938, 7
    %v3940 = vsub.s32 2, %v3939
    %v3941 = vrot.slane %v3901, %v3940
    %v3942 = vlaneseq
    %v3943 = vshrl.u32 %v3942, 7
    %v3944 = vsub.s32 2, %v3943
    %v3945 = vrot.slane %v3905, %v3944
    %v3946 = vlaneseq
    %v3947 = vshrl.u32 %v3946, 7
    %v3948 = vsub.s32 2, %v3947
    %v3949 = vrot.slane %v3909, %v3948
    %v3950 = vmul.f32 %v3876, %v3921
    %v3951 = vmul.f32 %v3876, %v3925
    %v3952 = vmul.f32 %v3876, %v3929
    %v3953 = vmul.f32 %v3876, %v3933
    %v3954 = vmul.f32 %v3876, %v3937
    %v3955 = vmul.f32 %v3876, %v3941
    %v3956 = vmul.f32 %v3876, %v3945
    %v3957 = vmul.f32 %v3876, %v3949
    %v3958 = vadd.f32 %v3866, %v3950
    %v3959 = vadd.f32 %v3867, %v3951
    %v3960 = vadd.f32 %v3868, %v3952
    %v3961 = vadd.f32 %v3869, %v3953
    %v3962 = vadd.f32 %v3870, %v3954
    %v3963 = vadd.f32 %v3871, %v3955
    %v3964 = vadd.f32 %v3872, %v3956
    %v3965 = vadd.f32 %v3873, %v3957
    %v3966 = vmul.f32 %v3958, %v3958
    %v3967 = vmul.f32 %v3959, %v3959
    %v3968 = vmul.f32 %v3960, %v3960
    %v3969 = vmul.f32 %v3961, %v3961
    %v3970 = vmul.f32 %v3962, %v3962
    %v3971 = vmul.f32 %v3963, %v3963
    %v3972 = vmul.f32 %v3964, %v3964
    %v3973 = vmul.f32 %v3965, %v3965
    %v3974 = vsel %vm3619, %v3966, 0.0
    %v3975 = vsel %vm3619, %v3967, 0.0
    %v3976 = vadd.f32 %v3974, %v3975
    %v3977 = vsel %vm3619, %v3968, 0.0
    %v3978 = vadd.f32 %v3976, %v3977
    %v3979 = vsel %vm3619, %v3969, 0.0
    %v3980 = vadd.f32 %v3978, %v3979
    %v3981 = vsel %vm3619, %v3970, 0.0
    %v3982 = vadd.f32 %v3980, %v3981
    %v3983 = vsel %vm3619, %v3971, 0.0
    %v3984 = vadd.f32 %v3982, %v3983
    %v3985 = vsel %vm3619, %v3972, 0.0
    %v3986 = vadd.f32 %v3984, %v3985
    %vm3987 = vcmask 844800
    %v3988 = vsel %vm3987, %v3973, 0.0
    %v3989 = vadd.f32 %v3986, %v3988
    %3990 = vadd.xlane.f32.xlu0 %v3989
    %v3991 = vpop.xlane.xlu0 %3990
    %v3992 = vmax.f32 %v3991, 1e-24
    %v3993 = vrsqrt.pop %v3992
    %v3994 = vmul.f32 %v3958, %v3993
    %v3995 = vmul.f32 %v3959, %v3993
    %v3996 = vmul.f32 %v3960, %v3993
    %v3997 = vmul.f32 %v3961, %v3993
    %v3998 = vmul.f32 %v3962, %v3993
    %v3999 = vmul.f32 %v3963, %v3993
    %v4000 = vmul.f32 %v3964, %v3993
    %v4001 = vmul.f32 %v3965, %v3993
    %v4002 = vpack.c.bf16 %v3994, %v3994
    %v4003 = vpack.c.bf16 %v3995, %v3995
    %v4004 = vpack.c.bf16 %v3996, %v3996
    %v4005 = vpack.c.bf16 %v3997, %v3997
    %v4006 = vpack.c.bf16 %v3998, %v3998
    %v4007 = vpack.c.bf16 %v3999, %v3999
    %v4008 = vpack.c.bf16 %v4000, %v4000
    %v4009 = vpack.c.bf16 %v4001, %v4001
    %v4010 = vld [vmem:[%s13] sm:$0xff]
    %v4011 = vld [vmem:[%s13 + $0x8] sm:$0xff]
    %v4012 = vld [vmem:[%s13 + $0x10] sm:$0xff]
    %v4013 = vld [vmem:[%s13 + $0x18] sm:$0xff]
    %v4014 = vld [vmem:[%s13 + $0x20] sm:$0xff]
    %v4015 = vld [vmem:[%s13 + $0x28] sm:$0xff]
    %v4016 = vld [vmem:[%s13 + $0x30] sm:$0xff]
    %v4017 = vld [vmem:[%s13 + $0x38] sm:$0xff]
    %v4018 = vld [vmem:[%s13 + $0x40] sm:$0xff]
    %v4019 = vld [vmem:[%s13 + $0x48] sm:$0xff]
    %v4020 = vld [vmem:[%s13 + $0x50] sm:$0xff]
    %v4021 = vld [vmem:[%s13 + $0x58] sm:$0xff]
    %v4022 = vld [vmem:[%s13 + $0x60] sm:$0xff]
    %v4023 = vld [vmem:[%s13 + $0x68] sm:$0xff]
    %v4024 = vld [vmem:[%s13 + $0x70] sm:$0xff]
    %v4025 = vld [vmem:[%s13 + $0x78] sm:$0xff]
    %v4026 = vld [vmem:[%s13 + $0x80] sm:$0xff]
    %v4027 = vld [vmem:[%s13 + $0x88] sm:$0xff]
    %v4028 = vld [vmem:[%s13 + $0x90] sm:$0xff]
    %v4029 = vld [vmem:[%s13 + $0x98] sm:$0xff]
    %v4030 = vld [vmem:[%s13 + $0xa0] sm:$0xff]
    %v4031 = vld [vmem:[%s13 + $0xa8] sm:$0xff]
    %v4032 = vld [vmem:[%s13 + $0xb0] sm:$0xff]
    %v4033 = vld [vmem:[%s13 + $0xb8] sm:$0xff]
    %v4034 = vld [vmem:[%s13 + $0xc0] sm:$0xff]
    %v4035 = vld [vmem:[%s13 + $0xc8] sm:$0xff]
    %v4036 = vld [vmem:[%s13 + $0xd0] sm:$0xff]
    %v4037 = vld [vmem:[%s13 + $0xd8] sm:$0xff]
    %v4038 = vld [vmem:[%s13 + $0xe0] sm:$0xff]
    %v4039 = vld [vmem:[%s13 + $0xe8] sm:$0xff]
    %v4040 = vld [vmem:[%s13 + $0xf0] sm:$0xff]
    %v4041 = vld [vmem:[%s13 + $0xf8] sm:$0xff]
    %v4042 = vld [vmem:[%s13 + $0x100] sm:$0xff]
    %v4043 = vld [vmem:[%s13 + $0x108] sm:$0xff]
    %v4044 = vld [vmem:[%s13 + $0x110] sm:$0xff]
    %v4045 = vld [vmem:[%s13 + $0x118] sm:$0xff]
    %v4046 = vld [vmem:[%s13 + $0x120] sm:$0xff]
    %v4047 = vld [vmem:[%s13 + $0x128] sm:$0xff]
    %v4048 = vld [vmem:[%s13 + $0x130] sm:$0xff]
    %v4049 = vld [vmem:[%s13 + $0x138] sm:$0xff]
    %v4050 = vld [vmem:[%s13 + $0x140] sm:$0xff]
    %v4051 = vld [vmem:[%s13 + $0x148] sm:$0xff]
    %v4052 = vld [vmem:[%s13 + $0x150] sm:$0xff]
    %v4053 = vld [vmem:[%s13 + $0x158] sm:$0xff]
    %v4054 = vld [vmem:[%s13 + $0x160] sm:$0xff]
    %v4055 = vld [vmem:[%s13 + $0x168] sm:$0xff]
    %v4056 = vld [vmem:[%s13 + $0x170] sm:$0xff]
    %v4057 = vld [vmem:[%s13 + $0x178] sm:$0xff]
    %v4058 = vld [vmem:[%s13 + $0x180] sm:$0xff]
    %v4059 = vld [vmem:[%s13 + $0x188] sm:$0xff]
    %v4060 = vld [vmem:[%s13 + $0x190] sm:$0xff]
    %v4061 = vld [vmem:[%s13 + $0x198] sm:$0xff]
    %v4062 = vld [vmem:[%s13 + $0x1a0] sm:$0xff]
    %v4063 = vld [vmem:[%s13 + $0x1a8] sm:$0xff]
    %v4064 = vld [vmem:[%s13 + $0x1b0] sm:$0xff]
    %v4065 = vld [vmem:[%s13 + $0x1b8] sm:$0xff]
    %v4066 = vld [vmem:[%s13 + $0x1c0] sm:$0xff]
    %v4067 = vld [vmem:[%s13 + $0x1c8] sm:$0xff]
    %v4068 = vld [vmem:[%s13 + $0x1d0] sm:$0xff]
    %v4069 = vld [vmem:[%s13 + $0x1d8] sm:$0xff]
    %v4070 = vld [vmem:[%s13 + $0x1e0] sm:$0xff]
    %v4071 = vld [vmem:[%s13 + $0x1e8] sm:$0xff]
    %v4072 = vld [vmem:[%s13 + $0x1f0] sm:$0xff]
    %v4073 = vld [vmem:[%s13 + $0x1f8] sm:$0xff]
    %v4074 = vld [vmem:[%s13 + $0x200] sm:$0xff]
    %v4075 = vld [vmem:[%s13 + $0x208] sm:$0xff]
    %v4076 = vld [vmem:[%s13 + $0x210] sm:$0xff]
    %v4077 = vld [vmem:[%s13 + $0x218] sm:$0xff]
    %v4078 = vld [vmem:[%s13 + $0x220] sm:$0xff]
    %v4079 = vld [vmem:[%s13 + $0x228] sm:$0xff]
    %v4080 = vld [vmem:[%s13 + $0x230] sm:$0xff]
    %v4081 = vld [vmem:[%s13 + $0x238] sm:$0xff]
    %v4082 = vld [vmem:[%s13 + $0x240] sm:$0xff]
    %v4083 = vld [vmem:[%s13 + $0x248] sm:$0xff]
    %v4084 = vld [vmem:[%s13 + $0x250] sm:$0xff]
    %v4085 = vld [vmem:[%s13 + $0x258] sm:$0xff]
    %v4086 = vld [vmem:[%s13 + $0x260] sm:$0xff]
    %v4087 = vld [vmem:[%s13 + $0x268] sm:$0xff]
    %v4088 = vld [vmem:[%s13 + $0x270] sm:$0xff]
    %v4089 = vld [vmem:[%s13 + $0x278] sm:$0xff]
    %v4090 = vld [vmem:[%s13 + $0x280] sm:$0xff]
    %v4091 = vld [vmem:[%s13 + $0x288] sm:$0xff]
    %v4092 = vld [vmem:[%s13 + $0x290] sm:$0xff]
    %v4093 = vld [vmem:[%s13 + $0x298] sm:$0xff]
    %v4094 = vld [vmem:[%s13 + $0x2a0] sm:$0xff]
    %v4095 = vld [vmem:[%s13 + $0x2a8] sm:$0xff]
    %v4096 = vld [vmem:[%s13 + $0x2b0] sm:$0xff]
    %v4097 = vld [vmem:[%s13 + $0x2b8] sm:$0xff]
    %v4098 = vld [vmem:[%s13 + $0x2c0] sm:$0xff]
    %v4099 = vld [vmem:[%s13 + $0x2c8] sm:$0xff]
    %v4100 = vld [vmem:[%s13 + $0x2d0] sm:$0xff]
    %v4101 = vld [vmem:[%s13 + $0x2d8] sm:$0xff]
    %v4102 = vld [vmem:[%s13 + $0x2e0] sm:$0xff]
    %v4103 = vld [vmem:[%s13 + $0x2e8] sm:$0xff]
    %v4104 = vld [vmem:[%s13 + $0x2f0] sm:$0xff]
    %v4105 = vld [vmem:[%s13 + $0x2f8] sm:$0xff]
    %v4106 = vld [vmem:[%s13 + $0x300] sm:$0xff]
    %v4107 = vld [vmem:[%s13 + $0x308] sm:$0xff]
    %v4108 = vld [vmem:[%s13 + $0x310] sm:$0xff]
    %v4109 = vld [vmem:[%s13 + $0x318] sm:$0xff]
    %v4110 = vld [vmem:[%s13 + $0x320] sm:$0xff]
    %v4111 = vld [vmem:[%s13 + $0x328] sm:$0xff]
    %v4112 = vld [vmem:[%s13 + $0x330] sm:$0xff]
    %v4113 = vld [vmem:[%s13 + $0x338] sm:$0xff]
    %v4114 = vld [vmem:[%s13 + $0x340] sm:$0xff]
    %v4115 = vld [vmem:[%s13 + $0x348] sm:$0xff]
    %v4116 = vld [vmem:[%s13 + $0x350] sm:$0xff]
    %v4117 = vld [vmem:[%s13 + $0x358] sm:$0xff]
    %v4118 = vld [vmem:[%s13 + $0x360] sm:$0xff]
    %v4119 = vld [vmem:[%s13 + $0x368] sm:$0xff]
    %v4120 = vld [vmem:[%s13 + $0x370] sm:$0xff]
    %v4121 = vld [vmem:[%s13 + $0x378] sm:$0xff]
    %v4122 = vld [vmem:[%s13 + $0x380] sm:$0xff]
    %v4123 = vld [vmem:[%s13 + $0x388] sm:$0xff]
    %v4124 = vld [vmem:[%s13 + $0x390] sm:$0xff]
    %v4125 = vld [vmem:[%s13 + $0x398] sm:$0xff]
    %v4126 = vld [vmem:[%s13 + $0x3a0] sm:$0xff]
    %v4127 = vld [vmem:[%s13 + $0x3a8] sm:$0xff]
    %v4128 = vld [vmem:[%s13 + $0x3b0] sm:$0xff]
    %v4129 = vld [vmem:[%s13 + $0x3b8] sm:$0xff]
    %v4130 = vld [vmem:[%s13 + $0x3c0] sm:$0xff]
    %v4131 = vld [vmem:[%s13 + $0x3c8] sm:$0xff]
    %v4132 = vld [vmem:[%s13 + $0x3d0] sm:$0xff]
    %v4133 = vld [vmem:[%s13 + $0x3d8] sm:$0xff]
    %v4134 = vld [vmem:[%s13 + $0x3e0] sm:$0xff]
    %v4135 = vld [vmem:[%s13 + $0x3e8] sm:$0xff]
    %v4136 = vld [vmem:[%s13 + $0x3f0] sm:$0xff]
    %v4137 = vld [vmem:[%s13 + $0x3f8] sm:$0xff]
    %v4138 = vld [vmem:[%s13 + $0x400] sm:$0xff]
    %v4139 = vld [vmem:[%s13 + $0x408] sm:$0xff]
    %v4140 = vld [vmem:[%s13 + $0x410] sm:$0xff]
    %v4141 = vld [vmem:[%s13 + $0x418] sm:$0xff]
    %v4142 = vld [vmem:[%s13 + $0x420] sm:$0xff]
    %v4143 = vld [vmem:[%s13 + $0x428] sm:$0xff]
    %v4144 = vld [vmem:[%s13 + $0x430] sm:$0xff]
    %v4145 = vld [vmem:[%s13 + $0x438] sm:$0xff]
    %v4146 = vld [vmem:[%s13 + $0x440] sm:$0xff]
    %v4147 = vld [vmem:[%s13 + $0x448] sm:$0xff]
    %v4148 = vld [vmem:[%s13 + $0x450] sm:$0xff]
    %v4149 = vld [vmem:[%s13 + $0x458] sm:$0xff]
    %v4150 = vld [vmem:[%s13 + $0x460] sm:$0xff]
    %v4151 = vld [vmem:[%s13 + $0x468] sm:$0xff]
    %v4152 = vld [vmem:[%s13 + $0x470] sm:$0xff]
    %v4153 = vld [vmem:[%s13 + $0x478] sm:$0xff]
    %v4154 = vld [vmem:[%s13 + $0x480] sm:$0xff]
    %v4155 = vld [vmem:[%s13 + $0x488] sm:$0xff]
    %v4156 = vld [vmem:[%s13 + $0x490] sm:$0xff]
    %v4157 = vld [vmem:[%s13 + $0x498] sm:$0xff]
    %v4158 = vld [vmem:[%s13 + $0x4a0] sm:$0xff]
    %v4159 = vld [vmem:[%s13 + $0x4a8] sm:$0xff]
    %v4160 = vld [vmem:[%s13 + $0x4b0] sm:$0xff]
    %v4161 = vld [vmem:[%s13 + $0x4b8] sm:$0xff]
    %v4162 = vld [vmem:[%s13 + $0x4c0] sm:$0xff]
    %v4163 = vld [vmem:[%s13 + $0x4c8] sm:$0xff]
    %v4164 = vld [vmem:[%s13 + $0x4d0] sm:$0xff]
    %v4165 = vld [vmem:[%s13 + $0x4d8] sm:$0xff]
    %v4166 = vld [vmem:[%s13 + $0x4e0] sm:$0xff]
    %v4167 = vld [vmem:[%s13 + $0x4e8] sm:$0xff]
    %v4168 = vld [vmem:[%s13 + $0x4f0] sm:$0xff]
    %v4169 = vld [vmem:[%s13 + $0x4f8] sm:$0xff]
    %v4170 = vld [vmem:[%s13 + $0x500] sm:$0xff]
    %v4171 = vld [vmem:[%s13 + $0x508] sm:$0xff]
    %v4172 = vld [vmem:[%s13 + $0x510] sm:$0xff]
    %v4173 = vld [vmem:[%s13 + $0x518] sm:$0xff]
    %v4174 = vld [vmem:[%s13 + $0x520] sm:$0xff]
    %v4175 = vld [vmem:[%s13 + $0x528] sm:$0xff]
    %v4176 = vld [vmem:[%s13 + $0x530] sm:$0xff]
    %v4177 = vld [vmem:[%s13 + $0x538] sm:$0xff]
    %v4178 = vld [vmem:[%s13 + $0x540] sm:$0xff]
    %v4179 = vld [vmem:[%s13 + $0x548] sm:$0xff]
    %v4180 = vld [vmem:[%s13 + $0x550] sm:$0xff]
    %v4181 = vld [vmem:[%s13 + $0x558] sm:$0xff]
    %v4182 = vld [vmem:[%s13 + $0x560] sm:$0xff]
    %v4183 = vld [vmem:[%s13 + $0x568] sm:$0xff]
    %v4184 = vld [vmem:[%s13 + $0x570] sm:$0xff]
    %v4185 = vld [vmem:[%s13 + $0x578] sm:$0xff]
    %v4186 = vld [vmem:[%s13 + $0x580] sm:$0xff]
    %v4187 = vld [vmem:[%s13 + $0x588] sm:$0xff]
    %v4188 = vld [vmem:[%s13 + $0x590] sm:$0xff]
    %v4189 = vld [vmem:[%s13 + $0x598] sm:$0xff]
    %v4190 = vld [vmem:[%s13 + $0x5a0] sm:$0xff]
    %v4191 = vld [vmem:[%s13 + $0x5a8] sm:$0xff]
    %v4192 = vld [vmem:[%s13 + $0x5b0] sm:$0xff]
    %v4193 = vld [vmem:[%s13 + $0x5b8] sm:$0xff]
    %v4194 = vld [vmem:[%s13 + $0x5c0] sm:$0xff]
    %v4195 = vld [vmem:[%s13 + $0x5c8] sm:$0xff]
    %v4196 = vld [vmem:[%s13 + $0x5d0] sm:$0xff]
    %v4197 = vld [vmem:[%s13 + $0x5d8] sm:$0xff]
    %v4198 = vld [vmem:[%s13 + $0x5e0] sm:$0xff]
    %v4199 = vld [vmem:[%s13 + $0x5e8] sm:$0xff]
    %v4200 = vld [vmem:[%s13 + $0x5f0] sm:$0xff]
    %v4201 = vld [vmem:[%s13 + $0x5f8] sm:$0xff]
    %v4202 = vld [vmem:[%s13 + $0x600] sm:$0xff]
    %v4203 = vld [vmem:[%s13 + $0x608] sm:$0xff]
    %v4204 = vld [vmem:[%s13 + $0x610] sm:$0xff]
    %v4205 = vld [vmem:[%s13 + $0x618] sm:$0xff]
    %v4206 = vld [vmem:[%s13 + $0x620] sm:$0xff]
    %v4207 = vld [vmem:[%s13 + $0x628] sm:$0xff]
    %v4208 = vld [vmem:[%s13 + $0x630] sm:$0xff]
    %v4209 = vld [vmem:[%s13 + $0x638] sm:$0xff]
    %v4210 = vld [vmem:[%s13 + $0x640] sm:$0xff]
    %v4211 = vld [vmem:[%s13 + $0x648] sm:$0xff]
    %v4212 = vld [vmem:[%s13 + $0x650] sm:$0xff]
    %v4213 = vld [vmem:[%s13 + $0x658] sm:$0xff]
    %v4214 = vld [vmem:[%s13 + $0x660] sm:$0xff]
    %v4215 = vld [vmem:[%s13 + $0x668] sm:$0xff]
    %v4216 = vld [vmem:[%s13 + $0x670] sm:$0xff]
    %v4217 = vld [vmem:[%s13 + $0x678] sm:$0xff]
    %v4218 = vld [vmem:[%s13 + $0x680] sm:$0xff]
    %v4219 = vld [vmem:[%s13 + $0x688] sm:$0xff]
    %v4220 = vld [vmem:[%s13 + $0x690] sm:$0xff]
    %v4221 = vld [vmem:[%s13 + $0x698] sm:$0xff]
    %v4222 = vld [vmem:[%s13 + $0x6a0] sm:$0xff]
    %v4223 = vld [vmem:[%s13 + $0x6a8] sm:$0xff]
    %v4224 = vld [vmem:[%s13 + $0x6b0] sm:$0xff]
    %v4225 = vld [vmem:[%s13 + $0x6b8] sm:$0xff]
    %v4226 = vld [vmem:[%s13 + $0x6c0] sm:$0xff]
    %v4227 = vld [vmem:[%s13 + $0x6c8] sm:$0xff]
    %v4228 = vld [vmem:[%s13 + $0x6d0] sm:$0xff]
    %v4229 = vld [vmem:[%s13 + $0x6d8] sm:$0xff]
    %v4230 = vld [vmem:[%s13 + $0x6e0] sm:$0xff]
    %v4231 = vld [vmem:[%s13 + $0x6e8] sm:$0xff]
    %v4232 = vld [vmem:[%s13 + $0x6f0] sm:$0xff]
    %v4233 = vld [vmem:[%s13 + $0x6f8] sm:$0xff]
    %v4234 = vld [vmem:[%s13 + $0x700] sm:$0xff]
    %v4235 = vld [vmem:[%s13 + $0x708] sm:$0xff]
    %v4236 = vld [vmem:[%s13 + $0x710] sm:$0xff]
    %v4237 = vld [vmem:[%s13 + $0x718] sm:$0xff]
    %v4238 = vld [vmem:[%s13 + $0x720] sm:$0xff]
    %v4239 = vld [vmem:[%s13 + $0x728] sm:$0xff]
    %v4240 = vld [vmem:[%s13 + $0x730] sm:$0xff]
    %v4241 = vld [vmem:[%s13 + $0x738] sm:$0xff]
    %v4242 = vld [vmem:[%s13 + $0x740] sm:$0xff]
    %v4243 = vld [vmem:[%s13 + $0x748] sm:$0xff]
    %v4244 = vld [vmem:[%s13 + $0x750] sm:$0xff]
    %v4245 = vld [vmem:[%s13 + $0x758] sm:$0xff]
    %v4246 = vld [vmem:[%s13 + $0x760] sm:$0xff]
    %v4247 = vld [vmem:[%s13 + $0x768] sm:$0xff]
    %v4248 = vld [vmem:[%s13 + $0x770] sm:$0xff]
    %v4249 = vld [vmem:[%s13 + $0x778] sm:$0xff]
    %v4250 = vld [vmem:[%s13 + $0x780] sm:$0xff]
    %v4251 = vld [vmem:[%s13 + $0x788] sm:$0xff]
    %v4252 = vld [vmem:[%s13 + $0x790] sm:$0xff]
    %v4253 = vld [vmem:[%s13 + $0x798] sm:$0xff]
    %v4254 = vld [vmem:[%s13 + $0x7a0] sm:$0xff]
    %v4255 = vld [vmem:[%s13 + $0x7a8] sm:$0xff]
    %v4256 = vld [vmem:[%s13 + $0x7b0] sm:$0xff]
    %v4257 = vld [vmem:[%s13 + $0x7b8] sm:$0xff]
    %v4258 = vld [vmem:[%s13 + $0x7c0] sm:$0xff]
    %v4259 = vld [vmem:[%s13 + $0x7c8] sm:$0xff]
    %v4260 = vunpack.c.l.s8.bf16 %v4010
    %v4261 = vunpack.c.h.s8.bf16 %v4010
    %v4262 = vunpack.c.l.s8.bf16 %v4011
    %v4263 = vunpack.c.h.s8.bf16 %v4011
    %v4264 = vunpack.c.l.s8.bf16 %v4012
    %v4265 = vunpack.c.h.s8.bf16 %v4012
    %v4266 = vunpack.c.l.s8.bf16 %v4013
    %v4267 = vunpack.c.h.s8.bf16 %v4013
    %v4268 = vunpack.c.l.s8.bf16 %v4014
    %v4269 = vunpack.c.h.s8.bf16 %v4014
    %v4270 = vunpack.c.l.s8.bf16 %v4015
    %v4271 = vunpack.c.h.s8.bf16 %v4015
    %v4272 = vunpack.c.l.s8.bf16 %v4016
    %v4273 = vunpack.c.h.s8.bf16 %v4016
    %v4274 = vunpack.c.l.s8.bf16 %v4017
    %v4275 = vunpack.c.h.s8.bf16 %v4017
    %v4276 = vunpack.c.l.s8.bf16 %v4018
    %v4277 = vunpack.c.h.s8.bf16 %v4018
    %v4278 = vunpack.c.l.s8.bf16 %v4019
    %v4279 = vunpack.c.h.s8.bf16 %v4019
    %v4280 = vunpack.c.l.s8.bf16 %v4020
    %v4281 = vunpack.c.h.s8.bf16 %v4020
    %v4282 = vunpack.c.l.s8.bf16 %v4021
    %v4283 = vunpack.c.h.s8.bf16 %v4021
    %v4284 = vunpack.c.l.s8.bf16 %v4022
    %v4285 = vunpack.c.h.s8.bf16 %v4022
    %v4286 = vunpack.c.l.s8.bf16 %v4023
    %v4287 = vunpack.c.h.s8.bf16 %v4023
    %v4288 = vunpack.c.l.s8.bf16 %v4024
    %v4289 = vunpack.c.h.s8.bf16 %v4024
    %v4290 = vunpack.c.l.s8.bf16 %v4025
    %v4291 = vunpack.c.h.s8.bf16 %v4025
    %v4292 = vunpack.c.l.s8.bf16 %v4026
    %v4293 = vunpack.c.h.s8.bf16 %v4026
    %v4294 = vunpack.c.l.s8.bf16 %v4027
    %v4295 = vunpack.c.h.s8.bf16 %v4027
    %v4296 = vunpack.c.l.s8.bf16 %v4028
    %v4297 = vunpack.c.h.s8.bf16 %v4028
    %v4298 = vunpack.c.l.s8.bf16 %v4029
    %v4299 = vunpack.c.h.s8.bf16 %v4029
    %v4300 = vunpack.c.l.s8.bf16 %v4030
    %v4301 = vunpack.c.h.s8.bf16 %v4030
    %v4302 = vunpack.c.l.s8.bf16 %v4031
    %v4303 = vunpack.c.h.s8.bf16 %v4031
    %v4304 = vunpack.c.l.s8.bf16 %v4032
    %v4305 = vunpack.c.h.s8.bf16 %v4032
    %v4306 = vunpack.c.l.s8.bf16 %v4033
    %v4307 = vunpack.c.h.s8.bf16 %v4033
    %v4308 = vunpack.c.l.s8.bf16 %v4034
    %v4309 = vunpack.c.h.s8.bf16 %v4034
    %v4310 = vunpack.c.l.s8.bf16 %v4035
    %v4311 = vunpack.c.h.s8.bf16 %v4035
    %v4312 = vunpack.c.l.s8.bf16 %v4036
    %v4313 = vunpack.c.h.s8.bf16 %v4036
    %v4314 = vunpack.c.l.s8.bf16 %v4037
    %v4315 = vunpack.c.h.s8.bf16 %v4037
    %v4316 = vunpack.c.l.s8.bf16 %v4038
    %v4317 = vunpack.c.h.s8.bf16 %v4038
    %v4318 = vunpack.c.l.s8.bf16 %v4039
    %v4319 = vunpack.c.h.s8.bf16 %v4039
    %v4320 = vunpack.c.l.s8.bf16 %v4040
    %v4321 = vunpack.c.h.s8.bf16 %v4040
    %v4322 = vunpack.c.l.s8.bf16 %v4041
    %v4323 = vunpack.c.h.s8.bf16 %v4041
    %v4324 = vunpack.c.l.s8.bf16 %v4042
    %v4325 = vunpack.c.h.s8.bf16 %v4042
    %v4326 = vunpack.c.l.s8.bf16 %v4043
    %v4327 = vunpack.c.h.s8.bf16 %v4043
    %v4328 = vunpack.c.l.s8.bf16 %v4044
    %v4329 = vunpack.c.h.s8.bf16 %v4044
    %v4330 = vunpack.c.l.s8.bf16 %v4045
    %v4331 = vunpack.c.h.s8.bf16 %v4045
    %v4332 = vunpack.c.l.s8.bf16 %v4046
    %v4333 = vunpack.c.h.s8.bf16 %v4046
    %v4334 = vunpack.c.l.s8.bf16 %v4047
    %v4335 = vunpack.c.h.s8.bf16 %v4047
    %v4336 = vunpack.c.l.s8.bf16 %v4048
    %v4337 = vunpack.c.h.s8.bf16 %v4048
    %v4338 = vunpack.c.l.s8.bf16 %v4049
    %v4339 = vunpack.c.h.s8.bf16 %v4049
    %v4340 = vunpack.c.l.s8.bf16 %v4050
    %v4341 = vunpack.c.h.s8.bf16 %v4050
    %v4342 = vunpack.c.l.s8.bf16 %v4051
    %v4343 = vunpack.c.h.s8.bf16 %v4051
    %v4344 = vunpack.c.l.s8.bf16 %v4052
    %v4345 = vunpack.c.h.s8.bf16 %v4052
    %v4346 = vunpack.c.l.s8.bf16 %v4053
    %v4347 = vunpack.c.h.s8.bf16 %v4053
    %v4348 = vunpack.c.l.s8.bf16 %v4054
    %v4349 = vunpack.c.h.s8.bf16 %v4054
    %v4350 = vunpack.c.l.s8.bf16 %v4055
    %v4351 = vunpack.c.h.s8.bf16 %v4055
    %v4352 = vunpack.c.l.s8.bf16 %v4056
    %v4353 = vunpack.c.h.s8.bf16 %v4056
    %v4354 = vunpack.c.l.s8.bf16 %v4057
    %v4355 = vunpack.c.h.s8.bf16 %v4057
    %v4356 = vunpack.c.l.s8.bf16 %v4058
    %v4357 = vunpack.c.h.s8.bf16 %v4058
    %v4358 = vunpack.c.l.s8.bf16 %v4059
    %v4359 = vunpack.c.h.s8.bf16 %v4059
    %v4360 = vunpack.c.l.s8.bf16 %v4060
    %v4361 = vunpack.c.h.s8.bf16 %v4060
    %v4362 = vunpack.c.l.s8.bf16 %v4061
    %v4363 = vunpack.c.h.s8.bf16 %v4061
    %v4364 = vunpack.c.l.s8.bf16 %v4062
    %v4365 = vunpack.c.h.s8.bf16 %v4062
    %v4366 = vunpack.c.l.s8.bf16 %v4063
    %v4367 = vunpack.c.h.s8.bf16 %v4063
    %v4368 = vunpack.c.l.s8.bf16 %v4064
    %v4369 = vunpack.c.h.s8.bf16 %v4064
    %v4370 = vunpack.c.l.s8.bf16 %v4065
    %v4371 = vunpack.c.h.s8.bf16 %v4065
    %v4372 = vunpack.c.l.s8.bf16 %v4066
    %v4373 = vunpack.c.h.s8.bf16 %v4066
    %v4374 = vunpack.c.l.s8.bf16 %v4067
    %v4375 = vunpack.c.h.s8.bf16 %v4067
    %v4376 = vunpack.c.l.s8.bf16 %v4068
    %v4377 = vunpack.c.h.s8.bf16 %v4068
    %v4378 = vunpack.c.l.s8.bf16 %v4069
    %v4379 = vunpack.c.h.s8.bf16 %v4069
    %v4380 = vunpack.c.l.s8.bf16 %v4070
    %v4381 = vunpack.c.h.s8.bf16 %v4070
    %v4382 = vunpack.c.l.s8.bf16 %v4071
    %v4383 = vunpack.c.h.s8.bf16 %v4071
    %v4384 = vunpack.c.l.s8.bf16 %v4072
    %v4385 = vunpack.c.h.s8.bf16 %v4072
    %v4386 = vunpack.c.l.s8.bf16 %v4073
    %v4387 = vunpack.c.h.s8.bf16 %v4073
    %v4388 = vunpack.c.l.s8.bf16 %v4074
    %v4389 = vunpack.c.h.s8.bf16 %v4074
    %v4390 = vunpack.c.l.s8.bf16 %v4075
    %v4391 = vunpack.c.h.s8.bf16 %v4075
    %v4392 = vunpack.c.l.s8.bf16 %v4076
    %v4393 = vunpack.c.h.s8.bf16 %v4076
    %v4394 = vunpack.c.l.s8.bf16 %v4077
    %v4395 = vunpack.c.h.s8.bf16 %v4077
    %v4396 = vunpack.c.l.s8.bf16 %v4078
    %v4397 = vunpack.c.h.s8.bf16 %v4078
    %v4398 = vunpack.c.l.s8.bf16 %v4079
    %v4399 = vunpack.c.h.s8.bf16 %v4079
    %v4400 = vunpack.c.l.s8.bf16 %v4080
    %v4401 = vunpack.c.h.s8.bf16 %v4080
    %v4402 = vunpack.c.l.s8.bf16 %v4081
    %v4403 = vunpack.c.h.s8.bf16 %v4081
    %v4404 = vunpack.c.l.s8.bf16 %v4082
    %v4405 = vunpack.c.h.s8.bf16 %v4082
    %v4406 = vunpack.c.l.s8.bf16 %v4083
    %v4407 = vunpack.c.h.s8.bf16 %v4083
    %v4408 = vunpack.c.l.s8.bf16 %v4084
    %v4409 = vunpack.c.h.s8.bf16 %v4084
    %v4410 = vunpack.c.l.s8.bf16 %v4085
    %v4411 = vunpack.c.h.s8.bf16 %v4085
    %v4412 = vunpack.c.l.s8.bf16 %v4086
    %v4413 = vunpack.c.h.s8.bf16 %v4086
    %v4414 = vunpack.c.l.s8.bf16 %v4087
    %v4415 = vunpack.c.h.s8.bf16 %v4087
    %v4416 = vunpack.c.l.s8.bf16 %v4088
    %v4417 = vunpack.c.h.s8.bf16 %v4088
    %v4418 = vunpack.c.l.s8.bf16 %v4089
    %v4419 = vunpack.c.h.s8.bf16 %v4089
    %v4420 = vunpack.c.l.s8.bf16 %v4090
    %v4421 = vunpack.c.h.s8.bf16 %v4090
    %v4422 = vunpack.c.l.s8.bf16 %v4091
    %v4423 = vunpack.c.h.s8.bf16 %v4091
    %v4424 = vunpack.c.l.s8.bf16 %v4092
    %v4425 = vunpack.c.h.s8.bf16 %v4092
    %v4426 = vunpack.c.l.s8.bf16 %v4093
    %v4427 = vunpack.c.h.s8.bf16 %v4093
    %v4428 = vunpack.c.l.s8.bf16 %v4094
    %v4429 = vunpack.c.h.s8.bf16 %v4094
    %v4430 = vunpack.c.l.s8.bf16 %v4095
    %v4431 = vunpack.c.h.s8.bf16 %v4095
    %v4432 = vunpack.c.l.s8.bf16 %v4096
    %v4433 = vunpack.c.h.s8.bf16 %v4096
    %v4434 = vunpack.c.l.s8.bf16 %v4097
    %v4435 = vunpack.c.h.s8.bf16 %v4097
    %v4436 = vunpack.c.l.s8.bf16 %v4098
    %v4437 = vunpack.c.h.s8.bf16 %v4098
    %v4438 = vunpack.c.l.s8.bf16 %v4099
    %v4439 = vunpack.c.h.s8.bf16 %v4099
    %v4440 = vunpack.c.l.s8.bf16 %v4100
    %v4441 = vunpack.c.h.s8.bf16 %v4100
    %v4442 = vunpack.c.l.s8.bf16 %v4101
    %v4443 = vunpack.c.h.s8.bf16 %v4101
    %v4444 = vunpack.c.l.s8.bf16 %v4102
    %v4445 = vunpack.c.h.s8.bf16 %v4102
    %v4446 = vunpack.c.l.s8.bf16 %v4103
    %v4447 = vunpack.c.h.s8.bf16 %v4103
    %v4448 = vunpack.c.l.s8.bf16 %v4104
    %v4449 = vunpack.c.h.s8.bf16 %v4104
    %v4450 = vunpack.c.l.s8.bf16 %v4105
    %v4451 = vunpack.c.h.s8.bf16 %v4105
    %v4452 = vunpack.c.l.s8.bf16 %v4106
    %v4453 = vunpack.c.h.s8.bf16 %v4106
    %v4454 = vunpack.c.l.s8.bf16 %v4107
    %v4455 = vunpack.c.h.s8.bf16 %v4107
    %v4456 = vunpack.c.l.s8.bf16 %v4108
    %v4457 = vunpack.c.h.s8.bf16 %v4108
    %v4458 = vunpack.c.l.s8.bf16 %v4109
    %v4459 = vunpack.c.h.s8.bf16 %v4109
    %v4460 = vunpack.c.l.s8.bf16 %v4110
    %v4461 = vunpack.c.h.s8.bf16 %v4110
    %v4462 = vunpack.c.l.s8.bf16 %v4111
    %v4463 = vunpack.c.h.s8.bf16 %v4111
    %v4464 = vunpack.c.l.s8.bf16 %v4112
    %v4465 = vunpack.c.h.s8.bf16 %v4112
    %v4466 = vunpack.c.l.s8.bf16 %v4113
    %v4467 = vunpack.c.h.s8.bf16 %v4113
    %v4468 = vunpack.c.l.s8.bf16 %v4114
    %v4469 = vunpack.c.h.s8.bf16 %v4114
    %v4470 = vunpack.c.l.s8.bf16 %v4115
    %v4471 = vunpack.c.h.s8.bf16 %v4115
    %v4472 = vunpack.c.l.s8.bf16 %v4116
    %v4473 = vunpack.c.h.s8.bf16 %v4116
    %v4474 = vunpack.c.l.s8.bf16 %v4117
    %v4475 = vunpack.c.h.s8.bf16 %v4117
    %v4476 = vunpack.c.l.s8.bf16 %v4118
    %v4477 = vunpack.c.h.s8.bf16 %v4118
    %v4478 = vunpack.c.l.s8.bf16 %v4119
    %v4479 = vunpack.c.h.s8.bf16 %v4119
    %v4480 = vunpack.c.l.s8.bf16 %v4120
    %v4481 = vunpack.c.h.s8.bf16 %v4120
    %v4482 = vunpack.c.l.s8.bf16 %v4121
    %v4483 = vunpack.c.h.s8.bf16 %v4121
    %v4484 = vunpack.c.l.s8.bf16 %v4122
    %v4485 = vunpack.c.h.s8.bf16 %v4122
    %v4486 = vunpack.c.l.s8.bf16 %v4123
    %v4487 = vunpack.c.h.s8.bf16 %v4123
    %v4488 = vunpack.c.l.s8.bf16 %v4124
    %v4489 = vunpack.c.h.s8.bf16 %v4124
    %v4490 = vunpack.c.l.s8.bf16 %v4125
    %v4491 = vunpack.c.h.s8.bf16 %v4125
    %v4492 = vunpack.c.l.s8.bf16 %v4126
    %v4493 = vunpack.c.h.s8.bf16 %v4126
    %v4494 = vunpack.c.l.s8.bf16 %v4127
    %v4495 = vunpack.c.h.s8.bf16 %v4127
    %v4496 = vunpack.c.l.s8.bf16 %v4128
    %v4497 = vunpack.c.h.s8.bf16 %v4128
    %v4498 = vunpack.c.l.s8.bf16 %v4129
    %v4499 = vunpack.c.h.s8.bf16 %v4129
    %v4500 = vunpack.c.l.s8.bf16 %v4130
    %v4501 = vunpack.c.h.s8.bf16 %v4130
    %v4502 = vunpack.c.l.s8.bf16 %v4131
    %v4503 = vunpack.c.h.s8.bf16 %v4131
    %v4504 = vunpack.c.l.s8.bf16 %v4132
    %v4505 = vunpack.c.h.s8.bf16 %v4132
    %v4506 = vunpack.c.l.s8.bf16 %v4133
    %v4507 = vunpack.c.h.s8.bf16 %v4133
    %v4508 = vunpack.c.l.s8.bf16 %v4134
    %v4509 = vunpack.c.h.s8.bf16 %v4134
    %v4510 = vunpack.c.l.s8.bf16 %v4135
    %v4511 = vunpack.c.h.s8.bf16 %v4135
    %v4512 = vunpack.c.l.s8.bf16 %v4136
    %v4513 = vunpack.c.h.s8.bf16 %v4136
    %v4514 = vunpack.c.l.s8.bf16 %v4137
    %v4515 = vunpack.c.h.s8.bf16 %v4137
    %v4516 = vunpack.c.l.s8.bf16 %v4138
    %v4517 = vunpack.c.h.s8.bf16 %v4138
    %v4518 = vunpack.c.l.s8.bf16 %v4139
    %v4519 = vunpack.c.h.s8.bf16 %v4139
    %v4520 = vunpack.c.l.s8.bf16 %v4140
    %v4521 = vunpack.c.h.s8.bf16 %v4140
    %v4522 = vunpack.c.l.s8.bf16 %v4141
    %v4523 = vunpack.c.h.s8.bf16 %v4141
    %v4524 = vunpack.c.l.s8.bf16 %v4142
    %v4525 = vunpack.c.h.s8.bf16 %v4142
    %v4526 = vunpack.c.l.s8.bf16 %v4143
    %v4527 = vunpack.c.h.s8.bf16 %v4143
    %v4528 = vunpack.c.l.s8.bf16 %v4144
    %v4529 = vunpack.c.h.s8.bf16 %v4144
    %v4530 = vunpack.c.l.s8.bf16 %v4145
    %v4531 = vunpack.c.h.s8.bf16 %v4145
    %v4532 = vunpack.c.l.s8.bf16 %v4146
    %v4533 = vunpack.c.h.s8.bf16 %v4146
    %v4534 = vunpack.c.l.s8.bf16 %v4147
    %v4535 = vunpack.c.h.s8.bf16 %v4147
    %v4536 = vunpack.c.l.s8.bf16 %v4148
    %v4537 = vunpack.c.h.s8.bf16 %v4148
    %v4538 = vunpack.c.l.s8.bf16 %v4149
    %v4539 = vunpack.c.h.s8.bf16 %v4149
    %v4540 = vunpack.c.l.s8.bf16 %v4150
    %v4541 = vunpack.c.h.s8.bf16 %v4150
    %v4542 = vunpack.c.l.s8.bf16 %v4151
    %v4543 = vunpack.c.h.s8.bf16 %v4151
    %v4544 = vunpack.c.l.s8.bf16 %v4152
    %v4545 = vunpack.c.h.s8.bf16 %v4152
    %v4546 = vunpack.c.l.s8.bf16 %v4153
    %v4547 = vunpack.c.h.s8.bf16 %v4153
    %v4548 = vunpack.c.l.s8.bf16 %v4154
    %v4549 = vunpack.c.h.s8.bf16 %v4154
    %v4550 = vunpack.c.l.s8.bf16 %v4155
    %v4551 = vunpack.c.h.s8.bf16 %v4155
    %v4552 = vunpack.c.l.s8.bf16 %v4156
    %v4553 = vunpack.c.h.s8.bf16 %v4156
    %v4554 = vunpack.c.l.s8.bf16 %v4157
    %v4555 = vunpack.c.h.s8.bf16 %v4157
    %v4556 = vunpack.c.l.s8.bf16 %v4158
    %v4557 = vunpack.c.h.s8.bf16 %v4158
    %v4558 = vunpack.c.l.s8.bf16 %v4159
    %v4559 = vunpack.c.h.s8.bf16 %v4159
    %v4560 = vunpack.c.l.s8.bf16 %v4160
    %v4561 = vunpack.c.h.s8.bf16 %v4160
    %v4562 = vunpack.c.l.s8.bf16 %v4161
    %v4563 = vunpack.c.h.s8.bf16 %v4161
    %v4564 = vunpack.c.l.s8.bf16 %v4162
    %v4565 = vunpack.c.h.s8.bf16 %v4162
    %v4566 = vunpack.c.l.s8.bf16 %v4163
    %v4567 = vunpack.c.h.s8.bf16 %v4163
    %v4568 = vunpack.c.l.s8.bf16 %v4164
    %v4569 = vunpack.c.h.s8.bf16 %v4164
    %v4570 = vunpack.c.l.s8.bf16 %v4165
    %v4571 = vunpack.c.h.s8.bf16 %v4165
    %v4572 = vunpack.c.l.s8.bf16 %v4166
    %v4573 = vunpack.c.h.s8.bf16 %v4166
    %v4574 = vunpack.c.l.s8.bf16 %v4167
    %v4575 = vunpack.c.h.s8.bf16 %v4167
    %v4576 = vunpack.c.l.s8.bf16 %v4168
    %v4577 = vunpack.c.h.s8.bf16 %v4168
    %v4578 = vunpack.c.l.s8.bf16 %v4169
    %v4579 = vunpack.c.h.s8.bf16 %v4169
    %v4580 = vunpack.c.l.s8.bf16 %v4170
    %v4581 = vunpack.c.h.s8.bf16 %v4170
    %v4582 = vunpack.c.l.s8.bf16 %v4171
    %v4583 = vunpack.c.h.s8.bf16 %v4171
    %v4584 = vunpack.c.l.s8.bf16 %v4172
    %v4585 = vunpack.c.h.s8.bf16 %v4172
    %v4586 = vunpack.c.l.s8.bf16 %v4173
    %v4587 = vunpack.c.h.s8.bf16 %v4173
    %v4588 = vunpack.c.l.s8.bf16 %v4174
    %v4589 = vunpack.c.h.s8.bf16 %v4174
    %v4590 = vunpack.c.l.s8.bf16 %v4175
    %v4591 = vunpack.c.h.s8.bf16 %v4175
    %v4592 = vunpack.c.l.s8.bf16 %v4176
    %v4593 = vunpack.c.h.s8.bf16 %v4176
    %v4594 = vunpack.c.l.s8.bf16 %v4177
    %v4595 = vunpack.c.h.s8.bf16 %v4177
    %v4596 = vunpack.c.l.s8.bf16 %v4178
    %v4597 = vunpack.c.h.s8.bf16 %v4178
    %v4598 = vunpack.c.l.s8.bf16 %v4179
    %v4599 = vunpack.c.h.s8.bf16 %v4179
    %v4600 = vunpack.c.l.s8.bf16 %v4180
    %v4601 = vunpack.c.h.s8.bf16 %v4180
    %v4602 = vunpack.c.l.s8.bf16 %v4181
    %v4603 = vunpack.c.h.s8.bf16 %v4181
    %v4604 = vunpack.c.l.s8.bf16 %v4182
    %v4605 = vunpack.c.h.s8.bf16 %v4182
    %v4606 = vunpack.c.l.s8.bf16 %v4183
    %v4607 = vunpack.c.h.s8.bf16 %v4183
    %v4608 = vunpack.c.l.s8.bf16 %v4184
    %v4609 = vunpack.c.h.s8.bf16 %v4184
    %v4610 = vunpack.c.l.s8.bf16 %v4185
    %v4611 = vunpack.c.h.s8.bf16 %v4185
    %v4612 = vunpack.c.l.s8.bf16 %v4186
    %v4613 = vunpack.c.h.s8.bf16 %v4186
    %v4614 = vunpack.c.l.s8.bf16 %v4187
    %v4615 = vunpack.c.h.s8.bf16 %v4187
    %v4616 = vunpack.c.l.s8.bf16 %v4188
    %v4617 = vunpack.c.h.s8.bf16 %v4188
    %v4618 = vunpack.c.l.s8.bf16 %v4189
    %v4619 = vunpack.c.h.s8.bf16 %v4189
    %v4620 = vunpack.c.l.s8.bf16 %v4190
    %v4621 = vunpack.c.h.s8.bf16 %v4190
    %v4622 = vunpack.c.l.s8.bf16 %v4191
    %v4623 = vunpack.c.h.s8.bf16 %v4191
    %v4624 = vunpack.c.l.s8.bf16 %v4192
    %v4625 = vunpack.c.h.s8.bf16 %v4192
    %v4626 = vunpack.c.l.s8.bf16 %v4193
    %v4627 = vunpack.c.h.s8.bf16 %v4193
    %v4628 = vunpack.c.l.s8.bf16 %v4194
    %v4629 = vunpack.c.h.s8.bf16 %v4194
    %v4630 = vunpack.c.l.s8.bf16 %v4195
    %v4631 = vunpack.c.h.s8.bf16 %v4195
    %v4632 = vunpack.c.l.s8.bf16 %v4196
    %v4633 = vunpack.c.h.s8.bf16 %v4196
    %v4634 = vunpack.c.l.s8.bf16 %v4197
    %v4635 = vunpack.c.h.s8.bf16 %v4197
    %v4636 = vunpack.c.l.s8.bf16 %v4198
    %v4637 = vunpack.c.h.s8.bf16 %v4198
    %v4638 = vunpack.c.l.s8.bf16 %v4199
    %v4639 = vunpack.c.h.s8.bf16 %v4199
    %v4640 = vunpack.c.l.s8.bf16 %v4200
    %v4641 = vunpack.c.h.s8.bf16 %v4200
    %v4642 = vunpack.c.l.s8.bf16 %v4201
    %v4643 = vunpack.c.h.s8.bf16 %v4201
    %v4644 = vunpack.c.l.s8.bf16 %v4202
    %v4645 = vunpack.c.h.s8.bf16 %v4202
    %v4646 = vunpack.c.l.s8.bf16 %v4203
    %v4647 = vunpack.c.h.s8.bf16 %v4203
    %v4648 = vunpack.c.l.s8.bf16 %v4204
    %v4649 = vunpack.c.h.s8.bf16 %v4204
    %v4650 = vunpack.c.l.s8.bf16 %v4205
    %v4651 = vunpack.c.h.s8.bf16 %v4205
    %v4652 = vunpack.c.l.s8.bf16 %v4206
    %v4653 = vunpack.c.h.s8.bf16 %v4206
    %v4654 = vunpack.c.l.s8.bf16 %v4207
    %v4655 = vunpack.c.h.s8.bf16 %v4207
    %v4656 = vunpack.c.l.s8.bf16 %v4208
    %v4657 = vunpack.c.h.s8.bf16 %v4208
    %v4658 = vunpack.c.l.s8.bf16 %v4209
    %v4659 = vunpack.c.h.s8.bf16 %v4209
    %v4660 = vunpack.c.l.s8.bf16 %v4210
    %v4661 = vunpack.c.h.s8.bf16 %v4210
    %v4662 = vunpack.c.l.s8.bf16 %v4211
    %v4663 = vunpack.c.h.s8.bf16 %v4211
    %v4664 = vunpack.c.l.s8.bf16 %v4212
    %v4665 = vunpack.c.h.s8.bf16 %v4212
    %v4666 = vunpack.c.l.s8.bf16 %v4213
    %v4667 = vunpack.c.h.s8.bf16 %v4213
    %v4668 = vunpack.c.l.s8.bf16 %v4214
    %v4669 = vunpack.c.h.s8.bf16 %v4214
    %v4670 = vunpack.c.l.s8.bf16 %v4215
    %v4671 = vunpack.c.h.s8.bf16 %v4215
    %v4672 = vunpack.c.l.s8.bf16 %v4216
    %v4673 = vunpack.c.h.s8.bf16 %v4216
    %v4674 = vunpack.c.l.s8.bf16 %v4217
    %v4675 = vunpack.c.h.s8.bf16 %v4217
    %v4676 = vunpack.c.l.s8.bf16 %v4218
    %v4677 = vunpack.c.h.s8.bf16 %v4218
    %v4678 = vunpack.c.l.s8.bf16 %v4219
    %v4679 = vunpack.c.h.s8.bf16 %v4219
    %v4680 = vunpack.c.l.s8.bf16 %v4220
    %v4681 = vunpack.c.h.s8.bf16 %v4220
    %v4682 = vunpack.c.l.s8.bf16 %v4221
    %v4683 = vunpack.c.h.s8.bf16 %v4221
    %v4684 = vunpack.c.l.s8.bf16 %v4222
    %v4685 = vunpack.c.h.s8.bf16 %v4222
    %v4686 = vunpack.c.l.s8.bf16 %v4223
    %v4687 = vunpack.c.h.s8.bf16 %v4223
    %v4688 = vunpack.c.l.s8.bf16 %v4224
    %v4689 = vunpack.c.h.s8.bf16 %v4224
    %v4690 = vunpack.c.l.s8.bf16 %v4225
    %v4691 = vunpack.c.h.s8.bf16 %v4225
    %v4692 = vunpack.c.l.s8.bf16 %v4226
    %v4693 = vunpack.c.h.s8.bf16 %v4226
    %v4694 = vunpack.c.l.s8.bf16 %v4227
    %v4695 = vunpack.c.h.s8.bf16 %v4227
    %v4696 = vunpack.c.l.s8.bf16 %v4228
    %v4697 = vunpack.c.h.s8.bf16 %v4228
    %v4698 = vunpack.c.l.s8.bf16 %v4229
    %v4699 = vunpack.c.h.s8.bf16 %v4229
    %v4700 = vunpack.c.l.s8.bf16 %v4230
    %v4701 = vunpack.c.h.s8.bf16 %v4230
    %v4702 = vunpack.c.l.s8.bf16 %v4231
    %v4703 = vunpack.c.h.s8.bf16 %v4231
    %v4704 = vunpack.c.l.s8.bf16 %v4232
    %v4705 = vunpack.c.h.s8.bf16 %v4232
    %v4706 = vunpack.c.l.s8.bf16 %v4233
    %v4707 = vunpack.c.h.s8.bf16 %v4233
    %v4708 = vunpack.c.l.s8.bf16 %v4234
    %v4709 = vunpack.c.h.s8.bf16 %v4234
    %v4710 = vunpack.c.l.s8.bf16 %v4235
    %v4711 = vunpack.c.h.s8.bf16 %v4235
    %v4712 = vunpack.c.l.s8.bf16 %v4236
    %v4713 = vunpack.c.h.s8.bf16 %v4236
    %v4714 = vunpack.c.l.s8.bf16 %v4237
    %v4715 = vunpack.c.h.s8.bf16 %v4237
    %v4716 = vunpack.c.l.s8.bf16 %v4238
    %v4717 = vunpack.c.h.s8.bf16 %v4238
    %v4718 = vunpack.c.l.s8.bf16 %v4239
    %v4719 = vunpack.c.h.s8.bf16 %v4239
    %v4720 = vunpack.c.l.s8.bf16 %v4240
    %v4721 = vunpack.c.h.s8.bf16 %v4240
    %v4722 = vunpack.c.l.s8.bf16 %v4241
    %v4723 = vunpack.c.h.s8.bf16 %v4241
    %v4724 = vunpack.c.l.s8.bf16 %v4242
    %v4725 = vunpack.c.h.s8.bf16 %v4242
    %v4726 = vunpack.c.l.s8.bf16 %v4243
    %v4727 = vunpack.c.h.s8.bf16 %v4243
    %v4728 = vunpack.c.l.s8.bf16 %v4244
    %v4729 = vunpack.c.h.s8.bf16 %v4244
    %v4730 = vunpack.c.l.s8.bf16 %v4245
    %v4731 = vunpack.c.h.s8.bf16 %v4245
    %v4732 = vunpack.c.l.s8.bf16 %v4246
    %v4733 = vunpack.c.h.s8.bf16 %v4246
    %v4734 = vunpack.c.l.s8.bf16 %v4247
    %v4735 = vunpack.c.h.s8.bf16 %v4247
    %v4736 = vunpack.c.l.s8.bf16 %v4248
    %v4737 = vunpack.c.h.s8.bf16 %v4248
    %v4738 = vunpack.c.l.s8.bf16 %v4249
    %v4739 = vunpack.c.h.s8.bf16 %v4249
    %v4740 = vunpack.c.l.s8.bf16 %v4250
    %v4741 = vunpack.c.h.s8.bf16 %v4250
    %v4742 = vunpack.c.l.s8.bf16 %v4251
    %v4743 = vunpack.c.h.s8.bf16 %v4251
    %v4744 = vunpack.c.l.s8.bf16 %v4252
    %v4745 = vunpack.c.h.s8.bf16 %v4252
    %v4746 = vunpack.c.l.s8.bf16 %v4253
    %v4747 = vunpack.c.h.s8.bf16 %v4253
    %v4748 = vunpack.c.l.s8.bf16 %v4254
    %v4749 = vunpack.c.h.s8.bf16 %v4254
    %v4750 = vunpack.c.l.s8.bf16 %v4255
    %v4751 = vunpack.c.h.s8.bf16 %v4255
    %v4752 = vunpack.c.l.s8.bf16 %v4256
    %v4753 = vunpack.c.h.s8.bf16 %v4256
    %v4754 = vunpack.c.l.s8.bf16 %v4257
    %v4755 = vunpack.c.h.s8.bf16 %v4257
    %v4756 = vunpack.c.l.s8.bf16 %v4258
    %v4757 = vunpack.c.h.s8.bf16 %v4258
    %v4758 = vunpack.c.l.s8.bf16 %v4259
    %v4759 = vunpack.c.h.s8.bf16 %v4259
    %v5260 = vunpack.c.l.b16 %v4260
    %v5261 = vunpack.c.h.b16 %v4260
    %v5262 = vunpack.c.l.b16 %v4261
    %v5263 = vunpack.c.h.b16 %v4261
    %v5264 = vunpack.c.l.b16 %v4262
    %v5265 = vunpack.c.h.b16 %v4262
    %v5266 = vunpack.c.l.b16 %v4263
    %v5267 = vunpack.c.h.b16 %v4263
    %v5268 = vunpack.c.l.b16 %v4264
    %v5269 = vunpack.c.h.b16 %v4264
    %v5270 = vunpack.c.l.b16 %v4265
    %v5271 = vunpack.c.h.b16 %v4265
    %v5272 = vunpack.c.l.b16 %v4266
    %v5273 = vunpack.c.h.b16 %v4266
    %v5274 = vunpack.c.l.b16 %v4267
    %v5275 = vunpack.c.h.b16 %v4267
    %v5276 = vunpack.c.l.b16 %v4268
    %v5277 = vunpack.c.h.b16 %v4268
    %v5278 = vunpack.c.l.b16 %v4269
    %v5279 = vunpack.c.h.b16 %v4269
    %v5280 = vunpack.c.l.b16 %v4270
    %v5281 = vunpack.c.h.b16 %v4270
    %v5282 = vunpack.c.l.b16 %v4271
    %v5283 = vunpack.c.h.b16 %v4271
    %v5284 = vunpack.c.l.b16 %v4272
    %v5285 = vunpack.c.h.b16 %v4272
    %v5286 = vunpack.c.l.b16 %v4273
    %v5287 = vunpack.c.h.b16 %v4273
    %v5288 = vunpack.c.l.b16 %v4274
    %v5289 = vunpack.c.h.b16 %v4274
    %v5290 = vunpack.c.l.b16 %v4275
    %v5291 = vunpack.c.h.b16 %v4275
    %v5292 = vunpack.c.l.b16 %v4276
    %v5293 = vunpack.c.h.b16 %v4276
    %v5294 = vunpack.c.l.b16 %v4277
    %v5295 = vunpack.c.h.b16 %v4277
    %v5296 = vunpack.c.l.b16 %v4278
    %v5297 = vunpack.c.h.b16 %v4278
    %v5298 = vunpack.c.l.b16 %v4279
    %v5299 = vunpack.c.h.b16 %v4279
    %v5300 = vunpack.c.l.b16 %v4280
    %v5301 = vunpack.c.h.b16 %v4280
    %v5302 = vunpack.c.l.b16 %v4281
    %v5303 = vunpack.c.h.b16 %v4281
    %v5304 = vunpack.c.l.b16 %v4282
    %v5305 = vunpack.c.h.b16 %v4282
    %v5306 = vunpack.c.l.b16 %v4283
    %v5307 = vunpack.c.h.b16 %v4283
    %v5308 = vunpack.c.l.b16 %v4284
    %v5309 = vunpack.c.h.b16 %v4284
    %v5310 = vunpack.c.l.b16 %v4285
    %v5311 = vunpack.c.h.b16 %v4285
    %v5312 = vunpack.c.l.b16 %v4286
    %v5313 = vunpack.c.h.b16 %v4286
    %v5314 = vunpack.c.l.b16 %v4287
    %v5315 = vunpack.c.h.b16 %v4287
    %v5316 = vunpack.c.l.b16 %v4288
    %v5317 = vunpack.c.h.b16 %v4288
    %v5318 = vunpack.c.l.b16 %v4289
    %v5319 = vunpack.c.h.b16 %v4289
    %v5320 = vunpack.c.l.b16 %v4290
    %v5321 = vunpack.c.h.b16 %v4290
    %v5322 = vunpack.c.l.b16 %v4291
    %v5323 = vunpack.c.h.b16 %v4291
    %v5324 = vunpack.c.l.b16 %v4292
    %v5325 = vunpack.c.h.b16 %v4292
    %v5326 = vunpack.c.l.b16 %v4293
    %v5327 = vunpack.c.h.b16 %v4293
    %v5328 = vunpack.c.l.b16 %v4294
    %v5329 = vunpack.c.h.b16 %v4294
    %v5330 = vunpack.c.l.b16 %v4295
    %v5331 = vunpack.c.h.b16 %v4295
    %v5332 = vunpack.c.l.b16 %v4296
    %v5333 = vunpack.c.h.b16 %v4296
    %v5334 = vunpack.c.l.b16 %v4297
    %v5335 = vunpack.c.h.b16 %v4297
    %v5336 = vunpack.c.l.b16 %v4298
    %v5337 = vunpack.c.h.b16 %v4298
    %v5338 = vunpack.c.l.b16 %v4299
    %v5339 = vunpack.c.h.b16 %v4299
    %v5340 = vunpack.c.l.b16 %v4300
    %v5341 = vunpack.c.h.b16 %v4300
    %v5342 = vunpack.c.l.b16 %v4301
    %v5343 = vunpack.c.h.b16 %v4301
    %v5344 = vunpack.c.l.b16 %v4302
    %v5345 = vunpack.c.h.b16 %v4302
    %v5346 = vunpack.c.l.b16 %v4303
    %v5347 = vunpack.c.h.b16 %v4303
    %v5348 = vunpack.c.l.b16 %v4304
    %v5349 = vunpack.c.h.b16 %v4304
    %v5350 = vunpack.c.l.b16 %v4305
    %v5351 = vunpack.c.h.b16 %v4305
    %v5352 = vunpack.c.l.b16 %v4306
    %v5353 = vunpack.c.h.b16 %v4306
    %v5354 = vunpack.c.l.b16 %v4307
    %v5355 = vunpack.c.h.b16 %v4307
    %v5356 = vunpack.c.l.b16 %v4308
    %v5357 = vunpack.c.h.b16 %v4308
    %v5358 = vunpack.c.l.b16 %v4309
    %v5359 = vunpack.c.h.b16 %v4309
    %v5360 = vunpack.c.l.b16 %v4310
    %v5361 = vunpack.c.h.b16 %v4310
    %v5362 = vunpack.c.l.b16 %v4311
    %v5363 = vunpack.c.h.b16 %v4311
    %v5364 = vunpack.c.l.b16 %v4312
    %v5365 = vunpack.c.h.b16 %v4312
    %v5366 = vunpack.c.l.b16 %v4313
    %v5367 = vunpack.c.h.b16 %v4313
    %v5368 = vunpack.c.l.b16 %v4314
    %v5369 = vunpack.c.h.b16 %v4314
    %v5370 = vunpack.c.l.b16 %v4315
    %v5371 = vunpack.c.h.b16 %v4315
    %v5372 = vunpack.c.l.b16 %v4316
    %v5373 = vunpack.c.h.b16 %v4316
    %v5374 = vunpack.c.l.b16 %v4317
    %v5375 = vunpack.c.h.b16 %v4317
    %v5376 = vunpack.c.l.b16 %v4318
    %v5377 = vunpack.c.h.b16 %v4318
    %v5378 = vunpack.c.l.b16 %v4319
    %v5379 = vunpack.c.h.b16 %v4319
    %v5380 = vunpack.c.l.b16 %v4320
    %v5381 = vunpack.c.h.b16 %v4320
    %v5382 = vunpack.c.l.b16 %v4321
    %v5383 = vunpack.c.h.b16 %v4321
    %v5384 = vunpack.c.l.b16 %v4322
    %v5385 = vunpack.c.h.b16 %v4322
    %v5386 = vunpack.c.l.b16 %v4323
    %v5387 = vunpack.c.h.b16 %v4323
    %v5388 = vunpack.c.l.b16 %v4324
    %v5389 = vunpack.c.h.b16 %v4324
    %v5390 = vunpack.c.l.b16 %v4325
    %v5391 = vunpack.c.h.b16 %v4325
    %v5392 = vunpack.c.l.b16 %v4326
    %v5393 = vunpack.c.h.b16 %v4326
    %v5394 = vunpack.c.l.b16 %v4327
    %v5395 = vunpack.c.h.b16 %v4327
    %v5396 = vunpack.c.l.b16 %v4328
    %v5397 = vunpack.c.h.b16 %v4328
    %v5398 = vunpack.c.l.b16 %v4329
    %v5399 = vunpack.c.h.b16 %v4329
    %v5400 = vunpack.c.l.b16 %v4330
    %v5401 = vunpack.c.h.b16 %v4330
    %v5402 = vunpack.c.l.b16 %v4331
    %v5403 = vunpack.c.h.b16 %v4331
    %v5404 = vunpack.c.l.b16 %v4332
    %v5405 = vunpack.c.h.b16 %v4332
    %v5406 = vunpack.c.l.b16 %v4333
    %v5407 = vunpack.c.h.b16 %v4333
    %v5408 = vunpack.c.l.b16 %v4334
    %v5409 = vunpack.c.h.b16 %v4334
    %v5410 = vunpack.c.l.b16 %v4335
    %v5411 = vunpack.c.h.b16 %v4335
    %v5412 = vunpack.c.l.b16 %v4336
    %v5413 = vunpack.c.h.b16 %v4336
    %v5414 = vunpack.c.l.b16 %v4337
    %v5415 = vunpack.c.h.b16 %v4337
    %v5416 = vunpack.c.l.b16 %v4338
    %v5417 = vunpack.c.h.b16 %v4338
    %v5418 = vunpack.c.l.b16 %v4339
    %v5419 = vunpack.c.h.b16 %v4339
    %v5420 = vunpack.c.l.b16 %v4340
    %v5421 = vunpack.c.h.b16 %v4340
    %v5422 = vunpack.c.l.b16 %v4341
    %v5423 = vunpack.c.h.b16 %v4341
    %v5424 = vunpack.c.l.b16 %v4342
    %v5425 = vunpack.c.h.b16 %v4342
    %v5426 = vunpack.c.l.b16 %v4343
    %v5427 = vunpack.c.h.b16 %v4343
    %v5428 = vunpack.c.l.b16 %v4344
    %v5429 = vunpack.c.h.b16 %v4344
    %v5430 = vunpack.c.l.b16 %v4345
    %v5431 = vunpack.c.h.b16 %v4345
    %v5432 = vunpack.c.l.b16 %v4346
    %v5433 = vunpack.c.h.b16 %v4346
    %v5434 = vunpack.c.l.b16 %v4347
    %v5435 = vunpack.c.h.b16 %v4347
    %v5436 = vunpack.c.l.b16 %v4348
    %v5437 = vunpack.c.h.b16 %v4348
    %v5438 = vunpack.c.l.b16 %v4349
    %v5439 = vunpack.c.h.b16 %v4349
    %v5440 = vunpack.c.l.b16 %v4350
    %v5441 = vunpack.c.h.b16 %v4350
    %v5442 = vunpack.c.l.b16 %v4351
    %v5443 = vunpack.c.h.b16 %v4351
    %v5444 = vunpack.c.l.b16 %v4352
    %v5445 = vunpack.c.h.b16 %v4352
    %v5446 = vunpack.c.l.b16 %v4353
    %v5447 = vunpack.c.h.b16 %v4353
    %v5448 = vunpack.c.l.b16 %v4354
    %v5449 = vunpack.c.h.b16 %v4354
    %v5450 = vunpack.c.l.b16 %v4355
    %v5451 = vunpack.c.h.b16 %v4355
    %v5452 = vunpack.c.l.b16 %v4356
    %v5453 = vunpack.c.h.b16 %v4356
    %v5454 = vunpack.c.l.b16 %v4357
    %v5455 = vunpack.c.h.b16 %v4357
    %v5456 = vunpack.c.l.b16 %v4358
    %v5457 = vunpack.c.h.b16 %v4358
    %v5458 = vunpack.c.l.b16 %v4359
    %v5459 = vunpack.c.h.b16 %v4359
    %v5460 = vunpack.c.l.b16 %v4360
    %v5461 = vunpack.c.h.b16 %v4360
    %v5462 = vunpack.c.l.b16 %v4361
    %v5463 = vunpack.c.h.b16 %v4361
    %v5464 = vunpack.c.l.b16 %v4362
    %v5465 = vunpack.c.h.b16 %v4362
    %v5466 = vunpack.c.l.b16 %v4363
    %v5467 = vunpack.c.h.b16 %v4363
    %v5468 = vunpack.c.l.b16 %v4364
    %v5469 = vunpack.c.h.b16 %v4364
    %v5470 = vunpack.c.l.b16 %v4365
    %v5471 = vunpack.c.h.b16 %v4365
    %v5472 = vunpack.c.l.b16 %v4366
    %v5473 = vunpack.c.h.b16 %v4366
    %v5474 = vunpack.c.l.b16 %v4367
    %v5475 = vunpack.c.h.b16 %v4367
    %v5476 = vunpack.c.l.b16 %v4368
    %v5477 = vunpack.c.h.b16 %v4368
    %v5478 = vunpack.c.l.b16 %v4369
    %v5479 = vunpack.c.h.b16 %v4369
    %v5480 = vunpack.c.l.b16 %v4370
    %v5481 = vunpack.c.h.b16 %v4370
    %v5482 = vunpack.c.l.b16 %v4371
    %v5483 = vunpack.c.h.b16 %v4371
    %v5484 = vunpack.c.l.b16 %v4372
    %v5485 = vunpack.c.h.b16 %v4372
    %v5486 = vunpack.c.l.b16 %v4373
    %v5487 = vunpack.c.h.b16 %v4373
    %v5488 = vunpack.c.l.b16 %v4374
    %v5489 = vunpack.c.h.b16 %v4374
    %v5490 = vunpack.c.l.b16 %v4375
    %v5491 = vunpack.c.h.b16 %v4375
    %v5492 = vunpack.c.l.b16 %v4376
    %v5493 = vunpack.c.h.b16 %v4376
    %v5494 = vunpack.c.l.b16 %v4377
    %v5495 = vunpack.c.h.b16 %v4377
    %v5496 = vunpack.c.l.b16 %v4378
    %v5497 = vunpack.c.h.b16 %v4378
    %v5498 = vunpack.c.l.b16 %v4379
    %v5499 = vunpack.c.h.b16 %v4379
    %v5500 = vunpack.c.l.b16 %v4380
    %v5501 = vunpack.c.h.b16 %v4380
    %v5502 = vunpack.c.l.b16 %v4381
    %v5503 = vunpack.c.h.b16 %v4381
    %v5504 = vunpack.c.l.b16 %v4382
    %v5505 = vunpack.c.h.b16 %v4382
    %v5506 = vunpack.c.l.b16 %v4383
    %v5507 = vunpack.c.h.b16 %v4383
    %v5508 = vunpack.c.l.b16 %v4384
    %v5509 = vunpack.c.h.b16 %v4384
    %v5510 = vunpack.c.l.b16 %v4385
    %v5511 = vunpack.c.h.b16 %v4385
    %v5512 = vunpack.c.l.b16 %v4386
    %v5513 = vunpack.c.h.b16 %v4386
    %v5514 = vunpack.c.l.b16 %v4387
    %v5515 = vunpack.c.h.b16 %v4387
    %v5516 = vunpack.c.l.b16 %v4388
    %v5517 = vunpack.c.h.b16 %v4388
    %v5518 = vunpack.c.l.b16 %v4389
    %v5519 = vunpack.c.h.b16 %v4389
    %v5520 = vunpack.c.l.b16 %v4390
    %v5521 = vunpack.c.h.b16 %v4390
    %v5522 = vunpack.c.l.b16 %v4391
    %v5523 = vunpack.c.h.b16 %v4391
    %v5524 = vunpack.c.l.b16 %v4392
    %v5525 = vunpack.c.h.b16 %v4392
    %v5526 = vunpack.c.l.b16 %v4393
    %v5527 = vunpack.c.h.b16 %v4393
    %v5528 = vunpack.c.l.b16 %v4394
    %v5529 = vunpack.c.h.b16 %v4394
    %v5530 = vunpack.c.l.b16 %v4395
    %v5531 = vunpack.c.h.b16 %v4395
    %v5532 = vunpack.c.l.b16 %v4396
    %v5533 = vunpack.c.h.b16 %v4396
    %v5534 = vunpack.c.l.b16 %v4397
    %v5535 = vunpack.c.h.b16 %v4397
    %v5536 = vunpack.c.l.b16 %v4398
    %v5537 = vunpack.c.h.b16 %v4398
    %v5538 = vunpack.c.l.b16 %v4399
    %v5539 = vunpack.c.h.b16 %v4399
    %v5540 = vunpack.c.l.b16 %v4400
    %v5541 = vunpack.c.h.b16 %v4400
    %v5542 = vunpack.c.l.b16 %v4401
    %v5543 = vunpack.c.h.b16 %v4401
    %v5544 = vunpack.c.l.b16 %v4402
    %v5545 = vunpack.c.h.b16 %v4402
    %v5546 = vunpack.c.l.b16 %v4403
    %v5547 = vunpack.c.h.b16 %v4403
    %v5548 = vunpack.c.l.b16 %v4404
    %v5549 = vunpack.c.h.b16 %v4404
    %v5550 = vunpack.c.l.b16 %v4405
    %v5551 = vunpack.c.h.b16 %v4405
    %v5552 = vunpack.c.l.b16 %v4406
    %v5553 = vunpack.c.h.b16 %v4406
    %v5554 = vunpack.c.l.b16 %v4407
    %v5555 = vunpack.c.h.b16 %v4407
    %v5556 = vunpack.c.l.b16 %v4408
    %v5557 = vunpack.c.h.b16 %v4408
    %v5558 = vunpack.c.l.b16 %v4409
    %v5559 = vunpack.c.h.b16 %v4409
    %v5560 = vunpack.c.l.b16 %v4410
    %v5561 = vunpack.c.h.b16 %v4410
    %v5562 = vunpack.c.l.b16 %v4411
    %v5563 = vunpack.c.h.b16 %v4411
    %v5564 = vunpack.c.l.b16 %v4412
    %v5565 = vunpack.c.h.b16 %v4412
    %v5566 = vunpack.c.l.b16 %v4413
    %v5567 = vunpack.c.h.b16 %v4413
    %v5568 = vunpack.c.l.b16 %v4414
    %v5569 = vunpack.c.h.b16 %v4414
    %v5570 = vunpack.c.l.b16 %v4415
    %v5571 = vunpack.c.h.b16 %v4415
    %v5572 = vunpack.c.l.b16 %v4416
    %v5573 = vunpack.c.h.b16 %v4416
    %v5574 = vunpack.c.l.b16 %v4417
    %v5575 = vunpack.c.h.b16 %v4417
    %v5576 = vunpack.c.l.b16 %v4418
    %v5577 = vunpack.c.h.b16 %v4418
    %v5578 = vunpack.c.l.b16 %v4419
    %v5579 = vunpack.c.h.b16 %v4419
    %v5580 = vunpack.c.l.b16 %v4420
    %v5581 = vunpack.c.h.b16 %v4420
    %v5582 = vunpack.c.l.b16 %v4421
    %v5583 = vunpack.c.h.b16 %v4421
    %v5584 = vunpack.c.l.b16 %v4422
    %v5585 = vunpack.c.h.b16 %v4422
    %v5586 = vunpack.c.l.b16 %v4423
    %v5587 = vunpack.c.h.b16 %v4423
    %v5588 = vunpack.c.l.b16 %v4424
    %v5589 = vunpack.c.h.b16 %v4424
    %v5590 = vunpack.c.l.b16 %v4425
    %v5591 = vunpack.c.h.b16 %v4425
    %v5592 = vunpack.c.l.b16 %v4426
    %v5593 = vunpack.c.h.b16 %v4426
    %v5594 = vunpack.c.l.b16 %v4427
    %v5595 = vunpack.c.h.b16 %v4427
    %v5596 = vunpack.c.l.b16 %v4428
    %v5597 = vunpack.c.h.b16 %v4428
    %v5598 = vunpack.c.l.b16 %v4429
    %v5599 = vunpack.c.h.b16 %v4429
    %v5600 = vunpack.c.l.b16 %v4430
    %v5601 = vunpack.c.h.b16 %v4430
    %v5602 = vunpack.c.l.b16 %v4431
    %v5603 = vunpack.c.h.b16 %v4431
    %v5604 = vunpack.c.l.b16 %v4432
    %v5605 = vunpack.c.h.b16 %v4432
    %v5606 = vunpack.c.l.b16 %v4433
    %v5607 = vunpack.c.h.b16 %v4433
    %v5608 = vunpack.c.l.b16 %v4434
    %v5609 = vunpack.c.h.b16 %v4434
    %v5610 = vunpack.c.l.b16 %v4435
    %v5611 = vunpack.c.h.b16 %v4435
    %v5612 = vunpack.c.l.b16 %v4436
    %v5613 = vunpack.c.h.b16 %v4436
    %v5614 = vunpack.c.l.b16 %v4437
    %v5615 = vunpack.c.h.b16 %v4437
    %v5616 = vunpack.c.l.b16 %v4438
    %v5617 = vunpack.c.h.b16 %v4438
    %v5618 = vunpack.c.l.b16 %v4439
    %v5619 = vunpack.c.h.b16 %v4439
    %v5620 = vunpack.c.l.b16 %v4440
    %v5621 = vunpack.c.h.b16 %v4440
    %v5622 = vunpack.c.l.b16 %v4441
    %v5623 = vunpack.c.h.b16 %v4441
    %v5624 = vunpack.c.l.b16 %v4442
    %v5625 = vunpack.c.h.b16 %v4442
    %v5626 = vunpack.c.l.b16 %v4443
    %v5627 = vunpack.c.h.b16 %v4443
    %v5628 = vunpack.c.l.b16 %v4444
    %v5629 = vunpack.c.h.b16 %v4444
    %v5630 = vunpack.c.l.b16 %v4445
    %v5631 = vunpack.c.h.b16 %v4445
    %v5632 = vunpack.c.l.b16 %v4446
    %v5633 = vunpack.c.h.b16 %v4446
    %v5634 = vunpack.c.l.b16 %v4447
    %v5635 = vunpack.c.h.b16 %v4447
    %v5636 = vunpack.c.l.b16 %v4448
    %v5637 = vunpack.c.h.b16 %v4448
    %v5638 = vunpack.c.l.b16 %v4449
    %v5639 = vunpack.c.h.b16 %v4449
    %v5640 = vunpack.c.l.b16 %v4450
    %v5641 = vunpack.c.h.b16 %v4450
    %v5642 = vunpack.c.l.b16 %v4451
    %v5643 = vunpack.c.h.b16 %v4451
    %v5644 = vunpack.c.l.b16 %v4452
    %v5645 = vunpack.c.h.b16 %v4452
    %v5646 = vunpack.c.l.b16 %v4453
    %v5647 = vunpack.c.h.b16 %v4453
    %v5648 = vunpack.c.l.b16 %v4454
    %v5649 = vunpack.c.h.b16 %v4454
    %v5650 = vunpack.c.l.b16 %v4455
    %v5651 = vunpack.c.h.b16 %v4455
    %v5652 = vunpack.c.l.b16 %v4456
    %v5653 = vunpack.c.h.b16 %v4456
    %v5654 = vunpack.c.l.b16 %v4457
    %v5655 = vunpack.c.h.b16 %v4457
    %v5656 = vunpack.c.l.b16 %v4458
    %v5657 = vunpack.c.h.b16 %v4458
    %v5658 = vunpack.c.l.b16 %v4459
    %v5659 = vunpack.c.h.b16 %v4459
    %v5660 = vunpack.c.l.b16 %v4460
    %v5661 = vunpack.c.h.b16 %v4460
    %v5662 = vunpack.c.l.b16 %v4461
    %v5663 = vunpack.c.h.b16 %v4461
    %v5664 = vunpack.c.l.b16 %v4462
    %v5665 = vunpack.c.h.b16 %v4462
    %v5666 = vunpack.c.l.b16 %v4463
    %v5667 = vunpack.c.h.b16 %v4463
    %v5668 = vunpack.c.l.b16 %v4464
    %v5669 = vunpack.c.h.b16 %v4464
    %v5670 = vunpack.c.l.b16 %v4465
    %v5671 = vunpack.c.h.b16 %v4465
    %v5672 = vunpack.c.l.b16 %v4466
    %v5673 = vunpack.c.h.b16 %v4466
    %v5674 = vunpack.c.l.b16 %v4467
    %v5675 = vunpack.c.h.b16 %v4467
    %v5676 = vunpack.c.l.b16 %v4468
    %v5677 = vunpack.c.h.b16 %v4468
    %v5678 = vunpack.c.l.b16 %v4469
    %v5679 = vunpack.c.h.b16 %v4469
    %v5680 = vunpack.c.l.b16 %v4470
    %v5681 = vunpack.c.h.b16 %v4470
    %v5682 = vunpack.c.l.b16 %v4471
    %v5683 = vunpack.c.h.b16 %v4471
    %v5684 = vunpack.c.l.b16 %v4472
    %v5685 = vunpack.c.h.b16 %v4472
    %v5686 = vunpack.c.l.b16 %v4473
    %v5687 = vunpack.c.h.b16 %v4473
    %v5688 = vunpack.c.l.b16 %v4474
    %v5689 = vunpack.c.h.b16 %v4474
    %v5690 = vunpack.c.l.b16 %v4475
    %v5691 = vunpack.c.h.b16 %v4475
    %v5692 = vunpack.c.l.b16 %v4476
    %v5693 = vunpack.c.h.b16 %v4476
    %v5694 = vunpack.c.l.b16 %v4477
    %v5695 = vunpack.c.h.b16 %v4477
    %v5696 = vunpack.c.l.b16 %v4478
    %v5697 = vunpack.c.h.b16 %v4478
    %v5698 = vunpack.c.l.b16 %v4479
    %v5699 = vunpack.c.h.b16 %v4479
    %v5700 = vunpack.c.l.b16 %v4480
    %v5701 = vunpack.c.h.b16 %v4480
    %v5702 = vunpack.c.l.b16 %v4481
    %v5703 = vunpack.c.h.b16 %v4481
    %v5704 = vunpack.c.l.b16 %v4482
    %v5705 = vunpack.c.h.b16 %v4482
    %v5706 = vunpack.c.l.b16 %v4483
    %v5707 = vunpack.c.h.b16 %v4483
    %v5708 = vunpack.c.l.b16 %v4484
    %v5709 = vunpack.c.h.b16 %v4484
    %v5710 = vunpack.c.l.b16 %v4485
    %v5711 = vunpack.c.h.b16 %v4485
    %v5712 = vunpack.c.l.b16 %v4486
    %v5713 = vunpack.c.h.b16 %v4486
    %v5714 = vunpack.c.l.b16 %v4487
    %v5715 = vunpack.c.h.b16 %v4487
    %v5716 = vunpack.c.l.b16 %v4488
    %v5717 = vunpack.c.h.b16 %v4488
    %v5718 = vunpack.c.l.b16 %v4489
    %v5719 = vunpack.c.h.b16 %v4489
    %v5720 = vunpack.c.l.b16 %v4490
    %v5721 = vunpack.c.h.b16 %v4490
    %v5722 = vunpack.c.l.b16 %v4491
    %v5723 = vunpack.c.h.b16 %v4491
    %v5724 = vunpack.c.l.b16 %v4492
    %v5725 = vunpack.c.h.b16 %v4492
    %v5726 = vunpack.c.l.b16 %v4493
    %v5727 = vunpack.c.h.b16 %v4493
    %v5728 = vunpack.c.l.b16 %v4494
    %v5729 = vunpack.c.h.b16 %v4494
    %v5730 = vunpack.c.l.b16 %v4495
    %v5731 = vunpack.c.h.b16 %v4495
    %v5732 = vunpack.c.l.b16 %v4496
    %v5733 = vunpack.c.h.b16 %v4496
    %v5734 = vunpack.c.l.b16 %v4497
    %v5735 = vunpack.c.h.b16 %v4497
    %v5736 = vunpack.c.l.b16 %v4498
    %v5737 = vunpack.c.h.b16 %v4498
    %v5738 = vunpack.c.l.b16 %v4499
    %v5739 = vunpack.c.h.b16 %v4499
    %v5740 = vunpack.c.l.b16 %v4500
    %v5741 = vunpack.c.h.b16 %v4500
    %v5742 = vunpack.c.l.b16 %v4501
    %v5743 = vunpack.c.h.b16 %v4501
    %v5744 = vunpack.c.l.b16 %v4502
    %v5745 = vunpack.c.h.b16 %v4502
    %v5746 = vunpack.c.l.b16 %v4503
    %v5747 = vunpack.c.h.b16 %v4503
    %v5748 = vunpack.c.l.b16 %v4504
    %v5749 = vunpack.c.h.b16 %v4504
    %v5750 = vunpack.c.l.b16 %v4505
    %v5751 = vunpack.c.h.b16 %v4505
    %v5752 = vunpack.c.l.b16 %v4506
    %v5753 = vunpack.c.h.b16 %v4506
    %v5754 = vunpack.c.l.b16 %v4507
    %v5755 = vunpack.c.h.b16 %v4507
    %v5756 = vunpack.c.l.b16 %v4508
    %v5757 = vunpack.c.h.b16 %v4508
    %v5758 = vunpack.c.l.b16 %v4509
    %v5759 = vunpack.c.h.b16 %v4509
    %v5760 = vunpack.c.l.b16 %v4510
    %v5761 = vunpack.c.h.b16 %v4510
    %v5762 = vunpack.c.l.b16 %v4511
    %v5763 = vunpack.c.h.b16 %v4511
    %v5764 = vunpack.c.l.b16 %v4512
    %v5765 = vunpack.c.h.b16 %v4512
    %v5766 = vunpack.c.l.b16 %v4513
    %v5767 = vunpack.c.h.b16 %v4513
    %v5768 = vunpack.c.l.b16 %v4514
    %v5769 = vunpack.c.h.b16 %v4514
    %v5770 = vunpack.c.l.b16 %v4515
    %v5771 = vunpack.c.h.b16 %v4515
    %v5772 = vunpack.c.l.b16 %v4516
    %v5773 = vunpack.c.h.b16 %v4516
    %v5774 = vunpack.c.l.b16 %v4517
    %v5775 = vunpack.c.h.b16 %v4517
    %v5776 = vunpack.c.l.b16 %v4518
    %v5777 = vunpack.c.h.b16 %v4518
    %v5778 = vunpack.c.l.b16 %v4519
    %v5779 = vunpack.c.h.b16 %v4519
    %v5780 = vunpack.c.l.b16 %v4520
    %v5781 = vunpack.c.h.b16 %v4520
    %v5782 = vunpack.c.l.b16 %v4521
    %v5783 = vunpack.c.h.b16 %v4521
    %v5784 = vunpack.c.l.b16 %v4522
    %v5785 = vunpack.c.h.b16 %v4522
    %v5786 = vunpack.c.l.b16 %v4523
    %v5787 = vunpack.c.h.b16 %v4523
    %v5788 = vunpack.c.l.b16 %v4524
    %v5789 = vunpack.c.h.b16 %v4524
    %v5790 = vunpack.c.l.b16 %v4525
    %v5791 = vunpack.c.h.b16 %v4525
    %v5792 = vunpack.c.l.b16 %v4526
    %v5793 = vunpack.c.h.b16 %v4526
    %v5794 = vunpack.c.l.b16 %v4527
    %v5795 = vunpack.c.h.b16 %v4527
    %v5796 = vunpack.c.l.b16 %v4528
    %v5797 = vunpack.c.h.b16 %v4528
    %v5798 = vunpack.c.l.b16 %v4529
    %v5799 = vunpack.c.h.b16 %v4529
    %v5800 = vunpack.c.l.b16 %v4530
    %v5801 = vunpack.c.h.b16 %v4530
    %v5802 = vunpack.c.l.b16 %v4531
    %v5803 = vunpack.c.h.b16 %v4531
    %v5804 = vunpack.c.l.b16 %v4532
    %v5805 = vunpack.c.h.b16 %v4532
    %v5806 = vunpack.c.l.b16 %v4533
    %v5807 = vunpack.c.h.b16 %v4533
    %v5808 = vunpack.c.l.b16 %v4534
    %v5809 = vunpack.c.h.b16 %v4534
    %v5810 = vunpack.c.l.b16 %v4535
    %v5811 = vunpack.c.h.b16 %v4535
    %v5812 = vunpack.c.l.b16 %v4536
    %v5813 = vunpack.c.h.b16 %v4536
    %v5814 = vunpack.c.l.b16 %v4537
    %v5815 = vunpack.c.h.b16 %v4537
    %v5816 = vunpack.c.l.b16 %v4538
    %v5817 = vunpack.c.h.b16 %v4538
    %v5818 = vunpack.c.l.b16 %v4539
    %v5819 = vunpack.c.h.b16 %v4539
    %v5820 = vunpack.c.l.b16 %v4540
    %v5821 = vunpack.c.h.b16 %v4540
    %v5822 = vunpack.c.l.b16 %v4541
    %v5823 = vunpack.c.h.b16 %v4541
    %v5824 = vunpack.c.l.b16 %v4542
    %v5825 = vunpack.c.h.b16 %v4542
    %v5826 = vunpack.c.l.b16 %v4543
    %v5827 = vunpack.c.h.b16 %v4543
    %v5828 = vunpack.c.l.b16 %v4544
    %v5829 = vunpack.c.h.b16 %v4544
    %v5830 = vunpack.c.l.b16 %v4545
    %v5831 = vunpack.c.h.b16 %v4545
    %v5832 = vunpack.c.l.b16 %v4546
    %v5833 = vunpack.c.h.b16 %v4546
    %v5834 = vunpack.c.l.b16 %v4547
    %v5835 = vunpack.c.h.b16 %v4547
    %v5836 = vunpack.c.l.b16 %v4548
    %v5837 = vunpack.c.h.b16 %v4548
    %v5838 = vunpack.c.l.b16 %v4549
    %v5839 = vunpack.c.h.b16 %v4549
    %v5840 = vunpack.c.l.b16 %v4550
    %v5841 = vunpack.c.h.b16 %v4550
    %v5842 = vunpack.c.l.b16 %v4551
    %v5843 = vunpack.c.h.b16 %v4551
    %v5844 = vunpack.c.l.b16 %v4552
    %v5845 = vunpack.c.h.b16 %v4552
    %v5846 = vunpack.c.l.b16 %v4553
    %v5847 = vunpack.c.h.b16 %v4553
    %v5848 = vunpack.c.l.b16 %v4554
    %v5849 = vunpack.c.h.b16 %v4554
    %v5850 = vunpack.c.l.b16 %v4555
    %v5851 = vunpack.c.h.b16 %v4555
    %v5852 = vunpack.c.l.b16 %v4556
    %v5853 = vunpack.c.h.b16 %v4556
    %v5854 = vunpack.c.l.b16 %v4557
    %v5855 = vunpack.c.h.b16 %v4557
    %v5856 = vunpack.c.l.b16 %v4558
    %v5857 = vunpack.c.h.b16 %v4558
    %v5858 = vunpack.c.l.b16 %v4559
    %v5859 = vunpack.c.h.b16 %v4559
    %v5860 = vunpack.c.l.b16 %v4560
    %v5861 = vunpack.c.h.b16 %v4560
    %v5862 = vunpack.c.l.b16 %v4561
    %v5863 = vunpack.c.h.b16 %v4561
    %v5864 = vunpack.c.l.b16 %v4562
    %v5865 = vunpack.c.h.b16 %v4562
    %v5866 = vunpack.c.l.b16 %v4563
    %v5867 = vunpack.c.h.b16 %v4563
    %v5868 = vunpack.c.l.b16 %v4564
    %v5869 = vunpack.c.h.b16 %v4564
    %v5870 = vunpack.c.l.b16 %v4565
    %v5871 = vunpack.c.h.b16 %v4565
    %v5872 = vunpack.c.l.b16 %v4566
    %v5873 = vunpack.c.h.b16 %v4566
    %v5874 = vunpack.c.l.b16 %v4567
    %v5875 = vunpack.c.h.b16 %v4567
    %v5876 = vunpack.c.l.b16 %v4568
    %v5877 = vunpack.c.h.b16 %v4568
    %v5878 = vunpack.c.l.b16 %v4569
    %v5879 = vunpack.c.h.b16 %v4569
    %v5880 = vunpack.c.l.b16 %v4570
    %v5881 = vunpack.c.h.b16 %v4570
    %v5882 = vunpack.c.l.b16 %v4571
    %v5883 = vunpack.c.h.b16 %v4571
    %v5884 = vunpack.c.l.b16 %v4572
    %v5885 = vunpack.c.h.b16 %v4572
    %v5886 = vunpack.c.l.b16 %v4573
    %v5887 = vunpack.c.h.b16 %v4573
    %v5888 = vunpack.c.l.b16 %v4574
    %v5889 = vunpack.c.h.b16 %v4574
    %v5890 = vunpack.c.l.b16 %v4575
    %v5891 = vunpack.c.h.b16 %v4575
    %v5892 = vunpack.c.l.b16 %v4576
    %v5893 = vunpack.c.h.b16 %v4576
    %v5894 = vunpack.c.l.b16 %v4577
    %v5895 = vunpack.c.h.b16 %v4577
    %v5896 = vunpack.c.l.b16 %v4578
    %v5897 = vunpack.c.h.b16 %v4578
    %v5898 = vunpack.c.l.b16 %v4579
    %v5899 = vunpack.c.h.b16 %v4579
    %v5900 = vunpack.c.l.b16 %v4580
    %v5901 = vunpack.c.h.b16 %v4580
    %v5902 = vunpack.c.l.b16 %v4581
    %v5903 = vunpack.c.h.b16 %v4581
    %v5904 = vunpack.c.l.b16 %v4582
    %v5905 = vunpack.c.h.b16 %v4582
    %v5906 = vunpack.c.l.b16 %v4583
    %v5907 = vunpack.c.h.b16 %v4583
    %v5908 = vunpack.c.l.b16 %v4584
    %v5909 = vunpack.c.h.b16 %v4584
    %v5910 = vunpack.c.l.b16 %v4585
    %v5911 = vunpack.c.h.b16 %v4585
    %v5912 = vunpack.c.l.b16 %v4586
    %v5913 = vunpack.c.h.b16 %v4586
    %v5914 = vunpack.c.l.b16 %v4587
    %v5915 = vunpack.c.h.b16 %v4587
    %v5916 = vunpack.c.l.b16 %v4588
    %v5917 = vunpack.c.h.b16 %v4588
    %v5918 = vunpack.c.l.b16 %v4589
    %v5919 = vunpack.c.h.b16 %v4589
    %v5920 = vunpack.c.l.b16 %v4590
    %v5921 = vunpack.c.h.b16 %v4590
    %v5922 = vunpack.c.l.b16 %v4591
    %v5923 = vunpack.c.h.b16 %v4591
    %v5924 = vunpack.c.l.b16 %v4592
    %v5925 = vunpack.c.h.b16 %v4592
    %v5926 = vunpack.c.l.b16 %v4593
    %v5927 = vunpack.c.h.b16 %v4593
    %v5928 = vunpack.c.l.b16 %v4594
    %v5929 = vunpack.c.h.b16 %v4594
    %v5930 = vunpack.c.l.b16 %v4595
    %v5931 = vunpack.c.h.b16 %v4595
    %v5932 = vunpack.c.l.b16 %v4596
    %v5933 = vunpack.c.h.b16 %v4596
    %v5934 = vunpack.c.l.b16 %v4597
    %v5935 = vunpack.c.h.b16 %v4597
    %v5936 = vunpack.c.l.b16 %v4598
    %v5937 = vunpack.c.h.b16 %v4598
    %v5938 = vunpack.c.l.b16 %v4599
    %v5939 = vunpack.c.h.b16 %v4599
    %v5940 = vunpack.c.l.b16 %v4600
    %v5941 = vunpack.c.h.b16 %v4600
    %v5942 = vunpack.c.l.b16 %v4601
    %v5943 = vunpack.c.h.b16 %v4601
    %v5944 = vunpack.c.l.b16 %v4602
    %v5945 = vunpack.c.h.b16 %v4602
    %v5946 = vunpack.c.l.b16 %v4603
    %v5947 = vunpack.c.h.b16 %v4603
    %v5948 = vunpack.c.l.b16 %v4604
    %v5949 = vunpack.c.h.b16 %v4604
    %v5950 = vunpack.c.l.b16 %v4605
    %v5951 = vunpack.c.h.b16 %v4605
    %v5952 = vunpack.c.l.b16 %v4606
    %v5953 = vunpack.c.h.b16 %v4606
    %v5954 = vunpack.c.l.b16 %v4607
    %v5955 = vunpack.c.h.b16 %v4607
    %v5956 = vunpack.c.l.b16 %v4608
    %v5957 = vunpack.c.h.b16 %v4608
    %v5958 = vunpack.c.l.b16 %v4609
    %v5959 = vunpack.c.h.b16 %v4609
    %v5960 = vunpack.c.l.b16 %v4610
    %v5961 = vunpack.c.h.b16 %v4610
    %v5962 = vunpack.c.l.b16 %v4611
    %v5963 = vunpack.c.h.b16 %v4611
    %v5964 = vunpack.c.l.b16 %v4612
    %v5965 = vunpack.c.h.b16 %v4612
    %v5966 = vunpack.c.l.b16 %v4613
    %v5967 = vunpack.c.h.b16 %v4613
    %v5968 = vunpack.c.l.b16 %v4614
    %v5969 = vunpack.c.h.b16 %v4614
    %v5970 = vunpack.c.l.b16 %v4615
    %v5971 = vunpack.c.h.b16 %v4615
    %v5972 = vunpack.c.l.b16 %v4616
    %v5973 = vunpack.c.h.b16 %v4616
    %v5974 = vunpack.c.l.b16 %v4617
    %v5975 = vunpack.c.h.b16 %v4617
    %v5976 = vunpack.c.l.b16 %v4618
    %v5977 = vunpack.c.h.b16 %v4618
    %v5978 = vunpack.c.l.b16 %v4619
    %v5979 = vunpack.c.h.b16 %v4619
    %v5980 = vunpack.c.l.b16 %v4620
    %v5981 = vunpack.c.h.b16 %v4620
    %v5982 = vunpack.c.l.b16 %v4621
    %v5983 = vunpack.c.h.b16 %v4621
    %v5984 = vunpack.c.l.b16 %v4622
    %v5985 = vunpack.c.h.b16 %v4622
    %v5986 = vunpack.c.l.b16 %v4623
    %v5987 = vunpack.c.h.b16 %v4623
    %v5988 = vunpack.c.l.b16 %v4624
    %v5989 = vunpack.c.h.b16 %v4624
    %v5990 = vunpack.c.l.b16 %v4625
    %v5991 = vunpack.c.h.b16 %v4625
    %v5992 = vunpack.c.l.b16 %v4626
    %v5993 = vunpack.c.h.b16 %v4626
    %v5994 = vunpack.c.l.b16 %v4627
    %v5995 = vunpack.c.h.b16 %v4627
    %v5996 = vunpack.c.l.b16 %v4628
    %v5997 = vunpack.c.h.b16 %v4628
    %v5998 = vunpack.c.l.b16 %v4629
    %v5999 = vunpack.c.h.b16 %v4629
    %v6000 = vunpack.c.l.b16 %v4630
    %v6001 = vunpack.c.h.b16 %v4630
    %v6002 = vunpack.c.l.b16 %v4631
    %v6003 = vunpack.c.h.b16 %v4631
    %v6004 = vunpack.c.l.b16 %v4632
    %v6005 = vunpack.c.h.b16 %v4632
    %v6006 = vunpack.c.l.b16 %v4633
    %v6007 = vunpack.c.h.b16 %v4633
    %v6008 = vunpack.c.l.b16 %v4634
    %v6009 = vunpack.c.h.b16 %v4634
    %v6010 = vunpack.c.l.b16 %v4635
    %v6011 = vunpack.c.h.b16 %v4635
    %v6012 = vunpack.c.l.b16 %v4636
    %v6013 = vunpack.c.h.b16 %v4636
    %v6014 = vunpack.c.l.b16 %v4637
    %v6015 = vunpack.c.h.b16 %v4637
    %v6016 = vunpack.c.l.b16 %v4638
    %v6017 = vunpack.c.h.b16 %v4638
    %v6018 = vunpack.c.l.b16 %v4639
    %v6019 = vunpack.c.h.b16 %v4639
    %v6020 = vunpack.c.l.b16 %v4640
    %v6021 = vunpack.c.h.b16 %v4640
    %v6022 = vunpack.c.l.b16 %v4641
    %v6023 = vunpack.c.h.b16 %v4641
    %v6024 = vunpack.c.l.b16 %v4642
    %v6025 = vunpack.c.h.b16 %v4642
    %v6026 = vunpack.c.l.b16 %v4643
    %v6027 = vunpack.c.h.b16 %v4643
    %v6028 = vunpack.c.l.b16 %v4644
    %v6029 = vunpack.c.h.b16 %v4644
    %v6030 = vunpack.c.l.b16 %v4645
    %v6031 = vunpack.c.h.b16 %v4645
    %v6032 = vunpack.c.l.b16 %v4646
    %v6033 = vunpack.c.h.b16 %v4646
    %v6034 = vunpack.c.l.b16 %v4647
    %v6035 = vunpack.c.h.b16 %v4647
    %v6036 = vunpack.c.l.b16 %v4648
    %v6037 = vunpack.c.h.b16 %v4648
    %v6038 = vunpack.c.l.b16 %v4649
    %v6039 = vunpack.c.h.b16 %v4649
    %v6040 = vunpack.c.l.b16 %v4650
    %v6041 = vunpack.c.h.b16 %v4650
    %v6042 = vunpack.c.l.b16 %v4651
    %v6043 = vunpack.c.h.b16 %v4651
    %v6044 = vunpack.c.l.b16 %v4652
    %v6045 = vunpack.c.h.b16 %v4652
    %v6046 = vunpack.c.l.b16 %v4653
    %v6047 = vunpack.c.h.b16 %v4653
    %v6048 = vunpack.c.l.b16 %v4654
    %v6049 = vunpack.c.h.b16 %v4654
    %v6050 = vunpack.c.l.b16 %v4655
    %v6051 = vunpack.c.h.b16 %v4655
    %v6052 = vunpack.c.l.b16 %v4656
    %v6053 = vunpack.c.h.b16 %v4656
    %v6054 = vunpack.c.l.b16 %v4657
    %v6055 = vunpack.c.h.b16 %v4657
    %v6056 = vunpack.c.l.b16 %v4658
    %v6057 = vunpack.c.h.b16 %v4658
    %v6058 = vunpack.c.l.b16 %v4659
    %v6059 = vunpack.c.h.b16 %v4659
    %v6060 = vunpack.c.l.b16 %v4660
    %v6061 = vunpack.c.h.b16 %v4660
    %v6062 = vunpack.c.l.b16 %v4661
    %v6063 = vunpack.c.h.b16 %v4661
    %v6064 = vunpack.c.l.b16 %v4662
    %v6065 = vunpack.c.h.b16 %v4662
    %v6066 = vunpack.c.l.b16 %v4663
    %v6067 = vunpack.c.h.b16 %v4663
    %v6068 = vunpack.c.l.b16 %v4664
    %v6069 = vunpack.c.h.b16 %v4664
    %v6070 = vunpack.c.l.b16 %v4665
    %v6071 = vunpack.c.h.b16 %v4665
    %v6072 = vunpack.c.l.b16 %v4666
    %v6073 = vunpack.c.h.b16 %v4666
    %v6074 = vunpack.c.l.b16 %v4667
    %v6075 = vunpack.c.h.b16 %v4667
    %v6076 = vunpack.c.l.b16 %v4668
    %v6077 = vunpack.c.h.b16 %v4668
    %v6078 = vunpack.c.l.b16 %v4669
    %v6079 = vunpack.c.h.b16 %v4669
    %v6080 = vunpack.c.l.b16 %v4670
    %v6081 = vunpack.c.h.b16 %v4670
    %v6082 = vunpack.c.l.b16 %v4671
    %v6083 = vunpack.c.h.b16 %v4671
    %v6084 = vunpack.c.l.b16 %v4672
    %v6085 = vunpack.c.h.b16 %v4672
    %v6086 = vunpack.c.l.b16 %v4673
    %v6087 = vunpack.c.h.b16 %v4673
    %v6088 = vunpack.c.l.b16 %v4674
    %v6089 = vunpack.c.h.b16 %v4674
    %v6090 = vunpack.c.l.b16 %v4675
    %v6091 = vunpack.c.h.b16 %v4675
    %v6092 = vunpack.c.l.b16 %v4676
    %v6093 = vunpack.c.h.b16 %v4676
    %v6094 = vunpack.c.l.b16 %v4677
    %v6095 = vunpack.c.h.b16 %v4677
    %v6096 = vunpack.c.l.b16 %v4678
    %v6097 = vunpack.c.h.b16 %v4678
    %v6098 = vunpack.c.l.b16 %v4679
    %v6099 = vunpack.c.h.b16 %v4679
    %v6100 = vunpack.c.l.b16 %v4680
    %v6101 = vunpack.c.h.b16 %v4680
    %v6102 = vunpack.c.l.b16 %v4681
    %v6103 = vunpack.c.h.b16 %v4681
    %v6104 = vunpack.c.l.b16 %v4682
    %v6105 = vunpack.c.h.b16 %v4682
    %v6106 = vunpack.c.l.b16 %v4683
    %v6107 = vunpack.c.h.b16 %v4683
    %v6108 = vunpack.c.l.b16 %v4684
    %v6109 = vunpack.c.h.b16 %v4684
    %v6110 = vunpack.c.l.b16 %v4685
    %v6111 = vunpack.c.h.b16 %v4685
    %v6112 = vunpack.c.l.b16 %v4686
    %v6113 = vunpack.c.h.b16 %v4686
    %v6114 = vunpack.c.l.b16 %v4687
    %v6115 = vunpack.c.h.b16 %v4687
    %v6116 = vunpack.c.l.b16 %v4688
    %v6117 = vunpack.c.h.b16 %v4688
    %v6118 = vunpack.c.l.b16 %v4689
    %v6119 = vunpack.c.h.b16 %v4689
    %v6120 = vunpack.c.l.b16 %v4690
    %v6121 = vunpack.c.h.b16 %v4690
    %v6122 = vunpack.c.l.b16 %v4691
    %v6123 = vunpack.c.h.b16 %v4691
    %v6124 = vunpack.c.l.b16 %v4692
    %v6125 = vunpack.c.h.b16 %v4692
    %v6126 = vunpack.c.l.b16 %v4693
    %v6127 = vunpack.c.h.b16 %v4693
    %v6128 = vunpack.c.l.b16 %v4694
    %v6129 = vunpack.c.h.b16 %v4694
    %v6130 = vunpack.c.l.b16 %v4695
    %v6131 = vunpack.c.h.b16 %v4695
    %v6132 = vunpack.c.l.b16 %v4696
    %v6133 = vunpack.c.h.b16 %v4696
    %v6134 = vunpack.c.l.b16 %v4697
    %v6135 = vunpack.c.h.b16 %v4697
    %v6136 = vunpack.c.l.b16 %v4698
    %v6137 = vunpack.c.h.b16 %v4698
    %v6138 = vunpack.c.l.b16 %v4699
    %v6139 = vunpack.c.h.b16 %v4699
    %v6140 = vunpack.c.l.b16 %v4700
    %v6141 = vunpack.c.h.b16 %v4700
    %v6142 = vunpack.c.l.b16 %v4701
    %v6143 = vunpack.c.h.b16 %v4701
    %v6144 = vunpack.c.l.b16 %v4702
    %v6145 = vunpack.c.h.b16 %v4702
    %v6146 = vunpack.c.l.b16 %v4703
    %v6147 = vunpack.c.h.b16 %v4703
    %v6148 = vunpack.c.l.b16 %v4704
    %v6149 = vunpack.c.h.b16 %v4704
    %v6150 = vunpack.c.l.b16 %v4705
    %v6151 = vunpack.c.h.b16 %v4705
    %v6152 = vunpack.c.l.b16 %v4706
    %v6153 = vunpack.c.h.b16 %v4706
    %v6154 = vunpack.c.l.b16 %v4707
    %v6155 = vunpack.c.h.b16 %v4707
    %v6156 = vunpack.c.l.b16 %v4708
    %v6157 = vunpack.c.h.b16 %v4708
    %v6158 = vunpack.c.l.b16 %v4709
    %v6159 = vunpack.c.h.b16 %v4709
    %v6160 = vunpack.c.l.b16 %v4710
    %v6161 = vunpack.c.h.b16 %v4710
    %v6162 = vunpack.c.l.b16 %v4711
    %v6163 = vunpack.c.h.b16 %v4711
    %v6164 = vunpack.c.l.b16 %v4712
    %v6165 = vunpack.c.h.b16 %v4712
    %v6166 = vunpack.c.l.b16 %v4713
    %v6167 = vunpack.c.h.b16 %v4713
    %v6168 = vunpack.c.l.b16 %v4714
    %v6169 = vunpack.c.h.b16 %v4714
    %v6170 = vunpack.c.l.b16 %v4715
    %v6171 = vunpack.c.h.b16 %v4715
    %v6172 = vunpack.c.l.b16 %v4716
    %v6173 = vunpack.c.h.b16 %v4716
    %v6174 = vunpack.c.l.b16 %v4717
    %v6175 = vunpack.c.h.b16 %v4717
    %v6176 = vunpack.c.l.b16 %v4718
    %v6177 = vunpack.c.h.b16 %v4718
    %v6178 = vunpack.c.l.b16 %v4719
    %v6179 = vunpack.c.h.b16 %v4719
    %v6180 = vunpack.c.l.b16 %v4720
    %v6181 = vunpack.c.h.b16 %v4720
    %v6182 = vunpack.c.l.b16 %v4721
    %v6183 = vunpack.c.h.b16 %v4721
    %v6184 = vunpack.c.l.b16 %v4722
    %v6185 = vunpack.c.h.b16 %v4722
    %v6186 = vunpack.c.l.b16 %v4723
    %v6187 = vunpack.c.h.b16 %v4723
    %v6188 = vunpack.c.l.b16 %v4724
    %v6189 = vunpack.c.h.b16 %v4724
    %v6190 = vunpack.c.l.b16 %v4725
    %v6191 = vunpack.c.h.b16 %v4725
    %v6192 = vunpack.c.l.b16 %v4726
    %v6193 = vunpack.c.h.b16 %v4726
    %v6194 = vunpack.c.l.b16 %v4727
    %v6195 = vunpack.c.h.b16 %v4727
    %v6196 = vunpack.c.l.b16 %v4728
    %v6197 = vunpack.c.h.b16 %v4728
    %v6198 = vunpack.c.l.b16 %v4729
    %v6199 = vunpack.c.h.b16 %v4729
    %v6200 = vunpack.c.l.b16 %v4730
    %v6201 = vunpack.c.h.b16 %v4730
    %v6202 = vunpack.c.l.b16 %v4731
    %v6203 = vunpack.c.h.b16 %v4731
    %v6204 = vunpack.c.l.b16 %v4732
    %v6205 = vunpack.c.h.b16 %v4732
    %v6206 = vunpack.c.l.b16 %v4733
    %v6207 = vunpack.c.h.b16 %v4733
    %v6208 = vunpack.c.l.b16 %v4734
    %v6209 = vunpack.c.h.b16 %v4734
    %v6210 = vunpack.c.l.b16 %v4735
    %v6211 = vunpack.c.h.b16 %v4735
    %v6212 = vunpack.c.l.b16 %v4736
    %v6213 = vunpack.c.h.b16 %v4736
    %v6214 = vunpack.c.l.b16 %v4737
    %v6215 = vunpack.c.h.b16 %v4737
    %v6216 = vunpack.c.l.b16 %v4738
    %v6217 = vunpack.c.h.b16 %v4738
    %v6218 = vunpack.c.l.b16 %v4739
    %v6219 = vunpack.c.h.b16 %v4739
    %v6220 = vunpack.c.l.b16 %v4740
    %v6221 = vunpack.c.h.b16 %v4740
    %v6222 = vunpack.c.l.b16 %v4741
    %v6223 = vunpack.c.h.b16 %v4741
    %v6224 = vunpack.c.l.b16 %v4742
    %v6225 = vunpack.c.h.b16 %v4742
    %v6226 = vunpack.c.l.b16 %v4743
    %v6227 = vunpack.c.h.b16 %v4743
    %v6228 = vunpack.c.l.b16 %v4744
    %v6229 = vunpack.c.h.b16 %v4744
    %v6230 = vunpack.c.l.b16 %v4745
    %v6231 = vunpack.c.h.b16 %v4745
    %v6232 = vunpack.c.l.b16 %v4746
    %v6233 = vunpack.c.h.b16 %v4746
    %v6234 = vunpack.c.l.b16 %v4747
    %v6235 = vunpack.c.h.b16 %v4747
    %v6236 = vunpack.c.l.b16 %v4748
    %v6237 = vunpack.c.h.b16 %v4748
    %v6238 = vunpack.c.l.b16 %v4749
    %v6239 = vunpack.c.h.b16 %v4749
    %v6240 = vunpack.c.l.b16 %v4750
    %v6241 = vunpack.c.h.b16 %v4750
    %v6242 = vunpack.c.l.b16 %v4751
    %v6243 = vunpack.c.h.b16 %v4751
    %v6244 = vunpack.c.l.b16 %v4752
    %v6245 = vunpack.c.h.b16 %v4752
    %v6246 = vunpack.c.l.b16 %v4753
    %v6247 = vunpack.c.h.b16 %v4753
    %v6248 = vunpack.c.l.b16 %v4754
    %v6249 = vunpack.c.h.b16 %v4754
    %v6250 = vunpack.c.l.b16 %v4755
    %v6251 = vunpack.c.h.b16 %v4755
    %v6252 = vunpack.c.l.b16 %v4756
    %v6253 = vunpack.c.h.b16 %v4756
    %v6254 = vunpack.c.l.b16 %v4757
    %v6255 = vunpack.c.h.b16 %v4757
    %v6256 = vunpack.c.l.b16 %v4758
    %v6257 = vunpack.c.h.b16 %v4758
    %v6258 = vunpack.c.l.b16 %v4759
    %v6259 = vunpack.c.h.b16 %v4759
    %v6260 = vpack.c.b16 %v5268, %v5260
    %v6261 = vpack.c.b16 %v5269, %v5261
    %v6262 = vpack.c.b16 %v5270, %v5262
    %v6263 = vpack.c.b16 %v5271, %v5263
    %v6264 = vpack.c.b16 %v5272, %v5264
    %v6265 = vpack.c.b16 %v5273, %v5265
    %v6266 = vpack.c.b16 %v5274, %v5266
    %v6267 = vpack.c.b16 %v5275, %v5267
    %v6268 = vpack.c.b16 %v5284, %v5276
    %v6269 = vpack.c.b16 %v5285, %v5277
    %v6270 = vpack.c.b16 %v5286, %v5278
    %v6271 = vpack.c.b16 %v5287, %v5279
    %v6272 = vpack.c.b16 %v5288, %v5280
    %v6273 = vpack.c.b16 %v5289, %v5281
    %v6274 = vpack.c.b16 %v5290, %v5282
    %v6275 = vpack.c.b16 %v5291, %v5283
    %v6276 = vpack.c.b16 %v5300, %v5292
    %v6277 = vpack.c.b16 %v5301, %v5293
    %v6278 = vpack.c.b16 %v5302, %v5294
    %v6279 = vpack.c.b16 %v5303, %v5295
    %v6280 = vpack.c.b16 %v5304, %v5296
    %v6281 = vpack.c.b16 %v5305, %v5297
    %v6282 = vpack.c.b16 %v5306, %v5298
    %v6283 = vpack.c.b16 %v5307, %v5299
    %v6284 = vpack.c.b16 %v5316, %v5308
    %v6285 = vpack.c.b16 %v5317, %v5309
    %v6286 = vpack.c.b16 %v5318, %v5310
    %v6287 = vpack.c.b16 %v5319, %v5311
    %v6288 = vpack.c.b16 %v5320, %v5312
    %v6289 = vpack.c.b16 %v5321, %v5313
    %v6290 = vpack.c.b16 %v5322, %v5314
    %v6291 = vpack.c.b16 %v5323, %v5315
    %v6292 = vpack.c.b16 %v5332, %v5324
    %v6293 = vpack.c.b16 %v5333, %v5325
    %v6294 = vpack.c.b16 %v5334, %v5326
    %v6295 = vpack.c.b16 %v5335, %v5327
    %v6296 = vpack.c.b16 %v5336, %v5328
    %v6297 = vpack.c.b16 %v5337, %v5329
    %v6298 = vpack.c.b16 %v5338, %v5330
    %v6299 = vpack.c.b16 %v5339, %v5331
    %v6300 = vpack.c.b16 %v5348, %v5340
    %v6301 = vpack.c.b16 %v5349, %v5341
    %v6302 = vpack.c.b16 %v5350, %v5342
    %v6303 = vpack.c.b16 %v5351, %v5343
    %v6304 = vpack.c.b16 %v5352, %v5344
    %v6305 = vpack.c.b16 %v5353, %v5345
    %v6306 = vpack.c.b16 %v5354, %v5346
    %v6307 = vpack.c.b16 %v5355, %v5347
    %v6308 = vpack.c.b16 %v5364, %v5356
    %v6309 = vpack.c.b16 %v5365, %v5357
    %v6310 = vpack.c.b16 %v5366, %v5358
    %v6311 = vpack.c.b16 %v5367, %v5359
    %v6312 = vpack.c.b16 %v5368, %v5360
    %v6313 = vpack.c.b16 %v5369, %v5361
    %v6314 = vpack.c.b16 %v5370, %v5362
    %v6315 = vpack.c.b16 %v5371, %v5363
    %v6316 = vpack.c.b16 %v5380, %v5372
    %v6317 = vpack.c.b16 %v5381, %v5373
    %v6318 = vpack.c.b16 %v5382, %v5374
    %v6319 = vpack.c.b16 %v5383, %v5375
    %v6320 = vpack.c.b16 %v5384, %v5376
    %v6321 = vpack.c.b16 %v5385, %v5377
    %v6322 = vpack.c.b16 %v5386, %v5378
    %v6323 = vpack.c.b16 %v5387, %v5379
    %v6324 = vpack.c.b16 %v5396, %v5388
    %v6325 = vpack.c.b16 %v5397, %v5389
    %v6326 = vpack.c.b16 %v5398, %v5390
    %v6327 = vpack.c.b16 %v5399, %v5391
    %v6328 = vpack.c.b16 %v5400, %v5392
    %v6329 = vpack.c.b16 %v5401, %v5393
    %v6330 = vpack.c.b16 %v5402, %v5394
    %v6331 = vpack.c.b16 %v5403, %v5395
    %v6332 = vpack.c.b16 %v5412, %v5404
    %v6333 = vpack.c.b16 %v5413, %v5405
    %v6334 = vpack.c.b16 %v5414, %v5406
    %v6335 = vpack.c.b16 %v5415, %v5407
    %v6336 = vpack.c.b16 %v5416, %v5408
    %v6337 = vpack.c.b16 %v5417, %v5409
    %v6338 = vpack.c.b16 %v5418, %v5410
    %v6339 = vpack.c.b16 %v5419, %v5411
    %v6340 = vpack.c.b16 %v5428, %v5420
    %v6341 = vpack.c.b16 %v5429, %v5421
    %v6342 = vpack.c.b16 %v5430, %v5422
    %v6343 = vpack.c.b16 %v5431, %v5423
    %v6344 = vpack.c.b16 %v5432, %v5424
    %v6345 = vpack.c.b16 %v5433, %v5425
    %v6346 = vpack.c.b16 %v5434, %v5426
    %v6347 = vpack.c.b16 %v5435, %v5427
    %v6348 = vpack.c.b16 %v5444, %v5436
    %v6349 = vpack.c.b16 %v5445, %v5437
    %v6350 = vpack.c.b16 %v5446, %v5438
    %v6351 = vpack.c.b16 %v5447, %v5439
    %v6352 = vpack.c.b16 %v5448, %v5440
    %v6353 = vpack.c.b16 %v5449, %v5441
    %v6354 = vpack.c.b16 %v5450, %v5442
    %v6355 = vpack.c.b16 %v5451, %v5443
    %v6356 = vpack.c.b16 %v5460, %v5452
    %v6357 = vpack.c.b16 %v5461, %v5453
    %v6358 = vpack.c.b16 %v5462, %v5454
    %v6359 = vpack.c.b16 %v5463, %v5455
    %v6360 = vpack.c.b16 %v5464, %v5456
    %v6361 = vpack.c.b16 %v5465, %v5457
    %v6362 = vpack.c.b16 %v5466, %v5458
    %v6363 = vpack.c.b16 %v5467, %v5459
    %v6364 = vpack.c.b16 %v5476, %v5468
    %v6365 = vpack.c.b16 %v5477, %v5469
    %v6366 = vpack.c.b16 %v5478, %v5470
    %v6367 = vpack.c.b16 %v5479, %v5471
    %v6368 = vpack.c.b16 %v5480, %v5472
    %v6369 = vpack.c.b16 %v5481, %v5473
    %v6370 = vpack.c.b16 %v5482, %v5474
    %v6371 = vpack.c.b16 %v5483, %v5475
    %v6372 = vpack.c.b16 %v5492, %v5484
    %v6373 = vpack.c.b16 %v5493, %v5485
    %v6374 = vpack.c.b16 %v5494, %v5486
    %v6375 = vpack.c.b16 %v5495, %v5487
    %v6376 = vpack.c.b16 %v5496, %v5488
    %v6377 = vpack.c.b16 %v5497, %v5489
    %v6378 = vpack.c.b16 %v5498, %v5490
    %v6379 = vpack.c.b16 %v5499, %v5491
    %v6380 = vpack.c.b16 %v5508, %v5500
    %v6381 = vpack.c.b16 %v5509, %v5501
    %v6382 = vpack.c.b16 %v5510, %v5502
    %v6383 = vpack.c.b16 %v5511, %v5503
    %v6384 = vpack.c.b16 %v5512, %v5504
    %v6385 = vpack.c.b16 %v5513, %v5505
    %v6386 = vpack.c.b16 %v5514, %v5506
    %v6387 = vpack.c.b16 %v5515, %v5507
    %v6388 = vpack.c.b16 %v5524, %v5516
    %v6389 = vpack.c.b16 %v5525, %v5517
    %v6390 = vpack.c.b16 %v5526, %v5518
    %v6391 = vpack.c.b16 %v5527, %v5519
    %v6392 = vpack.c.b16 %v5528, %v5520
    %v6393 = vpack.c.b16 %v5529, %v5521
    %v6394 = vpack.c.b16 %v5530, %v5522
    %v6395 = vpack.c.b16 %v5531, %v5523
    %v6396 = vpack.c.b16 %v5540, %v5532
    %v6397 = vpack.c.b16 %v5541, %v5533
    %v6398 = vpack.c.b16 %v5542, %v5534
    %v6399 = vpack.c.b16 %v5543, %v5535
    %v6400 = vpack.c.b16 %v5544, %v5536
    %v6401 = vpack.c.b16 %v5545, %v5537
    %v6402 = vpack.c.b16 %v5546, %v5538
    %v6403 = vpack.c.b16 %v5547, %v5539
    %v6404 = vpack.c.b16 %v5556, %v5548
    %v6405 = vpack.c.b16 %v5557, %v5549
    %v6406 = vpack.c.b16 %v5558, %v5550
    %v6407 = vpack.c.b16 %v5559, %v5551
    %v6408 = vpack.c.b16 %v5560, %v5552
    %v6409 = vpack.c.b16 %v5561, %v5553
    %v6410 = vpack.c.b16 %v5562, %v5554
    %v6411 = vpack.c.b16 %v5563, %v5555
    %v6412 = vpack.c.b16 %v5572, %v5564
    %v6413 = vpack.c.b16 %v5573, %v5565
    %v6414 = vpack.c.b16 %v5574, %v5566
    %v6415 = vpack.c.b16 %v5575, %v5567
    %v6416 = vpack.c.b16 %v5576, %v5568
    %v6417 = vpack.c.b16 %v5577, %v5569
    %v6418 = vpack.c.b16 %v5578, %v5570
    %v6419 = vpack.c.b16 %v5579, %v5571
    %v6420 = vpack.c.b16 %v5588, %v5580
    %v6421 = vpack.c.b16 %v5589, %v5581
    %v6422 = vpack.c.b16 %v5590, %v5582
    %v6423 = vpack.c.b16 %v5591, %v5583
    %v6424 = vpack.c.b16 %v5592, %v5584
    %v6425 = vpack.c.b16 %v5593, %v5585
    %v6426 = vpack.c.b16 %v5594, %v5586
    %v6427 = vpack.c.b16 %v5595, %v5587
    %v6428 = vpack.c.b16 %v5604, %v5596
    %v6429 = vpack.c.b16 %v5605, %v5597
    %v6430 = vpack.c.b16 %v5606, %v5598
    %v6431 = vpack.c.b16 %v5607, %v5599
    %v6432 = vpack.c.b16 %v5608, %v5600
    %v6433 = vpack.c.b16 %v5609, %v5601
    %v6434 = vpack.c.b16 %v5610, %v5602
    %v6435 = vpack.c.b16 %v5611, %v5603
    %v6436 = vpack.c.b16 %v5620, %v5612
    %v6437 = vpack.c.b16 %v5621, %v5613
    %v6438 = vpack.c.b16 %v5622, %v5614
    %v6439 = vpack.c.b16 %v5623, %v5615
    %v6440 = vpack.c.b16 %v5624, %v5616
    %v6441 = vpack.c.b16 %v5625, %v5617
    %v6442 = vpack.c.b16 %v5626, %v5618
    %v6443 = vpack.c.b16 %v5627, %v5619
    %v6444 = vpack.c.b16 %v5636, %v5628
    %v6445 = vpack.c.b16 %v5637, %v5629
    %v6446 = vpack.c.b16 %v5638, %v5630
    %v6447 = vpack.c.b16 %v5639, %v5631
    %v6448 = vpack.c.b16 %v5640, %v5632
    %v6449 = vpack.c.b16 %v5641, %v5633
    %v6450 = vpack.c.b16 %v5642, %v5634
    %v6451 = vpack.c.b16 %v5643, %v5635
    %v6452 = vpack.c.b16 %v5652, %v5644
    %v6453 = vpack.c.b16 %v5653, %v5645
    %v6454 = vpack.c.b16 %v5654, %v5646
    %v6455 = vpack.c.b16 %v5655, %v5647
    %v6456 = vpack.c.b16 %v5656, %v5648
    %v6457 = vpack.c.b16 %v5657, %v5649
    %v6458 = vpack.c.b16 %v5658, %v5650
    %v6459 = vpack.c.b16 %v5659, %v5651
    %v6460 = vpack.c.b16 %v5668, %v5660
    %v6461 = vpack.c.b16 %v5669, %v5661
    %v6462 = vpack.c.b16 %v5670, %v5662
    %v6463 = vpack.c.b16 %v5671, %v5663
    %v6464 = vpack.c.b16 %v5672, %v5664
    %v6465 = vpack.c.b16 %v5673, %v5665
    %v6466 = vpack.c.b16 %v5674, %v5666
    %v6467 = vpack.c.b16 %v5675, %v5667
    %v6468 = vpack.c.b16 %v5684, %v5676
    %v6469 = vpack.c.b16 %v5685, %v5677
    %v6470 = vpack.c.b16 %v5686, %v5678
    %v6471 = vpack.c.b16 %v5687, %v5679
    %v6472 = vpack.c.b16 %v5688, %v5680
    %v6473 = vpack.c.b16 %v5689, %v5681
    %v6474 = vpack.c.b16 %v5690, %v5682
    %v6475 = vpack.c.b16 %v5691, %v5683
    %v6476 = vpack.c.b16 %v5700, %v5692
    %v6477 = vpack.c.b16 %v5701, %v5693
    %v6478 = vpack.c.b16 %v5702, %v5694
    %v6479 = vpack.c.b16 %v5703, %v5695
    %v6480 = vpack.c.b16 %v5704, %v5696
    %v6481 = vpack.c.b16 %v5705, %v5697
    %v6482 = vpack.c.b16 %v5706, %v5698
    %v6483 = vpack.c.b16 %v5707, %v5699
    %v6484 = vpack.c.b16 %v5716, %v5708
    %v6485 = vpack.c.b16 %v5717, %v5709
    %v6486 = vpack.c.b16 %v5718, %v5710
    %v6487 = vpack.c.b16 %v5719, %v5711
    %v6488 = vpack.c.b16 %v5720, %v5712
    %v6489 = vpack.c.b16 %v5721, %v5713
    %v6490 = vpack.c.b16 %v5722, %v5714
    %v6491 = vpack.c.b16 %v5723, %v5715
    %v6492 = vpack.c.b16 %v5732, %v5724
    %v6493 = vpack.c.b16 %v5733, %v5725
    %v6494 = vpack.c.b16 %v5734, %v5726
    %v6495 = vpack.c.b16 %v5735, %v5727
    %v6496 = vpack.c.b16 %v5736, %v5728
    %v6497 = vpack.c.b16 %v5737, %v5729
    %v6498 = vpack.c.b16 %v5738, %v5730
    %v6499 = vpack.c.b16 %v5739, %v5731
    %v6500 = vpack.c.b16 %v5748, %v5740
    %v6501 = vpack.c.b16 %v5749, %v5741
    %v6502 = vpack.c.b16 %v5750, %v5742
    %v6503 = vpack.c.b16 %v5751, %v5743
    %v6504 = vpack.c.b16 %v5752, %v5744
    %v6505 = vpack.c.b16 %v5753, %v5745
    %v6506 = vpack.c.b16 %v5754, %v5746
    %v6507 = vpack.c.b16 %v5755, %v5747
    %v6508 = vpack.c.b16 %v5764, %v5756
    %v6509 = vpack.c.b16 %v5765, %v5757
    %v6510 = vpack.c.b16 %v5766, %v5758
    %v6511 = vpack.c.b16 %v5767, %v5759
    %v6512 = vpack.c.b16 %v5768, %v5760
    %v6513 = vpack.c.b16 %v5769, %v5761
    %v6514 = vpack.c.b16 %v5770, %v5762
    %v6515 = vpack.c.b16 %v5771, %v5763
    %v6516 = vpack.c.b16 %v5780, %v5772
    %v6517 = vpack.c.b16 %v5781, %v5773
    %v6518 = vpack.c.b16 %v5782, %v5774
    %v6519 = vpack.c.b16 %v5783, %v5775
    %v6520 = vpack.c.b16 %v5784, %v5776
    %v6521 = vpack.c.b16 %v5785, %v5777
    %v6522 = vpack.c.b16 %v5786, %v5778
    %v6523 = vpack.c.b16 %v5787, %v5779
    %v6524 = vpack.c.b16 %v5796, %v5788
    %v6525 = vpack.c.b16 %v5797, %v5789
    %v6526 = vpack.c.b16 %v5798, %v5790
    %v6527 = vpack.c.b16 %v5799, %v5791
    %v6528 = vpack.c.b16 %v5800, %v5792
    %v6529 = vpack.c.b16 %v5801, %v5793
    %v6530 = vpack.c.b16 %v5802, %v5794
    %v6531 = vpack.c.b16 %v5803, %v5795
    %v6532 = vpack.c.b16 %v5812, %v5804
    %v6533 = vpack.c.b16 %v5813, %v5805
    %v6534 = vpack.c.b16 %v5814, %v5806
    %v6535 = vpack.c.b16 %v5815, %v5807
    %v6536 = vpack.c.b16 %v5816, %v5808
    %v6537 = vpack.c.b16 %v5817, %v5809
    %v6538 = vpack.c.b16 %v5818, %v5810
    %v6539 = vpack.c.b16 %v5819, %v5811
    %v6540 = vpack.c.b16 %v5828, %v5820
    %v6541 = vpack.c.b16 %v5829, %v5821
    %v6542 = vpack.c.b16 %v5830, %v5822
    %v6543 = vpack.c.b16 %v5831, %v5823
    %v6544 = vpack.c.b16 %v5832, %v5824
    %v6545 = vpack.c.b16 %v5833, %v5825
    %v6546 = vpack.c.b16 %v5834, %v5826
    %v6547 = vpack.c.b16 %v5835, %v5827
    %v6548 = vpack.c.b16 %v5844, %v5836
    %v6549 = vpack.c.b16 %v5845, %v5837
    %v6550 = vpack.c.b16 %v5846, %v5838
    %v6551 = vpack.c.b16 %v5847, %v5839
    %v6552 = vpack.c.b16 %v5848, %v5840
    %v6553 = vpack.c.b16 %v5849, %v5841
    %v6554 = vpack.c.b16 %v5850, %v5842
    %v6555 = vpack.c.b16 %v5851, %v5843
    %v6556 = vpack.c.b16 %v5860, %v5852
    %v6557 = vpack.c.b16 %v5861, %v5853
    %v6558 = vpack.c.b16 %v5862, %v5854
    %v6559 = vpack.c.b16 %v5863, %v5855
    %v6560 = vpack.c.b16 %v5864, %v5856
    %v6561 = vpack.c.b16 %v5865, %v5857
    %v6562 = vpack.c.b16 %v5866, %v5858
    %v6563 = vpack.c.b16 %v5867, %v5859
    %v6564 = vpack.c.b16 %v5876, %v5868
    %v6565 = vpack.c.b16 %v5877, %v5869
    %v6566 = vpack.c.b16 %v5878, %v5870
    %v6567 = vpack.c.b16 %v5879, %v5871
    %v6568 = vpack.c.b16 %v5880, %v5872
    %v6569 = vpack.c.b16 %v5881, %v5873
    %v6570 = vpack.c.b16 %v5882, %v5874
    %v6571 = vpack.c.b16 %v5883, %v5875
    %v6572 = vpack.c.b16 %v5892, %v5884
    %v6573 = vpack.c.b16 %v5893, %v5885
    %v6574 = vpack.c.b16 %v5894, %v5886
    %v6575 = vpack.c.b16 %v5895, %v5887
    %v6576 = vpack.c.b16 %v5896, %v5888
    %v6577 = vpack.c.b16 %v5897, %v5889
    %v6578 = vpack.c.b16 %v5898, %v5890
    %v6579 = vpack.c.b16 %v5899, %v5891
    %v6580 = vpack.c.b16 %v5908, %v5900
    %v6581 = vpack.c.b16 %v5909, %v5901
    %v6582 = vpack.c.b16 %v5910, %v5902
    %v6583 = vpack.c.b16 %v5911, %v5903
    %v6584 = vpack.c.b16 %v5912, %v5904
    %v6585 = vpack.c.b16 %v5913, %v5905
    %v6586 = vpack.c.b16 %v5914, %v5906
    %v6587 = vpack.c.b16 %v5915, %v5907
    %v6588 = vpack.c.b16 %v5924, %v5916
    %v6589 = vpack.c.b16 %v5925, %v5917
    %v6590 = vpack.c.b16 %v5926, %v5918
    %v6591 = vpack.c.b16 %v5927, %v5919
    %v6592 = vpack.c.b16 %v5928, %v5920
    %v6593 = vpack.c.b16 %v5929, %v5921
    %v6594 = vpack.c.b16 %v5930, %v5922
    %v6595 = vpack.c.b16 %v5931, %v5923
    %v6596 = vpack.c.b16 %v5940, %v5932
    %v6597 = vpack.c.b16 %v5941, %v5933
    %v6598 = vpack.c.b16 %v5942, %v5934
    %v6599 = vpack.c.b16 %v5943, %v5935
    %v6600 = vpack.c.b16 %v5944, %v5936
    %v6601 = vpack.c.b16 %v5945, %v5937
    %v6602 = vpack.c.b16 %v5946, %v5938
    %v6603 = vpack.c.b16 %v5947, %v5939
    %v6604 = vpack.c.b16 %v5956, %v5948
    %v6605 = vpack.c.b16 %v5957, %v5949
    %v6606 = vpack.c.b16 %v5958, %v5950
    %v6607 = vpack.c.b16 %v5959, %v5951
    %v6608 = vpack.c.b16 %v5960, %v5952
    %v6609 = vpack.c.b16 %v5961, %v5953
    %v6610 = vpack.c.b16 %v5962, %v5954
    %v6611 = vpack.c.b16 %v5963, %v5955
    %v6612 = vpack.c.b16 %v5972, %v5964
    %v6613 = vpack.c.b16 %v5973, %v5965
    %v6614 = vpack.c.b16 %v5974, %v5966
    %v6615 = vpack.c.b16 %v5975, %v5967
    %v6616 = vpack.c.b16 %v5976, %v5968
    %v6617 = vpack.c.b16 %v5977, %v5969
    %v6618 = vpack.c.b16 %v5978, %v5970
    %v6619 = vpack.c.b16 %v5979, %v5971
    %v6620 = vpack.c.b16 %v5988, %v5980
    %v6621 = vpack.c.b16 %v5989, %v5981
    %v6622 = vpack.c.b16 %v5990, %v5982
    %v6623 = vpack.c.b16 %v5991, %v5983
    %v6624 = vpack.c.b16 %v5992, %v5984
    %v6625 = vpack.c.b16 %v5993, %v5985
    %v6626 = vpack.c.b16 %v5994, %v5986
    %v6627 = vpack.c.b16 %v5995, %v5987
    %v6628 = vpack.c.b16 %v6004, %v5996
    %v6629 = vpack.c.b16 %v6005, %v5997
    %v6630 = vpack.c.b16 %v6006, %v5998
    %v6631 = vpack.c.b16 %v6007, %v5999
    %v6632 = vpack.c.b16 %v6008, %v6000
    %v6633 = vpack.c.b16 %v6009, %v6001
    %v6634 = vpack.c.b16 %v6010, %v6002
    %v6635 = vpack.c.b16 %v6011, %v6003
    %v6636 = vpack.c.b16 %v6020, %v6012
    %v6637 = vpack.c.b16 %v6021, %v6013
    %v6638 = vpack.c.b16 %v6022, %v6014
    %v6639 = vpack.c.b16 %v6023, %v6015
    %v6640 = vpack.c.b16 %v6024, %v6016
    %v6641 = vpack.c.b16 %v6025, %v6017
    %v6642 = vpack.c.b16 %v6026, %v6018
    %v6643 = vpack.c.b16 %v6027, %v6019
    %v6644 = vpack.c.b16 %v6036, %v6028
    %v6645 = vpack.c.b16 %v6037, %v6029
    %v6646 = vpack.c.b16 %v6038, %v6030
    %v6647 = vpack.c.b16 %v6039, %v6031
    %v6648 = vpack.c.b16 %v6040, %v6032
    %v6649 = vpack.c.b16 %v6041, %v6033
    %v6650 = vpack.c.b16 %v6042, %v6034
    %v6651 = vpack.c.b16 %v6043, %v6035
    %v6652 = vpack.c.b16 %v6052, %v6044
    %v6653 = vpack.c.b16 %v6053, %v6045
    %v6654 = vpack.c.b16 %v6054, %v6046
    %v6655 = vpack.c.b16 %v6055, %v6047
    %v6656 = vpack.c.b16 %v6056, %v6048
    %v6657 = vpack.c.b16 %v6057, %v6049
    %v6658 = vpack.c.b16 %v6058, %v6050
    %v6659 = vpack.c.b16 %v6059, %v6051
    %v6660 = vpack.c.b16 %v6068, %v6060
    %v6661 = vpack.c.b16 %v6069, %v6061
    %v6662 = vpack.c.b16 %v6070, %v6062
    %v6663 = vpack.c.b16 %v6071, %v6063
    %v6664 = vpack.c.b16 %v6072, %v6064
    %v6665 = vpack.c.b16 %v6073, %v6065
    %v6666 = vpack.c.b16 %v6074, %v6066
    %v6667 = vpack.c.b16 %v6075, %v6067
    %v6668 = vpack.c.b16 %v6084, %v6076
    %v6669 = vpack.c.b16 %v6085, %v6077
    %v6670 = vpack.c.b16 %v6086, %v6078
    %v6671 = vpack.c.b16 %v6087, %v6079
    %v6672 = vpack.c.b16 %v6088, %v6080
    %v6673 = vpack.c.b16 %v6089, %v6081
    %v6674 = vpack.c.b16 %v6090, %v6082
    %v6675 = vpack.c.b16 %v6091, %v6083
    %v6676 = vpack.c.b16 %v6100, %v6092
    %v6677 = vpack.c.b16 %v6101, %v6093
    %v6678 = vpack.c.b16 %v6102, %v6094
    %v6679 = vpack.c.b16 %v6103, %v6095
    %v6680 = vpack.c.b16 %v6104, %v6096
    %v6681 = vpack.c.b16 %v6105, %v6097
    %v6682 = vpack.c.b16 %v6106, %v6098
    %v6683 = vpack.c.b16 %v6107, %v6099
    %v6684 = vpack.c.b16 %v6116, %v6108
    %v6685 = vpack.c.b16 %v6117, %v6109
    %v6686 = vpack.c.b16 %v6118, %v6110
    %v6687 = vpack.c.b16 %v6119, %v6111
    %v6688 = vpack.c.b16 %v6120, %v6112
    %v6689 = vpack.c.b16 %v6121, %v6113
    %v6690 = vpack.c.b16 %v6122, %v6114
    %v6691 = vpack.c.b16 %v6123, %v6115
    %v6692 = vpack.c.b16 %v6132, %v6124
    %v6693 = vpack.c.b16 %v6133, %v6125
    %v6694 = vpack.c.b16 %v6134, %v6126
    %v6695 = vpack.c.b16 %v6135, %v6127
    %v6696 = vpack.c.b16 %v6136, %v6128
    %v6697 = vpack.c.b16 %v6137, %v6129
    %v6698 = vpack.c.b16 %v6138, %v6130
    %v6699 = vpack.c.b16 %v6139, %v6131
    %v6700 = vpack.c.b16 %v6148, %v6140
    %v6701 = vpack.c.b16 %v6149, %v6141
    %v6702 = vpack.c.b16 %v6150, %v6142
    %v6703 = vpack.c.b16 %v6151, %v6143
    %v6704 = vpack.c.b16 %v6152, %v6144
    %v6705 = vpack.c.b16 %v6153, %v6145
    %v6706 = vpack.c.b16 %v6154, %v6146
    %v6707 = vpack.c.b16 %v6155, %v6147
    %v6708 = vpack.c.b16 %v6164, %v6156
    %v6709 = vpack.c.b16 %v6165, %v6157
    %v6710 = vpack.c.b16 %v6166, %v6158
    %v6711 = vpack.c.b16 %v6167, %v6159
    %v6712 = vpack.c.b16 %v6168, %v6160
    %v6713 = vpack.c.b16 %v6169, %v6161
    %v6714 = vpack.c.b16 %v6170, %v6162
    %v6715 = vpack.c.b16 %v6171, %v6163
    %v6716 = vpack.c.b16 %v6180, %v6172
    %v6717 = vpack.c.b16 %v6181, %v6173
    %v6718 = vpack.c.b16 %v6182, %v6174
    %v6719 = vpack.c.b16 %v6183, %v6175
    %v6720 = vpack.c.b16 %v6184, %v6176
    %v6721 = vpack.c.b16 %v6185, %v6177
    %v6722 = vpack.c.b16 %v6186, %v6178
    %v6723 = vpack.c.b16 %v6187, %v6179
    %v6724 = vpack.c.b16 %v6196, %v6188
    %v6725 = vpack.c.b16 %v6197, %v6189
    %v6726 = vpack.c.b16 %v6198, %v6190
    %v6727 = vpack.c.b16 %v6199, %v6191
    %v6728 = vpack.c.b16 %v6200, %v6192
    %v6729 = vpack.c.b16 %v6201, %v6193
    %v6730 = vpack.c.b16 %v6202, %v6194
    %v6731 = vpack.c.b16 %v6203, %v6195
    %v6732 = vpack.c.b16 %v6212, %v6204
    %v6733 = vpack.c.b16 %v6213, %v6205
    %v6734 = vpack.c.b16 %v6214, %v6206
    %v6735 = vpack.c.b16 %v6215, %v6207
    %v6736 = vpack.c.b16 %v6216, %v6208
    %v6737 = vpack.c.b16 %v6217, %v6209
    %v6738 = vpack.c.b16 %v6218, %v6210
    %v6739 = vpack.c.b16 %v6219, %v6211
    %v6740 = vpack.c.b16 %v6228, %v6220
    %v6741 = vpack.c.b16 %v6229, %v6221
    %v6742 = vpack.c.b16 %v6230, %v6222
    %v6743 = vpack.c.b16 %v6231, %v6223
    %v6744 = vpack.c.b16 %v6232, %v6224
    %v6745 = vpack.c.b16 %v6233, %v6225
    %v6746 = vpack.c.b16 %v6234, %v6226
    %v6747 = vpack.c.b16 %v6235, %v6227
    %v6748 = vpack.c.b16 %v6244, %v6236
    %v6749 = vpack.c.b16 %v6245, %v6237
    %v6750 = vpack.c.b16 %v6246, %v6238
    %v6751 = vpack.c.b16 %v6247, %v6239
    %v6752 = vpack.c.b16 %v6248, %v6240
    %v6753 = vpack.c.b16 %v6249, %v6241
    %v6754 = vpack.c.b16 %v6250, %v6242
    %v6755 = vpack.c.b16 %v6251, %v6243
    %v6756 = vpack.c.b16 %v6252, %v6252
    %v6757 = vpack.c.b16 %v6253, %v6253
    %v6758 = vpack.c.b16 %v6254, %v6254
    %v6759 = vpack.c.b16 %v6255, %v6255
    %v6760 = vpack.c.b16 %v6256, %v6256
    %v6761 = vpack.c.b16 %v6257, %v6257
    %v6762 = vpack.c.b16 %v6258, %v6258
    %v6763 = vpack.c.b16 %v6259, %v6259
    %v7261 = vsel %vm3218, %v4009, 0
    %v7264 = vsel %vm3222, %v6756, 0
    %v7267 = vsel %vm3222, %v6757, 0
    %v7270 = vsel %vm3222, %v6758, 0
    %v7273 = vsel %vm3222, %v6759, 0
    %v7276 = vsel %vm3222, %v6760, 0
    %v7279 = vsel %vm3222, %v6761, 0
    %v7282 = vsel %vm3222, %v6762, 0
    %v7285 = vsel %vm3222, %v6763, 0
    %7287 = vmatprep.subr.bf16.mxu0 %v6261
    %7288 = vmatpush1.bf16.msra.mxu0 %v6260
    %7289 = vmatprep.subr.bf16.mxu0 %v6269
    %7290 = vmatpush1.bf16.msra.mxu0 %v6268
    %7291 = vmatprep.subr.bf16.mxu0 %v6277
    %7292 = vmatpush1.bf16.msra.mxu0 %v6276
    %7293 = vmatprep.subr.bf16.mxu0 %v6285
    %7294 = vmatpush1.bf16.msra.mxu0 %v6284
    %7295 = vmatprep.subr.bf16.mxu0 %v6293
    %7296 = vmatpush1.bf16.msra.mxu0 %v6292
    %7297 = vmatprep.subr.bf16.mxu0 %v6301
    %7298 = vmatpush1.bf16.msra.mxu0 %v6300
    %7299 = vmatprep.subr.bf16.mxu0 %v6309
    %7300 = vmatpush1.bf16.msra.mxu0 %v6308
    %7301 = vmatprep.subr.bf16.mxu0 %v6317
    %7302 = vmatpush1.bf16.msra.mxu0 %v6316
    %7303 = vmatprep.subr.bf16.mxu0 %v6325
    %7304 = vmatpush1.bf16.msra.mxu0 %v6324
    %7305 = vmatprep.subr.bf16.mxu0 %v6333
    %7306 = vmatpush1.bf16.msra.mxu0 %v6332
    %7307 = vmatprep.subr.bf16.mxu0 %v6341
    %7308 = vmatpush1.bf16.msra.mxu0 %v6340
    %7309 = vmatprep.subr.bf16.mxu0 %v6349
    %7310 = vmatpush1.bf16.msra.mxu0 %v6348
    %7311 = vmatprep.subr.bf16.mxu0 %v6357
    %7312 = vmatpush1.bf16.msra.mxu0 %v6356
    %7313 = vmatprep.subr.bf16.mxu0 %v6365
    %7314 = vmatpush1.bf16.msra.mxu0 %v6364
    %7315 = vmatprep.subr.bf16.mxu0 %v6373
    %7316 = vmatpush1.bf16.msra.mxu0 %v6372
    %7317 = vmatprep.subr.bf16.mxu0 %v6381
    %7318 = vmatpush1.bf16.msra.mxu0 %v6380
    %7319 = vmatprep.mubr.bf16.mxu0 %v4003
    %7320 = vmatmul.mubr.bf16.gmra.mrb[0].mxu0 %v4002
    %v7321 = vpop.f32.mrb[0].mxu0
    %v7322 = vadd.f32 0.0, %v7321
    %v7323 = vpop.f32.mrb[0].mxu0
    %v7324 = vadd.f32 0.0, %v7323
    %v7325 = vpop.f32.mrb[0].mxu0
    %v7326 = vpop.f32.mrb[0].mxu0
    %7327 = vdwg.mxu0
    %7328 = vmatprep.subr.bf16.mxu0 %v6389
    %7329 = vmatpush1.bf16.msra.mxu0 %v6388
    %7330 = vmatprep.subr.bf16.mxu0 %v6397
    %7331 = vmatpush1.bf16.msra.mxu0 %v6396
    %7332 = vmatprep.subr.bf16.mxu0 %v6405
    %7333 = vmatpush1.bf16.msra.mxu0 %v6404
    %7334 = vmatprep.subr.bf16.mxu0 %v6413
    %7335 = vmatpush1.bf16.msra.mxu0 %v6412
    %7336 = vmatprep.subr.bf16.mxu0 %v6421
    %7337 = vmatpush1.bf16.msra.mxu0 %v6420
    %7338 = vmatprep.subr.bf16.mxu0 %v6429
    %7339 = vmatpush1.bf16.msra.mxu0 %v6428
    %7340 = vmatprep.subr.bf16.mxu0 %v6437
    %7341 = vmatpush1.bf16.msra.mxu0 %v6436
    %7342 = vmatprep.subr.bf16.mxu0 %v6445
    %7343 = vmatpush1.bf16.msra.mxu0 %v6444
    %7344 = vmatprep.subr.bf16.mxu0 %v6453
    %7345 = vmatpush1.bf16.msra.mxu0 %v6452
    %7346 = vmatprep.subr.bf16.mxu0 %v6461
    %7347 = vmatpush1.bf16.msra.mxu0 %v6460
    %7348 = vmatprep.subr.bf16.mxu0 %v6469
    %7349 = vmatpush1.bf16.msra.mxu0 %v6468
    %7350 = vmatprep.subr.bf16.mxu0 %v6477
    %7351 = vmatpush1.bf16.msra.mxu0 %v6476
    %7352 = vmatprep.subr.bf16.mxu0 %v6485
    %7353 = vmatpush1.bf16.msra.mxu0 %v6484
    %7354 = vmatprep.subr.bf16.mxu0 %v6493
    %7355 = vmatpush1.bf16.msra.mxu0 %v6492
    %7356 = vmatprep.subr.bf16.mxu0 %v6501
    %7357 = vmatpush1.bf16.msra.mxu0 %v6500
    %7358 = vmatprep.subr.bf16.mxu0 %v6509
    %7359 = vmatpush1.bf16.msra.mxu0 %v6508
    %7360 = vmatprep.mubr.bf16.mxu0 %v4005
    %7361 = vmatmul.mubr.bf16.gmra.mrb[0].mxu0 %v4004
    %v7362 = vpop.f32.mrb[0].mxu0
    %v7363 = vadd.f32 %v7322, %v7362
    %v7364 = vpop.f32.mrb[0].mxu0
    %v7365 = vadd.f32 %v7324, %v7364
    %v7366 = vpop.f32.mrb[0].mxu0
    %v7367 = vpop.f32.mrb[0].mxu0
    %7368 = vdwg.mxu0
    %7369 = vmatprep.subr.bf16.mxu0 %v6517
    %7370 = vmatpush1.bf16.msra.mxu0 %v6516
    %7371 = vmatprep.subr.bf16.mxu0 %v6525
    %7372 = vmatpush1.bf16.msra.mxu0 %v6524
    %7373 = vmatprep.subr.bf16.mxu0 %v6533
    %7374 = vmatpush1.bf16.msra.mxu0 %v6532
    %7375 = vmatprep.subr.bf16.mxu0 %v6541
    %7376 = vmatpush1.bf16.msra.mxu0 %v6540
    %7377 = vmatprep.subr.bf16.mxu0 %v6549
    %7378 = vmatpush1.bf16.msra.mxu0 %v6548
    %7379 = vmatprep.subr.bf16.mxu0 %v6557
    %7380 = vmatpush1.bf16.msra.mxu0 %v6556
    %7381 = vmatprep.subr.bf16.mxu0 %v6565
    %7382 = vmatpush1.bf16.msra.mxu0 %v6564
    %7383 = vmatprep.subr.bf16.mxu0 %v6573
    %7384 = vmatpush1.bf16.msra.mxu0 %v6572
    %7385 = vmatprep.subr.bf16.mxu0 %v6581
    %7386 = vmatpush1.bf16.msra.mxu0 %v6580
    %7387 = vmatprep.subr.bf16.mxu0 %v6589
    %7388 = vmatpush1.bf16.msra.mxu0 %v6588
    %7389 = vmatprep.subr.bf16.mxu0 %v6597
    %7390 = vmatpush1.bf16.msra.mxu0 %v6596
    %7391 = vmatprep.subr.bf16.mxu0 %v6605
    %7392 = vmatpush1.bf16.msra.mxu0 %v6604
    %7393 = vmatprep.subr.bf16.mxu0 %v6613
    %7394 = vmatpush1.bf16.msra.mxu0 %v6612
    %7395 = vmatprep.subr.bf16.mxu0 %v6621
    %7396 = vmatpush1.bf16.msra.mxu0 %v6620
    %7397 = vmatprep.subr.bf16.mxu0 %v6629
    %7398 = vmatpush1.bf16.msra.mxu0 %v6628
    %7399 = vmatprep.subr.bf16.mxu0 %v6637
    %7400 = vmatpush1.bf16.msra.mxu0 %v6636
    %7401 = vmatprep.mubr.bf16.mxu0 %v4007
    %7402 = vmatmul.mubr.bf16.gmra.mrb[0].mxu0 %v4006
    %v7403 = vpop.f32.mrb[0].mxu0
    %v7404 = vadd.f32 %v7363, %v7403
    %v7405 = vpop.f32.mrb[0].mxu0
    %v7406 = vadd.f32 %v7365, %v7405
    %v7407 = vpop.f32.mrb[0].mxu0
    %v7408 = vpop.f32.mrb[0].mxu0
    %7409 = vdwg.mxu0
    %7410 = vmatprep.subr.bf16.mxu0 %v6645
    %7411 = vmatpush1.bf16.msra.mxu0 %v6644
    %7412 = vmatprep.subr.bf16.mxu0 %v6653
    %7413 = vmatpush1.bf16.msra.mxu0 %v6652
    %7414 = vmatprep.subr.bf16.mxu0 %v6661
    %7415 = vmatpush1.bf16.msra.mxu0 %v6660
    %7416 = vmatprep.subr.bf16.mxu0 %v6669
    %7417 = vmatpush1.bf16.msra.mxu0 %v6668
    %7418 = vmatprep.subr.bf16.mxu0 %v6677
    %7419 = vmatpush1.bf16.msra.mxu0 %v6676
    %7420 = vmatprep.subr.bf16.mxu0 %v6685
    %7421 = vmatpush1.bf16.msra.mxu0 %v6684
    %7422 = vmatprep.subr.bf16.mxu0 %v6693
    %7423 = vmatpush1.bf16.msra.mxu0 %v6692
    %7424 = vmatprep.subr.bf16.mxu0 %v6701
    %7425 = vmatpush1.bf16.msra.mxu0 %v6700
    %7426 = vmatprep.subr.bf16.mxu0 %v6709
    %7427 = vmatpush1.bf16.msra.mxu0 %v6708
    %7428 = vmatprep.subr.bf16.mxu0 %v6717
    %7429 = vmatpush1.bf16.msra.mxu0 %v6716
    %7430 = vmatprep.subr.bf16.mxu0 %v6725
    %7431 = vmatpush1.bf16.msra.mxu0 %v6724
    %7432 = vmatprep.subr.bf16.mxu0 %v6733
    %7433 = vmatpush1.bf16.msra.mxu0 %v6732
    %7434 = vmatprep.subr.bf16.mxu0 %v6741
    %7435 = vmatpush1.bf16.msra.mxu0 %v6740
    %7436 = vmatprep.subr.bf16.mxu0 %v6749
    %7437 = vmatpush1.bf16.msra.mxu0 %v6748
    %7438 = vmatprep.subr.bf16.mxu0 %v7267
    %7439 = vmatpush1.bf16.msra.mxu0 %v7264
    %7440 = vmatprep.subr.bf16.mxu0 0
    %7441 = vmatpush1.bf16.msra.mxu0 0
    %7442 = vmatprep.mubr.bf16.mxu0 %v7261
    %7443 = vmatmul.mubr.bf16.gmra.mrb[0].mxu0 %v4008
    %v7444 = vpop.f32.mrb[0].mxu0
    %v7445 = vadd.f32 %v7404, %v7444
    %v7446 = vpop.f32.mrb[0].mxu0
    %v7447 = vadd.f32 %v7406, %v7446
    %v7448 = vpop.f32.mrb[0].mxu0
    %v7449 = vpop.f32.mrb[0].mxu0
    %7450 = vdwg.mxu0
    %7451 = vmatprep.subr.bf16.mxu0 %v6263
    %7452 = vmatpush1.bf16.msra.mxu0 %v6262
    %7453 = vmatprep.subr.bf16.mxu0 %v6271
    %7454 = vmatpush1.bf16.msra.mxu0 %v6270
    %7455 = vmatprep.subr.bf16.mxu0 %v6279
    %7456 = vmatpush1.bf16.msra.mxu0 %v6278
    %7457 = vmatprep.subr.bf16.mxu0 %v6287
    %7458 = vmatpush1.bf16.msra.mxu0 %v6286
    %7459 = vmatprep.subr.bf16.mxu0 %v6295
    %7460 = vmatpush1.bf16.msra.mxu0 %v6294
    %7461 = vmatprep.subr.bf16.mxu0 %v6303
    %7462 = vmatpush1.bf16.msra.mxu0 %v6302
    %7463 = vmatprep.subr.bf16.mxu0 %v6311
    %7464 = vmatpush1.bf16.msra.mxu0 %v6310
    %7465 = vmatprep.subr.bf16.mxu0 %v6319
    %7466 = vmatpush1.bf16.msra.mxu0 %v6318
    %7467 = vmatprep.subr.bf16.mxu0 %v6327
    %7468 = vmatpush1.bf16.msra.mxu0 %v6326
    %7469 = vmatprep.subr.bf16.mxu0 %v6335
    %7470 = vmatpush1.bf16.msra.mxu0 %v6334
    %7471 = vmatprep.subr.bf16.mxu0 %v6343
    %7472 = vmatpush1.bf16.msra.mxu0 %v6342
    %7473 = vmatprep.subr.bf16.mxu0 %v6351
    %7474 = vmatpush1.bf16.msra.mxu0 %v6350
    %7475 = vmatprep.subr.bf16.mxu0 %v6359
    %7476 = vmatpush1.bf16.msra.mxu0 %v6358
    %7477 = vmatprep.subr.bf16.mxu0 %v6367
    %7478 = vmatpush1.bf16.msra.mxu0 %v6366
    %7479 = vmatprep.subr.bf16.mxu0 %v6375
    %7480 = vmatpush1.bf16.msra.mxu0 %v6374
    %7481 = vmatprep.subr.bf16.mxu0 %v6383
    %7482 = vmatpush1.bf16.msra.mxu0 %v6382
    %7483 = vmatprep.mubr.bf16.mxu0 %v4003
    %7484 = vmatmul.mubr.bf16.gmra.mrb[0].mxu0 %v4002
    %v7485 = vpop.f32.mrb[0].mxu0
    %v7486 = vadd.f32 0.0, %v7485
    %v7487 = vpop.f32.mrb[0].mxu0
    %v7488 = vadd.f32 0.0, %v7487
    %v7489 = vpop.f32.mrb[0].mxu0
    %v7490 = vpop.f32.mrb[0].mxu0
    %7491 = vdwg.mxu0
    %7492 = vmatprep.subr.bf16.mxu0 %v6391
    %7493 = vmatpush1.bf16.msra.mxu0 %v6390
    %7494 = vmatprep.subr.bf16.mxu0 %v6399
    %7495 = vmatpush1.bf16.msra.mxu0 %v6398
    %7496 = vmatprep.subr.bf16.mxu0 %v6407
    %7497 = vmatpush1.bf16.msra.mxu0 %v6406
    %7498 = vmatprep.subr.bf16.mxu0 %v6415
    %7499 = vmatpush1.bf16.msra.mxu0 %v6414
    %7500 = vmatprep.subr.bf16.mxu0 %v6423
    %7501 = vmatpush1.bf16.msra.mxu0 %v6422
    %7502 = vmatprep.subr.bf16.mxu0 %v6431
    %7503 = vmatpush1.bf16.msra.mxu0 %v6430
    %7504 = vmatprep.subr.bf16.mxu0 %v6439
    %7505 = vmatpush1.bf16.msra.mxu0 %v6438
    %7506 = vmatprep.subr.bf16.mxu0 %v6447
    %7507 = vmatpush1.bf16.msra.mxu0 %v6446
    %7508 = vmatprep.subr.bf16.mxu0 %v6455
    %7509 = vmatpush1.bf16.msra.mxu0 %v6454
    %7510 = vmatprep.subr.bf16.mxu0 %v6463
    %7511 = vmatpush1.bf16.msra.mxu0 %v6462
    %7512 = vmatprep.subr.bf16.mxu0 %v6471
    %7513 = vmatpush1.bf16.msra.mxu0 %v6470
    %7514 = vmatprep.subr.bf16.mxu0 %v6479
    %7515 = vmatpush1.bf16.msra.mxu0 %v6478
    %7516 = vmatprep.subr.bf16.mxu0 %v6487
    %7517 = vmatpush1.bf16.msra.mxu0 %v6486
    %7518 = vmatprep.subr.bf16.mxu0 %v6495
    %7519 = vmatpush1.bf16.msra.mxu0 %v6494
    %7520 = vmatprep.subr.bf16.mxu0 %v6503
    %7521 = vmatpush1.bf16.msra.mxu0 %v6502
    %7522 = vmatprep.subr.bf16.mxu0 %v6511
    %7523 = vmatpush1.bf16.msra.mxu0 %v6510
    %7524 = vmatprep.mubr.bf16.mxu0 %v4005
    %7525 = vmatmul.mubr.bf16.gmra.mrb[0].mxu0 %v4004
    %v7526 = vpop.f32.mrb[0].mxu0
    %v7527 = vadd.f32 %v7486, %v7526
    %v7528 = vpop.f32.mrb[0].mxu0
    %v7529 = vadd.f32 %v7488, %v7528
    %v7530 = vpop.f32.mrb[0].mxu0
    %v7531 = vpop.f32.mrb[0].mxu0
    %7532 = vdwg.mxu0
    %7533 = vmatprep.subr.bf16.mxu0 %v6519
    %7534 = vmatpush1.bf16.msra.mxu0 %v6518
    %7535 = vmatprep.subr.bf16.mxu0 %v6527
    %7536 = vmatpush1.bf16.msra.mxu0 %v6526
    %7537 = vmatprep.subr.bf16.mxu0 %v6535
    %7538 = vmatpush1.bf16.msra.mxu0 %v6534
    %7539 = vmatprep.subr.bf16.mxu0 %v6543
    %7540 = vmatpush1.bf16.msra.mxu0 %v6542
    %7541 = vmatprep.subr.bf16.mxu0 %v6551
    %7542 = vmatpush1.bf16.msra.mxu0 %v6550
    %7543 = vmatprep.subr.bf16.mxu0 %v6559
    %7544 = vmatpush1.bf16.msra.mxu0 %v6558
    %7545 = vmatprep.subr.bf16.mxu0 %v6567
    %7546 = vmatpush1.bf16.msra.mxu0 %v6566
    %7547 = vmatprep.subr.bf16.mxu0 %v6575
    %7548 = vmatpush1.bf16.msra.mxu0 %v6574
    %7549 = vmatprep.subr.bf16.mxu0 %v6583
    %7550 = vmatpush1.bf16.msra.mxu0 %v6582
    %7551 = vmatprep.subr.bf16.mxu0 %v6591
    %7552 = vmatpush1.bf16.msra.mxu0 %v6590
    %7553 = vmatprep.subr.bf16.mxu0 %v6599
    %7554 = vmatpush1.bf16.msra.mxu0 %v6598
    %7555 = vmatprep.subr.bf16.mxu0 %v6607
    %7556 = vmatpush1.bf16.msra.mxu0 %v6606
    %7557 = vmatprep.subr.bf16.mxu0 %v6615
    %7558 = vmatpush1.bf16.msra.mxu0 %v6614
    %7559 = vmatprep.subr.bf16.mxu0 %v6623
    %7560 = vmatpush1.bf16.msra.mxu0 %v6622
    %7561 = vmatprep.subr.bf16.mxu0 %v6631
    %7562 = vmatpush1.bf16.msra.mxu0 %v6630
    %7563 = vmatprep.subr.bf16.mxu0 %v6639
    %7564 = vmatpush1.bf16.msra.mxu0 %v6638
    %7565 = vmatprep.mubr.bf16.mxu0 %v4007
    %7566 = vmatmul.mubr.bf16.gmra.mrb[0].mxu0 %v4006
    %v7567 = vpop.f32.mrb[0].mxu0
    %v7568 = vadd.f32 %v7527, %v7567
    %v7569 = vpop.f32.mrb[0].mxu0
    %v7570 = vadd.f32 %v7529, %v7569
    %v7571 = vpop.f32.mrb[0].mxu0
    %v7572 = vpop.f32.mrb[0].mxu0
    %7573 = vdwg.mxu0
    %7574 = vmatprep.subr.bf16.mxu0 %v6647
    %7575 = vmatpush1.bf16.msra.mxu0 %v6646
    %7576 = vmatprep.subr.bf16.mxu0 %v6655
    %7577 = vmatpush1.bf16.msra.mxu0 %v6654
    %7578 = vmatprep.subr.bf16.mxu0 %v6663
    %7579 = vmatpush1.bf16.msra.mxu0 %v6662
    %7580 = vmatprep.subr.bf16.mxu0 %v6671
    %7581 = vmatpush1.bf16.msra.mxu0 %v6670
    %7582 = vmatprep.subr.bf16.mxu0 %v6679
    %7583 = vmatpush1.bf16.msra.mxu0 %v6678
    %7584 = vmatprep.subr.bf16.mxu0 %v6687
    %7585 = vmatpush1.bf16.msra.mxu0 %v6686
    %7586 = vmatprep.subr.bf16.mxu0 %v6695
    %7587 = vmatpush1.bf16.msra.mxu0 %v6694
    %7588 = vmatprep.subr.bf16.mxu0 %v6703
    %7589 = vmatpush1.bf16.msra.mxu0 %v6702
    %7590 = vmatprep.subr.bf16.mxu0 %v6711
    %7591 = vmatpush1.bf16.msra.mxu0 %v6710
    %7592 = vmatprep.subr.bf16.mxu0 %v6719
    %7593 = vmatpush1.bf16.msra.mxu0 %v6718
    %7594 = vmatprep.subr.bf16.mxu0 %v6727
    %7595 = vmatpush1.bf16.msra.mxu0 %v6726
    %7596 = vmatprep.subr.bf16.mxu0 %v6735
    %7597 = vmatpush1.bf16.msra.mxu0 %v6734
    %7598 = vmatprep.subr.bf16.mxu0 %v6743
    %7599 = vmatpush1.bf16.msra.mxu0 %v6742
    %7600 = vmatprep.subr.bf16.mxu0 %v6751
    %7601 = vmatpush1.bf16.msra.mxu0 %v6750
    %7602 = vmatprep.subr.bf16.mxu0 %v7273
    %7603 = vmatpush1.bf16.msra.mxu0 %v7270
    %7604 = vmatprep.subr.bf16.mxu0 0
    %7605 = vmatpush1.bf16.msra.mxu0 0
    %7606 = vmatprep.mubr.bf16.mxu0 %v7261
    %7607 = vmatmul.mubr.bf16.gmra.mrb[0].mxu0 %v4008
    %v7608 = vpop.f32.mrb[0].mxu0
    %v7609 = vadd.f32 %v7568, %v7608
    %v7610 = vpop.f32.mrb[0].mxu0
    %v7611 = vadd.f32 %v7570, %v7610
    %v7612 = vpop.f32.mrb[0].mxu0
    %v7613 = vpop.f32.mrb[0].mxu0
    %7614 = vdwg.mxu0
    %7615 = vmatprep.subr.bf16.mxu0 %v6265
    %7616 = vmatpush1.bf16.msra.mxu0 %v6264
    %7617 = vmatprep.subr.bf16.mxu0 %v6273
    %7618 = vmatpush1.bf16.msra.mxu0 %v6272
    %7619 = vmatprep.subr.bf16.mxu0 %v6281
    %7620 = vmatpush1.bf16.msra.mxu0 %v6280
    %7621 = vmatprep.subr.bf16.mxu0 %v6289
    %7622 = vmatpush1.bf16.msra.mxu0 %v6288
    %7623 = vmatprep.subr.bf16.mxu0 %v6297
    %7624 = vmatpush1.bf16.msra.mxu0 %v6296
    %7625 = vmatprep.subr.bf16.mxu0 %v6305
    %7626 = vmatpush1.bf16.msra.mxu0 %v6304
    %7627 = vmatprep.subr.bf16.mxu0 %v6313
    %7628 = vmatpush1.bf16.msra.mxu0 %v6312
    %7629 = vmatprep.subr.bf16.mxu0 %v6321
    %7630 = vmatpush1.bf16.msra.mxu0 %v6320
    %7631 = vmatprep.subr.bf16.mxu0 %v6329
    %7632 = vmatpush1.bf16.msra.mxu0 %v6328
    %7633 = vmatprep.subr.bf16.mxu0 %v6337
    %7634 = vmatpush1.bf16.msra.mxu0 %v6336
    %7635 = vmatprep.subr.bf16.mxu0 %v6345
    %7636 = vmatpush1.bf16.msra.mxu0 %v6344
    %7637 = vmatprep.subr.bf16.mxu0 %v6353
    %7638 = vmatpush1.bf16.msra.mxu0 %v6352
    %7639 = vmatprep.subr.bf16.mxu0 %v6361
    %7640 = vmatpush1.bf16.msra.mxu0 %v6360
    %7641 = vmatprep.subr.bf16.mxu0 %v6369
    %7642 = vmatpush1.bf16.msra.mxu0 %v6368
    %7643 = vmatprep.subr.bf16.mxu0 %v6377
    %7644 = vmatpush1.bf16.msra.mxu0 %v6376
    %7645 = vmatprep.subr.bf16.mxu0 %v6385
    %7646 = vmatpush1.bf16.msra.mxu0 %v6384
    %7647 = vmatprep.mubr.bf16.mxu0 %v4003
    %7648 = vmatmul.mubr.bf16.gmra.mrb[0].mxu0 %v4002
    %v7649 = vpop.f32.mrb[0].mxu0
    %v7650 = vadd.f32 0.0, %v7649
    %v7651 = vpop.f32.mrb[0].mxu0
    %v7652 = vadd.f32 0.0, %v7651
    %v7653 = vpop.f32.mrb[0].mxu0
    %v7654 = vpop.f32.mrb[0].mxu0
    %7655 = vdwg.mxu0
    %7656 = vmatprep.subr.bf16.mxu0 %v6393
    %7657 = vmatpush1.bf16.msra.mxu0 %v6392
    %7658 = vmatprep.subr.bf16.mxu0 %v6401
    %7659 = vmatpush1.bf16.msra.mxu0 %v6400
    %7660 = vmatprep.subr.bf16.mxu0 %v6409
    %7661 = vmatpush1.bf16.msra.mxu0 %v6408
    %7662 = vmatprep.subr.bf16.mxu0 %v6417
    %7663 = vmatpush1.bf16.msra.mxu0 %v6416
    %7664 = vmatprep.subr.bf16.mxu0 %v6425
    %7665 = vmatpush1.bf16.msra.mxu0 %v6424
    %7666 = vmatprep.subr.bf16.mxu0 %v6433
    %7667 = vmatpush1.bf16.msra.mxu0 %v6432
    %7668 = vmatprep.subr.bf16.mxu0 %v6441
    %7669 = vmatpush1.bf16.msra.mxu0 %v6440
    %7670 = vmatprep.subr.bf16.mxu0 %v6449
    %7671 = vmatpush1.bf16.msra.mxu0 %v6448
    %7672 = vmatprep.subr.bf16.mxu0 %v6457
    %7673 = vmatpush1.bf16.msra.mxu0 %v6456
    %7674 = vmatprep.subr.bf16.mxu0 %v6465
    %7675 = vmatpush1.bf16.msra.mxu0 %v6464
    %7676 = vmatprep.subr.bf16.mxu0 %v6473
    %7677 = vmatpush1.bf16.msra.mxu0 %v6472
    %7678 = vmatprep.subr.bf16.mxu0 %v6481
    %7679 = vmatpush1.bf16.msra.mxu0 %v6480
    %7680 = vmatprep.subr.bf16.mxu0 %v6489
    %7681 = vmatpush1.bf16.msra.mxu0 %v6488
    %7682 = vmatprep.subr.bf16.mxu0 %v6497
    %7683 = vmatpush1.bf16.msra.mxu0 %v6496
    %7684 = vmatprep.subr.bf16.mxu0 %v6505
    %7685 = vmatpush1.bf16.msra.mxu0 %v6504
    %7686 = vmatprep.subr.bf16.mxu0 %v6513
    %7687 = vmatpush1.bf16.msra.mxu0 %v6512
    %7688 = vmatprep.mubr.bf16.mxu0 %v4005
    %7689 = vmatmul.mubr.bf16.gmra.mrb[0].mxu0 %v4004
    %v7690 = vpop.f32.mrb[0].mxu0
    %v7691 = vadd.f32 %v7650, %v7690
    %v7692 = vpop.f32.mrb[0].mxu0
    %v7693 = vadd.f32 %v7652, %v7692
    %v7694 = vpop.f32.mrb[0].mxu0
    %v7695 = vpop.f32.mrb[0].mxu0
    %7696 = vdwg.mxu0
    %7697 = vmatprep.subr.bf16.mxu0 %v6521
    %7698 = vmatpush1.bf16.msra.mxu0 %v6520
    %7699 = vmatprep.subr.bf16.mxu0 %v6529
    %7700 = vmatpush1.bf16.msra.mxu0 %v6528
    %7701 = vmatprep.subr.bf16.mxu0 %v6537
    %7702 = vmatpush1.bf16.msra.mxu0 %v6536
    %7703 = vmatprep.subr.bf16.mxu0 %v6545
    %7704 = vmatpush1.bf16.msra.mxu0 %v6544
    %7705 = vmatprep.subr.bf16.mxu0 %v6553
    %7706 = vmatpush1.bf16.msra.mxu0 %v6552
    %7707 = vmatprep.subr.bf16.mxu0 %v6561
    %7708 = vmatpush1.bf16.msra.mxu0 %v6560
    %7709 = vmatprep.subr.bf16.mxu0 %v6569
    %7710 = vmatpush1.bf16.msra.mxu0 %v6568
    %7711 = vmatprep.subr.bf16.mxu0 %v6577
    %7712 = vmatpush1.bf16.msra.mxu0 %v6576
    %7713 = vmatprep.subr.bf16.mxu0 %v6585
    %7714 = vmatpush1.bf16.msra.mxu0 %v6584
    %7715 = vmatprep.subr.bf16.mxu0 %v6593
    %7716 = vmatpush1.bf16.msra.mxu0 %v6592
    %7717 = vmatprep.subr.bf16.mxu0 %v6601
    %7718 = vmatpush1.bf16.msra.mxu0 %v6600
    %7719 = vmatprep.subr.bf16.mxu0 %v6609
    %7720 = vmatpush1.bf16.msra.mxu0 %v6608
    %7721 = vmatprep.subr.bf16.mxu0 %v6617
    %7722 = vmatpush1.bf16.msra.mxu0 %v6616
    %7723 = vmatprep.subr.bf16.mxu0 %v6625
    %7724 = vmatpush1.bf16.msra.mxu0 %v6624
    %7725 = vmatprep.subr.bf16.mxu0 %v6633
    %7726 = vmatpush1.bf16.msra.mxu0 %v6632
    %7727 = vmatprep.subr.bf16.mxu0 %v6641
    %7728 = vmatpush1.bf16.msra.mxu0 %v6640
    %7729 = vmatprep.mubr.bf16.mxu0 %v4007
    %7730 = vmatmul.mubr.bf16.gmra.mrb[0].mxu0 %v4006
    %v7731 = vpop.f32.mrb[0].mxu0
    %v7732 = vadd.f32 %v7691, %v7731
    %v7733 = vpop.f32.mrb[0].mxu0
    %v7734 = vadd.f32 %v7693, %v7733
    %v7735 = vpop.f32.mrb[0].mxu0
    %v7736 = vpop.f32.mrb[0].mxu0
    %7737 = vdwg.mxu0
    %7738 = vmatprep.subr.bf16.mxu0 %v6649
    %7739 = vmatpush1.bf16.msra.mxu0 %v6648
    %7740 = vmatprep.subr.bf16.mxu0 %v6657
    %7741 = vmatpush1.bf16.msra.mxu0 %v6656
    %7742 = vmatprep.subr.bf16.mxu0 %v6665
    %7743 = vmatpush1.bf16.msra.mxu0 %v6664
    %7744 = vmatprep.subr.bf16.mxu0 %v6673
    %7745 = vmatpush1.bf16.msra.mxu0 %v6672
    %7746 = vmatprep.subr.bf16.mxu0 %v6681
    %7747 = vmatpush1.bf16.msra.mxu0 %v6680
    %7748 = vmatprep.subr.bf16.mxu0 %v6689
    %7749 = vmatpush1.bf16.msra.mxu0 %v6688
    %7750 = vmatprep.subr.bf16.mxu0 %v6697
    %7751 = vmatpush1.bf16.msra.mxu0 %v6696
    %7752 = vmatprep.subr.bf16.mxu0 %v6705
    %7753 = vmatpush1.bf16.msra.mxu0 %v6704
    %7754 = vmatprep.subr.bf16.mxu0 %v6713
    %7755 = vmatpush1.bf16.msra.mxu0 %v6712
    %7756 = vmatprep.subr.bf16.mxu0 %v6721
    %7757 = vmatpush1.bf16.msra.mxu0 %v6720
    %7758 = vmatprep.subr.bf16.mxu0 %v6729
    %7759 = vmatpush1.bf16.msra.mxu0 %v6728
    %7760 = vmatprep.subr.bf16.mxu0 %v6737
    %7761 = vmatpush1.bf16.msra.mxu0 %v6736
    %7762 = vmatprep.subr.bf16.mxu0 %v6745
    %7763 = vmatpush1.bf16.msra.mxu0 %v6744
    %7764 = vmatprep.subr.bf16.mxu0 %v6753
    %7765 = vmatpush1.bf16.msra.mxu0 %v6752
    %7766 = vmatprep.subr.bf16.mxu0 %v7279
    %7767 = vmatpush1.bf16.msra.mxu0 %v7276
    %7768 = vmatprep.subr.bf16.mxu0 0
    %7769 = vmatpush1.bf16.msra.mxu0 0
    %7770 = vmatprep.mubr.bf16.mxu0 %v7261
    %7771 = vmatmul.mubr.bf16.gmra.mrb[0].mxu0 %v4008
    %v7772 = vpop.f32.mrb[0].mxu0
    %v7773 = vadd.f32 %v7732, %v7772
    %v7774 = vpop.f32.mrb[0].mxu0
    %v7775 = vadd.f32 %v7734, %v7774
    %v7776 = vpop.f32.mrb[0].mxu0
    %v7777 = vpop.f32.mrb[0].mxu0
    %7778 = vdwg.mxu0
    %7779 = vmatprep.subr.bf16.mxu0 %v6267
    %7780 = vmatpush1.bf16.msra.mxu0 %v6266
    %7781 = vmatprep.subr.bf16.mxu0 %v6275
    %7782 = vmatpush1.bf16.msra.mxu0 %v6274
    %7783 = vmatprep.subr.bf16.mxu0 %v6283
    %7784 = vmatpush1.bf16.msra.mxu0 %v6282
    %7785 = vmatprep.subr.bf16.mxu0 %v6291
    %7786 = vmatpush1.bf16.msra.mxu0 %v6290
    %7787 = vmatprep.subr.bf16.mxu0 %v6299
    %7788 = vmatpush1.bf16.msra.mxu0 %v6298
    %7789 = vmatprep.subr.bf16.mxu0 %v6307
    %7790 = vmatpush1.bf16.msra.mxu0 %v6306
    %7791 = vmatprep.subr.bf16.mxu0 %v6315
    %7792 = vmatpush1.bf16.msra.mxu0 %v6314
    %7793 = vmatprep.subr.bf16.mxu0 %v6323
    %7794 = vmatpush1.bf16.msra.mxu0 %v6322
    %7795 = vmatprep.subr.bf16.mxu0 %v6331
    %7796 = vmatpush1.bf16.msra.mxu0 %v6330
    %7797 = vmatprep.subr.bf16.mxu0 %v6339
    %7798 = vmatpush1.bf16.msra.mxu0 %v6338
    %7799 = vmatprep.subr.bf16.mxu0 %v6347
    %7800 = vmatpush1.bf16.msra.mxu0 %v6346
    %7801 = vmatprep.subr.bf16.mxu0 %v6355
    %7802 = vmatpush1.bf16.msra.mxu0 %v6354
    %7803 = vmatprep.subr.bf16.mxu0 %v6363
    %7804 = vmatpush1.bf16.msra.mxu0 %v6362
    %7805 = vmatprep.subr.bf16.mxu0 %v6371
    %7806 = vmatpush1.bf16.msra.mxu0 %v6370
    %7807 = vmatprep.subr.bf16.mxu0 %v6379
    %7808 = vmatpush1.bf16.msra.mxu0 %v6378
    %7809 = vmatprep.subr.bf16.mxu0 %v6387
    %7810 = vmatpush1.bf16.msra.mxu0 %v6386
    %7811 = vmatprep.mubr.bf16.mxu0 %v4003
    %7812 = vmatmul.mubr.bf16.gmra.mrb[0].mxu0 %v4002
    %v7813 = vpop.f32.mrb[0].mxu0
    %v7814 = vadd.f32 0.0, %v7813
    %v7815 = vpop.f32.mrb[0].mxu0
    %v7816 = vadd.f32 0.0, %v7815
    %v7817 = vpop.f32.mrb[0].mxu0
    %v7818 = vpop.f32.mrb[0].mxu0
    %7819 = vdwg.mxu0
    %7820 = vmatprep.subr.bf16.mxu0 %v6395
    %7821 = vmatpush1.bf16.msra.mxu0 %v6394
    %7822 = vmatprep.subr.bf16.mxu0 %v6403
    %7823 = vmatpush1.bf16.msra.mxu0 %v6402
    %7824 = vmatprep.subr.bf16.mxu0 %v6411
    %7825 = vmatpush1.bf16.msra.mxu0 %v6410
    %7826 = vmatprep.subr.bf16.mxu0 %v6419
    %7827 = vmatpush1.bf16.msra.mxu0 %v6418
    %7828 = vmatprep.subr.bf16.mxu0 %v6427
    %7829 = vmatpush1.bf16.msra.mxu0 %v6426
    %7830 = vmatprep.subr.bf16.mxu0 %v6435
    %7831 = vmatpush1.bf16.msra.mxu0 %v6434
    %7832 = vmatprep.subr.bf16.mxu0 %v6443
    %7833 = vmatpush1.bf16.msra.mxu0 %v6442
    %7834 = vmatprep.subr.bf16.mxu0 %v6451
    %7835 = vmatpush1.bf16.msra.mxu0 %v6450
    %7836 = vmatprep.subr.bf16.mxu0 %v6459
    %7837 = vmatpush1.bf16.msra.mxu0 %v6458
    %7838 = vmatprep.subr.bf16.mxu0 %v6467
    %7839 = vmatpush1.bf16.msra.mxu0 %v6466
    %7840 = vmatprep.subr.bf16.mxu0 %v6475
    %7841 = vmatpush1.bf16.msra.mxu0 %v6474
    %7842 = vmatprep.subr.bf16.mxu0 %v6483
    %7843 = vmatpush1.bf16.msra.mxu0 %v6482
    %7844 = vmatprep.subr.bf16.mxu0 %v6491
    %7845 = vmatpush1.bf16.msra.mxu0 %v6490
    %7846 = vmatprep.subr.bf16.mxu0 %v6499
    %7847 = vmatpush1.bf16.msra.mxu0 %v6498
    %7848 = vmatprep.subr.bf16.mxu0 %v6507
    %7849 = vmatpush1.bf16.msra.mxu0 %v6506
    %7850 = vmatprep.subr.bf16.mxu0 %v6515
    %7851 = vmatpush1.bf16.msra.mxu0 %v6514
    %7852 = vmatprep.mubr.bf16.mxu0 %v4005
    %7853 = vmatmul.mubr.bf16.gmra.mrb[0].mxu0 %v4004
    %v7854 = vpop.f32.mrb[0].mxu0
    %v7855 = vadd.f32 %v7814, %v7854
    %v7856 = vpop.f32.mrb[0].mxu0
    %v7857 = vadd.f32 %v7816, %v7856
    %v7858 = vpop.f32.mrb[0].mxu0
    %v7859 = vpop.f32.mrb[0].mxu0
    %7860 = vdwg.mxu0
    %7861 = vmatprep.subr.bf16.mxu0 %v6523
    %7862 = vmatpush1.bf16.msra.mxu0 %v6522
    %7863 = vmatprep.subr.bf16.mxu0 %v6531
    %7864 = vmatpush1.bf16.msra.mxu0 %v6530
    %7865 = vmatprep.subr.bf16.mxu0 %v6539
    %7866 = vmatpush1.bf16.msra.mxu0 %v6538
    %7867 = vmatprep.subr.bf16.mxu0 %v6547
    %7868 = vmatpush1.bf16.msra.mxu0 %v6546
    %7869 = vmatprep.subr.bf16.mxu0 %v6555
    %7870 = vmatpush1.bf16.msra.mxu0 %v6554
    %7871 = vmatprep.subr.bf16.mxu0 %v6563
    %7872 = vmatpush1.bf16.msra.mxu0 %v6562
    %7873 = vmatprep.subr.bf16.mxu0 %v6571
    %7874 = vmatpush1.bf16.msra.mxu0 %v6570
    %7875 = vmatprep.subr.bf16.mxu0 %v6579
    %7876 = vmatpush1.bf16.msra.mxu0 %v6578
    %7877 = vmatprep.subr.bf16.mxu0 %v6587
    %7878 = vmatpush1.bf16.msra.mxu0 %v6586
    %7879 = vmatprep.subr.bf16.mxu0 %v6595
    %7880 = vmatpush1.bf16.msra.mxu0 %v6594
    %7881 = vmatprep.subr.bf16.mxu0 %v6603
    %7882 = vmatpush1.bf16.msra.mxu0 %v6602
    %7883 = vmatprep.subr.bf16.mxu0 %v6611
    %7884 = vmatpush1.bf16.msra.mxu0 %v6610
    %7885 = vmatprep.subr.bf16.mxu0 %v6619
    %7886 = vmatpush1.bf16.msra.mxu0 %v6618
    %7887 = vmatprep.subr.bf16.mxu0 %v6627
    %7888 = vmatpush1.bf16.msra.mxu0 %v6626
    %7889 = vmatprep.subr.bf16.mxu0 %v6635
    %7890 = vmatpush1.bf16.msra.mxu0 %v6634
    %7891 = vmatprep.subr.bf16.mxu0 %v6643
    %7892 = vmatpush1.bf16.msra.mxu0 %v6642
    %7893 = vmatprep.mubr.bf16.mxu0 %v4007
    %7894 = vmatmul.mubr.bf16.gmra.mrb[0].mxu0 %v4006
    %v7895 = vpop.f32.mrb[0].mxu0
    %v7896 = vadd.f32 %v7855, %v7895
    %v7897 = vpop.f32.mrb[0].mxu0
    %v7898 = vadd.f32 %v7857, %v7897
    %v7899 = vpop.f32.mrb[0].mxu0
    %v7900 = vpop.f32.mrb[0].mxu0
    %7901 = vdwg.mxu0
    %7902 = vmatprep.subr.bf16.mxu0 %v6651
    %7903 = vmatpush1.bf16.msra.mxu0 %v6650
    %7904 = vmatprep.subr.bf16.mxu0 %v6659
    %7905 = vmatpush1.bf16.msra.mxu0 %v6658
    %7906 = vmatprep.subr.bf16.mxu0 %v6667
    %7907 = vmatpush1.bf16.msra.mxu0 %v6666
    %7908 = vmatprep.subr.bf16.mxu0 %v6675
    %7909 = vmatpush1.bf16.msra.mxu0 %v6674
    %7910 = vmatprep.subr.bf16.mxu0 %v6683
    %7911 = vmatpush1.bf16.msra.mxu0 %v6682
    %7912 = vmatprep.subr.bf16.mxu0 %v6691
    %7913 = vmatpush1.bf16.msra.mxu0 %v6690
    %7914 = vmatprep.subr.bf16.mxu0 %v6699
    %7915 = vmatpush1.bf16.msra.mxu0 %v6698
    %7916 = vmatprep.subr.bf16.mxu0 %v6707
    %7917 = vmatpush1.bf16.msra.mxu0 %v6706
    %7918 = vmatprep.subr.bf16.mxu0 %v6715
    %7919 = vmatpush1.bf16.msra.mxu0 %v6714
    %7920 = vmatprep.subr.bf16.mxu0 %v6723
    %7921 = vmatpush1.bf16.msra.mxu0 %v6722
    %7922 = vmatprep.subr.bf16.mxu0 %v6731
    %7923 = vmatpush1.bf16.msra.mxu0 %v6730
    %7924 = vmatprep.subr.bf16.mxu0 %v6739
    %7925 = vmatpush1.bf16.msra.mxu0 %v6738
    %7926 = vmatprep.subr.bf16.mxu0 %v6747
    %7927 = vmatpush1.bf16.msra.mxu0 %v6746
    %7928 = vmatprep.subr.bf16.mxu0 %v6755
    %7929 = vmatpush1.bf16.msra.mxu0 %v6754
    %7930 = vmatprep.subr.bf16.mxu0 %v7285
    %7931 = vmatpush1.bf16.msra.mxu0 %v7282
    %7932 = vmatprep.subr.bf16.mxu0 0
    %7933 = vmatpush1.bf16.msra.mxu0 0
    %7934 = vmatprep.mubr.bf16.mxu0 %v7261
    %7935 = vmatmul.mubr.bf16.gmra.mrb[0].mxu0 %v4008
    %v7936 = vpop.f32.mrb[0].mxu0
    %v7937 = vadd.f32 %v7896, %v7936
    %v7938 = vpop.f32.mrb[0].mxu0
    %v7939 = vadd.f32 %v7898, %v7938
    %v7940 = vpop.f32.mrb[0].mxu0
    %v7941 = vpop.f32.mrb[0].mxu0
    %7942 = vdwg.mxu0
    %v7943 = vld [vmem:[%s14] sm:$0xff]
    %v7945 = vlaneseq
    %v7946 = vshrl.u32 %v7945, 7
    %v7947 = vsub.s32 0, %v7946
    %v7948 = vrot.slane %v7943, %v7947
    %v7949 = vlaneseq
    %v7950 = vshrl.u32 %v7949, 7
    %v7951 = vsub.s32 1, %v7950
    %v7952 = vrot.slane %v7943, %v7951
    %v7953 = vlaneseq
    %v7954 = vshrl.u32 %v7953, 7
    %v7955 = vsub.s32 2, %v7954
    %v7956 = vrot.slane %v7943, %v7955
    %v7957 = vlaneseq
    %v7958 = vshrl.u32 %v7957, 7
    %v7959 = vsub.s32 3, %v7958
    %v7960 = vrot.slane %v7943, %v7959
    %v7961 = vlaneseq
    %v7962 = vshrl.u32 %v7961, 7
    %v7963 = vsub.s32 4, %v7962
    %v7964 = vrot.slane %v7943, %v7963
    %v7965 = vlaneseq
    %v7966 = vshrl.u32 %v7965, 7
    %v7967 = vsub.s32 5, %v7966
    %v7968 = vrot.slane %v7943, %v7967
    %v7969 = vlaneseq
    %v7970 = vshrl.u32 %v7969, 7
    %v7971 = vsub.s32 6, %v7970
    %v7972 = vrot.slane %v7943, %v7971
    %v7973 = vlaneseq
    %v7974 = vshrl.u32 %v7973, 7
    %v7975 = vsub.s32 7, %v7974
    %v7976 = vrot.slane %v7943, %v7975
    %v7985 = vmul.f32 %v7445, %v7948
    %v7986 = vmul.f32 %v7447, %v7952
    %v7987 = vmul.f32 %v7609, %v7956
    %v7988 = vmul.f32 %v7611, %v7960
    %v7989 = vmul.f32 %v7773, %v7964
    %v7990 = vmul.f32 %v7775, %v7968
    %v7991 = vmul.f32 %v7937, %v7972
    %v7992 = vmul.f32 %v7939, %v7976
    %v7993 = vpack.c.bf16 %v3632, %v3632
    %v7994 = vpack.c.bf16 %v3633, %v3633
    %v7995 = vpack.c.bf16 %v3634, %v3634
    %v7996 = vpack.c.bf16 %v3635, %v3635
    %v7997 = vld [vmem:[%s15] sm:$0xff]
    %v7998 = vld [vmem:[%s15 + $0x8] sm:$0xff]
    %v7999 = vld [vmem:[%s15 + $0x10] sm:$0xff]
    %v8000 = vld [vmem:[%s15 + $0x18] sm:$0xff]
    %v8001 = vld [vmem:[%s15 + $0x20] sm:$0xff]
    %v8002 = vld [vmem:[%s15 + $0x28] sm:$0xff]
    %v8003 = vld [vmem:[%s15 + $0x30] sm:$0xff]
    %v8004 = vld [vmem:[%s15 + $0x38] sm:$0xff]
    %v8005 = vld [vmem:[%s15 + $0x40] sm:$0xff]
    %v8006 = vld [vmem:[%s15 + $0x48] sm:$0xff]
    %v8007 = vld [vmem:[%s15 + $0x50] sm:$0xff]
    %v8008 = vld [vmem:[%s15 + $0x58] sm:$0xff]
    %v8009 = vld [vmem:[%s15 + $0x60] sm:$0xff]
    %v8010 = vld [vmem:[%s15 + $0x68] sm:$0xff]
    %v8011 = vld [vmem:[%s15 + $0x70] sm:$0xff]
    %v8012 = vld [vmem:[%s15 + $0x78] sm:$0xff]
    %v8013 = vld [vmem:[%s15 + $0x80] sm:$0xff]
    %v8014 = vld [vmem:[%s15 + $0x88] sm:$0xff]
    %v8015 = vld [vmem:[%s15 + $0x90] sm:$0xff]
    %v8016 = vld [vmem:[%s15 + $0x98] sm:$0xff]
    %v8017 = vld [vmem:[%s15 + $0xa0] sm:$0xff]
    %v8018 = vld [vmem:[%s15 + $0xa8] sm:$0xff]
    %v8019 = vld [vmem:[%s15 + $0xb0] sm:$0xff]
    %v8020 = vld [vmem:[%s15 + $0xb8] sm:$0xff]
    %v8021 = vld [vmem:[%s15 + $0xc0] sm:$0xff]
    %v8022 = vld [vmem:[%s15 + $0xc8] sm:$0xff]
    %v8023 = vld [vmem:[%s15 + $0xd0] sm:$0xff]
    %v8024 = vld [vmem:[%s15 + $0xd8] sm:$0xff]
    %v8025 = vld [vmem:[%s15 + $0xe0] sm:$0xff]
    %v8026 = vld [vmem:[%s15 + $0xe8] sm:$0xff]
    %v8027 = vld [vmem:[%s15 + $0xf0] sm:$0xff]
    %v8028 = vld [vmem:[%s15 + $0xf8] sm:$0xff]
    %v8029 = vld [vmem:[%s15 + $0x100] sm:$0xff]
    %v8030 = vld [vmem:[%s15 + $0x108] sm:$0xff]
    %v8031 = vld [vmem:[%s15 + $0x110] sm:$0xff]
    %v8032 = vld [vmem:[%s15 + $0x118] sm:$0xff]
    %v8033 = vld [vmem:[%s15 + $0x120] sm:$0xff]
    %v8034 = vld [vmem:[%s15 + $0x128] sm:$0xff]
    %v8035 = vld [vmem:[%s15 + $0x130] sm:$0xff]
    %v8036 = vld [vmem:[%s15 + $0x138] sm:$0xff]
    %v8037 = vld [vmem:[%s15 + $0x140] sm:$0xff]
    %v8038 = vld [vmem:[%s15 + $0x148] sm:$0xff]
    %v8039 = vld [vmem:[%s15 + $0x150] sm:$0xff]
    %v8040 = vld [vmem:[%s15 + $0x158] sm:$0xff]
    %v8041 = vld [vmem:[%s15 + $0x160] sm:$0xff]
    %v8042 = vld [vmem:[%s15 + $0x168] sm:$0xff]
    %v8043 = vld [vmem:[%s15 + $0x170] sm:$0xff]
    %v8044 = vld [vmem:[%s15 + $0x178] sm:$0xff]
    %v8045 = vld [vmem:[%s15 + $0x180] sm:$0xff]
    %v8046 = vld [vmem:[%s15 + $0x188] sm:$0xff]
    %v8047 = vld [vmem:[%s15 + $0x190] sm:$0xff]
    %v8048 = vld [vmem:[%s15 + $0x198] sm:$0xff]
    %v8049 = vld [vmem:[%s15 + $0x1a0] sm:$0xff]
    %v8050 = vld [vmem:[%s15 + $0x1a8] sm:$0xff]
    %v8051 = vld [vmem:[%s15 + $0x1b0] sm:$0xff]
    %v8052 = vld [vmem:[%s15 + $0x1b8] sm:$0xff]
    %v8053 = vld [vmem:[%s15 + $0x1c0] sm:$0xff]
    %v8054 = vld [vmem:[%s15 + $0x1c8] sm:$0xff]
    %v8055 = vld [vmem:[%s15 + $0x1d0] sm:$0xff]
    %v8056 = vld [vmem:[%s15 + $0x1d8] sm:$0xff]
    %v8057 = vld [vmem:[%s15 + $0x1e0] sm:$0xff]
    %v8058 = vld [vmem:[%s15 + $0x1e8] sm:$0xff]
    %v8059 = vld [vmem:[%s15 + $0x1f0] sm:$0xff]
    %v8060 = vld [vmem:[%s15 + $0x1f8] sm:$0xff]
    %v8061 = vld [vmem:[%s15 + $0x200] sm:$0xff]
    %v8062 = vld [vmem:[%s15 + $0x208] sm:$0xff]
    %v8063 = vld [vmem:[%s15 + $0x210] sm:$0xff]
    %v8064 = vld [vmem:[%s15 + $0x218] sm:$0xff]
    %v8065 = vld [vmem:[%s15 + $0x220] sm:$0xff]
    %v8066 = vld [vmem:[%s15 + $0x228] sm:$0xff]
    %v8067 = vld [vmem:[%s15 + $0x230] sm:$0xff]
    %v8068 = vld [vmem:[%s15 + $0x238] sm:$0xff]
    %v8069 = vld [vmem:[%s15 + $0x240] sm:$0xff]
    %v8070 = vld [vmem:[%s15 + $0x248] sm:$0xff]
    %v8071 = vld [vmem:[%s15 + $0x250] sm:$0xff]
    %v8072 = vld [vmem:[%s15 + $0x258] sm:$0xff]
    %v8073 = vld [vmem:[%s15 + $0x260] sm:$0xff]
    %v8074 = vld [vmem:[%s15 + $0x268] sm:$0xff]
    %v8075 = vld [vmem:[%s15 + $0x270] sm:$0xff]
    %v8076 = vld [vmem:[%s15 + $0x278] sm:$0xff]
    %v8077 = vld [vmem:[%s15 + $0x280] sm:$0xff]
    %v8078 = vld [vmem:[%s15 + $0x288] sm:$0xff]
    %v8079 = vld [vmem:[%s15 + $0x290] sm:$0xff]
    %v8080 = vld [vmem:[%s15 + $0x298] sm:$0xff]
    %v8081 = vld [vmem:[%s15 + $0x2a0] sm:$0xff]
    %v8082 = vld [vmem:[%s15 + $0x2a8] sm:$0xff]
    %v8083 = vld [vmem:[%s15 + $0x2b0] sm:$0xff]
    %v8084 = vld [vmem:[%s15 + $0x2b8] sm:$0xff]
    %v8085 = vld [vmem:[%s15 + $0x2c0] sm:$0xff]
    %v8086 = vld [vmem:[%s15 + $0x2c8] sm:$0xff]
    %v8087 = vld [vmem:[%s15 + $0x2d0] sm:$0xff]
    %v8088 = vld [vmem:[%s15 + $0x2d8] sm:$0xff]
    %v8089 = vld [vmem:[%s15 + $0x2e0] sm:$0xff]
    %v8090 = vld [vmem:[%s15 + $0x2e8] sm:$0xff]
    %v8091 = vld [vmem:[%s15 + $0x2f0] sm:$0xff]
    %v8092 = vld [vmem:[%s15 + $0x2f8] sm:$0xff]
    %v8093 = vld [vmem:[%s15 + $0x300] sm:$0xff]
    %v8094 = vld [vmem:[%s15 + $0x308] sm:$0xff]
    %v8095 = vld [vmem:[%s15 + $0x310] sm:$0xff]
    %v8096 = vld [vmem:[%s15 + $0x318] sm:$0xff]
    %v8097 = vld [vmem:[%s15 + $0x320] sm:$0xff]
    %v8098 = vld [vmem:[%s15 + $0x328] sm:$0xff]
    %v8099 = vld [vmem:[%s15 + $0x330] sm:$0xff]
    %v8100 = vld [vmem:[%s15 + $0x338] sm:$0xff]
    %v8101 = vld [vmem:[%s15 + $0x340] sm:$0xff]
    %v8102 = vld [vmem:[%s15 + $0x348] sm:$0xff]
    %v8103 = vld [vmem:[%s15 + $0x350] sm:$0xff]
    %v8104 = vld [vmem:[%s15 + $0x358] sm:$0xff]
    %v8105 = vld [vmem:[%s15 + $0x360] sm:$0xff]
    %v8106 = vld [vmem:[%s15 + $0x368] sm:$0xff]
    %v8107 = vld [vmem:[%s15 + $0x370] sm:$0xff]
    %v8108 = vld [vmem:[%s15 + $0x378] sm:$0xff]
    %v8109 = vld [vmem:[%s15 + $0x380] sm:$0xff]
    %v8110 = vld [vmem:[%s15 + $0x388] sm:$0xff]
    %v8111 = vld [vmem:[%s15 + $0x390] sm:$0xff]
    %v8112 = vld [vmem:[%s15 + $0x398] sm:$0xff]
    %v8113 = vld [vmem:[%s15 + $0x3a0] sm:$0xff]
    %v8114 = vld [vmem:[%s15 + $0x3a8] sm:$0xff]
    %v8115 = vld [vmem:[%s15 + $0x3b0] sm:$0xff]
    %v8116 = vld [vmem:[%s15 + $0x3b8] sm:$0xff]
    %v8117 = vld [vmem:[%s15 + $0x3c0] sm:$0xff]
    %v8118 = vld [vmem:[%s15 + $0x3c8] sm:$0xff]
    %v8119 = vld [vmem:[%s15 + $0x3d0] sm:$0xff]
    %v8120 = vld [vmem:[%s15 + $0x3d8] sm:$0xff]
    %v8121 = vld [vmem:[%s15 + $0x3e0] sm:$0x55]
    %v8122 = vld [vmem:[%s15 + $0x3e8] sm:$0x55]
    %v8123 = vunpack.c.l.s8.bf16 %v7997
    %v8124 = vunpack.c.h.s8.bf16 %v7997
    %v8125 = vunpack.c.l.s8.bf16 %v7998
    %v8126 = vunpack.c.h.s8.bf16 %v7998
    %v8127 = vunpack.c.l.s8.bf16 %v7999
    %v8128 = vunpack.c.h.s8.bf16 %v7999
    %v8129 = vunpack.c.l.s8.bf16 %v8000
    %v8130 = vunpack.c.h.s8.bf16 %v8000
    %v8131 = vunpack.c.l.s8.bf16 %v8001
    %v8132 = vunpack.c.h.s8.bf16 %v8001
    %v8133 = vunpack.c.l.s8.bf16 %v8002
    %v8134 = vunpack.c.h.s8.bf16 %v8002
    %v8135 = vunpack.c.l.s8.bf16 %v8003
    %v8136 = vunpack.c.h.s8.bf16 %v8003
    %v8137 = vunpack.c.l.s8.bf16 %v8004
    %v8138 = vunpack.c.h.s8.bf16 %v8004
    %v8139 = vunpack.c.l.s8.bf16 %v8005
    %v8140 = vunpack.c.h.s8.bf16 %v8005
    %v8141 = vunpack.c.l.s8.bf16 %v8006
    %v8142 = vunpack.c.h.s8.bf16 %v8006
    %v8143 = vunpack.c.l.s8.bf16 %v8007
    %v8144 = vunpack.c.h.s8.bf16 %v8007
    %v8145 = vunpack.c.l.s8.bf16 %v8008
    %v8146 = vunpack.c.h.s8.bf16 %v8008
    %v8147 = vunpack.c.l.s8.bf16 %v8009
    %v8148 = vunpack.c.h.s8.bf16 %v8009
    %v8149 = vunpack.c.l.s8.bf16 %v8010
    %v8150 = vunpack.c.h.s8.bf16 %v8010
    %v8151 = vunpack.c.l.s8.bf16 %v8011
    %v8152 = vunpack.c.h.s8.bf16 %v8011
    %v8153 = vunpack.c.l.s8.bf16 %v8012
    %v8154 = vunpack.c.h.s8.bf16 %v8012
    %v8155 = vunpack.c.l.s8.bf16 %v8013
    %v8156 = vunpack.c.h.s8.bf16 %v8013
    %v8157 = vunpack.c.l.s8.bf16 %v8014
    %v8158 = vunpack.c.h.s8.bf16 %v8014
    %v8159 = vunpack.c.l.s8.bf16 %v8015
    %v8160 = vunpack.c.h.s8.bf16 %v8015
    %v8161 = vunpack.c.l.s8.bf16 %v8016
    %v8162 = vunpack.c.h.s8.bf16 %v8016
    %v8163 = vunpack.c.l.s8.bf16 %v8017
    %v8164 = vunpack.c.h.s8.bf16 %v8017
    %v8165 = vunpack.c.l.s8.bf16 %v8018
    %v8166 = vunpack.c.h.s8.bf16 %v8018
    %v8167 = vunpack.c.l.s8.bf16 %v8019
    %v8168 = vunpack.c.h.s8.bf16 %v8019
    %v8169 = vunpack.c.l.s8.bf16 %v8020
    %v8170 = vunpack.c.h.s8.bf16 %v8020
    %v8171 = vunpack.c.l.s8.bf16 %v8021
    %v8172 = vunpack.c.h.s8.bf16 %v8021
    %v8173 = vunpack.c.l.s8.bf16 %v8022
    %v8174 = vunpack.c.h.s8.bf16 %v8022
    %v8175 = vunpack.c.l.s8.bf16 %v8023
    %v8176 = vunpack.c.h.s8.bf16 %v8023
    %v8177 = vunpack.c.l.s8.bf16 %v8024
    %v8178 = vunpack.c.h.s8.bf16 %v8024
    %v8179 = vunpack.c.l.s8.bf16 %v8025
    %v8180 = vunpack.c.h.s8.bf16 %v8025
    %v8181 = vunpack.c.l.s8.bf16 %v8026
    %v8182 = vunpack.c.h.s8.bf16 %v8026
    %v8183 = vunpack.c.l.s8.bf16 %v8027
    %v8184 = vunpack.c.h.s8.bf16 %v8027
    %v8185 = vunpack.c.l.s8.bf16 %v8028
    %v8186 = vunpack.c.h.s8.bf16 %v8028
    %v8187 = vunpack.c.l.s8.bf16 %v8029
    %v8188 = vunpack.c.h.s8.bf16 %v8029
    %v8189 = vunpack.c.l.s8.bf16 %v8030
    %v8190 = vunpack.c.h.s8.bf16 %v8030
    %v8191 = vunpack.c.l.s8.bf16 %v8031
    %v8192 = vunpack.c.h.s8.bf16 %v8031
    %v8193 = vunpack.c.l.s8.bf16 %v8032
    %v8194 = vunpack.c.h.s8.bf16 %v8032
    %v8195 = vunpack.c.l.s8.bf16 %v8033
    %v8196 = vunpack.c.h.s8.bf16 %v8033
    %v8197 = vunpack.c.l.s8.bf16 %v8034
    %v8198 = vunpack.c.h.s8.bf16 %v8034
    %v8199 = vunpack.c.l.s8.bf16 %v8035
    %v8200 = vunpack.c.h.s8.bf16 %v8035
    %v8201 = vunpack.c.l.s8.bf16 %v8036
    %v8202 = vunpack.c.h.s8.bf16 %v8036
    %v8203 = vunpack.c.l.s8.bf16 %v8037
    %v8204 = vunpack.c.h.s8.bf16 %v8037
    %v8205 = vunpack.c.l.s8.bf16 %v8038
    %v8206 = vunpack.c.h.s8.bf16 %v8038
    %v8207 = vunpack.c.l.s8.bf16 %v8039
    %v8208 = vunpack.c.h.s8.bf16 %v8039
    %v8209 = vunpack.c.l.s8.bf16 %v8040
    %v8210 = vunpack.c.h.s8.bf16 %v8040
    %v8211 = vunpack.c.l.s8.bf16 %v8041
    %v8212 = vunpack.c.h.s8.bf16 %v8041
    %v8213 = vunpack.c.l.s8.bf16 %v8042
    %v8214 = vunpack.c.h.s8.bf16 %v8042
    %v8215 = vunpack.c.l.s8.bf16 %v8043
    %v8216 = vunpack.c.h.s8.bf16 %v8043
    %v8217 = vunpack.c.l.s8.bf16 %v8044
    %v8218 = vunpack.c.h.s8.bf16 %v8044
    %v8219 = vunpack.c.l.s8.bf16 %v8045
    %v8220 = vunpack.c.h.s8.bf16 %v8045
    %v8221 = vunpack.c.l.s8.bf16 %v8046
    %v8222 = vunpack.c.h.s8.bf16 %v8046
    %v8223 = vunpack.c.l.s8.bf16 %v8047
    %v8224 = vunpack.c.h.s8.bf16 %v8047
    %v8225 = vunpack.c.l.s8.bf16 %v8048
    %v8226 = vunpack.c.h.s8.bf16 %v8048
    %v8227 = vunpack.c.l.s8.bf16 %v8049
    %v8228 = vunpack.c.h.s8.bf16 %v8049
    %v8229 = vunpack.c.l.s8.bf16 %v8050
    %v8230 = vunpack.c.h.s8.bf16 %v8050
    %v8231 = vunpack.c.l.s8.bf16 %v8051
    %v8232 = vunpack.c.h.s8.bf16 %v8051
    %v8233 = vunpack.c.l.s8.bf16 %v8052
    %v8234 = vunpack.c.h.s8.bf16 %v8052
    %v8235 = vunpack.c.l.s8.bf16 %v8053
    %v8236 = vunpack.c.h.s8.bf16 %v8053
    %v8237 = vunpack.c.l.s8.bf16 %v8054
    %v8238 = vunpack.c.h.s8.bf16 %v8054
    %v8239 = vunpack.c.l.s8.bf16 %v8055
    %v8240 = vunpack.c.h.s8.bf16 %v8055
    %v8241 = vunpack.c.l.s8.bf16 %v8056
    %v8242 = vunpack.c.h.s8.bf16 %v8056
    %v8243 = vunpack.c.l.s8.bf16 %v8057
    %v8244 = vunpack.c.h.s8.bf16 %v8057
    %v8245 = vunpack.c.l.s8.bf16 %v8058
    %v8246 = vunpack.c.h.s8.bf16 %v8058
    %v8247 = vunpack.c.l.s8.bf16 %v8059
    %v8248 = vunpack.c.h.s8.bf16 %v8059
    %v8249 = vunpack.c.l.s8.bf16 %v8060
    %v8250 = vunpack.c.h.s8.bf16 %v8060
    %v8251 = vunpack.c.l.s8.bf16 %v8061
    %v8252 = vunpack.c.h.s8.bf16 %v8061
    %v8253 = vunpack.c.l.s8.bf16 %v8062
    %v8254 = vunpack.c.h.s8.bf16 %v8062
    %v8255 = vunpack.c.l.s8.bf16 %v8063
    %v8256 = vunpack.c.h.s8.bf16 %v8063
    %v8257 = vunpack.c.l.s8.bf16 %v8064
    %v8258 = vunpack.c.h.s8.bf16 %v8064
    %v8259 = vunpack.c.l.s8.bf16 %v8065
    %v8260 = vunpack.c.h.s8.bf16 %v8065
    %v8261 = vunpack.c.l.s8.bf16 %v8066
    %v8262 = vunpack.c.h.s8.bf16 %v8066
    %v8263 = vunpack.c.l.s8.bf16 %v8067
    %v8264 = vunpack.c.h.s8.bf16 %v8067
    %v8265 = vunpack.c.l.s8.bf16 %v8068
    %v8266 = vunpack.c.h.s8.bf16 %v8068
    %v8267 = vunpack.c.l.s8.bf16 %v8069
    %v8268 = vunpack.c.h.s8.bf16 %v8069
    %v8269 = vunpack.c.l.s8.bf16 %v8070
    %v8270 = vunpack.c.h.s8.bf16 %v8070
    %v8271 = vunpack.c.l.s8.bf16 %v8071
    %v8272 = vunpack.c.h.s8.bf16 %v8071
    %v8273 = vunpack.c.l.s8.bf16 %v8072
    %v8274 = vunpack.c.h.s8.bf16 %v8072
    %v8275 = vunpack.c.l.s8.bf16 %v8073
    %v8276 = vunpack.c.h.s8.bf16 %v8073
    %v8277 = vunpack.c.l.s8.bf16 %v8074
    %v8278 = vunpack.c.h.s8.bf16 %v8074
    %v8279 = vunpack.c.l.s8.bf16 %v8075
    %v8280 = vunpack.c.h.s8.bf16 %v8075
    %v8281 = vunpack.c.l.s8.bf16 %v8076
    %v8282 = vunpack.c.h.s8.bf16 %v8076
    %v8283 = vunpack.c.l.s8.bf16 %v8077
    %v8284 = vunpack.c.h.s8.bf16 %v8077
    %v8285 = vunpack.c.l.s8.bf16 %v8078
    %v8286 = vunpack.c.h.s8.bf16 %v8078
    %v8287 = vunpack.c.l.s8.bf16 %v8079
    %v8288 = vunpack.c.h.s8.bf16 %v8079
    %v8289 = vunpack.c.l.s8.bf16 %v8080
    %v8290 = vunpack.c.h.s8.bf16 %v8080
    %v8291 = vunpack.c.l.s8.bf16 %v8081
    %v8292 = vunpack.c.h.s8.bf16 %v8081
    %v8293 = vunpack.c.l.s8.bf16 %v8082
    %v8294 = vunpack.c.h.s8.bf16 %v8082
    %v8295 = vunpack.c.l.s8.bf16 %v8083
    %v8296 = vunpack.c.h.s8.bf16 %v8083
    %v8297 = vunpack.c.l.s8.bf16 %v8084
    %v8298 = vunpack.c.h.s8.bf16 %v8084
    %v8299 = vunpack.c.l.s8.bf16 %v8085
    %v8300 = vunpack.c.h.s8.bf16 %v8085
    %v8301 = vunpack.c.l.s8.bf16 %v8086
    %v8302 = vunpack.c.h.s8.bf16 %v8086
    %v8303 = vunpack.c.l.s8.bf16 %v8087
    %v8304 = vunpack.c.h.s8.bf16 %v8087
    %v8305 = vunpack.c.l.s8.bf16 %v8088
    %v8306 = vunpack.c.h.s8.bf16 %v8088
    %v8307 = vunpack.c.l.s8.bf16 %v8089
    %v8308 = vunpack.c.h.s8.bf16 %v8089
    %v8309 = vunpack.c.l.s8.bf16 %v8090
    %v8310 = vunpack.c.h.s8.bf16 %v8090
    %v8311 = vunpack.c.l.s8.bf16 %v8091
    %v8312 = vunpack.c.h.s8.bf16 %v8091
    %v8313 = vunpack.c.l.s8.bf16 %v8092
    %v8314 = vunpack.c.h.s8.bf16 %v8092
    %v8315 = vunpack.c.l.s8.bf16 %v8093
    %v8316 = vunpack.c.h.s8.bf16 %v8093
    %v8317 = vunpack.c.l.s8.bf16 %v8094
    %v8318 = vunpack.c.h.s8.bf16 %v8094
    %v8319 = vunpack.c.l.s8.bf16 %v8095
    %v8320 = vunpack.c.h.s8.bf16 %v8095
    %v8321 = vunpack.c.l.s8.bf16 %v8096
    %v8322 = vunpack.c.h.s8.bf16 %v8096
    %v8323 = vunpack.c.l.s8.bf16 %v8097
    %v8324 = vunpack.c.h.s8.bf16 %v8097
    %v8325 = vunpack.c.l.s8.bf16 %v8098
    %v8326 = vunpack.c.h.s8.bf16 %v8098
    %v8327 = vunpack.c.l.s8.bf16 %v8099
    %v8328 = vunpack.c.h.s8.bf16 %v8099
    %v8329 = vunpack.c.l.s8.bf16 %v8100
    %v8330 = vunpack.c.h.s8.bf16 %v8100
    %v8331 = vunpack.c.l.s8.bf16 %v8101
    %v8332 = vunpack.c.h.s8.bf16 %v8101
    %v8333 = vunpack.c.l.s8.bf16 %v8102
    %v8334 = vunpack.c.h.s8.bf16 %v8102
    %v8335 = vunpack.c.l.s8.bf16 %v8103
    %v8336 = vunpack.c.h.s8.bf16 %v8103
    %v8337 = vunpack.c.l.s8.bf16 %v8104
    %v8338 = vunpack.c.h.s8.bf16 %v8104
    %v8339 = vunpack.c.l.s8.bf16 %v8105
    %v8340 = vunpack.c.h.s8.bf16 %v8105
    %v8341 = vunpack.c.l.s8.bf16 %v8106
    %v8342 = vunpack.c.h.s8.bf16 %v8106
    %v8343 = vunpack.c.l.s8.bf16 %v8107
    %v8344 = vunpack.c.h.s8.bf16 %v8107
    %v8345 = vunpack.c.l.s8.bf16 %v8108
    %v8346 = vunpack.c.h.s8.bf16 %v8108
    %v8347 = vunpack.c.l.s8.bf16 %v8109
    %v8348 = vunpack.c.h.s8.bf16 %v8109
    %v8349 = vunpack.c.l.s8.bf16 %v8110
    %v8350 = vunpack.c.h.s8.bf16 %v8110
    %v8351 = vunpack.c.l.s8.bf16 %v8111
    %v8352 = vunpack.c.h.s8.bf16 %v8111
    %v8353 = vunpack.c.l.s8.bf16 %v8112
    %v8354 = vunpack.c.h.s8.bf16 %v8112
    %v8355 = vunpack.c.l.s8.bf16 %v8113
    %v8356 = vunpack.c.h.s8.bf16 %v8113
    %v8357 = vunpack.c.l.s8.bf16 %v8114
    %v8358 = vunpack.c.h.s8.bf16 %v8114
    %v8359 = vunpack.c.l.s8.bf16 %v8115
    %v8360 = vunpack.c.h.s8.bf16 %v8115
    %v8361 = vunpack.c.l.s8.bf16 %v8116
    %v8362 = vunpack.c.h.s8.bf16 %v8116
    %v8363 = vunpack.c.l.s8.bf16 %v8117
    %v8364 = vunpack.c.h.s8.bf16 %v8117
    %v8365 = vunpack.c.l.s8.bf16 %v8118
    %v8366 = vunpack.c.h.s8.bf16 %v8118
    %v8367 = vunpack.c.l.s8.bf16 %v8119
    %v8368 = vunpack.c.h.s8.bf16 %v8119
    %v8369 = vunpack.c.l.s8.bf16 %v8120
    %v8370 = vunpack.c.h.s8.bf16 %v8120
    %v8371 = vunpack.c.l.s8.bf16 %v8121
    %v8372 = vunpack.c.h.s8.bf16 %v8121
    %v8373 = vunpack.c.l.s8.bf16 %v8122
    %v8374 = vunpack.c.h.s8.bf16 %v8122
    %v8627 = vunpack.c.l.b16 %v8123
    %v8628 = vunpack.c.h.b16 %v8123
    %v8629 = vunpack.c.l.b16 %v8124
    %v8630 = vunpack.c.h.b16 %v8124
    %v8631 = vunpack.c.l.b16 %v8125
    %v8632 = vunpack.c.h.b16 %v8125
    %v8633 = vunpack.c.l.b16 %v8126
    %v8634 = vunpack.c.h.b16 %v8126
    %v8635 = vunpack.c.l.b16 %v8127
    %v8636 = vunpack.c.h.b16 %v8127
    %v8637 = vunpack.c.l.b16 %v8128
    %v8638 = vunpack.c.h.b16 %v8128
    %v8639 = vunpack.c.l.b16 %v8129
    %v8640 = vunpack.c.h.b16 %v8129
    %v8641 = vunpack.c.l.b16 %v8130
    %v8642 = vunpack.c.h.b16 %v8130
    %v8643 = vunpack.c.l.b16 %v8131
    %v8644 = vunpack.c.h.b16 %v8131
    %v8645 = vunpack.c.l.b16 %v8132
    %v8646 = vunpack.c.h.b16 %v8132
    %v8647 = vunpack.c.l.b16 %v8133
    %v8648 = vunpack.c.h.b16 %v8133
    %v8649 = vunpack.c.l.b16 %v8134
    %v8650 = vunpack.c.h.b16 %v8134
    %v8651 = vunpack.c.l.b16 %v8135
    %v8652 = vunpack.c.h.b16 %v8135
    %v8653 = vunpack.c.l.b16 %v8136
    %v8654 = vunpack.c.h.b16 %v8136
    %v8655 = vunpack.c.l.b16 %v8137
    %v8656 = vunpack.c.h.b16 %v8137
    %v8657 = vunpack.c.l.b16 %v8138
    %v8658 = vunpack.c.h.b16 %v8138
    %v8659 = vunpack.c.l.b16 %v8139
    %v8660 = vunpack.c.h.b16 %v8139
    %v8661 = vunpack.c.l.b16 %v8140
    %v8662 = vunpack.c.h.b16 %v8140
    %v8663 = vunpack.c.l.b16 %v8141
    %v8664 = vunpack.c.h.b16 %v8141
    %v8665 = vunpack.c.l.b16 %v8142
    %v8666 = vunpack.c.h.b16 %v8142
    %v8667 = vunpack.c.l.b16 %v8143
    %v8668 = vunpack.c.h.b16 %v8143
    %v8669 = vunpack.c.l.b16 %v8144
    %v8670 = vunpack.c.h.b16 %v8144
    %v8671 = vunpack.c.l.b16 %v8145
    %v8672 = vunpack.c.h.b16 %v8145
    %v8673 = vunpack.c.l.b16 %v8146
    %v8674 = vunpack.c.h.b16 %v8146
    %v8675 = vunpack.c.l.b16 %v8147
    %v8676 = vunpack.c.h.b16 %v8147
    %v8677 = vunpack.c.l.b16 %v8148
    %v8678 = vunpack.c.h.b16 %v8148
    %v8679 = vunpack.c.l.b16 %v8149
    %v8680 = vunpack.c.h.b16 %v8149
    %v8681 = vunpack.c.l.b16 %v8150
    %v8682 = vunpack.c.h.b16 %v8150
    %v8683 = vunpack.c.l.b16 %v8151
    %v8684 = vunpack.c.h.b16 %v8151
    %v8685 = vunpack.c.l.b16 %v8152
    %v8686 = vunpack.c.h.b16 %v8152
    %v8687 = vunpack.c.l.b16 %v8153
    %v8688 = vunpack.c.h.b16 %v8153
    %v8689 = vunpack.c.l.b16 %v8154
    %v8690 = vunpack.c.h.b16 %v8154
    %v8691 = vunpack.c.l.b16 %v8155
    %v8692 = vunpack.c.h.b16 %v8155
    %v8693 = vunpack.c.l.b16 %v8156
    %v8694 = vunpack.c.h.b16 %v8156
    %v8695 = vunpack.c.l.b16 %v8157
    %v8696 = vunpack.c.h.b16 %v8157
    %v8697 = vunpack.c.l.b16 %v8158
    %v8698 = vunpack.c.h.b16 %v8158
    %v8699 = vunpack.c.l.b16 %v8159
    %v8700 = vunpack.c.h.b16 %v8159
    %v8701 = vunpack.c.l.b16 %v8160
    %v8702 = vunpack.c.h.b16 %v8160
    %v8703 = vunpack.c.l.b16 %v8161
    %v8704 = vunpack.c.h.b16 %v8161
    %v8705 = vunpack.c.l.b16 %v8162
    %v8706 = vunpack.c.h.b16 %v8162
    %v8707 = vunpack.c.l.b16 %v8163
    %v8708 = vunpack.c.h.b16 %v8163
    %v8709 = vunpack.c.l.b16 %v8164
    %v8710 = vunpack.c.h.b16 %v8164
    %v8711 = vunpack.c.l.b16 %v8165
    %v8712 = vunpack.c.h.b16 %v8165
    %v8713 = vunpack.c.l.b16 %v8166
    %v8714 = vunpack.c.h.b16 %v8166
    %v8715 = vunpack.c.l.b16 %v8167
    %v8716 = vunpack.c.h.b16 %v8167
    %v8717 = vunpack.c.l.b16 %v8168
    %v8718 = vunpack.c.h.b16 %v8168
    %v8719 = vunpack.c.l.b16 %v8169
    %v8720 = vunpack.c.h.b16 %v8169
    %v8721 = vunpack.c.l.b16 %v8170
    %v8722 = vunpack.c.h.b16 %v8170
    %v8723 = vunpack.c.l.b16 %v8171
    %v8724 = vunpack.c.h.b16 %v8171
    %v8725 = vunpack.c.l.b16 %v8172
    %v8726 = vunpack.c.h.b16 %v8172
    %v8727 = vunpack.c.l.b16 %v8173
    %v8728 = vunpack.c.h.b16 %v8173
    %v8729 = vunpack.c.l.b16 %v8174
    %v8730 = vunpack.c.h.b16 %v8174
    %v8731 = vunpack.c.l.b16 %v8175
    %v8732 = vunpack.c.h.b16 %v8175
    %v8733 = vunpack.c.l.b16 %v8176
    %v8734 = vunpack.c.h.b16 %v8176
    %v8735 = vunpack.c.l.b16 %v8177
    %v8736 = vunpack.c.h.b16 %v8177
    %v8737 = vunpack.c.l.b16 %v8178
    %v8738 = vunpack.c.h.b16 %v8178
    %v8739 = vunpack.c.l.b16 %v8179
    %v8740 = vunpack.c.h.b16 %v8179
    %v8741 = vunpack.c.l.b16 %v8180
    %v8742 = vunpack.c.h.b16 %v8180
    %v8743 = vunpack.c.l.b16 %v8181
    %v8744 = vunpack.c.h.b16 %v8181
    %v8745 = vunpack.c.l.b16 %v8182
    %v8746 = vunpack.c.h.b16 %v8182
    %v8747 = vunpack.c.l.b16 %v8183
    %v8748 = vunpack.c.h.b16 %v8183
    %v8749 = vunpack.c.l.b16 %v8184
    %v8750 = vunpack.c.h.b16 %v8184
    %v8751 = vunpack.c.l.b16 %v8185
    %v8752 = vunpack.c.h.b16 %v8185
    %v8753 = vunpack.c.l.b16 %v8186
    %v8754 = vunpack.c.h.b16 %v8186
    %v8755 = vunpack.c.l.b16 %v8187
    %v8756 = vunpack.c.h.b16 %v8187
    %v8757 = vunpack.c.l.b16 %v8188
    %v8758 = vunpack.c.h.b16 %v8188
    %v8759 = vunpack.c.l.b16 %v8189
    %v8760 = vunpack.c.h.b16 %v8189
    %v8761 = vunpack.c.l.b16 %v8190
    %v8762 = vunpack.c.h.b16 %v8190
    %v8763 = vunpack.c.l.b16 %v8191
    %v8764 = vunpack.c.h.b16 %v8191
    %v8765 = vunpack.c.l.b16 %v8192
    %v8766 = vunpack.c.h.b16 %v8192
    %v8767 = vunpack.c.l.b16 %v8193
    %v8768 = vunpack.c.h.b16 %v8193
    %v8769 = vunpack.c.l.b16 %v8194
    %v8770 = vunpack.c.h.b16 %v8194
    %v8771 = vunpack.c.l.b16 %v8195
    %v8772 = vunpack.c.h.b16 %v8195
    %v8773 = vunpack.c.l.b16 %v8196
    %v8774 = vunpack.c.h.b16 %v8196
    %v8775 = vunpack.c.l.b16 %v8197
    %v8776 = vunpack.c.h.b16 %v8197
    %v8777 = vunpack.c.l.b16 %v8198
    %v8778 = vunpack.c.h.b16 %v8198
    %v8779 = vunpack.c.l.b16 %v8199
    %v8780 = vunpack.c.h.b16 %v8199
    %v8781 = vunpack.c.l.b16 %v8200
    %v8782 = vunpack.c.h.b16 %v8200
    %v8783 = vunpack.c.l.b16 %v8201
    %v8784 = vunpack.c.h.b16 %v8201
    %v8785 = vunpack.c.l.b16 %v8202
    %v8786 = vunpack.c.h.b16 %v8202
    %v8787 = vunpack.c.l.b16 %v8203
    %v8788 = vunpack.c.h.b16 %v8203
    %v8789 = vunpack.c.l.b16 %v8204
    %v8790 = vunpack.c.h.b16 %v8204
    %v8791 = vunpack.c.l.b16 %v8205
    %v8792 = vunpack.c.h.b16 %v8205
    %v8793 = vunpack.c.l.b16 %v8206
    %v8794 = vunpack.c.h.b16 %v8206
    %v8795 = vunpack.c.l.b16 %v8207
    %v8796 = vunpack.c.h.b16 %v8207
    %v8797 = vunpack.c.l.b16 %v8208
    %v8798 = vunpack.c.h.b16 %v8208
    %v8799 = vunpack.c.l.b16 %v8209
    %v8800 = vunpack.c.h.b16 %v8209
    %v8801 = vunpack.c.l.b16 %v8210
    %v8802 = vunpack.c.h.b16 %v8210
    %v8803 = vunpack.c.l.b16 %v8211
    %v8804 = vunpack.c.h.b16 %v8211
    %v8805 = vunpack.c.l.b16 %v8212
    %v8806 = vunpack.c.h.b16 %v8212
    %v8807 = vunpack.c.l.b16 %v8213
    %v8808 = vunpack.c.h.b16 %v8213
    %v8809 = vunpack.c.l.b16 %v8214
    %v8810 = vunpack.c.h.b16 %v8214
    %v8811 = vunpack.c.l.b16 %v8215
    %v8812 = vunpack.c.h.b16 %v8215
    %v8813 = vunpack.c.l.b16 %v8216
    %v8814 = vunpack.c.h.b16 %v8216
    %v8815 = vunpack.c.l.b16 %v8217
    %v8816 = vunpack.c.h.b16 %v8217
    %v8817 = vunpack.c.l.b16 %v8218
    %v8818 = vunpack.c.h.b16 %v8218
    %v8819 = vunpack.c.l.b16 %v8219
    %v8820 = vunpack.c.h.b16 %v8219
    %v8821 = vunpack.c.l.b16 %v8220
    %v8822 = vunpack.c.h.b16 %v8220
    %v8823 = vunpack.c.l.b16 %v8221
    %v8824 = vunpack.c.h.b16 %v8221
    %v8825 = vunpack.c.l.b16 %v8222
    %v8826 = vunpack.c.h.b16 %v8222
    %v8827 = vunpack.c.l.b16 %v8223
    %v8828 = vunpack.c.h.b16 %v8223
    %v8829 = vunpack.c.l.b16 %v8224
    %v8830 = vunpack.c.h.b16 %v8224
    %v8831 = vunpack.c.l.b16 %v8225
    %v8832 = vunpack.c.h.b16 %v8225
    %v8833 = vunpack.c.l.b16 %v8226
    %v8834 = vunpack.c.h.b16 %v8226
    %v8835 = vunpack.c.l.b16 %v8227
    %v8836 = vunpack.c.h.b16 %v8227
    %v8837 = vunpack.c.l.b16 %v8228
    %v8838 = vunpack.c.h.b16 %v8228
    %v8839 = vunpack.c.l.b16 %v8229
    %v8840 = vunpack.c.h.b16 %v8229
    %v8841 = vunpack.c.l.b16 %v8230
    %v8842 = vunpack.c.h.b16 %v8230
    %v8843 = vunpack.c.l.b16 %v8231
    %v8844 = vunpack.c.h.b16 %v8231
    %v8845 = vunpack.c.l.b16 %v8232
    %v8846 = vunpack.c.h.b16 %v8232
    %v8847 = vunpack.c.l.b16 %v8233
    %v8848 = vunpack.c.h.b16 %v8233
    %v8849 = vunpack.c.l.b16 %v8234
    %v8850 = vunpack.c.h.b16 %v8234
    %v8851 = vunpack.c.l.b16 %v8235
    %v8852 = vunpack.c.h.b16 %v8235
    %v8853 = vunpack.c.l.b16 %v8236
    %v8854 = vunpack.c.h.b16 %v8236
    %v8855 = vunpack.c.l.b16 %v8237
    %v8856 = vunpack.c.h.b16 %v8237
    %v8857 = vunpack.c.l.b16 %v8238
    %v8858 = vunpack.c.h.b16 %v8238
    %v8859 = vunpack.c.l.b16 %v8239
    %v8860 = vunpack.c.h.b16 %v8239
    %v8861 = vunpack.c.l.b16 %v8240
    %v8862 = vunpack.c.h.b16 %v8240
    %v8863 = vunpack.c.l.b16 %v8241
    %v8864 = vunpack.c.h.b16 %v8241
    %v8865 = vunpack.c.l.b16 %v8242
    %v8866 = vunpack.c.h.b16 %v8242
    %v8867 = vunpack.c.l.b16 %v8243
    %v8868 = vunpack.c.h.b16 %v8243
    %v8869 = vunpack.c.l.b16 %v8244
    %v8870 = vunpack.c.h.b16 %v8244
    %v8871 = vunpack.c.l.b16 %v8245
    %v8872 = vunpack.c.h.b16 %v8245
    %v8873 = vunpack.c.l.b16 %v8246
    %v8874 = vunpack.c.h.b16 %v8246
    %v8875 = vunpack.c.l.b16 %v8247
    %v8876 = vunpack.c.h.b16 %v8247
    %v8877 = vunpack.c.l.b16 %v8248
    %v8878 = vunpack.c.h.b16 %v8248
    %v8879 = vunpack.c.l.b16 %v8249
    %v8880 = vunpack.c.h.b16 %v8249
    %v8881 = vunpack.c.l.b16 %v8250
    %v8882 = vunpack.c.h.b16 %v8250
    %v8883 = vunpack.c.l.b16 %v8251
    %v8884 = vunpack.c.h.b16 %v8251
    %v8885 = vunpack.c.l.b16 %v8252
    %v8886 = vunpack.c.h.b16 %v8252
    %v8887 = vunpack.c.l.b16 %v8253
    %v8888 = vunpack.c.h.b16 %v8253
    %v8889 = vunpack.c.l.b16 %v8254
    %v8890 = vunpack.c.h.b16 %v8254
    %v8891 = vunpack.c.l.b16 %v8255
    %v8892 = vunpack.c.h.b16 %v8255
    %v8893 = vunpack.c.l.b16 %v8256
    %v8894 = vunpack.c.h.b16 %v8256
    %v8895 = vunpack.c.l.b16 %v8257
    %v8896 = vunpack.c.h.b16 %v8257
    %v8897 = vunpack.c.l.b16 %v8258
    %v8898 = vunpack.c.h.b16 %v8258
    %v8899 = vunpack.c.l.b16 %v8259
    %v8900 = vunpack.c.h.b16 %v8259
    %v8901 = vunpack.c.l.b16 %v8260
    %v8902 = vunpack.c.h.b16 %v8260
    %v8903 = vunpack.c.l.b16 %v8261
    %v8904 = vunpack.c.h.b16 %v8261
    %v8905 = vunpack.c.l.b16 %v8262
    %v8906 = vunpack.c.h.b16 %v8262
    %v8907 = vunpack.c.l.b16 %v8263
    %v8908 = vunpack.c.h.b16 %v8263
    %v8909 = vunpack.c.l.b16 %v8264
    %v8910 = vunpack.c.h.b16 %v8264
    %v8911 = vunpack.c.l.b16 %v8265
    %v8912 = vunpack.c.h.b16 %v8265
    %v8913 = vunpack.c.l.b16 %v8266
    %v8914 = vunpack.c.h.b16 %v8266
    %v8915 = vunpack.c.l.b16 %v8267
    %v8916 = vunpack.c.h.b16 %v8267
    %v8917 = vunpack.c.l.b16 %v8268
    %v8918 = vunpack.c.h.b16 %v8268
    %v8919 = vunpack.c.l.b16 %v8269
    %v8920 = vunpack.c.h.b16 %v8269
    %v8921 = vunpack.c.l.b16 %v8270
    %v8922 = vunpack.c.h.b16 %v8270
    %v8923 = vunpack.c.l.b16 %v8271
    %v8924 = vunpack.c.h.b16 %v8271
    %v8925 = vunpack.c.l.b16 %v8272
    %v8926 = vunpack.c.h.b16 %v8272
    %v8927 = vunpack.c.l.b16 %v8273
    %v8928 = vunpack.c.h.b16 %v8273
    %v8929 = vunpack.c.l.b16 %v8274
    %v8930 = vunpack.c.h.b16 %v8274
    %v8931 = vunpack.c.l.b16 %v8275
    %v8932 = vunpack.c.h.b16 %v8275
    %v8933 = vunpack.c.l.b16 %v8276
    %v8934 = vunpack.c.h.b16 %v8276
    %v8935 = vunpack.c.l.b16 %v8277
    %v8936 = vunpack.c.h.b16 %v8277
    %v8937 = vunpack.c.l.b16 %v8278
    %v8938 = vunpack.c.h.b16 %v8278
    %v8939 = vunpack.c.l.b16 %v8279
    %v8940 = vunpack.c.h.b16 %v8279
    %v8941 = vunpack.c.l.b16 %v8280
    %v8942 = vunpack.c.h.b16 %v8280
    %v8943 = vunpack.c.l.b16 %v8281
    %v8944 = vunpack.c.h.b16 %v8281
    %v8945 = vunpack.c.l.b16 %v8282
    %v8946 = vunpack.c.h.b16 %v8282
    %v8947 = vunpack.c.l.b16 %v8283
    %v8948 = vunpack.c.h.b16 %v8283
    %v8949 = vunpack.c.l.b16 %v8284
    %v8950 = vunpack.c.h.b16 %v8284
    %v8951 = vunpack.c.l.b16 %v8285
    %v8952 = vunpack.c.h.b16 %v8285
    %v8953 = vunpack.c.l.b16 %v8286
    %v8954 = vunpack.c.h.b16 %v8286
    %v8955 = vunpack.c.l.b16 %v8287
    %v8956 = vunpack.c.h.b16 %v8287
    %v8957 = vunpack.c.l.b16 %v8288
    %v8958 = vunpack.c.h.b16 %v8288
    %v8959 = vunpack.c.l.b16 %v8289
    %v8960 = vunpack.c.h.b16 %v8289
    %v8961 = vunpack.c.l.b16 %v8290
    %v8962 = vunpack.c.h.b16 %v8290
    %v8963 = vunpack.c.l.b16 %v8291
    %v8964 = vunpack.c.h.b16 %v8291
    %v8965 = vunpack.c.l.b16 %v8292
    %v8966 = vunpack.c.h.b16 %v8292
    %v8967 = vunpack.c.l.b16 %v8293
    %v8968 = vunpack.c.h.b16 %v8293
    %v8969 = vunpack.c.l.b16 %v8294
    %v8970 = vunpack.c.h.b16 %v8294
    %v8971 = vunpack.c.l.b16 %v8295
    %v8972 = vunpack.c.h.b16 %v8295
    %v8973 = vunpack.c.l.b16 %v8296
    %v8974 = vunpack.c.h.b16 %v8296
    %v8975 = vunpack.c.l.b16 %v8297
    %v8976 = vunpack.c.h.b16 %v8297
    %v8977 = vunpack.c.l.b16 %v8298
    %v8978 = vunpack.c.h.b16 %v8298
    %v8979 = vunpack.c.l.b16 %v8299
    %v8980 = vunpack.c.h.b16 %v8299
    %v8981 = vunpack.c.l.b16 %v8300
    %v8982 = vunpack.c.h.b16 %v8300
    %v8983 = vunpack.c.l.b16 %v8301
    %v8984 = vunpack.c.h.b16 %v8301
    %v8985 = vunpack.c.l.b16 %v8302
    %v8986 = vunpack.c.h.b16 %v8302
    %v8987 = vunpack.c.l.b16 %v8303
    %v8988 = vunpack.c.h.b16 %v8303
    %v8989 = vunpack.c.l.b16 %v8304
    %v8990 = vunpack.c.h.b16 %v8304
    %v8991 = vunpack.c.l.b16 %v8305
    %v8992 = vunpack.c.h.b16 %v8305
    %v8993 = vunpack.c.l.b16 %v8306
    %v8994 = vunpack.c.h.b16 %v8306
    %v8995 = vunpack.c.l.b16 %v8307
    %v8996 = vunpack.c.h.b16 %v8307
    %v8997 = vunpack.c.l.b16 %v8308
    %v8998 = vunpack.c.h.b16 %v8308
    %v8999 = vunpack.c.l.b16 %v8309
    %v9000 = vunpack.c.h.b16 %v8309
    %v9001 = vunpack.c.l.b16 %v8310
    %v9002 = vunpack.c.h.b16 %v8310
    %v9003 = vunpack.c.l.b16 %v8311
    %v9004 = vunpack.c.h.b16 %v8311
    %v9005 = vunpack.c.l.b16 %v8312
    %v9006 = vunpack.c.h.b16 %v8312
    %v9007 = vunpack.c.l.b16 %v8313
    %v9008 = vunpack.c.h.b16 %v8313
    %v9009 = vunpack.c.l.b16 %v8314
    %v9010 = vunpack.c.h.b16 %v8314
    %v9011 = vunpack.c.l.b16 %v8315
    %v9012 = vunpack.c.h.b16 %v8315
    %v9013 = vunpack.c.l.b16 %v8316
    %v9014 = vunpack.c.h.b16 %v8316
    %v9015 = vunpack.c.l.b16 %v8317
    %v9016 = vunpack.c.h.b16 %v8317
    %v9017 = vunpack.c.l.b16 %v8318
    %v9018 = vunpack.c.h.b16 %v8318
    %v9019 = vunpack.c.l.b16 %v8319
    %v9020 = vunpack.c.h.b16 %v8319
    %v9021 = vunpack.c.l.b16 %v8320
    %v9022 = vunpack.c.h.b16 %v8320
    %v9023 = vunpack.c.l.b16 %v8321
    %v9024 = vunpack.c.h.b16 %v8321
    %v9025 = vunpack.c.l.b16 %v8322
    %v9026 = vunpack.c.h.b16 %v8322
    %v9027 = vunpack.c.l.b16 %v8323
    %v9028 = vunpack.c.h.b16 %v8323
    %v9029 = vunpack.c.l.b16 %v8324
    %v9030 = vunpack.c.h.b16 %v8324
    %v9031 = vunpack.c.l.b16 %v8325
    %v9032 = vunpack.c.h.b16 %v8325
    %v9033 = vunpack.c.l.b16 %v8326
    %v9034 = vunpack.c.h.b16 %v8326
    %v9035 = vunpack.c.l.b16 %v8327
    %v9036 = vunpack.c.h.b16 %v8327
    %v9037 = vunpack.c.l.b16 %v8328
    %v9038 = vunpack.c.h.b16 %v8328
    %v9039 = vunpack.c.l.b16 %v8329
    %v9040 = vunpack.c.h.b16 %v8329
    %v9041 = vunpack.c.l.b16 %v8330
    %v9042 = vunpack.c.h.b16 %v8330
    %v9043 = vunpack.c.l.b16 %v8331
    %v9044 = vunpack.c.h.b16 %v8331
    %v9045 = vunpack.c.l.b16 %v8332
    %v9046 = vunpack.c.h.b16 %v8332
    %v9047 = vunpack.c.l.b16 %v8333
    %v9048 = vunpack.c.h.b16 %v8333
    %v9049 = vunpack.c.l.b16 %v8334
    %v9050 = vunpack.c.h.b16 %v8334
    %v9051 = vunpack.c.l.b16 %v8335
    %v9052 = vunpack.c.h.b16 %v8335
    %v9053 = vunpack.c.l.b16 %v8336
    %v9054 = vunpack.c.h.b16 %v8336
    %v9055 = vunpack.c.l.b16 %v8337
    %v9056 = vunpack.c.h.b16 %v8337
    %v9057 = vunpack.c.l.b16 %v8338
    %v9058 = vunpack.c.h.b16 %v8338
    %v9059 = vunpack.c.l.b16 %v8339
    %v9060 = vunpack.c.h.b16 %v8339
    %v9061 = vunpack.c.l.b16 %v8340
    %v9062 = vunpack.c.h.b16 %v8340
    %v9063 = vunpack.c.l.b16 %v8341
    %v9064 = vunpack.c.h.b16 %v8341
    %v9065 = vunpack.c.l.b16 %v8342
    %v9066 = vunpack.c.h.b16 %v8342
    %v9067 = vunpack.c.l.b16 %v8343
    %v9068 = vunpack.c.h.b16 %v8343
    %v9069 = vunpack.c.l.b16 %v8344
    %v9070 = vunpack.c.h.b16 %v8344
    %v9071 = vunpack.c.l.b16 %v8345
    %v9072 = vunpack.c.h.b16 %v8345
    %v9073 = vunpack.c.l.b16 %v8346
    %v9074 = vunpack.c.h.b16 %v8346
    %v9075 = vunpack.c.l.b16 %v8347
    %v9076 = vunpack.c.h.b16 %v8347
    %v9077 = vunpack.c.l.b16 %v8348
    %v9078 = vunpack.c.h.b16 %v8348
    %v9079 = vunpack.c.l.b16 %v8349
    %v9080 = vunpack.c.h.b16 %v8349
    %v9081 = vunpack.c.l.b16 %v8350
    %v9082 = vunpack.c.h.b16 %v8350
    %v9083 = vunpack.c.l.b16 %v8351
    %v9084 = vunpack.c.h.b16 %v8351
    %v9085 = vunpack.c.l.b16 %v8352
    %v9086 = vunpack.c.h.b16 %v8352
    %v9087 = vunpack.c.l.b16 %v8353
    %v9088 = vunpack.c.h.b16 %v8353
    %v9089 = vunpack.c.l.b16 %v8354
    %v9090 = vunpack.c.h.b16 %v8354
    %v9091 = vunpack.c.l.b16 %v8355
    %v9092 = vunpack.c.h.b16 %v8355
    %v9093 = vunpack.c.l.b16 %v8356
    %v9094 = vunpack.c.h.b16 %v8356
    %v9095 = vunpack.c.l.b16 %v8357
    %v9096 = vunpack.c.h.b16 %v8357
    %v9097 = vunpack.c.l.b16 %v8358
    %v9098 = vunpack.c.h.b16 %v8358
    %v9099 = vunpack.c.l.b16 %v8359
    %v9100 = vunpack.c.h.b16 %v8359
    %v9101 = vunpack.c.l.b16 %v8360
    %v9102 = vunpack.c.h.b16 %v8360
    %v9103 = vunpack.c.l.b16 %v8361
    %v9104 = vunpack.c.h.b16 %v8361
    %v9105 = vunpack.c.l.b16 %v8362
    %v9106 = vunpack.c.h.b16 %v8362
    %v9107 = vunpack.c.l.b16 %v8363
    %v9108 = vunpack.c.h.b16 %v8363
    %v9109 = vunpack.c.l.b16 %v8364
    %v9110 = vunpack.c.h.b16 %v8364
    %v9111 = vunpack.c.l.b16 %v8365
    %v9112 = vunpack.c.h.b16 %v8365
    %v9113 = vunpack.c.l.b16 %v8366
    %v9114 = vunpack.c.h.b16 %v8366
    %v9115 = vunpack.c.l.b16 %v8367
    %v9116 = vunpack.c.h.b16 %v8367
    %v9117 = vunpack.c.l.b16 %v8368
    %v9118 = vunpack.c.h.b16 %v8368
    %v9119 = vunpack.c.l.b16 %v8369
    %v9120 = vunpack.c.h.b16 %v8369
    %v9121 = vunpack.c.l.b16 %v8370
    %v9122 = vunpack.c.h.b16 %v8370
    %v9123 = vunpack.c.l.b16 %v8371
    %v9124 = vunpack.c.h.b16 %v8371
    %v9125 = vunpack.c.l.b16 %v8372
    %v9126 = vunpack.c.h.b16 %v8372
    %v9127 = vunpack.c.l.b16 %v8373
    %v9128 = vunpack.c.h.b16 %v8373
    %v9129 = vunpack.c.l.b16 %v8374
    %v9130 = vunpack.c.h.b16 %v8374
    %v9131 = vpack.c.b16 %v8635, %v8627
    %v9132 = vpack.c.b16 %v8636, %v8628
    %v9133 = vpack.c.b16 %v8637, %v8629
    %v9134 = vpack.c.b16 %v8638, %v8630
    %v9135 = vpack.c.b16 %v8639, %v8631
    %v9136 = vpack.c.b16 %v8640, %v8632
    %v9137 = vpack.c.b16 %v8641, %v8633
    %v9138 = vpack.c.b16 %v8642, %v8634
    %v9139 = vpack.c.b16 %v8651, %v8643
    %v9140 = vpack.c.b16 %v8652, %v8644
    %v9141 = vpack.c.b16 %v8653, %v8645
    %v9142 = vpack.c.b16 %v8654, %v8646
    %v9143 = vpack.c.b16 %v8655, %v8647
    %v9144 = vpack.c.b16 %v8656, %v8648
    %v9145 = vpack.c.b16 %v8657, %v8649
    %v9146 = vpack.c.b16 %v8658, %v8650
    %v9147 = vpack.c.b16 %v8667, %v8659
    %v9148 = vpack.c.b16 %v8668, %v8660
    %v9149 = vpack.c.b16 %v8669, %v8661
    %v9150 = vpack.c.b16 %v8670, %v8662
    %v9151 = vpack.c.b16 %v8671, %v8663
    %v9152 = vpack.c.b16 %v8672, %v8664
    %v9153 = vpack.c.b16 %v8673, %v8665
    %v9154 = vpack.c.b16 %v8674, %v8666
    %v9155 = vpack.c.b16 %v8683, %v8675
    %v9156 = vpack.c.b16 %v8684, %v8676
    %v9157 = vpack.c.b16 %v8685, %v8677
    %v9158 = vpack.c.b16 %v8686, %v8678
    %v9159 = vpack.c.b16 %v8687, %v8679
    %v9160 = vpack.c.b16 %v8688, %v8680
    %v9161 = vpack.c.b16 %v8689, %v8681
    %v9162 = vpack.c.b16 %v8690, %v8682
    %v9163 = vpack.c.b16 %v8699, %v8691
    %v9164 = vpack.c.b16 %v8700, %v8692
    %v9165 = vpack.c.b16 %v8701, %v8693
    %v9166 = vpack.c.b16 %v8702, %v8694
    %v9167 = vpack.c.b16 %v8703, %v8695
    %v9168 = vpack.c.b16 %v8704, %v8696
    %v9169 = vpack.c.b16 %v8705, %v8697
    %v9170 = vpack.c.b16 %v8706, %v8698
    %v9171 = vpack.c.b16 %v8715, %v8707
    %v9172 = vpack.c.b16 %v8716, %v8708
    %v9173 = vpack.c.b16 %v8717, %v8709
    %v9174 = vpack.c.b16 %v8718, %v8710
    %v9175 = vpack.c.b16 %v8719, %v8711
    %v9176 = vpack.c.b16 %v8720, %v8712
    %v9177 = vpack.c.b16 %v8721, %v8713
    %v9178 = vpack.c.b16 %v8722, %v8714
    %v9179 = vpack.c.b16 %v8731, %v8723
    %v9180 = vpack.c.b16 %v8732, %v8724
    %v9181 = vpack.c.b16 %v8733, %v8725
    %v9182 = vpack.c.b16 %v8734, %v8726
    %v9183 = vpack.c.b16 %v8735, %v8727
    %v9184 = vpack.c.b16 %v8736, %v8728
    %v9185 = vpack.c.b16 %v8737, %v8729
    %v9186 = vpack.c.b16 %v8738, %v8730
    %v9187 = vpack.c.b16 %v8747, %v8739
    %v9188 = vpack.c.b16 %v8748, %v8740
    %v9189 = vpack.c.b16 %v8749, %v8741
    %v9190 = vpack.c.b16 %v8750, %v8742
    %v9191 = vpack.c.b16 %v8751, %v8743
    %v9192 = vpack.c.b16 %v8752, %v8744
    %v9193 = vpack.c.b16 %v8753, %v8745
    %v9194 = vpack.c.b16 %v8754, %v8746
    %v9195 = vpack.c.b16 %v8763, %v8755
    %v9196 = vpack.c.b16 %v8764, %v8756
    %v9197 = vpack.c.b16 %v8765, %v8757
    %v9198 = vpack.c.b16 %v8766, %v8758
    %v9199 = vpack.c.b16 %v8767, %v8759
    %v9200 = vpack.c.b16 %v8768, %v8760
    %v9201 = vpack.c.b16 %v8769, %v8761
    %v9202 = vpack.c.b16 %v8770, %v8762
    %v9203 = vpack.c.b16 %v8779, %v8771
    %v9204 = vpack.c.b16 %v8780, %v8772
    %v9205 = vpack.c.b16 %v8781, %v8773
    %v9206 = vpack.c.b16 %v8782, %v8774
    %v9207 = vpack.c.b16 %v8783, %v8775
    %v9208 = vpack.c.b16 %v8784, %v8776
    %v9209 = vpack.c.b16 %v8785, %v8777
    %v9210 = vpack.c.b16 %v8786, %v8778
    %v9211 = vpack.c.b16 %v8795, %v8787
    %v9212 = vpack.c.b16 %v8796, %v8788
    %v9213 = vpack.c.b16 %v8797, %v8789
    %v9214 = vpack.c.b16 %v8798, %v8790
    %v9215 = vpack.c.b16 %v8799, %v8791
    %v9216 = vpack.c.b16 %v8800, %v8792
    %v9217 = vpack.c.b16 %v8801, %v8793
    %v9218 = vpack.c.b16 %v8802, %v8794
    %v9219 = vpack.c.b16 %v8811, %v8803
    %v9220 = vpack.c.b16 %v8812, %v8804
    %v9221 = vpack.c.b16 %v8813, %v8805
    %v9222 = vpack.c.b16 %v8814, %v8806
    %v9223 = vpack.c.b16 %v8815, %v8807
    %v9224 = vpack.c.b16 %v8816, %v8808
    %v9225 = vpack.c.b16 %v8817, %v8809
    %v9226 = vpack.c.b16 %v8818, %v8810
    %v9227 = vpack.c.b16 %v8827, %v8819
    %v9228 = vpack.c.b16 %v8828, %v8820
    %v9229 = vpack.c.b16 %v8829, %v8821
    %v9230 = vpack.c.b16 %v8830, %v8822
    %v9231 = vpack.c.b16 %v8831, %v8823
    %v9232 = vpack.c.b16 %v8832, %v8824
    %v9233 = vpack.c.b16 %v8833, %v8825
    %v9234 = vpack.c.b16 %v8834, %v8826
    %v9235 = vpack.c.b16 %v8843, %v8835
    %v9236 = vpack.c.b16 %v8844, %v8836
    %v9237 = vpack.c.b16 %v8845, %v8837
    %v9238 = vpack.c.b16 %v8846, %v8838
    %v9239 = vpack.c.b16 %v8847, %v8839
    %v9240 = vpack.c.b16 %v8848, %v8840
    %v9241 = vpack.c.b16 %v8849, %v8841
    %v9242 = vpack.c.b16 %v8850, %v8842
    %v9243 = vpack.c.b16 %v8859, %v8851
    %v9244 = vpack.c.b16 %v8860, %v8852
    %v9245 = vpack.c.b16 %v8861, %v8853
    %v9246 = vpack.c.b16 %v8862, %v8854
    %v9247 = vpack.c.b16 %v8863, %v8855
    %v9248 = vpack.c.b16 %v8864, %v8856
    %v9249 = vpack.c.b16 %v8865, %v8857
    %v9250 = vpack.c.b16 %v8866, %v8858
    %v9251 = vpack.c.b16 %v8875, %v8867
    %v9252 = vpack.c.b16 %v8876, %v8868
    %v9253 = vpack.c.b16 %v8877, %v8869
    %v9254 = vpack.c.b16 %v8878, %v8870
    %v9255 = vpack.c.b16 %v8879, %v8871
    %v9256 = vpack.c.b16 %v8880, %v8872
    %v9257 = vpack.c.b16 %v8881, %v8873
    %v9258 = vpack.c.b16 %v8882, %v8874
    %v9259 = vpack.c.b16 %v8891, %v8883
    %v9260 = vpack.c.b16 %v8892, %v8884
    %v9261 = vpack.c.b16 %v8893, %v8885
    %v9262 = vpack.c.b16 %v8894, %v8886
    %v9263 = vpack.c.b16 %v8895, %v8887
    %v9264 = vpack.c.b16 %v8896, %v8888
    %v9265 = vpack.c.b16 %v8897, %v8889
    %v9266 = vpack.c.b16 %v8898, %v8890
    %v9267 = vpack.c.b16 %v8907, %v8899
    %v9268 = vpack.c.b16 %v8908, %v8900
    %v9269 = vpack.c.b16 %v8909, %v8901
    %v9270 = vpack.c.b16 %v8910, %v8902
    %v9271 = vpack.c.b16 %v8911, %v8903
    %v9272 = vpack.c.b16 %v8912, %v8904
    %v9273 = vpack.c.b16 %v8913, %v8905
    %v9274 = vpack.c.b16 %v8914, %v8906
    %v9275 = vpack.c.b16 %v8923, %v8915
    %v9276 = vpack.c.b16 %v8924, %v8916
    %v9277 = vpack.c.b16 %v8925, %v8917
    %v9278 = vpack.c.b16 %v8926, %v8918
    %v9279 = vpack.c.b16 %v8927, %v8919
    %v9280 = vpack.c.b16 %v8928, %v8920
    %v9281 = vpack.c.b16 %v8929, %v8921
    %v9282 = vpack.c.b16 %v8930, %v8922
    %v9283 = vpack.c.b16 %v8939, %v8931
    %v9284 = vpack.c.b16 %v8940, %v8932
    %v9285 = vpack.c.b16 %v8941, %v8933
    %v9286 = vpack.c.b16 %v8942, %v8934
    %v9287 = vpack.c.b16 %v8943, %v8935
    %v9288 = vpack.c.b16 %v8944, %v8936
    %v9289 = vpack.c.b16 %v8945, %v8937
    %v9290 = vpack.c.b16 %v8946, %v8938
    %v9291 = vpack.c.b16 %v8955, %v8947
    %v9292 = vpack.c.b16 %v8956, %v8948
    %v9293 = vpack.c.b16 %v8957, %v8949
    %v9294 = vpack.c.b16 %v8958, %v8950
    %v9295 = vpack.c.b16 %v8959, %v8951
    %v9296 = vpack.c.b16 %v8960, %v8952
    %v9297 = vpack.c.b16 %v8961, %v8953
    %v9298 = vpack.c.b16 %v8962, %v8954
    %v9299 = vpack.c.b16 %v8971, %v8963
    %v9300 = vpack.c.b16 %v8972, %v8964
    %v9301 = vpack.c.b16 %v8973, %v8965
    %v9302 = vpack.c.b16 %v8974, %v8966
    %v9303 = vpack.c.b16 %v8975, %v8967
    %v9304 = vpack.c.b16 %v8976, %v8968
    %v9305 = vpack.c.b16 %v8977, %v8969
    %v9306 = vpack.c.b16 %v8978, %v8970
    %v9307 = vpack.c.b16 %v8987, %v8979
    %v9308 = vpack.c.b16 %v8988, %v8980
    %v9309 = vpack.c.b16 %v8989, %v8981
    %v9310 = vpack.c.b16 %v8990, %v8982
    %v9311 = vpack.c.b16 %v8991, %v8983
    %v9312 = vpack.c.b16 %v8992, %v8984
    %v9313 = vpack.c.b16 %v8993, %v8985
    %v9314 = vpack.c.b16 %v8994, %v8986
    %v9315 = vpack.c.b16 %v9003, %v8995
    %v9316 = vpack.c.b16 %v9004, %v8996
    %v9317 = vpack.c.b16 %v9005, %v8997
    %v9318 = vpack.c.b16 %v9006, %v8998
    %v9319 = vpack.c.b16 %v9007, %v8999
    %v9320 = vpack.c.b16 %v9008, %v9000
    %v9321 = vpack.c.b16 %v9009, %v9001
    %v9322 = vpack.c.b16 %v9010, %v9002
    %v9323 = vpack.c.b16 %v9019, %v9011
    %v9324 = vpack.c.b16 %v9020, %v9012
    %v9325 = vpack.c.b16 %v9021, %v9013
    %v9326 = vpack.c.b16 %v9022, %v9014
    %v9327 = vpack.c.b16 %v9023, %v9015
    %v9328 = vpack.c.b16 %v9024, %v9016
    %v9329 = vpack.c.b16 %v9025, %v9017
    %v9330 = vpack.c.b16 %v9026, %v9018
    %v9331 = vpack.c.b16 %v9035, %v9027
    %v9332 = vpack.c.b16 %v9036, %v9028
    %v9333 = vpack.c.b16 %v9037, %v9029
    %v9334 = vpack.c.b16 %v9038, %v9030
    %v9335 = vpack.c.b16 %v9039, %v9031
    %v9336 = vpack.c.b16 %v9040, %v9032
    %v9337 = vpack.c.b16 %v9041, %v9033
    %v9338 = vpack.c.b16 %v9042, %v9034
    %v9339 = vpack.c.b16 %v9051, %v9043
    %v9340 = vpack.c.b16 %v9052, %v9044
    %v9341 = vpack.c.b16 %v9053, %v9045
    %v9342 = vpack.c.b16 %v9054, %v9046
    %v9343 = vpack.c.b16 %v9055, %v9047
    %v9344 = vpack.c.b16 %v9056, %v9048
    %v9345 = vpack.c.b16 %v9057, %v9049
    %v9346 = vpack.c.b16 %v9058, %v9050
    %v9347 = vpack.c.b16 %v9067, %v9059
    %v9348 = vpack.c.b16 %v9068, %v9060
    %v9349 = vpack.c.b16 %v9069, %v9061
    %v9350 = vpack.c.b16 %v9070, %v9062
    %v9351 = vpack.c.b16 %v9071, %v9063
    %v9352 = vpack.c.b16 %v9072, %v9064
    %v9353 = vpack.c.b16 %v9073, %v9065
    %v9354 = vpack.c.b16 %v9074, %v9066
    %v9355 = vpack.c.b16 %v9083, %v9075
    %v9356 = vpack.c.b16 %v9084, %v9076
    %v9357 = vpack.c.b16 %v9085, %v9077
    %v9358 = vpack.c.b16 %v9086, %v9078
    %v9359 = vpack.c.b16 %v9087, %v9079
    %v9360 = vpack.c.b16 %v9088, %v9080
    %v9361 = vpack.c.b16 %v9089, %v9081
    %v9362 = vpack.c.b16 %v9090, %v9082
    %v9363 = vpack.c.b16 %v9099, %v9091
    %v9364 = vpack.c.b16 %v9100, %v9092
    %v9365 = vpack.c.b16 %v9101, %v9093
    %v9366 = vpack.c.b16 %v9102, %v9094
    %v9367 = vpack.c.b16 %v9103, %v9095
    %v9368 = vpack.c.b16 %v9104, %v9096
    %v9369 = vpack.c.b16 %v9105, %v9097
    %v9370 = vpack.c.b16 %v9106, %v9098
    %v9371 = vpack.c.b16 %v9115, %v9107
    %v9372 = vpack.c.b16 %v9116, %v9108
    %v9373 = vpack.c.b16 %v9117, %v9109
    %v9374 = vpack.c.b16 %v9118, %v9110
    %v9375 = vpack.c.b16 %v9119, %v9111
    %v9376 = vpack.c.b16 %v9120, %v9112
    %v9377 = vpack.c.b16 %v9121, %v9113
    %v9378 = vpack.c.b16 %v9122, %v9114
    %v9379 = vpack.c.b16 %v9123, %v9123
    %v9380 = vpack.c.b16 %v9124, %v9124
    %v9381 = vpack.c.b16 %v9125, %v9125
    %v9382 = vpack.c.b16 %v9126, %v9126
    %v9383 = vpack.c.b16 %v9127, %v9127
    %v9384 = vpack.c.b16 %v9128, %v9128
    %v9385 = vpack.c.b16 %v9129, %v9129
    %v9386 = vpack.c.b16 %v9130, %v9130
    %vm9635 = vcmask 949248
    %v9637 = vsel %vm9635, %v7996, 0
    %v9640 = vsel %vm3619, %v9379, 0
    %v9643 = vsel %vm3619, %v9380, 0
    %v9646 = vsel %vm3619, %v9381, 0
    %v9649 = vsel %vm3619, %v9382, 0
    %v9652 = vsel %vm3619, %v9383, 0
    %v9655 = vsel %vm3619, %v9384, 0
    %v9658 = vsel %vm3619, %v9385, 0
    %v9661 = vsel %vm3619, %v9386, 0
    %9663 = vmatprep.subr.bf16.mxu0 %v9132
    %9664 = vmatpush1.bf16.msra.mxu0 %v9131
    %9665 = vmatprep.subr.bf16.mxu0 %v9140
    %9666 = vmatpush1.bf16.msra.mxu0 %v9139
    %9667 = vmatprep.subr.bf16.mxu0 %v9148
    %9668 = vmatpush1.bf16.msra.mxu0 %v9147
    %9669 = vmatprep.subr.bf16.mxu0 %v9156
    %9670 = vmatpush1.bf16.msra.mxu0 %v9155
    %9671 = vmatprep.subr.bf16.mxu0 %v9164
    %9672 = vmatpush1.bf16.msra.mxu0 %v9163
    %9673 = vmatprep.subr.bf16.mxu0 %v9172
    %9674 = vmatpush1.bf16.msra.mxu0 %v9171
    %9675 = vmatprep.subr.bf16.mxu0 %v9180
    %9676 = vmatpush1.bf16.msra.mxu0 %v9179
    %9677 = vmatprep.subr.bf16.mxu0 %v9188
    %9678 = vmatpush1.bf16.msra.mxu0 %v9187
    %9679 = vmatprep.subr.bf16.mxu0 %v9196
    %9680 = vmatpush1.bf16.msra.mxu0 %v9195
    %9681 = vmatprep.subr.bf16.mxu0 %v9204
    %9682 = vmatpush1.bf16.msra.mxu0 %v9203
    %9683 = vmatprep.subr.bf16.mxu0 %v9212
    %9684 = vmatpush1.bf16.msra.mxu0 %v9211
    %9685 = vmatprep.subr.bf16.mxu0 %v9220
    %9686 = vmatpush1.bf16.msra.mxu0 %v9219
    %9687 = vmatprep.subr.bf16.mxu0 %v9228
    %9688 = vmatpush1.bf16.msra.mxu0 %v9227
    %9689 = vmatprep.subr.bf16.mxu0 %v9236
    %9690 = vmatpush1.bf16.msra.mxu0 %v9235
    %9691 = vmatprep.subr.bf16.mxu0 %v9244
    %9692 = vmatpush1.bf16.msra.mxu0 %v9243
    %9693 = vmatprep.subr.bf16.mxu0 %v9252
    %9694 = vmatpush1.bf16.msra.mxu0 %v9251
    %9695 = vmatprep.mubr.bf16.mxu0 %v7994
    %9696 = vmatmul.mubr.bf16.gmra.mrb[0].mxu0 %v7993
    %v9697 = vpop.f32.mrb[0].mxu0
    %v9698 = vadd.f32 0.0, %v9697
    %v9699 = vpop.f32.mrb[0].mxu0
    %v9700 = vadd.f32 0.0, %v9699
    %v9701 = vpop.f32.mrb[0].mxu0
    %v9702 = vpop.f32.mrb[0].mxu0
    %9703 = vdwg.mxu0
    %9704 = vmatprep.subr.bf16.mxu0 %v9260
    %9705 = vmatpush1.bf16.msra.mxu0 %v9259
    %9706 = vmatprep.subr.bf16.mxu0 %v9268
    %9707 = vmatpush1.bf16.msra.mxu0 %v9267
    %9708 = vmatprep.subr.bf16.mxu0 %v9276
    %9709 = vmatpush1.bf16.msra.mxu0 %v9275
    %9710 = vmatprep.subr.bf16.mxu0 %v9284
    %9711 = vmatpush1.bf16.msra.mxu0 %v9283
    %9712 = vmatprep.subr.bf16.mxu0 %v9292
    %9713 = vmatpush1.bf16.msra.mxu0 %v9291
    %9714 = vmatprep.subr.bf16.mxu0 %v9300
    %9715 = vmatpush1.bf16.msra.mxu0 %v9299
    %9716 = vmatprep.subr.bf16.mxu0 %v9308
    %9717 = vmatpush1.bf16.msra.mxu0 %v9307
    %9718 = vmatprep.subr.bf16.mxu0 %v9316
    %9719 = vmatpush1.bf16.msra.mxu0 %v9315
    %9720 = vmatprep.subr.bf16.mxu0 %v9324
    %9721 = vmatpush1.bf16.msra.mxu0 %v9323
    %9722 = vmatprep.subr.bf16.mxu0 %v9332
    %9723 = vmatpush1.bf16.msra.mxu0 %v9331
    %9724 = vmatprep.subr.bf16.mxu0 %v9340
    %9725 = vmatpush1.bf16.msra.mxu0 %v9339
    %9726 = vmatprep.subr.bf16.mxu0 %v9348
    %9727 = vmatpush1.bf16.msra.mxu0 %v9347
    %9728 = vmatprep.subr.bf16.mxu0 %v9356
    %9729 = vmatpush1.bf16.msra.mxu0 %v9355
    %9730 = vmatprep.subr.bf16.mxu0 %v9364
    %9731 = vmatpush1.bf16.msra.mxu0 %v9363
    %9732 = vmatprep.subr.bf16.mxu0 %v9372
    %9733 = vmatpush1.bf16.msra.mxu0 %v9371
    %9734 = vmatprep.subr.bf16.mxu0 %v9643
    %9735 = vmatpush1.bf16.msra.mxu0 %v9640
    %9736 = vmatprep.mubr.bf16.mxu0 %v9637
    %9737 = vmatmul.mubr.bf16.gmra.mrb[0].mxu0 %v7995
    %v9738 = vpop.f32.mrb[0].mxu0
    %v9739 = vadd.f32 %v9698, %v9738
    %v9740 = vpop.f32.mrb[0].mxu0
    %v9741 = vadd.f32 %v9700, %v9740
    %v9742 = vpop.f32.mrb[0].mxu0
    %v9743 = vpop.f32.mrb[0].mxu0
    %9744 = vdwg.mxu0
    %9745 = vmatprep.subr.bf16.mxu0 %v9134
    %9746 = vmatpush1.bf16.msra.mxu0 %v9133
    %9747 = vmatprep.subr.bf16.mxu0 %v9142
    %9748 = vmatpush1.bf16.msra.mxu0 %v9141
    %9749 = vmatprep.subr.bf16.mxu0 %v9150
    %9750 = vmatpush1.bf16.msra.mxu0 %v9149
    %9751 = vmatprep.subr.bf16.mxu0 %v9158
    %9752 = vmatpush1.bf16.msra.mxu0 %v9157
    %9753 = vmatprep.subr.bf16.mxu0 %v9166
    %9754 = vmatpush1.bf16.msra.mxu0 %v9165
    %9755 = vmatprep.subr.bf16.mxu0 %v9174
    %9756 = vmatpush1.bf16.msra.mxu0 %v9173
    %9757 = vmatprep.subr.bf16.mxu0 %v9182
    %9758 = vmatpush1.bf16.msra.mxu0 %v9181
    %9759 = vmatprep.subr.bf16.mxu0 %v9190
    %9760 = vmatpush1.bf16.msra.mxu0 %v9189
    %9761 = vmatprep.subr.bf16.mxu0 %v9198
    %9762 = vmatpush1.bf16.msra.mxu0 %v9197
    %9763 = vmatprep.subr.bf16.mxu0 %v9206
    %9764 = vmatpush1.bf16.msra.mxu0 %v9205
    %9765 = vmatprep.subr.bf16.mxu0 %v9214
    %9766 = vmatpush1.bf16.msra.mxu0 %v9213
    %9767 = vmatprep.subr.bf16.mxu0 %v9222
    %9768 = vmatpush1.bf16.msra.mxu0 %v9221
    %9769 = vmatprep.subr.bf16.mxu0 %v9230
    %9770 = vmatpush1.bf16.msra.mxu0 %v9229
    %9771 = vmatprep.subr.bf16.mxu0 %v9238
    %9772 = vmatpush1.bf16.msra.mxu0 %v9237
    %9773 = vmatprep.subr.bf16.mxu0 %v9246
    %9774 = vmatpush1.bf16.msra.mxu0 %v9245
    %9775 = vmatprep.subr.bf16.mxu0 %v9254
    %9776 = vmatpush1.bf16.msra.mxu0 %v9253
    %9777 = vmatprep.mubr.bf16.mxu0 %v7994
    %9778 = vmatmul.mubr.bf16.gmra.mrb[0].mxu0 %v7993
    %v9779 = vpop.f32.mrb[0].mxu0
    %v9780 = vadd.f32 0.0, %v9779
    %v9781 = vpop.f32.mrb[0].mxu0
    %v9782 = vadd.f32 0.0, %v9781
    %v9783 = vpop.f32.mrb[0].mxu0
    %v9784 = vpop.f32.mrb[0].mxu0
    %9785 = vdwg.mxu0
    %9786 = vmatprep.subr.bf16.mxu0 %v9262
    %9787 = vmatpush1.bf16.msra.mxu0 %v9261
    %9788 = vmatprep.subr.bf16.mxu0 %v9270
    %9789 = vmatpush1.bf16.msra.mxu0 %v9269
    %9790 = vmatprep.subr.bf16.mxu0 %v9278
    %9791 = vmatpush1.bf16.msra.mxu0 %v9277
    %9792 = vmatprep.subr.bf16.mxu0 %v9286
    %9793 = vmatpush1.bf16.msra.mxu0 %v9285
    %9794 = vmatprep.subr.bf16.mxu0 %v9294
    %9795 = vmatpush1.bf16.msra.mxu0 %v9293
    %9796 = vmatprep.subr.bf16.mxu0 %v9302
    %9797 = vmatpush1.bf16.msra.mxu0 %v9301
    %9798 = vmatprep.subr.bf16.mxu0 %v9310
    %9799 = vmatpush1.bf16.msra.mxu0 %v9309
    %9800 = vmatprep.subr.bf16.mxu0 %v9318
    %9801 = vmatpush1.bf16.msra.mxu0 %v9317
    %9802 = vmatprep.subr.bf16.mxu0 %v9326
    %9803 = vmatpush1.bf16.msra.mxu0 %v9325
    %9804 = vmatprep.subr.bf16.mxu0 %v9334
    %9805 = vmatpush1.bf16.msra.mxu0 %v9333
    %9806 = vmatprep.subr.bf16.mxu0 %v9342
    %9807 = vmatpush1.bf16.msra.mxu0 %v9341
    %9808 = vmatprep.subr.bf16.mxu0 %v9350
    %9809 = vmatpush1.bf16.msra.mxu0 %v9349
    %9810 = vmatprep.subr.bf16.mxu0 %v9358
    %9811 = vmatpush1.bf16.msra.mxu0 %v9357
    %9812 = vmatprep.subr.bf16.mxu0 %v9366
    %9813 = vmatpush1.bf16.msra.mxu0 %v9365
    %9814 = vmatprep.subr.bf16.mxu0 %v9374
    %9815 = vmatpush1.bf16.msra.mxu0 %v9373
    %9816 = vmatprep.subr.bf16.mxu0 %v9649
    %9817 = vmatpush1.bf16.msra.mxu0 %v9646
    %9818 = vmatprep.mubr.bf16.mxu0 %v9637
    %9819 = vmatmul.mubr.bf16.gmra.mrb[0].mxu0 %v7995
    %v9820 = vpop.f32.mrb[0].mxu0
    %v9821 = vadd.f32 %v9780, %v9820
    %v9822 = vpop.f32.mrb[0].mxu0
    %v9823 = vadd.f32 %v9782, %v9822
    %v9824 = vpop.f32.mrb[0].mxu0
    %v9825 = vpop.f32.mrb[0].mxu0
    %9826 = vdwg.mxu0
    %9827 = vmatprep.subr.bf16.mxu0 %v9136
    %9828 = vmatpush1.bf16.msra.mxu0 %v9135
    %9829 = vmatprep.subr.bf16.mxu0 %v9144
    %9830 = vmatpush1.bf16.msra.mxu0 %v9143
    %9831 = vmatprep.subr.bf16.mxu0 %v9152
    %9832 = vmatpush1.bf16.msra.mxu0 %v9151
    %9833 = vmatprep.subr.bf16.mxu0 %v9160
    %9834 = vmatpush1.bf16.msra.mxu0 %v9159
    %9835 = vmatprep.subr.bf16.mxu0 %v9168
    %9836 = vmatpush1.bf16.msra.mxu0 %v9167
    %9837 = vmatprep.subr.bf16.mxu0 %v9176
    %9838 = vmatpush1.bf16.msra.mxu0 %v9175
    %9839 = vmatprep.subr.bf16.mxu0 %v9184
    %9840 = vmatpush1.bf16.msra.mxu0 %v9183
    %9841 = vmatprep.subr.bf16.mxu0 %v9192
    %9842 = vmatpush1.bf16.msra.mxu0 %v9191
    %9843 = vmatprep.subr.bf16.mxu0 %v9200
    %9844 = vmatpush1.bf16.msra.mxu0 %v9199
    %9845 = vmatprep.subr.bf16.mxu0 %v9208
    %9846 = vmatpush1.bf16.msra.mxu0 %v9207
    %9847 = vmatprep.subr.bf16.mxu0 %v9216
    %9848 = vmatpush1.bf16.msra.mxu0 %v9215
    %9849 = vmatprep.subr.bf16.mxu0 %v9224
    %9850 = vmatpush1.bf16.msra.mxu0 %v9223
    %9851 = vmatprep.subr.bf16.mxu0 %v9232
    %9852 = vmatpush1.bf16.msra.mxu0 %v9231
    %9853 = vmatprep.subr.bf16.mxu0 %v9240
    %9854 = vmatpush1.bf16.msra.mxu0 %v9239
    %9855 = vmatprep.subr.bf16.mxu0 %v9248
    %9856 = vmatpush1.bf16.msra.mxu0 %v9247
    %9857 = vmatprep.subr.bf16.mxu0 %v9256
    %9858 = vmatpush1.bf16.msra.mxu0 %v9255
    %9859 = vmatprep.mubr.bf16.mxu0 %v7994
    %9860 = vmatmul.mubr.bf16.gmra.mrb[0].mxu0 %v7993
    %v9861 = vpop.f32.mrb[0].mxu0
    %v9862 = vadd.f32 0.0, %v9861
    %v9863 = vpop.f32.mrb[0].mxu0
    %v9864 = vadd.f32 0.0, %v9863
    %v9865 = vpop.f32.mrb[0].mxu0
    %v9866 = vpop.f32.mrb[0].mxu0
    %9867 = vdwg.mxu0
    %9868 = vmatprep.subr.bf16.mxu0 %v9264
    %9869 = vmatpush1.bf16.msra.mxu0 %v9263
    %9870 = vmatprep.subr.bf16.mxu0 %v9272
    %9871 = vmatpush1.bf16.msra.mxu0 %v9271
    %9872 = vmatprep.subr.bf16.mxu0 %v9280
    %9873 = vmatpush1.bf16.msra.mxu0 %v9279
    %9874 = vmatprep.subr.bf16.mxu0 %v9288
    %9875 = vmatpush1.bf16.msra.mxu0 %v9287
    %9876 = vmatprep.subr.bf16.mxu0 %v9296
    %9877 = vmatpush1.bf16.msra.mxu0 %v9295
    %9878 = vmatprep.subr.bf16.mxu0 %v9304
    %9879 = vmatpush1.bf16.msra.mxu0 %v9303
    %9880 = vmatprep.subr.bf16.mxu0 %v9312
    %9881 = vmatpush1.bf16.msra.mxu0 %v9311
    %9882 = vmatprep.subr.bf16.mxu0 %v9320
    %9883 = vmatpush1.bf16.msra.mxu0 %v9319
    %9884 = vmatprep.subr.bf16.mxu0 %v9328
    %9885 = vmatpush1.bf16.msra.mxu0 %v9327
    %9886 = vmatprep.subr.bf16.mxu0 %v9336
    %9887 = vmatpush1.bf16.msra.mxu0 %v9335
    %9888 = vmatprep.subr.bf16.mxu0 %v9344
    %9889 = vmatpush1.bf16.msra.mxu0 %v9343
    %9890 = vmatprep.subr.bf16.mxu0 %v9352
    %9891 = vmatpush1.bf16.msra.mxu0 %v9351
    %9892 = vmatprep.subr.bf16.mxu0 %v9360
    %9893 = vmatpush1.bf16.msra.mxu0 %v9359
    %9894 = vmatprep.subr.bf16.mxu0 %v9368
    %9895 = vmatpush1.bf16.msra.mxu0 %v9367
    %9896 = vmatprep.subr.bf16.mxu0 %v9376
    %9897 = vmatpush1.bf16.msra.mxu0 %v9375
    %9898 = vmatprep.subr.bf16.mxu0 %v9655
    %9899 = vmatpush1.bf16.msra.mxu0 %v9652
    %9900 = vmatprep.mubr.bf16.mxu0 %v9637
    %9901 = vmatmul.mubr.bf16.gmra.mrb[0].mxu0 %v7995
    %v9902 = vpop.f32.mrb[0].mxu0
    %v9903 = vadd.f32 %v9862, %v9902
    %v9904 = vpop.f32.mrb[0].mxu0
    %v9905 = vadd.f32 %v9864, %v9904
    %v9906 = vpop.f32.mrb[0].mxu0
    %v9907 = vpop.f32.mrb[0].mxu0
    %9908 = vdwg.mxu0
    %9909 = vmatprep.subr.bf16.mxu0 %v9138
    %9910 = vmatpush1.bf16.msra.mxu0 %v9137
    %9911 = vmatprep.subr.bf16.mxu0 %v9146
    %9912 = vmatpush1.bf16.msra.mxu0 %v9145
    %9913 = vmatprep.subr.bf16.mxu0 %v9154
    %9914 = vmatpush1.bf16.msra.mxu0 %v9153
    %9915 = vmatprep.subr.bf16.mxu0 %v9162
    %9916 = vmatpush1.bf16.msra.mxu0 %v9161
    %9917 = vmatprep.subr.bf16.mxu0 %v9170
    %9918 = vmatpush1.bf16.msra.mxu0 %v9169
    %9919 = vmatprep.subr.bf16.mxu0 %v9178
    %9920 = vmatpush1.bf16.msra.mxu0 %v9177
    %9921 = vmatprep.subr.bf16.mxu0 %v9186
    %9922 = vmatpush1.bf16.msra.mxu0 %v9185
    %9923 = vmatprep.subr.bf16.mxu0 %v9194
    %9924 = vmatpush1.bf16.msra.mxu0 %v9193
    %9925 = vmatprep.subr.bf16.mxu0 %v9202
    %9926 = vmatpush1.bf16.msra.mxu0 %v9201
    %9927 = vmatprep.subr.bf16.mxu0 %v9210
    %9928 = vmatpush1.bf16.msra.mxu0 %v9209
    %9929 = vmatprep.subr.bf16.mxu0 %v9218
    %9930 = vmatpush1.bf16.msra.mxu0 %v9217
    %9931 = vmatprep.subr.bf16.mxu0 %v9226
    %9932 = vmatpush1.bf16.msra.mxu0 %v9225
    %9933 = vmatprep.subr.bf16.mxu0 %v9234
    %9934 = vmatpush1.bf16.msra.mxu0 %v9233
    %9935 = vmatprep.subr.bf16.mxu0 %v9242
    %9936 = vmatpush1.bf16.msra.mxu0 %v9241
    %9937 = vmatprep.subr.bf16.mxu0 %v9250
    %9938 = vmatpush1.bf16.msra.mxu0 %v9249
    %9939 = vmatprep.subr.bf16.mxu0 %v9258
    %9940 = vmatpush1.bf16.msra.mxu0 %v9257
    %9941 = vmatprep.mubr.bf16.mxu0 %v7994
    %9942 = vmatmul.mubr.bf16.gmra.mrb[0].mxu0 %v7993
    %v9943 = vpop.f32.mrb[0].mxu0
    %v9944 = vadd.f32 0.0, %v9943
    %v9945 = vpop.f32.mrb[0].mxu0
    %v9946 = vadd.f32 0.0, %v9945
    %v9947 = vpop.f32.mrb[0].mxu0
    %v9948 = vpop.f32.mrb[0].mxu0
    %9949 = vdwg.mxu0
    %9950 = vmatprep.subr.bf16.mxu0 %v9266
    %9951 = vmatpush1.bf16.msra.mxu0 %v9265
    %9952 = vmatprep.subr.bf16.mxu0 %v9274
    %9953 = vmatpush1.bf16.msra.mxu0 %v9273
    %9954 = vmatprep.subr.bf16.mxu0 %v9282
    %9955 = vmatpush1.bf16.msra.mxu0 %v9281
    %9956 = vmatprep.subr.bf16.mxu0 %v9290
    %9957 = vmatpush1.bf16.msra.mxu0 %v9289
    %9958 = vmatprep.subr.bf16.mxu0 %v9298
    %9959 = vmatpush1.bf16.msra.mxu0 %v9297
    %9960 = vmatprep.subr.bf16.mxu0 %v9306
    %9961 = vmatpush1.bf16.msra.mxu0 %v9305
    %9962 = vmatprep.subr.bf16.mxu0 %v9314
    %9963 = vmatpush1.bf16.msra.mxu0 %v9313
    %9964 = vmatprep.subr.bf16.mxu0 %v9322
    %9965 = vmatpush1.bf16.msra.mxu0 %v9321
    %9966 = vmatprep.subr.bf16.mxu0 %v9330
    %9967 = vmatpush1.bf16.msra.mxu0 %v9329
    %9968 = vmatprep.subr.bf16.mxu0 %v9338
    %9969 = vmatpush1.bf16.msra.mxu0 %v9337
    %9970 = vmatprep.subr.bf16.mxu0 %v9346
    %9971 = vmatpush1.bf16.msra.mxu0 %v9345
    %9972 = vmatprep.subr.bf16.mxu0 %v9354
    %9973 = vmatpush1.bf16.msra.mxu0 %v9353
    %9974 = vmatprep.subr.bf16.mxu0 %v9362
    %9975 = vmatpush1.bf16.msra.mxu0 %v9361
    %9976 = vmatprep.subr.bf16.mxu0 %v9370
    %9977 = vmatpush1.bf16.msra.mxu0 %v9369
    %9978 = vmatprep.subr.bf16.mxu0 %v9378
    %9979 = vmatpush1.bf16.msra.mxu0 %v9377
    %9980 = vmatprep.subr.bf16.mxu0 %v9661
    %9981 = vmatpush1.bf16.msra.mxu0 %v9658
    %9982 = vmatprep.mubr.bf16.mxu0 %v9637
    %9983 = vmatmul.mubr.bf16.gmra.mrb[0].mxu0 %v7995
    %v9984 = vpop.f32.mrb[0].mxu0
    %v9985 = vadd.f32 %v9944, %v9984
    %v9986 = vpop.f32.mrb[0].mxu0
    %v9987 = vadd.f32 %v9946, %v9986
    %v9988 = vpop.f32.mrb[0].mxu0
    %v9989 = vpop.f32.mrb[0].mxu0
    %9990 = vdwg.mxu0
    %v9991 = vld [vmem:[%s16] sm:$0xff]
    %v9993 = vlaneseq
    %v9994 = vshrl.u32 %v9993, 7
    %v9995 = vsub.s32 0, %v9994
    %v9996 = vrot.slane %v9991, %v9995
    %v9997 = vlaneseq
    %v9998 = vshrl.u32 %v9997, 7
    %v9999 = vsub.s32 1, %v9998
    %v10000 = vrot.slane %v9991, %v9999
    %v10001 = vlaneseq
    %v10002 = vshrl.u32 %v10001, 7
    %v10003 = vsub.s32 2, %v10002
    %v10004 = vrot.slane %v9991, %v10003
    %v10005 = vlaneseq
    %v10006 = vshrl.u32 %v10005, 7
    %v10007 = vsub.s32 3, %v10006
    %v10008 = vrot.slane %v9991, %v10007
    %v10009 = vlaneseq
    %v10010 = vshrl.u32 %v10009, 7
    %v10011 = vsub.s32 4, %v10010
    %v10012 = vrot.slane %v9991, %v10011
    %v10013 = vlaneseq
    %v10014 = vshrl.u32 %v10013, 7
    %v10015 = vsub.s32 5, %v10014
    %v10016 = vrot.slane %v9991, %v10015
    %v10017 = vlaneseq
    %v10018 = vshrl.u32 %v10017, 7
    %v10019 = vsub.s32 6, %v10018
    %v10020 = vrot.slane %v9991, %v10019
    %v10021 = vlaneseq
    %v10022 = vshrl.u32 %v10021, 7
    %v10023 = vsub.s32 7, %v10022
    %v10024 = vrot.slane %v9991, %v10023
    %v10033 = vmul.f32 %v9739, %v9996
    %v10034 = vmul.f32 %v9741, %v10000
    %v10035 = vmul.f32 %v9821, %v10004
    %v10036 = vmul.f32 %v9823, %v10008
    %v10037 = vmul.f32 %v9903, %v10012
    %v10038 = vmul.f32 %v9905, %v10016
    %v10039 = vmul.f32 %v9985, %v10020
    %v10040 = vmul.f32 %v9987, %v10024
    %v10041 = vadd.f32 %v7985, %v10033
    %v10042 = vadd.f32 %v7986, %v10034
    %v10043 = vadd.f32 %v7987, %v10035
    %v10044 = vadd.f32 %v7988, %v10036
    %v10045 = vadd.f32 %v7989, %v10037
    %v10046 = vadd.f32 %v7990, %v10038
    %v10047 = vadd.f32 %v7991, %v10039
    %v10048 = vadd.f32 %v7992, %v10040
    %v10049 = vld [vmem:[%s17] sm:$0xff]
    %v10051 = vlaneseq
    %v10052 = vshrl.u32 %v10051, 7
    %v10053 = vsub.s32 0, %v10052
    %v10054 = vrot.slane %v10049, %v10053
    %v10055 = vlaneseq
    %v10056 = vshrl.u32 %v10055, 7
    %v10057 = vsub.s32 1, %v10056
    %v10058 = vrot.slane %v10049, %v10057
    %v10059 = vlaneseq
    %v10060 = vshrl.u32 %v10059, 7
    %v10061 = vsub.s32 2, %v10060
    %v10062 = vrot.slane %v10049, %v10061
    %v10063 = vlaneseq
    %v10064 = vshrl.u32 %v10063, 7
    %v10065 = vsub.s32 3, %v10064
    %v10066 = vrot.slane %v10049, %v10065
    %v10067 = vlaneseq
    %v10068 = vshrl.u32 %v10067, 7
    %v10069 = vsub.s32 4, %v10068
    %v10070 = vrot.slane %v10049, %v10069
    %v10071 = vlaneseq
    %v10072 = vshrl.u32 %v10071, 7
    %v10073 = vsub.s32 5, %v10072
    %v10074 = vrot.slane %v10049, %v10073
    %v10075 = vlaneseq
    %v10076 = vshrl.u32 %v10075, 7
    %v10077 = vsub.s32 6, %v10076
    %v10078 = vrot.slane %v10049, %v10077
    %v10079 = vlaneseq
    %v10080 = vshrl.u32 %v10079, 7
    %v10081 = vsub.s32 7, %v10080
    %v10082 = vrot.slane %v10049, %v10081
    %v10091 = vadd.f32 %v10041, %v10054
    %v10092 = vadd.f32 %v10042, %v10058
    %v10093 = vadd.f32 %v10043, %v10062
    %v10094 = vadd.f32 %v10044, %v10066
    %v10095 = vadd.f32 %v10045, %v10070
    %v10096 = vadd.f32 %v10046, %v10074
    %v10097 = vadd.f32 %v10047, %v10078
    %v10098 = vadd.f32 %v10048, %v10082
    %v10099 = vmul.f32 %v10091, %v10091
    %v10100 = vmul.f32 %v10092, %v10092
    %v10101 = vmul.f32 %v10093, %v10093
    %v10102 = vmul.f32 %v10094, %v10094
    %v10103 = vmul.f32 %v10095, %v10095
    %v10104 = vmul.f32 %v10096, %v10096
    %v10105 = vmul.f32 %v10097, %v10097
    %v10106 = vmul.f32 %v10098, %v10098
    %v10107 = vsel %vm3619, %v10099, 0.0
    %v10108 = vsel %vm3619, %v10100, 0.0
    %v10109 = vadd.f32 %v10107, %v10108
    %v10110 = vsel %vm3619, %v10101, 0.0
    %v10111 = vadd.f32 %v10109, %v10110
    %v10112 = vsel %vm3619, %v10102, 0.0
    %v10113 = vadd.f32 %v10111, %v10112
    %v10114 = vsel %vm3619, %v10103, 0.0
    %v10115 = vadd.f32 %v10113, %v10114
    %v10116 = vsel %vm3619, %v10104, 0.0
    %v10117 = vadd.f32 %v10115, %v10116
    %v10118 = vsel %vm3619, %v10105, 0.0
    %v10119 = vadd.f32 %v10117, %v10118
    %v10120 = vsel %vm3987, %v10106, 0.0
    %v10121 = vadd.f32 %v10119, %v10120
    %10122 = vadd.xlane.f32.xlu0 %v10121
    %v10123 = vpop.xlane.xlu0 %10122
    %v10124 = vmax.f32 %v10123, 1e-24
    %v10125 = vrsqrt.pop %v10124
    %v10126 = vmul.f32 %v10091, %v10125
    %v10127 = vmul.f32 %v10092, %v10125
    %v10128 = vmul.f32 %v10093, %v10125
    %v10129 = vmul.f32 %v10094, %v10125
    %v10130 = vmul.f32 %v10095, %v10125
    %v10131 = vmul.f32 %v10096, %v10125
    %v10132 = vmul.f32 %v10097, %v10125
    %v10133 = vmul.f32 %v10098, %v10125
    %v10142 = vcombine.low %v10126, %v10127
    %v10143 = vcombine.low %v10128, %v10129
    %v10145 = vunpack.c.l.s4 1983009808
    %v10146 = vunpack.c.0.s8 %v10145
    %v10147 = vlaneseq
    %v10148 = vshrl.u32 %v10147, 7
    %v10149 = vsub.s32 %v10146, %v10148
    %v10150 = vrot.slane %v10142, %v10149
    %v10152 = vunpack.c.l.s4 1983009808
    %v10153 = vunpack.c.0.s8 %v10152
    %v10154 = vlaneseq
    %v10155 = vshrl.u32 %v10154, 7
    %v10156 = vsub.s32 %v10153, %v10155
    %v10157 = vrot.slane %v10143, %v10156
    %v10158 = vcombine.low %v10150, %v10157
    %v10159 = vcombine.low %v10130, %v10131
    %v10160 = vcombine.low %v10132, %v10133
    %v10162 = vunpack.c.l.s4 1983009808
    %v10163 = vunpack.c.0.s8 %v10162
    %v10164 = vlaneseq
    %v10165 = vshrl.u32 %v10164, 7
    %v10166 = vsub.s32 %v10163, %v10165
    %v10167 = vrot.slane %v10159, %v10166
    %v10169 = vunpack.c.l.s4 1983009808
    %v10170 = vunpack.c.0.s8 %v10169
    %v10171 = vlaneseq
    %v10172 = vshrl.u32 %v10171, 7
    %v10173 = vsub.s32 %v10170, %v10172
    %v10174 = vrot.slane %v10160, %v10173
    %v10175 = vcombine.low %v10167, %v10174
    %10178 = vst [vmem:[#allocation2] sm:$0xff] %v10158
    %vm10179 = vcmask 1043458
    %vm10180 = vmor %vm10179, %vm3619
    %vm10181 = vcmask 1045508
    %vm10182 = vmor %vm10181, %vm10180
    %vm10183 = vcmask 850950
    %vm10184 = vmor %vm10183, %vm10182
    %10185 = vst.msk [vmem:[#allocation2 + $0x8] sm:$0xff] %vm10184, %v10175
    // Predicated region
    $region74: #{one_emb_forward.1} parent=1 // pred_check
      _
    $region75: #{one_emb_forward.1} parent=1 // pred_check_branch
      %10187 = sbr.rel (0) target = $region77
    $region76: #{one_emb_forward.1} parent=1 // pred_region
      %s10189 = ssub.s32 256, 256
      %10190 = vsyncadd [#allocation3], %s10189
      %s10192 = sshll.u32 [#allocation2], 4
      %s10193 = int_to_ptr.vmem [resolvable:$true] %s10192
      %10195 = dma.vmem_to_hbm [thread:$0]  %s10193, 256, %s18, [#allocation3]
    $region77: #{one_emb_forward.1} parent=1 // pred_fallthru
      _
    // Predicated region
    $region78: #{one_emb_forward.1} parent=1 // pred_check
      _
    $region79: #{one_emb_forward.1} parent=1 // pred_check_branch
      %10197 = sbr.rel (0) target = $region81
    $region80: #{one_emb_forward.1} parent=1 // pred_region
      %10198 = dma.done [#allocation3], 256
    $region81: #{one_emb_forward.1} parent=1 // pred_fallthru
      _
    %10199 = vsyncpa [#allocation3], 1

</llo_original>
